<compile_context>
chip_gen: v7x
topology: tpu7x:2x2x1
jax: 0.10.0
libtpu: 0.0.40
codegen_flags: <defaults>
</compile_context>

<pallas_src>
import functools

import jax
import jax.numpy as jnp
import numpy as np
from jax.experimental import pallas as pl
from jax.experimental.pallas import tpu as pltpu


# ----------------------------------------------------------------------------
# Fused kernel: conv1+BN1+ReLU -> conv2+BN2+ReLU -> 2x2 pool (per batch elem)
# ----------------------------------------------------------------------------
def _conv_block_kernel(x_ref, w1_ref, s1_ref, b1_ref, w2_ref, s2_ref, b2_ref,
                       o_ref, xpad_ref, h1_ref, acc_ref, *, pool_type, lpad):
    """
    x_ref   : (1, H, W, Cin)       input tile (one batch element)
    w1_ref  : (3, 3*Cin, Cp)       conv1 weight, kw folded into K, compute dtype
    s1_ref  : (1, Cp) f32          fused BN1 scale    b1_ref: (1, Cp) BN1 shift
    w2_ref  : (3, 3*Cp, Cp)        conv2 weight, kw folded into K, compute dtype
    s2_ref  : (1, Cp) f32          fused BN2 scale    b2_ref: (1, Cp) BN2 shift
    o_ref   : (1, H/2, W/2, Cp)    pooled output
    xpad_ref: (H+2, Wpad, Cin)     VMEM scratch, zero-haloed input (compute dtype)
    h1_ref  : (H+2, Wpad, Cp)      VMEM scratch, zero-haloed conv1 act (compute dtype)
    acc_ref : (H*W, Cp) f32        VMEM matmul accumulator (shared by both convs)
    Interior occupies rows 1..H and columns lpad..lpad+W-1 (lpad sublane-aligned).
    """
    _, H, W, _ = x_ref.shape
    _, Hh, Wh, Cp = o_ref.shape

    # --- rim-only halo zeroing (O(H+W) per step; unconditional so correctness
    #     does not depend on which core ran step 0 under megacore sharding).
    def zero_rim(ref):
        wpad, c = ref.shape[1], ref.shape[2]
        ref[pl.ds(0, 1)] = jnp.zeros((1, wpad, c), ref.dtype)          # top row
        ref[pl.ds(H + 1, 1)] = jnp.zeros((1, wpad, c), ref.dtype)      # bottom row
        ref[pl.ds(1, H), pl.ds(lpad - 1, 1), :] = jnp.zeros((H, 1, c), ref.dtype)
        ref[pl.ds(1, H), pl.ds(lpad + W, 1), :] = jnp.zeros((H, 1, c), ref.dtype)

    zero_rim(xpad_ref)
    zero_rim(h1_ref)

    # Spatial zero-padding done in VMEM; single cast to compute dtype here.
    xpad_ref[pl.ds(1, H), pl.ds(lpad, W), :] = x_ref[0].astype(xpad_ref.dtype)

    def conv3x3_bn_relu(src_ref, w_ref, s_ref, bias_ref):
        """3x3 conv over a zero-haloed VMEM ref, fused BN scale/shift + ReLU.

        kw taps are concatenated along channels -> 3 MXU matmuls of K=3*cin
        with f32 accumulation into acc_ref (VMEM).
        """
        cin = src_ref.shape[-1]
        for kh in range(3):
            patch = jnp.concatenate(
                [src_ref[pl.ds(kh, H), pl.ds(lpad - 1 + kw, W), :]
                 for kw in range(3)],
                axis=-1)                                   # (H, W, 3*cin)
            contrib = jnp.dot(patch.reshape(H * W, 3 * cin), w_ref[kh],
                              preferred_element_type=jnp.float32)
            if kh == 0:
                acc_ref[...] = contrib
            else:
                acc_ref[...] += contrib
        # BN + ReLU in f32.
        return jnp.maximum(acc_ref[...] * s_ref[...] + bias_ref[...], 0.0)

    # conv1 -> BN1 -> ReLU, kept VMEM-resident (compute dtype) with zero halo.
    h1 = conv3x3_bn_relu(xpad_ref, w1_ref, s1_ref, b1_ref)
    h1_ref[pl.ds(1, H), pl.ds(lpad, W), :] = (
        h1.reshape(H, W, Cp).astype(h1_ref.dtype))

    # conv2 -> BN2 -> ReLU (f32 result).
    y2 = conv3x3_bn_relu(h1_ref, w2_ref, s2_ref, b2_ref)

    # 2x2 pooling epilogue on the VMEM-resident activation (lane axis = Cp).
    yw = y2.reshape(Hh, 2, Wh, 2, Cp)
    p00 = yw[:, 0, :, 0, :]
    p01 = yw[:, 0, :, 1, :]
    p10 = yw[:, 1, :, 0, :]
    p11 = yw[:, 1, :, 1, :]
    if pool_type == "avg":
        out = 0.25 * (p00 + p01 + p10 + p11)
    elif pool_type == "max":
        out = jnp.maximum(jnp.maximum(p00, p01), jnp.maximum(p10, p11))
    else:  # 'avg+max'
        out = (0.25 * (p00 + p01 + p10 + p11)
               + jnp.maximum(jnp.maximum(p00, p01), jnp.maximum(p10, p11)))
    o_ref[...] = out.reshape(1, Hh, Wh, Cp).astype(o_ref.dtype)


# ----------------------------------------------------------------------------
# Wrapper (layout / channel padding / BN folding glue)
# ----------------------------------------------------------------------------
def _round_up(n, m):
    return ((n + m - 1) // m) * m


def _pad_axis_to(a, axis, size):
    if a.shape[axis] == size:
        return a
    pad = [(0, 0)] * a.ndim
    pad[axis] = (0, size - a.shape[axis])
    return jnp.pad(a, pad)


def _fuse_bn(gamma, beta, running_mean, running_var, eps=1e-5):
    scale = gamma / jnp.sqrt(running_var + eps)
    bias = beta - running_mean * scale
    return scale, bias


def conv_block_forward(x_nchw, params, pool_size=(2, 2), pool_type="avg",
                       compute_dtype=jnp.bfloat16, out_dtype=jnp.float32,
                       eps=1e-5):
    """Equivalent of ConvBlock.forward (eval mode).  Input/output are NCHW."""
    if pool_type not in ("avg", "max", "avg+max"):
        raise Exception("Incorrect argument!")
    assert pool_size == (2, 2), "only 2x2 pooling implemented"
    B, Cin, H, W = x_nchw.shape
    assert H % 2 == 0 and W % 2 == 0, "even spatial dims required for 2x2 pool"

    Cout = params["w1_hwio"].shape[-1]
    Cp = _round_up(Cout, 128)               # lane-dense channel padding
    Hh, Wh = H // 2, W // 2

    # Sublane-tile-aligned scratch layout for the chosen compute dtype
    # (f32 tile height 8, bf16 tile height 16).
    sub = 8 * (4 // jnp.dtype(compute_dtype).itemsize)
    lpad = sub                               # interior column start (aligned)
    wpad = _round_up(lpad + W + 1, sub)      # padded scratch width

    s1, b1 = _fuse_bn(*params["bn1"], eps=eps)
    s2, b2 = _fuse_bn(*params["bn2"], eps=eps)

    # Zero-pad weights / BN params to Cp channels (tiny arrays; exact zeros
    # propagate through conv/BN/ReLU so results are unchanged), fold kw into
    # the contraction axis, and cast the matmul operands ONCE to compute dtype.
    w1 = _pad_axis_to(params["w1_hwio"], 3, Cp)                        # (3,3,Cin,Cp)
    w2 = _pad_axis_to(_pad_axis_to(params["w2_hwio"], 2, Cp), 3, Cp)   # (3,3,Cp,Cp)
    w1r = w1.reshape(3, 3 * Cin, Cp).astype(compute_dtype)
    w2r = w2.reshape(3, 3 * Cp, Cp).astype(compute_dtype)
    s1p = _pad_axis_to(s1, 0, Cp).reshape(1, Cp).astype(jnp.float32)
    b1p = _pad_axis_to(b1, 0, Cp).reshape(1, Cp).astype(jnp.float32)
    s2p = _pad_axis_to(s2, 0, Cp).reshape(1, Cp).astype(jnp.float32)
    b2p = _pad_axis_to(b2, 0, Cp).reshape(1, Cp).astype(jnp.float32)

    x = jnp.transpose(x_nchw, (0, 2, 3, 1))    # NCHW -> NHWC (C on lanes)

    out = pl.pallas_call(
        functools.partial(_conv_block_kernel, pool_type=pool_type, lpad=lpad),
        out_shape=jax.ShapeDtypeStruct((B, Hh, Wh, Cp), out_dtype),
        grid=(B,),
        in_specs=[
            pl.BlockSpec((1, H, W, Cin), lambda b: (b, 0, 0, 0)),
            pl.BlockSpec((3, 3 * Cin, Cp), lambda b: (0, 0, 0)),
            pl.BlockSpec((1, Cp), lambda b: (0, 0)),
            pl.BlockSpec((1, Cp), lambda b: (0, 0)),
            pl.BlockSpec((3, 3 * Cp, Cp), lambda b: (0, 0, 0)),
            pl.BlockSpec((1, Cp), lambda b: (0, 0)),
            pl.BlockSpec((1, Cp), lambda b: (0, 0)),
        ],
        out_specs=pl.BlockSpec((1, Hh, Wh, Cp), lambda b: (b, 0, 0, 0)),
        scratch_shapes=[
            pltpu.VMEM((H + 2, wpad, Cin), compute_dtype),  # zero-haloed input
            pltpu.VMEM((H + 2, wpad, Cp), compute_dtype),   # conv1 activation
            pltpu.VMEM((H * W, Cp), jnp.float32),           # matmul accumulator
        ],
        compiler_params=pltpu.CompilerParams(
            dimension_semantics=("parallel",)),
    )(x, w1r, s1p, b1p, w2r, s2p, b2p)

    out = out[..., :Cout]                       # drop padded channels
    return jnp.transpose(out, (0, 3, 1, 2))     # NHWC -> NCHW


# ----------------------------------------------------------------------------
# Pure-JAX reference (same operand quantization as the kernel)
# ----------------------------------------------------------------------------
def _ref_forward(x_nchw, params, pool_type="avg",
                 compute_dtype=jnp.bfloat16, eps=1e-5):
    dn = ("NHWC", "HWIO", "NHWC")
    x = jnp.transpose(x_nchw, (0, 2, 3, 1))
    s1, b1 = _fuse_bn(*params["bn1"], eps=eps)
    s2, b2 = _fuse_bn(*params["bn2"], eps=eps)
    w1 = params["w1_hwio"].astype(compute_dtype)
    w2 = params["w2_hwio"].astype(compute_dtype)
    y = jax.lax.conv_general_dilated(
        x.astype(compute_dtype), w1, (1, 1), ((1, 1), (1, 1)),
        dimension_numbers=dn, preferred_element_type=jnp.float32)
    y = jnp.maximum(y * s1 + b1, 0.0)
    y = jax.lax.conv_general_dilated(
        y.astype(compute_dtype), w2, (1, 1), ((1, 1), (1, 1)),
        dimension_numbers=dn, preferred_element_type=jnp.float32)
    y = jnp.maximum(y * s2 + b2, 0.0)
    B, H, W, C = y.shape
    yw = y.reshape(B, H // 2, 2, W // 2, 2, C)
    if pool_type == "avg":
        y = yw.mean(axis=(2, 4))
    elif pool_type == "max":
        y = yw.max(axis=(2, 4))
    else:
        y = yw.mean(axis=(2, 4)) + yw.max(axis=(2, 4))
    return jnp.transpose(y, (0, 3, 1, 2))


# ----------------------------------------------------------------------------
# Main
# ----------------------------------------------------------------------------
if __name__ == "__main__":
    B, Cin, Cout, H, W = 2, 4, 8, 16, 16

    key = jax.random.PRNGKey(0)
    keys = jax.random.split(key, 12)

    # Deterministic synthetic parameters (PyTorch weight layout OIHW, then
    # transposed to HWIO for the NHWC kernel).
    w1_oihw = 0.1 * jax.random.normal(keys[0], (Cout, Cin, 3, 3), jnp.float32)
    w2_oihw = 0.1 * jax.random.normal(keys[1], (Cout, Cout, 3, 3), jnp.float32)
    params = {
        "w1_hwio": jnp.transpose(w1_oihw, (2, 3, 1, 0)),
        "w2_hwio": jnp.transpose(w2_oihw, (2, 3, 1, 0)),
        # (gamma, beta, running_mean, running_var)
        "bn1": (jax.random.uniform(keys[2], (Cout,), jnp.float32, 0.5, 1.5),
                0.1 * jax.random.normal(keys[3], (Cout,), jnp.float32),
                0.1 * jax.random.normal(keys[4], (Cout,), jnp.float32),
                jax.random.uniform(keys[5], (Cout,), jnp.float32, 0.5, 1.5)),
        "bn2": (jax.random.uniform(keys[6], (Cout,), jnp.float32, 0.5, 1.5),
                0.1 * jax.random.normal(keys[7], (Cout,), jnp.float32),
                0.1 * jax.random.normal(keys[8], (Cout,), jnp.float32),
                jax.random.uniform(keys[9], (Cout,), jnp.float32, 0.5, 1.5)),
    }

    x = jax.random.normal(keys[10], (B, Cin, H, W), jnp.float32)  # NCHW input

    # bf16-operand MXU path (default) vs. a reference with identical operand
    # quantization: differences are f32 accumulation order only.
    for pool_type in ("avg", "max", "avg+max"):
        out = jax.block_until_ready(
            conv_block_forward(x, params, pool_size=(2, 2), pool_type=pool_type))
        ref = jax.block_until_ready(
            _ref_forward(x, params, pool_type=pool_type))
        assert out.shape == (B, Cout, H // 2, W // 2), out.shape
        np.testing.assert_allclose(np.asarray(out), np.asarray(ref),
                                   rtol=2e-4, atol=2e-4)

    # f32 path, tight tolerance against the f32 reference.
    out = jax.block_until_ready(
        conv_block_forward(x, params, pool_type="avg",
                           compute_dtype=jnp.float32))
    ref = jax.block_until_ready(
        _ref_forward(x, params, pool_type="avg", compute_dtype=jnp.float32))
    np.testing.assert_allclose(np.asarray(out), np.asarray(ref),
                               rtol=1e-4, atol=1e-5)

    print("KERNEL_OK")
</pallas_src>

<mosaic_0001>
module attributes {stable_mosaic.version = 11 : i64} {
  func.func @_conv_block_kernel(%arg0: i32, %arg1: memref<1x16x16x4xf32, #tpu.memory_space<vmem>>, %arg2: memref<3x12x128xbf16, #tpu.memory_space<vmem>>, %arg3: memref<1x128xf32, #tpu.memory_space<vmem>>, %arg4: memref<1x128xf32, #tpu.memory_space<vmem>>, %arg5: memref<3x384x128xbf16, #tpu.memory_space<vmem>>, %arg6: memref<1x128xf32, #tpu.memory_space<vmem>>, %arg7: memref<1x128xf32, #tpu.memory_space<vmem>>, %arg8: memref<1x8x8x128xf32, #tpu.memory_space<vmem>>, %arg9: memref<18x48x4xbf16, #tpu.memory_space<vmem>>, %arg10: memref<18x48x128xbf16, #tpu.memory_space<vmem>>, %arg11: memref<256x128xf32, #tpu.memory_space<vmem>>) attributes {dimension_semantics = [#tpu.dimension_semantics<parallel>], iteration_bounds = array<i64: 2>, scalar_prefetch = 0 : i64, scratch_operands = 3 : i64, tpu.core_type = #tpu.core_type<tc>, window_params = [{transform_indices = @transform_0, window_bounds = array<i64: 1, 16, 16, 4>}, {pipeline_mode = #tpu.pipeline_mode<synchronous>, transform_indices = @transform_1, window_bounds = array<i64: 3, 12, 128>}, {pipeline_mode = #tpu.pipeline_mode<synchronous>, transform_indices = @transform_2, window_bounds = array<i64: 1, 128>}, {pipeline_mode = #tpu.pipeline_mode<synchronous>, transform_indices = @transform_3, window_bounds = array<i64: 1, 128>}, {pipeline_mode = #tpu.pipeline_mode<synchronous>, transform_indices = @transform_4, window_bounds = array<i64: 3, 384, 128>}, {pipeline_mode = #tpu.pipeline_mode<synchronous>, transform_indices = @transform_5, window_bounds = array<i64: 1, 128>}, {pipeline_mode = #tpu.pipeline_mode<synchronous>, transform_indices = @transform_6, window_bounds = array<i64: 1, 128>}, {transform_indices = @transform_7, window_bounds = array<i64: 1, 8, 8, 128>}]} {
    %cst = arith.constant 0.000000e+00 : bf16
    %0 = vector.broadcast %cst : bf16 to vector<1x48x4xbf16>
    %c0 = arith.constant 0 : index
    %c0_0 = arith.constant 0 : index
    %c0_1 = arith.constant 0 : index
    %1 = vector.load %arg9[%c0, %c0_0, %c0_1] : memref<18x48x4xbf16, #tpu.memory_space<vmem>>, vector<1x48x4xbf16>
    tpu.vector_store %arg9[%c0, %c0_0, %c0_1], %0 {strides = array<i32>} : memref<18x48x4xbf16, #tpu.memory_space<vmem>>, vector<1x48x4xbf16>,
    %cst_2 = arith.constant 0.000000e+00 : bf16
    %2 = vector.broadcast %cst_2 : bf16 to vector<1x48x4xbf16>
    %c17 = arith.constant 17 : index
    %c0_3 = arith.constant 0 : index
    %c0_4 = arith.constant 0 : index
    %3 = vector.load %arg9[%c17, %c0_3, %c0_4] : memref<18x48x4xbf16, #tpu.memory_space<vmem>>, vector<1x48x4xbf16>
    tpu.vector_store %arg9[%c17, %c0_3, %c0_4], %2 {strides = array<i32>} : memref<18x48x4xbf16, #tpu.memory_space<vmem>>, vector<1x48x4xbf16>,
    %cst_5 = arith.constant 0.000000e+00 : bf16
    %4 = vector.broadcast %cst_5 : bf16 to vector<16x1x4xbf16>
    %c1 = arith.constant 1 : index
    %c15 = arith.constant 15 : index
    %c0_6 = arith.constant 0 : index
    %5 = vector.load %arg9[%c1, %c15, %c0_6] : memref<18x48x4xbf16, #tpu.memory_space<vmem>>, vector<16x1x4xbf16>
    tpu.vector_store %arg9[%c1, %c15, %c0_6], %4 {strides = array<i32>} : memref<18x48x4xbf16, #tpu.memory_space<vmem>>, vector<16x1x4xbf16>,
    %cst_7 = arith.constant 0.000000e+00 : bf16
    %6 = vector.broadcast %cst_7 : bf16 to vector<16x1x4xbf16>
    %c1_8 = arith.constant 1 : index
    %c32 = arith.constant 32 : index
    %c0_9 = arith.constant 0 : index
    %7 = vector.load %arg9[%c1_8, %c32, %c0_9] : memref<18x48x4xbf16, #tpu.memory_space<vmem>>, vector<16x1x4xbf16>
    tpu.vector_store %arg9[%c1_8, %c32, %c0_9], %6 {strides = array<i32>} : memref<18x48x4xbf16, #tpu.memory_space<vmem>>, vector<16x1x4xbf16>,
    %cst_10 = arith.constant 0.000000e+00 : bf16
    %8 = vector.broadcast %cst_10 : bf16 to vector<1x48x128xbf16>
    %c0_11 = arith.constant 0 : index
    %c0_12 = arith.constant 0 : index
    %c0_13 = arith.constant 0 : index
    %9 = vector.load %arg10[%c0_11, %c0_12, %c0_13] : memref<18x48x128xbf16, #tpu.memory_space<vmem>>, vector<1x48x128xbf16>
    tpu.vector_store %arg10[%c0_11, %c0_12, %c0_13], %8 {strides = array<i32>} : memref<18x48x128xbf16, #tpu.memory_space<vmem>>, vector<1x48x128xbf16>,
    %cst_14 = arith.constant 0.000000e+00 : bf16
    %10 = vector.broadcast %cst_14 : bf16 to vector<1x48x128xbf16>
    %c17_15 = arith.constant 17 : index
    %c0_16 = arith.constant 0 : index
    %c0_17 = arith.constant 0 : index
    %11 = vector.load %arg10[%c17_15, %c0_16, %c0_17] : memref<18x48x128xbf16, #tpu.memory_space<vmem>>, vector<1x48x128xbf16>
    tpu.vector_store %arg10[%c17_15, %c0_16, %c0_17], %10 {strides = array<i32>} : memref<18x48x128xbf16, #tpu.memory_space<vmem>>, vector<1x48x128xbf16>,
    %cst_18 = arith.constant 0.000000e+00 : bf16
    %12 = vector.broadcast %cst_18 : bf16 to vector<16x1x128xbf16>
    %c1_19 = arith.constant 1 : index
    %c15_20 = arith.constant 15 : index
    %c0_21 = arith.constant 0 : index
    %13 = vector.load %arg10[%c1_19, %c15_20, %c0_21] : memref<18x48x128xbf16, #tpu.memory_space<vmem>>, vector<16x1x128xbf16>
    tpu.vector_store %arg10[%c1_19, %c15_20, %c0_21], %12 {strides = array<i32>} : memref<18x48x128xbf16, #tpu.memory_space<vmem>>, vector<16x1x128xbf16>,
    %cst_22 = arith.constant 0.000000e+00 : bf16
    %14 = vector.broadcast %cst_22 : bf16 to vector<16x1x128xbf16>
    %c1_23 = arith.constant 1 : index
    %c32_24 = arith.constant 32 : index
    %c0_25 = arith.constant 0 : index
    %15 = vector.load %arg10[%c1_23, %c32_24, %c0_25] : memref<18x48x128xbf16, #tpu.memory_space<vmem>>, vector<16x1x128xbf16>
    tpu.vector_store %arg10[%c1_23, %c32_24, %c0_25], %14 {strides = array<i32>} : memref<18x48x128xbf16, #tpu.memory_space<vmem>>, vector<16x1x128xbf16>,
    %c0_26 = arith.constant 0 : index
    %c0_27 = arith.constant 0 : index
    %c0_28 = arith.constant 0 : index
    %c0_29 = arith.constant 0 : index
    %16 = vector.load %arg1[%c0_26, %c0_27, %c0_28, %c0_29] : memref<1x16x16x4xf32, #tpu.memory_space<vmem>>, vector<1x16x16x4xf32>
    %17 = vector.shape_cast %16 : vector<1x16x16x4xf32> to vector<16x16x4xf32>
    %18 = arith.truncf %17 : vector<16x16x4xf32> to vector<16x16x4xbf16>
    %c1_30 = arith.constant 1 : index
    %c16 = arith.constant 16 : index
    %c0_31 = arith.constant 0 : index
    %19 = vector.load %arg9[%c1_30, %c16, %c0_31] : memref<18x48x4xbf16, #tpu.memory_space<vmem>>, vector<16x16x4xbf16>
    tpu.vector_store %arg9[%c1_30, %c16, %c0_31], %18 {strides = array<i32>} : memref<18x48x4xbf16, #tpu.memory_space<vmem>>, vector<16x16x4xbf16>,
    %c0_32 = arith.constant 0 : index
    %c15_33 = arith.constant 15 : index
    %c0_34 = arith.constant 0 : index
    %20 = vector.load %arg9[%c0_32, %c15_33, %c0_34] : memref<18x48x4xbf16, #tpu.memory_space<vmem>>, vector<16x16x4xbf16>
    %c0_35 = arith.constant 0 : index
    %c16_36 = arith.constant 16 : index
    %c0_37 = arith.constant 0 : index
    %21 = vector.load %arg9[%c0_35, %c16_36, %c0_37] : memref<18x48x4xbf16, #tpu.memory_space<vmem>>, vector<16x16x4xbf16>
    %c0_38 = arith.constant 0 : index
    %c17_39 = arith.constant 17 : index
    %c0_40 = arith.constant 0 : index
    %22 = vector.load %arg9[%c0_38, %c17_39, %c0_40] : memref<18x48x4xbf16, #tpu.memory_space<vmem>>, vector<16x16x4xbf16>
    %23 = tpu.concatenate %20, %21, %22 in 2 : vector<16x16x4xbf16>, vector<16x16x4xbf16>, vector<16x16x4xbf16> -> vector<16x16x12xbf16>
    %24 = vector.shape_cast %23 : vector<16x16x12xbf16> to vector<256x12xbf16>
    %c0_41 = arith.constant 0 : index
    %c0_42 = arith.constant 0 : index
    %c0_43 = arith.constant 0 : index
    %25 = vector.load %arg2[%c0_41, %c0_42, %c0_43] : memref<3x12x128xbf16, #tpu.memory_space<vmem>>, vector<1x12x128xbf16>
    %26 = vector.shape_cast %25 : vector<1x12x128xbf16> to vector<12x128xbf16>
    %cst_44 = arith.constant dense<0.000000e+00> : vector<256x128xf32>
    %27 = tpu.matmul %24, %26, %cst_44 {dimension_numbers = #tpu.dot_dimension_numbers<[1], [0], [0], [1], [0, 0, 1, 1], [], []>} : vector<256x12xbf16>, vector<12x128xbf16>, vector<256x128xf32> -> vector<256x128xf32>
    %c0_45 = arith.constant 0 : index
    %c0_46 = arith.constant 0 : index
    %28 = vector.load %arg11[%c0_45, %c0_46] : memref<256x128xf32, #tpu.memory_space<vmem>>, vector<256x128xf32>
    tpu.vector_store %arg11[%c0_45, %c0_46], %27 {strides = array<i32>} : memref<256x128xf32, #tpu.memory_space<vmem>>, vector<256x128xf32>,
    %c1_47 = arith.constant 1 : index
    %c15_48 = arith.constant 15 : index
    %c0_49 = arith.constant 0 : index
    %29 = vector.load %arg9[%c1_47, %c15_48, %c0_49] : memref<18x48x4xbf16, #tpu.memory_space<vmem>>, vector<16x16x4xbf16>
    %c1_50 = arith.constant 1 : index
    %c16_51 = arith.constant 16 : index
    %c0_52 = arith.constant 0 : index
    %30 = vector.load %arg9[%c1_50, %c16_51, %c0_52] : memref<18x48x4xbf16, #tpu.memory_space<vmem>>, vector<16x16x4xbf16>
    %c1_53 = arith.constant 1 : index
    %c17_54 = arith.constant 17 : index
    %c0_55 = arith.constant 0 : index
    %31 = vector.load %arg9[%c1_53, %c17_54, %c0_55] : memref<18x48x4xbf16, #tpu.memory_space<vmem>>, vector<16x16x4xbf16>
    %32 = tpu.concatenate %29, %30, %31 in 2 : vector<16x16x4xbf16>, vector<16x16x4xbf16>, vector<16x16x4xbf16> -> vector<16x16x12xbf16>
    %33 = vector.shape_cast %32 : vector<16x16x12xbf16> to vector<256x12xbf16>
    %c1_56 = arith.constant 1 : index
    %c0_57 = arith.constant 0 : index
    %c0_58 = arith.constant 0 : index
    %34 = vector.load %arg2[%c1_56, %c0_57, %c0_58] : memref<3x12x128xbf16, #tpu.memory_space<vmem>>, vector<1x12x128xbf16>
    %35 = vector.shape_cast %34 : vector<1x12x128xbf16> to vector<12x128xbf16>
    %cst_59 = arith.constant dense<0.000000e+00> : vector<256x128xf32>
    %36 = tpu.matmul %33, %35, %cst_59 {dimension_numbers = #tpu.dot_dimension_numbers<[1], [0], [0], [1], [0, 0, 1, 1], [], []>} : vector<256x12xbf16>, vector<12x128xbf16>, vector<256x128xf32> -> vector<256x128xf32>
    %c0_60 = arith.constant 0 : index
    %c0_61 = arith.constant 0 : index
    %37 = vector.load %arg11[%c0_60, %c0_61] : memref<256x128xf32, #tpu.memory_space<vmem>>, vector<256x128xf32>
    %38 = arith.addf %37, %36 : vector<256x128xf32>
    %c0_62 = arith.constant 0 : index
    %c0_63 = arith.constant 0 : index
    %39 = vector.load %arg11[%c0_62, %c0_63] : memref<256x128xf32, #tpu.memory_space<vmem>>, vector<256x128xf32>
    tpu.vector_store %arg11[%c0_62, %c0_63], %38 {strides = array<i32>} : memref<256x128xf32, #tpu.memory_space<vmem>>, vector<256x128xf32>,
    %c2 = arith.constant 2 : index
    %c15_64 = arith.constant 15 : index
    %c0_65 = arith.constant 0 : index
    %40 = vector.load %arg9[%c2, %c15_64, %c0_65] : memref<18x48x4xbf16, #tpu.memory_space<vmem>>, vector<16x16x4xbf16>
    %c2_66 = arith.constant 2 : index
    %c16_67 = arith.constant 16 : index
    %c0_68 = arith.constant 0 : index
    %41 = vector.load %arg9[%c2_66, %c16_67, %c0_68] : memref<18x48x4xbf16, #tpu.memory_space<vmem>>, vector<16x16x4xbf16>
    %c2_69 = arith.constant 2 : index
    %c17_70 = arith.constant 17 : index
    %c0_71 = arith.constant 0 : index
    %42 = vector.load %arg9[%c2_69, %c17_70, %c0_71] : memref<18x48x4xbf16, #tpu.memory_space<vmem>>, vector<16x16x4xbf16>
    %43 = tpu.concatenate %40, %41, %42 in 2 : vector<16x16x4xbf16>, vector<16x16x4xbf16>, vector<16x16x4xbf16> -> vector<16x16x12xbf16>
    %44 = vector.shape_cast %43 : vector<16x16x12xbf16> to vector<256x12xbf16>
    %c2_72 = arith.constant 2 : index
    %c0_73 = arith.constant 0 : index
    %c0_74 = arith.constant 0 : index
    %45 = vector.load %arg2[%c2_72, %c0_73, %c0_74] : memref<3x12x128xbf16, #tpu.memory_space<vmem>>, vector<1x12x128xbf16>
    %46 = vector.shape_cast %45 : vector<1x12x128xbf16> to vector<12x128xbf16>
    %cst_75 = arith.constant dense<0.000000e+00> : vector<256x128xf32>
    %47 = tpu.matmul %44, %46, %cst_75 {dimension_numbers = #tpu.dot_dimension_numbers<[1], [0], [0], [1], [0, 0, 1, 1], [], []>} : vector<256x12xbf16>, vector<12x128xbf16>, vector<256x128xf32> -> vector<256x128xf32>
    %c0_76 = arith.constant 0 : index
    %c0_77 = arith.constant 0 : index
    %48 = vector.load %arg11[%c0_76, %c0_77] : memref<256x128xf32, #tpu.memory_space<vmem>>, vector<256x128xf32>
    %49 = arith.addf %48, %47 : vector<256x128xf32>
    %c0_78 = arith.constant 0 : index
    %c0_79 = arith.constant 0 : index
    %50 = vector.load %arg11[%c0_78, %c0_79] : memref<256x128xf32, #tpu.memory_space<vmem>>, vector<256x128xf32>
    tpu.vector_store %arg11[%c0_78, %c0_79], %49 {strides = array<i32>} : memref<256x128xf32, #tpu.memory_space<vmem>>, vector<256x128xf32>,
    %c0_80 = arith.constant 0 : index
    %c0_81 = arith.constant 0 : index
    %51 = vector.load %arg11[%c0_80, %c0_81] : memref<256x128xf32, #tpu.memory_space<vmem>>, vector<256x128xf32>
    %c0_82 = arith.constant 0 : index
    %c0_83 = arith.constant 0 : index
    %52 = vector.load %arg3[%c0_82, %c0_83] : memref<1x128xf32, #tpu.memory_space<vmem>>, vector<1x128xf32>
    %53 = vector.broadcast %52 : vector<1x128xf32> to vector<256x128xf32>
    %54 = arith.mulf %51, %53 : vector<256x128xf32>
    %c0_84 = arith.constant 0 : index
    %c0_85 = arith.constant 0 : index
    %55 = vector.load %arg4[%c0_84, %c0_85] : memref<1x128xf32, #tpu.memory_space<vmem>>, vector<1x128xf32>
    %56 = vector.broadcast %55 : vector<1x128xf32> to vector<256x128xf32>
    %57 = arith.addf %54, %56 : vector<256x128xf32>
    %cst_86 = arith.constant 0.000000e+00 : f32
    %58 = vector.broadcast %cst_86 : f32 to vector<256x128xf32>
    %59 = arith.maximumf %57, %58 : vector<256x128xf32>
    %60 = vector.shape_cast %59 : vector<256x128xf32> to vector<16x16x128xf32>
    %61 = arith.truncf %60 : vector<16x16x128xf32> to vector<16x16x128xbf16>
    %c1_87 = arith.constant 1 : index
    %c16_88 = arith.constant 16 : index
    %c0_89 = arith.constant 0 : index
    %62 = vector.load %arg10[%c1_87, %c16_88, %c0_89] : memref<18x48x128xbf16, #tpu.memory_space<vmem>>, vector<16x16x128xbf16>
    tpu.vector_store %arg10[%c1_87, %c16_88, %c0_89], %61 {strides = array<i32>} : memref<18x48x128xbf16, #tpu.memory_space<vmem>>, vector<16x16x128xbf16>,
    %c0_90 = arith.constant 0 : index
    %c15_91 = arith.constant 15 : index
    %c0_92 = arith.constant 0 : index
    %63 = vector.load %arg10[%c0_90, %c15_91, %c0_92] : memref<18x48x128xbf16, #tpu.memory_space<vmem>>, vector<16x16x128xbf16>
    %c0_93 = arith.constant 0 : index
    %c16_94 = arith.constant 16 : index
    %c0_95 = arith.constant 0 : index
    %64 = vector.load %arg10[%c0_93, %c16_94, %c0_95] : memref<18x48x128xbf16, #tpu.memory_space<vmem>>, vector<16x16x128xbf16>
    %c0_96 = arith.constant 0 : index
    %c17_97 = arith.constant 17 : index
    %c0_98 = arith.constant 0 : index
    %65 = vector.load %arg10[%c0_96, %c17_97, %c0_98] : memref<18x48x128xbf16, #tpu.memory_space<vmem>>, vector<16x16x128xbf16>
    %66 = tpu.concatenate %63, %64, %65 in 2 : vector<16x16x128xbf16>, vector<16x16x128xbf16>, vector<16x16x128xbf16> -> vector<16x16x384xbf16>
    %67 = vector.shape_cast %66 : vector<16x16x384xbf16> to vector<256x384xbf16>
    %c0_99 = arith.constant 0 : index
    %c0_100 = arith.constant 0 : index
    %c0_101 = arith.constant 0 : index
    %68 = vector.load %arg5[%c0_99, %c0_100, %c0_101] : memref<3x384x128xbf16, #tpu.memory_space<vmem>>, vector<1x384x128xbf16>
    %69 = vector.shape_cast %68 : vector<1x384x128xbf16> to vector<384x128xbf16>
    %cst_102 = arith.constant dense<0.000000e+00> : vector<256x128xf32>
    %70 = tpu.matmul %67, %69, %cst_102 {dimension_numbers = #tpu.dot_dimension_numbers<[1], [0], [0], [1], [0, 0, 1, 1], [], []>} : vector<256x384xbf16>, vector<384x128xbf16>, vector<256x128xf32> -> vector<256x128xf32>
    %c0_103 = arith.constant 0 : index
    %c0_104 = arith.constant 0 : index
    %71 = vector.load %arg11[%c0_103, %c0_104] : memref<256x128xf32, #tpu.memory_space<vmem>>, vector<256x128xf32>
    tpu.vector_store %arg11[%c0_103, %c0_104], %70 {strides = array<i32>} : memref<256x128xf32, #tpu.memory_space<vmem>>, vector<256x128xf32>,
    %c1_105 = arith.constant 1 : index
    %c15_106 = arith.constant 15 : index
    %c0_107 = arith.constant 0 : index
    %72 = vector.load %arg10[%c1_105, %c15_106, %c0_107] : memref<18x48x128xbf16, #tpu.memory_space<vmem>>, vector<16x16x128xbf16>
    %c1_108 = arith.constant 1 : index
    %c16_109 = arith.constant 16 : index
    %c0_110 = arith.constant 0 : index
    %73 = vector.load %arg10[%c1_108, %c16_109, %c0_110] : memref<18x48x128xbf16, #tpu.memory_space<vmem>>, vector<16x16x128xbf16>
    %c1_111 = arith.constant 1 : index
    %c17_112 = arith.constant 17 : index
    %c0_113 = arith.constant 0 : index
    %74 = vector.load %arg10[%c1_111, %c17_112, %c0_113] : memref<18x48x128xbf16, #tpu.memory_space<vmem>>, vector<16x16x128xbf16>
    %75 = tpu.concatenate %72, %73, %74 in 2 : vector<16x16x128xbf16>, vector<16x16x128xbf16>, vector<16x16x128xbf16> -> vector<16x16x384xbf16>
    %76 = vector.shape_cast %75 : vector<16x16x384xbf16> to vector<256x384xbf16>
    %c1_114 = arith.constant 1 : index
    %c0_115 = arith.constant 0 : index
    %c0_116 = arith.constant 0 : index
    %77 = vector.load %arg5[%c1_114, %c0_115, %c0_116] : memref<3x384x128xbf16, #tpu.memory_space<vmem>>, vector<1x384x128xbf16>
    %78 = vector.shape_cast %77 : vector<1x384x128xbf16> to vector<384x128xbf16>
    %cst_117 = arith.constant dense<0.000000e+00> : vector<256x128xf32>
    %79 = tpu.matmul %76, %78, %cst_117 {dimension_numbers = #tpu.dot_dimension_numbers<[1], [0], [0], [1], [0, 0, 1, 1], [], []>} : vector<256x384xbf16>, vector<384x128xbf16>, vector<256x128xf32> -> vector<256x128xf32>
    %c0_118 = arith.constant 0 : index
    %c0_119 = arith.constant 0 : index
    %80 = vector.load %arg11[%c0_118, %c0_119] : memref<256x128xf32, #tpu.memory_space<vmem>>, vector<256x128xf32>
    %81 = arith.addf %80, %79 : vector<256x128xf32>
    %c0_120 = arith.constant 0 : index
    %c0_121 = arith.constant 0 : index
    %82 = vector.load %arg11[%c0_120, %c0_121] : memref<256x128xf32, #tpu.memory_space<vmem>>, vector<256x128xf32>
    tpu.vector_store %arg11[%c0_120, %c0_121], %81 {strides = array<i32>} : memref<256x128xf32, #tpu.memory_space<vmem>>, vector<256x128xf32>,
    %c2_122 = arith.constant 2 : index
    %c15_123 = arith.constant 15 : index
    %c0_124 = arith.constant 0 : index
    %83 = vector.load %arg10[%c2_122, %c15_123, %c0_124] : memref<18x48x128xbf16, #tpu.memory_space<vmem>>, vector<16x16x128xbf16>
    %c2_125 = arith.constant 2 : index
    %c16_126 = arith.constant 16 : index
    %c0_127 = arith.constant 0 : index
    %84 = vector.load %arg10[%c2_125, %c16_126, %c0_127] : memref<18x48x128xbf16, #tpu.memory_space<vmem>>, vector<16x16x128xbf16>
    %c2_128 = arith.constant 2 : index
    %c17_129 = arith.constant 17 : index
    %c0_130 = arith.constant 0 : index
    %85 = vector.load %arg10[%c2_128, %c17_129, %c0_130] : memref<18x48x128xbf16, #tpu.memory_space<vmem>>, vector<16x16x128xbf16>
    %86 = tpu.concatenate %83, %84, %85 in 2 : vector<16x16x128xbf16>, vector<16x16x128xbf16>, vector<16x16x128xbf16> -> vector<16x16x384xbf16>
    %87 = vector.shape_cast %86 : vector<16x16x384xbf16> to vector<256x384xbf16>
    %c2_131 = arith.constant 2 : index
    %c0_132 = arith.constant 0 : index
    %c0_133 = arith.constant 0 : index
    %88 = vector.load %arg5[%c2_131, %c0_132, %c0_133] : memref<3x384x128xbf16, #tpu.memory_space<vmem>>, vector<1x384x128xbf16>
    %89 = vector.shape_cast %88 : vector<1x384x128xbf16> to vector<384x128xbf16>
    %cst_134 = arith.constant dense<0.000000e+00> : vector<256x128xf32>
    %90 = tpu.matmul %87, %89, %cst_134 {dimension_numbers = #tpu.dot_dimension_numbers<[1], [0], [0], [1], [0, 0, 1, 1], [], []>} : vector<256x384xbf16>, vector<384x128xbf16>, vector<256x128xf32> -> vector<256x128xf32>
    %c0_135 = arith.constant 0 : index
    %c0_136 = arith.constant 0 : index
    %91 = vector.load %arg11[%c0_135, %c0_136] : memref<256x128xf32, #tpu.memory_space<vmem>>, vector<256x128xf32>
    %92 = arith.addf %91, %90 : vector<256x128xf32>
    %c0_137 = arith.constant 0 : index
    %c0_138 = arith.constant 0 : index
    %93 = vector.load %arg11[%c0_137, %c0_138] : memref<256x128xf32, #tpu.memory_space<vmem>>, vector<256x128xf32>
    tpu.vector_store %arg11[%c0_137, %c0_138], %92 {strides = array<i32>} : memref<256x128xf32, #tpu.memory_space<vmem>>, vector<256x128xf32>,
    %c0_139 = arith.constant 0 : index
    %c0_140 = arith.constant 0 : index
    %94 = vector.load %arg11[%c0_139, %c0_140] : memref<256x128xf32, #tpu.memory_space<vmem>>, vector<256x128xf32>
    %c0_141 = arith.constant 0 : index
    %c0_142 = arith.constant 0 : index
    %95 = vector.load %arg6[%c0_141, %c0_142] : memref<1x128xf32, #tpu.memory_space<vmem>>, vector<1x128xf32>
    %96 = vector.broadcast %95 : vector<1x128xf32> to vector<256x128xf32>
    %97 = arith.mulf %94, %96 : vector<256x128xf32>
    %c0_143 = arith.constant 0 : index
    %c0_144 = arith.constant 0 : index
    %98 = vector.load %arg7[%c0_143, %c0_144] : memref<1x128xf32, #tpu.memory_space<vmem>>, vector<1x128xf32>
    %99 = vector.broadcast %98 : vector<1x128xf32> to vector<256x128xf32>
    %100 = arith.addf %97, %99 : vector<256x128xf32>
    %cst_145 = arith.constant 0.000000e+00 : f32
    %101 = vector.broadcast %cst_145 : f32 to vector<256x128xf32>
    %102 = arith.maximumf %100, %101 : vector<256x128xf32>
    %103 = vector.shape_cast %102 : vector<256x128xf32> to vector<8x2x8x2x128xf32>
    %104 = vector.extract_strided_slice %103 {offsets = [0, 0, 0, 0, 0], sizes = [8, 1, 8, 1, 128], strides = [1, 1, 1, 1, 1]} : vector<8x2x8x2x128xf32> to vector<8x1x8x1x128xf32>
    %105 = vector.shape_cast %104 : vector<8x1x8x1x128xf32> to vector<8x8x128xf32>
    %106 = vector.extract_strided_slice %103 {offsets = [0, 0, 0, 1, 0], sizes = [8, 1, 8, 1, 128], strides = [1, 1, 1, 1, 1]} : vector<8x2x8x2x128xf32> to vector<8x1x8x1x128xf32>
    %107 = vector.shape_cast %106 : vector<8x1x8x1x128xf32> to vector<8x8x128xf32>
    %108 = vector.extract_strided_slice %103 {offsets = [0, 1, 0, 0, 0], sizes = [8, 1, 8, 1, 128], strides = [1, 1, 1, 1, 1]} : vector<8x2x8x2x128xf32> to vector<8x1x8x1x128xf32>
    %109 = vector.shape_cast %108 : vector<8x1x8x1x128xf32> to vector<8x8x128xf32>
    %110 = vector.extract_strided_slice %103 {offsets = [0, 1, 0, 1, 0], sizes = [8, 1, 8, 1, 128], strides = [1, 1, 1, 1, 1]} : vector<8x2x8x2x128xf32> to vector<8x1x8x1x128xf32>
    %111 = vector.shape_cast %110 : vector<8x1x8x1x128xf32> to vector<8x8x128xf32>
    %112 = arith.addf %105, %107 : vector<8x8x128xf32>
    %113 = arith.addf %112, %109 : vector<8x8x128xf32>
    %114 = arith.addf %113, %111 : vector<8x8x128xf32>
    %cst_146 = arith.constant 2.500000e-01 : f32
    %115 = vector.broadcast %cst_146 : f32 to vector<8x8x128xf32>
    %116 = arith.mulf %115, %114 : vector<8x8x128xf32>
    %117 = vector.shape_cast %116 : vector<8x8x128xf32> to vector<1x8x8x128xf32>
    %c0_147 = arith.constant 0 : index
    %c0_148 = arith.constant 0 : index
    %c0_149 = arith.constant 0 : index
    %c0_150 = arith.constant 0 : index
    %118 = vector.load %arg8[%c0_147, %c0_148, %c0_149, %c0_150] : memref<1x8x8x128xf32, #tpu.memory_space<vmem>>, vector<1x8x8x128xf32>
    tpu.vector_store %arg8[%c0_147, %c0_148, %c0_149, %c0_150], %117 {strides = array<i32>} : memref<1x8x8x128xf32, #tpu.memory_space<vmem>>, vector<1x8x8x128xf32>,
    return
  }
  func.func @transform_0(%arg0: i32) -> (i32, i32, i32, i32) {
    %c0_i32 = arith.constant 0 : i32
    %c0_i32_0 = arith.constant 0 : i32
    %c0_i32_1 = arith.constant 0 : i32
    %c0_i32_2 = arith.constant 0 : i32
    return %arg0, %c0_i32, %c0_i32_0, %c0_i32_1 : i32, i32, i32, i32
  }
  func.func @transform_1(%arg0: i32) -> (i32, i32, i32) {
    %c0_i32 = arith.constant 0 : i32
    %c0_i32_0 = arith.constant 0 : i32
    %c0_i32_1 = arith.constant 0 : i32
    %c0_i32_2 = arith.constant 0 : i32
    return %c0_i32, %c0_i32_0, %c0_i32_1 : i32, i32, i32
  }
  func.func @transform_2(%arg0: i32) -> (i32, i32) {
    %c0_i32 = arith.constant 0 : i32
    %c0_i32_0 = arith.constant 0 : i32
    %c0_i32_1 = arith.constant 0 : i32
    return %c0_i32, %c0_i32_0 : i32, i32
  }
  func.func @transform_3(%arg0: i32) -> (i32, i32) {
    %c0_i32 = arith.constant 0 : i32
    %c0_i32_0 = arith.constant 0 : i32
    %c0_i32_1 = arith.constant 0 : i32
    return %c0_i32, %c0_i32_0 : i32, i32
  }
  func.func @transform_4(%arg0: i32) -> (i32, i32, i32) {
    %c0_i32 = arith.constant 0 : i32
    %c0_i32_0 = arith.constant 0 : i32
    %c0_i32_1 = arith.constant 0 : i32
    %c0_i32_2 = arith.constant 0 : i32
    return %c0_i32, %c0_i32_0, %c0_i32_1 : i32, i32, i32
  }
  func.func @transform_5(%arg0: i32) -> (i32, i32) {
    %c0_i32 = arith.constant 0 : i32
    %c0_i32_0 = arith.constant 0 : i32
    %c0_i32_1 = arith.constant 0 : i32
    return %c0_i32, %c0_i32_0 : i32, i32
  }
  func.func @transform_6(%arg0: i32) -> (i32, i32) {
    %c0_i32 = arith.constant 0 : i32
    %c0_i32_0 = arith.constant 0 : i32
    %c0_i32_1 = arith.constant 0 : i32
    return %c0_i32, %c0_i32_0 : i32, i32
  }
  func.func @transform_7(%arg0: i32) -> (i32, i32, i32, i32) {
    %c0_i32 = arith.constant 0 : i32
    %c0_i32_0 = arith.constant 0 : i32
    %c0_i32_1 = arith.constant 0 : i32
    %c0_i32_2 = arith.constant 0 : i32
    return %arg0, %c0_i32, %c0_i32_0, %c0_i32_1 : i32, i32, i32, i32
  }
}

</mosaic_0001>

<llo_original>
// kernel: tpu_custom_call.1
$region0: #{tpu_custom_call.1}
  #allocation0 [shape = 'u32[]', space=smem, size = 0x4, offset = 0x4, fixed_abs, tag = 'smem constant byte address 0x4 - core index']
  #allocation1 [shape = 'u32[144,128]{1,0:T(1,128)}', space=vmem, size = 0x12000, scoped, tag = 'internal scratch']
  #allocation2 [shape = 'bf16[18,48,4]{2,1,0:T(16,128)(2,1)}', space=vmem, size = 0x36000, scoped, tag = 'scratch operand']
  #allocation3 [shape = 'bf16[18,48,128]{2,1,0:T(16,128)(2,1)}', space=vmem, size = 0x36000, scoped, tag = 'scratch operand']
  #allocation4 [shape = 'f32[256,128]{1,0:T(8,128)}', space=vmem, size = 0x20000, scoped, tag = 'scratch operand']
  %s0 = inlined_call_operand.vmem [shape: f32[2,16,16,4], index: 0, kind: input, shape index: {}]
  %s1 = inlined_call_operand.vmem [shape: bf16[3,12,128], index: 1, kind: input, shape index: {}]
  %s2 = inlined_call_operand.vmem [shape: f32[1,128], index: 2, kind: input, shape index: {}]
  %s3 = inlined_call_operand.vmem [shape: f32[1,128], index: 3, kind: input, shape index: {}]
  %s4 = inlined_call_operand.vmem [shape: bf16[3,384,128], index: 4, kind: input, shape index: {}]
  %s5 = inlined_call_operand.vmem [shape: f32[1,128], index: 5, kind: input, shape index: {}]
  %s6 = inlined_call_operand.vmem [shape: f32[1,128], index: 6, kind: input, shape index: {}]
  %s7 = inlined_call_operand.hbm [shape: f32[2,8,8,128], index: 7, kind: output, shape index: {}]
  %s8 = sld [smem:[#allocation0]]
  $region61: #{tpu_custom_call.1} parent=0
    _
  %s10 = ssub.s32 1, %s8
  %s11 = scalar_select 0, %s10, %s8
  $region1: #{tpu_custom_call.1} parent=0
    #allocation5 [shape = 'u8[65536]{0}', space=vmem, size = 0x10000, scoped, tag = 'output window, operand 0']
    #allocation6 [shape = 's32[2]{0}', space=sflag, size = 0x8, scoped, tag = 'scoped memory for tpu_custom_call.1']
    %12 = vsyncpa [#allocation6], 0
    %s13 = scalar_lea.sflag [#allocation6], 1
    %14 = vsyncpa %s13, 0
    loop: start=0, step=1, limit=4
    $region2: #{tpu_custom_call.1} parent=1 // loop_pre_header
      _
    $region3: #{tpu_custom_call.1} parent=1 // loop_header
      %s16 = sphi 0, %s20
      %p17 = scmp.ge.s32.totalorder %s16, 4
      %s26 = sphi 0, %s28
      %s29 = sphi 0, %s26
      %s30 = sphi 0, %s29
      %s46 = sphi 0, %s30
      %s50 = sphi 0, %s50
      %s52 = sphi 0, %s50
      %s53 = sphi 0, %s52
      %s67 = sphi 0, %s53
      %s71 = sphi 0, %s71
      %s73 = sphi 0, %s71
      %s74 = sphi 0, %s73
      %s88 = sphi 0, %s74
      %s92 = sphi 0, %s92
      %s94 = sphi 0, %s92
      %s95 = sphi 0, %s94
      %s109 = sphi 0, %s95
      %s113 = sphi 0, %s113
      %s115 = sphi 0, %s113
      %s116 = sphi 0, %s115
      %s130 = sphi 0, %s116
      %s134 = sphi 0, %s134
      %s136 = sphi 0, %s134
      %s137 = sphi 0, %s136
      %s151 = sphi 0, %s137
      %s155 = sphi 0, %s155
      %s157 = sphi 0, %s155
      %s158 = sphi 0, %s157
      %s172 = sphi 0, %s158
      %s178 = sphi 0, %s180
      %s181 = sphi 0, %s178
      %s182 = sphi 0, %s181
      %s198 = sphi 0, %s182
    $region4: #{tpu_custom_call.1} parent=1 // loop_header_branch
      %19 = sbr.rel (%p17) target = $region8
    $region5: #{tpu_custom_call.1} parent=1 // loop_body
      %s21 = ssub.s32 %s16, 1
      %s22 = ssub.s32 %s16, 2
      %s23 = sadd.s32 %s16, 1
      %s24 = ssub.s32 %s16, %s23
      %p25 = scmp.eq.s32.totalorder %s24, 0
      %s27 = sadd.s32 %s26, 1
      %s28 = scalar_select %p25, %s26, %s27
      %p31 = pneg %p25
      %p32 = scmp.eq.s32.totalorder %s16, 1
      %p33 = por %p31, %p32
      %p34 = scmp.ne.s32.totalorder %s26, %s29
      %p35 = scmp.eq.s32.totalorder %s16, 0
      %p36 = por %p34, %p35
      %p37 = scmp.ne.s32.totalorder %s26, %s29
      %p38 = scmp.eq.s32.totalorder %s21, 1
      %p39 = por %p37, %p38
      %p40 = scmp.ne.s32.totalorder %s29, %s30
      %p41 = scmp.eq.s32.totalorder %s21, 0
      %p42 = por %p40, %p41
      %p43 = scmp.ne.s32.totalorder %s29, %s30
      %p44 = scmp.eq.s32.totalorder %s22, 1
      %p45 = por %p43, %p44
      %p47 = scmp.ne.s32.totalorder %s30, %s46
      %p48 = scmp.eq.s32.totalorder %s22, 0
      %p49 = por %p47, %p48
      %s51 = sadd.s32 %s50, 1
      %p54 = scmp.eq.s32.totalorder %s16, 1
      %p55 = scmp.ne.s32.totalorder %s50, %s52
      %p56 = scmp.eq.s32.totalorder %s16, 0
      %p57 = por %p55, %p56
      %p58 = scmp.ne.s32.totalorder %s50, %s52
      %p59 = scmp.eq.s32.totalorder %s21, 1
      %p60 = por %p58, %p59
      %p61 = scmp.ne.s32.totalorder %s52, %s53
      %p62 = scmp.eq.s32.totalorder %s21, 0
      %p63 = por %p61, %p62
      %p64 = scmp.ne.s32.totalorder %s52, %s53
      %p65 = scmp.eq.s32.totalorder %s22, 1
      %p66 = por %p64, %p65
      %p68 = scmp.ne.s32.totalorder %s53, %s67
      %p69 = scmp.eq.s32.totalorder %s22, 0
      %p70 = por %p68, %p69
      %s72 = sadd.s32 %s71, 1
      %p75 = scmp.eq.s32.totalorder %s16, 1
      %p76 = scmp.ne.s32.totalorder %s71, %s73
      %p77 = scmp.eq.s32.totalorder %s16, 0
      %p78 = por %p76, %p77
      %p79 = scmp.ne.s32.totalorder %s71, %s73
      %p80 = scmp.eq.s32.totalorder %s21, 1
      %p81 = por %p79, %p80
      %p82 = scmp.ne.s32.totalorder %s73, %s74
      %p83 = scmp.eq.s32.totalorder %s21, 0
      %p84 = por %p82, %p83
      %p85 = scmp.ne.s32.totalorder %s73, %s74
      %p86 = scmp.eq.s32.totalorder %s22, 1
      %p87 = por %p85, %p86
      %p89 = scmp.ne.s32.totalorder %s74, %s88
      %p90 = scmp.eq.s32.totalorder %s22, 0
      %p91 = por %p89, %p90
      %s93 = sadd.s32 %s92, 1
      %p96 = scmp.eq.s32.totalorder %s16, 1
      %p97 = scmp.ne.s32.totalorder %s92, %s94
      %p98 = scmp.eq.s32.totalorder %s16, 0
      %p99 = por %p97, %p98
      %p100 = scmp.ne.s32.totalorder %s92, %s94
      %p101 = scmp.eq.s32.totalorder %s21, 1
      %p102 = por %p100, %p101
      %p103 = scmp.ne.s32.totalorder %s94, %s95
      %p104 = scmp.eq.s32.totalorder %s21, 0
      %p105 = por %p103, %p104
      %p106 = scmp.ne.s32.totalorder %s94, %s95
      %p107 = scmp.eq.s32.totalorder %s22, 1
      %p108 = por %p106, %p107
      %p110 = scmp.ne.s32.totalorder %s95, %s109
      %p111 = scmp.eq.s32.totalorder %s22, 0
      %p112 = por %p110, %p111
      %s114 = sadd.s32 %s113, 1
      %p117 = scmp.eq.s32.totalorder %s16, 1
      %p118 = scmp.ne.s32.totalorder %s113, %s115
      %p119 = scmp.eq.s32.totalorder %s16, 0
      %p120 = por %p118, %p119
      %p121 = scmp.ne.s32.totalorder %s113, %s115
      %p122 = scmp.eq.s32.totalorder %s21, 1
      %p123 = por %p121, %p122
      %p124 = scmp.ne.s32.totalorder %s115, %s116
      %p125 = scmp.eq.s32.totalorder %s21, 0
      %p126 = por %p124, %p125
      %p127 = scmp.ne.s32.totalorder %s115, %s116
      %p128 = scmp.eq.s32.totalorder %s22, 1
      %p129 = por %p127, %p128
      %p131 = scmp.ne.s32.totalorder %s116, %s130
      %p132 = scmp.eq.s32.totalorder %s22, 0
      %p133 = por %p131, %p132
      %s135 = sadd.s32 %s134, 1
      %p138 = scmp.eq.s32.totalorder %s16, 1
      %p139 = scmp.ne.s32.totalorder %s134, %s136
      %p140 = scmp.eq.s32.totalorder %s16, 0
      %p141 = por %p139, %p140
      %p142 = scmp.ne.s32.totalorder %s134, %s136
      %p143 = scmp.eq.s32.totalorder %s21, 1
      %p144 = por %p142, %p143
      %p145 = scmp.ne.s32.totalorder %s136, %s137
      %p146 = scmp.eq.s32.totalorder %s21, 0
      %p147 = por %p145, %p146
      %p148 = scmp.ne.s32.totalorder %s136, %s137
      %p149 = scmp.eq.s32.totalorder %s22, 1
      %p150 = por %p148, %p149
      %p152 = scmp.ne.s32.totalorder %s137, %s151
      %p153 = scmp.eq.s32.totalorder %s22, 0
      %p154 = por %p152, %p153
      %s156 = sadd.s32 %s155, 1
      %p159 = scmp.eq.s32.totalorder %s16, 1
      %p160 = scmp.ne.s32.totalorder %s155, %s157
      %p161 = scmp.eq.s32.totalorder %s16, 0
      %p162 = por %p160, %p161
      %p163 = scmp.ne.s32.totalorder %s155, %s157
      %p164 = scmp.eq.s32.totalorder %s21, 1
      %p165 = por %p163, %p164
      %p166 = scmp.ne.s32.totalorder %s157, %s158
      %p167 = scmp.eq.s32.totalorder %s21, 0
      %p168 = por %p166, %p167
      %p169 = scmp.ne.s32.totalorder %s157, %s158
      %p170 = scmp.eq.s32.totalorder %s22, 1
      %p171 = por %p169, %p170
      %p173 = scmp.ne.s32.totalorder %s158, %s172
      %p174 = scmp.eq.s32.totalorder %s22, 0
      %p175 = por %p173, %p174
      %s176 = ssub.s32 %s16, %s23
      %p177 = scmp.eq.s32.totalorder %s176, 0
      %s179 = sadd.s32 %s178, 1
      %s180 = scalar_select %p177, %s178, %s179
      %p183 = pneg %p177
      %p184 = scmp.eq.s32.totalorder %s16, 1
      %p185 = por %p183, %p184
      %p186 = scmp.ne.s32.totalorder %s178, %s181
      %p187 = scmp.eq.s32.totalorder %s16, 0
      %p188 = por %p186, %p187
      %p189 = scmp.ne.s32.totalorder %s178, %s181
      %p190 = scmp.eq.s32.totalorder %s21, 1
      %p191 = por %p189, %p190
      %p192 = scmp.ne.s32.totalorder %s181, %s182
      %p193 = scmp.eq.s32.totalorder %s21, 0
      %p194 = por %p192, %p193
      %p195 = scmp.ne.s32.totalorder %s181, %s182
      %p196 = scmp.eq.s32.totalorder %s22, 1
      %p197 = por %p195, %p196
      %p199 = scmp.ne.s32.totalorder %s182, %s198
      %p200 = scmp.eq.s32.totalorder %s22, 0
      %p201 = por %p199, %p200
      %p202 = scmp.le.s32.totalorder 1, %s16
      %p203 = scmp.lt.s32.totalorder %s16, 3
      %p204 = pnand %p202, %p203
      %p205 = pneg %p204
      // Predicated region
      $region9: #{tpu_custom_call.1} parent=5 // pred_check
        _
      $region10: #{tpu_custom_call.1} parent=5 // pred_check_branch
        %207 = sbr.rel (%p204) target = $region12
      $region11: #{tpu_custom_call.1} parent=5 // pred_region
        %s208 = ssub.s32 %s16, 1
        // Predicated region
        $region13: #{tpu_custom_call.1} parent=11 // pred_check
          %p209 = pneg %p63
        $region14: #{tpu_custom_call.1} parent=11 // pred_check_branch
          %211 = sbr.rel (%p209) target = $region16
        $region15: #{tpu_custom_call.1} parent=11 // pred_region
          _
        $region16: #{tpu_custom_call.1} parent=11 // pred_fallthru
          _
        // Predicated region
        $region17: #{tpu_custom_call.1} parent=11 // pred_check
          %p212 = pneg %p84
        $region18: #{tpu_custom_call.1} parent=11 // pred_check_branch
          %214 = sbr.rel (%p212) target = $region20
        $region19: #{tpu_custom_call.1} parent=11 // pred_region
          _
        $region20: #{tpu_custom_call.1} parent=11 // pred_fallthru
          _
        // Predicated region
        $region21: #{tpu_custom_call.1} parent=11 // pred_check
          %p215 = pneg %p105
        $region22: #{tpu_custom_call.1} parent=11 // pred_check_branch
          %217 = sbr.rel (%p215) target = $region24
        $region23: #{tpu_custom_call.1} parent=11 // pred_region
          _
        $region24: #{tpu_custom_call.1} parent=11 // pred_fallthru
          _
        // Predicated region
        $region25: #{tpu_custom_call.1} parent=11 // pred_check
          %p218 = pneg %p126
        $region26: #{tpu_custom_call.1} parent=11 // pred_check_branch
          %220 = sbr.rel (%p218) target = $region28
        $region27: #{tpu_custom_call.1} parent=11 // pred_region
          _
        $region28: #{tpu_custom_call.1} parent=11 // pred_fallthru
          _
        // Predicated region
        $region29: #{tpu_custom_call.1} parent=11 // pred_check
          %p221 = pneg %p147
        $region30: #{tpu_custom_call.1} parent=11 // pred_check_branch
          %223 = sbr.rel (%p221) target = $region32
        $region31: #{tpu_custom_call.1} parent=11 // pred_region
          _
        $region32: #{tpu_custom_call.1} parent=11 // pred_fallthru
          _
        // Predicated region
        $region33: #{tpu_custom_call.1} parent=11 // pred_check
          %p224 = pneg %p168
        $region34: #{tpu_custom_call.1} parent=11 // pred_check_branch
          %226 = sbr.rel (%p224) target = $region36
        $region35: #{tpu_custom_call.1} parent=11 // pred_region
          _
        $region36: #{tpu_custom_call.1} parent=11 // pred_fallthru
          _
      $region12: #{tpu_custom_call.1} parent=5 // pred_fallthru
        _
      %p227 = scmp.lt.s32.totalorder %s16, 2
      // Predicated region
      $region37: #{tpu_custom_call.1} parent=5 // pred_check
        %p228 = pneg %p227
      $region38: #{tpu_custom_call.1} parent=5 // pred_check_branch
        %230 = sbr.rel (%p228) target = $region40
      $region39: #{tpu_custom_call.1} parent=5 // pred_region
        // Predicated region
        $region41: #{tpu_custom_call.1} parent=39 // pred_check
          %p231 = pneg %p36
        $region42: #{tpu_custom_call.1} parent=39 // pred_check_branch
          %233 = sbr.rel (%p231) target = $region44
        $region43: #{tpu_custom_call.1} parent=39 // pred_region
          %p234 = scmp.lt.s32.totalorder %s16, 1
          %s235 = scalar_select %p234, %s16, 1
          %s236 = smul.addr %s235, 32
          %s237 = smul.addr %s236, 8
          %s238 = scalar_lea.vmem %s0, %s237
        $region44: #{tpu_custom_call.1} parent=39 // pred_fallthru
          _
      $region40: #{tpu_custom_call.1} parent=5 // pred_fallthru
        _
      %p239 = scmp.le.s32.totalorder 1, %s16
      %p240 = scmp.lt.s32.totalorder %s16, 3
      %p241 = pnand %p239, %p240
      %p242 = pneg %p241
      // Predicated region
      $region45: #{tpu_custom_call.1} parent=5 // pred_check
        _
      $region46: #{tpu_custom_call.1} parent=5 // pred_check_branch
        %244 = sbr.rel (%p241) target = $region48
      $region47: #{tpu_custom_call.1} parent=5 // pred_region
        %s245 = ssub.s32 %s16, 1
        %p246 = scmp.lt.s32.totalorder %s21, 1
        %s247 = scalar_select %p246, %s21, 1
        %s248 = smul.addr %s247, 32
        %s249 = smul.addr %s248, 8
        %s250 = scalar_lea.vmem %s0, %s249
        %p251 = pneg %p42
        %p252 = pneg %p39
        %p253 = pneg %p63
        %p254 = pneg %p60
        %p255 = pneg %p84
        %p256 = pneg %p81
        %p257 = pneg %p105
        %p258 = pneg %p102
        %p259 = pneg %p126
        %p260 = pneg %p123
        %p261 = pneg %p147
        %p262 = pneg %p144
        %p263 = pneg %p168
        %p264 = pneg %p165
        %p265 = pneg %p194
        %p266 = pneg %p191
        %s267 = sand.u32 %s181, 1
        %s268 = scalar_lea.sflag [#allocation6], %s267
        %s269 = sand.u32 %s181, 1
        %s270 = smul.addr %s269, 64
        %s271 = scalar_lea.vmem [#allocation5], %s270
        %p272 = scmp.lt.s32.totalorder %s21, 1
        %s273 = scalar_select %p272, %s21, 1
        %s274 = smul.addr %s273, 32
        %s275 = smul.addr %s274, 8
        %s276 = scalar_lea.vmem %s0, %s275
        %vm278 = vcmask 31744
        %279 = vst.msk [vmem:[#allocation2] sm:$0xff] %vm278, 0
        %280 = vst.msk [vmem:[#allocation2 + $0x8] sm:$0xff] %vm278, 0
        %281 = vst.msk [vmem:[#allocation2 + $0x10] sm:$0xff] %vm278, 0
        %s282 = scalar_lea.vmem [#allocation2], 408
        %283 = vst.msk [vmem:[%s282] sm:$0xff] %vm278, 0
        %284 = vst.msk [vmem:[%s282 + $0x8] sm:$0xff] %vm278, 0
        %285 = vst.msk [vmem:[%s282 + $0x10] sm:$0xff] %vm278, 0
        %s286 = scalar_lea.vmem [#allocation2], 24
        %vm287 = vcmask 31751
        %vm288 = vsmask.f32 7966
        %vm289 = vmand %vm287, %vm288
        %v290 = vld [vmem:[%s286] sm:$0x80]
        %v291 = vsel %vm289, 0, %v290
        %292 = vst [vmem:[%s286] sm:$0x80] %v291
        %v293 = vld [vmem:[%s286 + $0x18] sm:$0x80]
        %v294 = vsel %vm289, 0, %v293
        %295 = vst [vmem:[%s286 + $0x18] sm:$0x80] %v294
        %v296 = vld [vmem:[%s286 + $0x30] sm:$0x80]
        %v297 = vsel %vm289, 0, %v296
        %298 = vst [vmem:[%s286 + $0x30] sm:$0x80] %v297
        %v299 = vld [vmem:[%s286 + $0x48] sm:$0x80]
        %v300 = vsel %vm289, 0, %v299
        %301 = vst [vmem:[%s286 + $0x48] sm:$0x80] %v300
        %v302 = vld [vmem:[%s286 + $0x60] sm:$0x80]
        %v303 = vsel %vm289, 0, %v302
        %304 = vst [vmem:[%s286 + $0x60] sm:$0x80] %v303
        %v305 = vld [vmem:[%s286 + $0x78] sm:$0x80]
        %v306 = vsel %vm289, 0, %v305
        %307 = vst [vmem:[%s286 + $0x78] sm:$0x80] %v306
        %v308 = vld [vmem:[%s286 + $0x90] sm:$0x80]
        %v309 = vsel %vm289, 0, %v308
        %310 = vst [vmem:[%s286 + $0x90] sm:$0x80] %v309
        %v311 = vld [vmem:[%s286 + $0xa8] sm:$0x80]
        %v312 = vsel %vm289, 0, %v311
        %313 = vst [vmem:[%s286 + $0xa8] sm:$0x80] %v312
        %v314 = vld [vmem:[%s286 + $0xc0] sm:$0x80]
        %v315 = vsel %vm289, 0, %v314
        %316 = vst [vmem:[%s286 + $0xc0] sm:$0x80] %v315
        %v317 = vld [vmem:[%s286 + $0xd8] sm:$0x80]
        %v318 = vsel %vm289, 0, %v317
        %319 = vst [vmem:[%s286 + $0xd8] sm:$0x80] %v318
        %v320 = vld [vmem:[%s286 + $0xf0] sm:$0x80]
        %v321 = vsel %vm289, 0, %v320
        %322 = vst [vmem:[%s286 + $0xf0] sm:$0x80] %v321
        %v323 = vld [vmem:[%s286 + $0x108] sm:$0x80]
        %v324 = vsel %vm289, 0, %v323
        %325 = vst [vmem:[%s286 + $0x108] sm:$0x80] %v324
        %v326 = vld [vmem:[%s286 + $0x120] sm:$0x80]
        %v327 = vsel %vm289, 0, %v326
        %328 = vst [vmem:[%s286 + $0x120] sm:$0x80] %v327
        %v329 = vld [vmem:[%s286 + $0x138] sm:$0x80]
        %v330 = vsel %vm289, 0, %v329
        %331 = vst [vmem:[%s286 + $0x138] sm:$0x80] %v330
        %v332 = vld [vmem:[%s286 + $0x150] sm:$0x80]
        %v333 = vsel %vm289, 0, %v332
        %334 = vst [vmem:[%s286 + $0x150] sm:$0x80] %v333
        %v335 = vld [vmem:[%s286 + $0x168] sm:$0x80]
        %v336 = vsel %vm289, 0, %v335
        %337 = vst [vmem:[%s286 + $0x168] sm:$0x80] %v336
        %vm338 = vcmask 24576
        %vm339 = vsmask.f32 256
        %vm340 = vmand %vm338, %vm339
        %v341 = vld [vmem:[%s286 + $0x10] sm:$0x1]
        %v342 = vsel %vm340, 0, %v341
        %343 = vst [vmem:[%s286 + $0x10] sm:$0x1] %v342
        %v344 = vld [vmem:[%s286 + $0x28] sm:$0x1]
        %v345 = vsel %vm340, 0, %v344
        %346 = vst [vmem:[%s286 + $0x28] sm:$0x1] %v345
        %v347 = vld [vmem:[%s286 + $0x40] sm:$0x1]
        %v348 = vsel %vm340, 0, %v347
        %349 = vst [vmem:[%s286 + $0x40] sm:$0x1] %v348
        %v350 = vld [vmem:[%s286 + $0x58] sm:$0x1]
        %v351 = vsel %vm340, 0, %v350
        %352 = vst [vmem:[%s286 + $0x58] sm:$0x1] %v351
        %v353 = vld [vmem:[%s286 + $0x70] sm:$0x1]
        %v354 = vsel %vm340, 0, %v353
        %355 = vst [vmem:[%s286 + $0x70] sm:$0x1] %v354
        %v356 = vld [vmem:[%s286 + $0x88] sm:$0x1]
        %v357 = vsel %vm340, 0, %v356
        %358 = vst [vmem:[%s286 + $0x88] sm:$0x1] %v357
        %v359 = vld [vmem:[%s286 + $0xa0] sm:$0x1]
        %v360 = vsel %vm340, 0, %v359
        %361 = vst [vmem:[%s286 + $0xa0] sm:$0x1] %v360
        %v362 = vld [vmem:[%s286 + $0xb8] sm:$0x1]
        %v363 = vsel %vm340, 0, %v362
        %364 = vst [vmem:[%s286 + $0xb8] sm:$0x1] %v363
        %v365 = vld [vmem:[%s286 + $0xd0] sm:$0x1]
        %v366 = vsel %vm340, 0, %v365
        %367 = vst [vmem:[%s286 + $0xd0] sm:$0x1] %v366
        %v368 = vld [vmem:[%s286 + $0xe8] sm:$0x1]
        %v369 = vsel %vm340, 0, %v368
        %370 = vst [vmem:[%s286 + $0xe8] sm:$0x1] %v369
        %v371 = vld [vmem:[%s286 + $0x100] sm:$0x1]
        %v372 = vsel %vm340, 0, %v371
        %373 = vst [vmem:[%s286 + $0x100] sm:$0x1] %v372
        %v374 = vld [vmem:[%s286 + $0x118] sm:$0x1]
        %v375 = vsel %vm340, 0, %v374
        %376 = vst [vmem:[%s286 + $0x118] sm:$0x1] %v375
        %v377 = vld [vmem:[%s286 + $0x130] sm:$0x1]
        %v378 = vsel %vm340, 0, %v377
        %379 = vst [vmem:[%s286 + $0x130] sm:$0x1] %v378
        %v380 = vld [vmem:[%s286 + $0x148] sm:$0x1]
        %v381 = vsel %vm340, 0, %v380
        %382 = vst [vmem:[%s286 + $0x148] sm:$0x1] %v381
        %v383 = vld [vmem:[%s286 + $0x160] sm:$0x1]
        %v384 = vsel %vm340, 0, %v383
        %385 = vst [vmem:[%s286 + $0x160] sm:$0x1] %v384
        %v386 = vld [vmem:[%s286 + $0x178] sm:$0x1]
        %v387 = vsel %vm340, 0, %v386
        %388 = vst [vmem:[%s286 + $0x178] sm:$0x1] %v387
        %389 = vst [vmem:[#allocation3] sm:$0xff] 0
        %390 = vst [vmem:[#allocation3 + $0x8] sm:$0xff] 0
        %391 = vst [vmem:[#allocation3 + $0x10] sm:$0xff] 0
        %s392 = scalar_lea.vmem [#allocation3], 408
        %393 = vst [vmem:[%s392] sm:$0xff] 0
        %394 = vst [vmem:[%s392 + $0x8] sm:$0xff] 0
        %395 = vst [vmem:[%s392 + $0x10] sm:$0xff] 0
        %s396 = scalar_lea.vmem [#allocation3], 24
        %vm397 = vcmask 1047559
        %vm398 = vmand %vm397, %vm288
        %v399 = vld [vmem:[%s396] sm:$0x80]
        %v400 = vsel %vm398, 0, %v399
        %401 = vst [vmem:[%s396] sm:$0x80] %v400
        %v402 = vld [vmem:[%s396 + $0x18] sm:$0x80]
        %v403 = vsel %vm398, 0, %v402
        %404 = vst [vmem:[%s396 + $0x18] sm:$0x80] %v403
        %v405 = vld [vmem:[%s396 + $0x30] sm:$0x80]
        %v406 = vsel %vm398, 0, %v405
        %407 = vst [vmem:[%s396 + $0x30] sm:$0x80] %v406
        %v408 = vld [vmem:[%s396 + $0x48] sm:$0x80]
        %v409 = vsel %vm398, 0, %v408
        %410 = vst [vmem:[%s396 + $0x48] sm:$0x80] %v409
        %v411 = vld [vmem:[%s396 + $0x60] sm:$0x80]
        %v412 = vsel %vm398, 0, %v411
        %413 = vst [vmem:[%s396 + $0x60] sm:$0x80] %v412
        %v414 = vld [vmem:[%s396 + $0x78] sm:$0x80]
        %v415 = vsel %vm398, 0, %v414
        %416 = vst [vmem:[%s396 + $0x78] sm:$0x80] %v415
        %v417 = vld [vmem:[%s396 + $0x90] sm:$0x80]
        %v418 = vsel %vm398, 0, %v417
        %419 = vst [vmem:[%s396 + $0x90] sm:$0x80] %v418
        %v420 = vld [vmem:[%s396 + $0xa8] sm:$0x80]
        %v421 = vsel %vm398, 0, %v420
        %422 = vst [vmem:[%s396 + $0xa8] sm:$0x80] %v421
        %v423 = vld [vmem:[%s396 + $0xc0] sm:$0x80]
        %v424 = vsel %vm398, 0, %v423
        %425 = vst [vmem:[%s396 + $0xc0] sm:$0x80] %v424
        %v426 = vld [vmem:[%s396 + $0xd8] sm:$0x80]
        %v427 = vsel %vm398, 0, %v426
        %428 = vst [vmem:[%s396 + $0xd8] sm:$0x80] %v427
        %v429 = vld [vmem:[%s396 + $0xf0] sm:$0x80]
        %v430 = vsel %vm398, 0, %v429
        %431 = vst [vmem:[%s396 + $0xf0] sm:$0x80] %v430
        %v432 = vld [vmem:[%s396 + $0x108] sm:$0x80]
        %v433 = vsel %vm398, 0, %v432
        %434 = vst [vmem:[%s396 + $0x108] sm:$0x80] %v433
        %v435 = vld [vmem:[%s396 + $0x120] sm:$0x80]
        %v436 = vsel %vm398, 0, %v435
        %437 = vst [vmem:[%s396 + $0x120] sm:$0x80] %v436
        %v438 = vld [vmem:[%s396 + $0x138] sm:$0x80]
        %v439 = vsel %vm398, 0, %v438
        %440 = vst [vmem:[%s396 + $0x138] sm:$0x80] %v439
        %v441 = vld [vmem:[%s396 + $0x150] sm:$0x80]
        %v442 = vsel %vm398, 0, %v441
        %443 = vst [vmem:[%s396 + $0x150] sm:$0x80] %v442
        %v444 = vld [vmem:[%s396 + $0x168] sm:$0x80]
        %v445 = vsel %vm398, 0, %v444
        %446 = vst [vmem:[%s396 + $0x168] sm:$0x80] %v445
        %vm447 = vcmask 1040384
        %vm448 = vmand %vm447, %vm339
        %v449 = vld [vmem:[%s396 + $0x10] sm:$0x1]
        %v450 = vsel %vm448, 0, %v449
        %451 = vst [vmem:[%s396 + $0x10] sm:$0x1] %v450
        %v452 = vld [vmem:[%s396 + $0x28] sm:$0x1]
        %v453 = vsel %vm448, 0, %v452
        %454 = vst [vmem:[%s396 + $0x28] sm:$0x1] %v453
        %v455 = vld [vmem:[%s396 + $0x40] sm:$0x1]
        %v456 = vsel %vm448, 0, %v455
        %457 = vst [vmem:[%s396 + $0x40] sm:$0x1] %v456
        %v458 = vld [vmem:[%s396 + $0x58] sm:$0x1]
        %v459 = vsel %vm448, 0, %v458
        %460 = vst [vmem:[%s396 + $0x58] sm:$0x1] %v459
        %v461 = vld [vmem:[%s396 + $0x70] sm:$0x1]
        %v462 = vsel %vm448, 0, %v461
        %463 = vst [vmem:[%s396 + $0x70] sm:$0x1] %v462
        %v464 = vld [vmem:[%s396 + $0x88] sm:$0x1]
        %v465 = vsel %vm448, 0, %v464
        %466 = vst [vmem:[%s396 + $0x88] sm:$0x1] %v465
        %v467 = vld [vmem:[%s396 + $0xa0] sm:$0x1]
        %v468 = vsel %vm448, 0, %v467
        %469 = vst [vmem:[%s396 + $0xa0] sm:$0x1] %v468
        %v470 = vld [vmem:[%s396 + $0xb8] sm:$0x1]
        %v471 = vsel %vm448, 0, %v470
        %472 = vst [vmem:[%s396 + $0xb8] sm:$0x1] %v471
        %v473 = vld [vmem:[%s396 + $0xd0] sm:$0x1]
        %v474 = vsel %vm448, 0, %v473
        %475 = vst [vmem:[%s396 + $0xd0] sm:$0x1] %v474
        %v476 = vld [vmem:[%s396 + $0xe8] sm:$0x1]
        %v477 = vsel %vm448, 0, %v476
        %478 = vst [vmem:[%s396 + $0xe8] sm:$0x1] %v477
        %v479 = vld [vmem:[%s396 + $0x100] sm:$0x1]
        %v480 = vsel %vm448, 0, %v479
        %481 = vst [vmem:[%s396 + $0x100] sm:$0x1] %v480
        %v482 = vld [vmem:[%s396 + $0x118] sm:$0x1]
        %v483 = vsel %vm448, 0, %v482
        %484 = vst [vmem:[%s396 + $0x118] sm:$0x1] %v483
        %v485 = vld [vmem:[%s396 + $0x130] sm:$0x1]
        %v486 = vsel %vm448, 0, %v485
        %487 = vst [vmem:[%s396 + $0x130] sm:$0x1] %v486
        %v488 = vld [vmem:[%s396 + $0x148] sm:$0x1]
        %v489 = vsel %vm448, 0, %v488
        %490 = vst [vmem:[%s396 + $0x148] sm:$0x1] %v489
        %v491 = vld [vmem:[%s396 + $0x160] sm:$0x1]
        %v492 = vsel %vm448, 0, %v491
        %493 = vst [vmem:[%s396 + $0x160] sm:$0x1] %v492
        %v494 = vld [vmem:[%s396 + $0x178] sm:$0x1]
        %v495 = vsel %vm448, 0, %v494
        %496 = vst [vmem:[%s396 + $0x178] sm:$0x1] %v495
        %v497 = vld [vmem:[%s276] sm:$0xff]
        %v498 = vld [vmem:[%s276 + $0x8] sm:$0xff]
        %v499 = vld [vmem:[%s276 + $0x10] sm:$0xff]
        %v500 = vld [vmem:[%s276 + $0x18] sm:$0xff]
        %v501 = vld [vmem:[%s276 + $0x20] sm:$0xff]
        %v502 = vld [vmem:[%s276 + $0x28] sm:$0xff]
        %v503 = vld [vmem:[%s276 + $0x30] sm:$0xff]
        %v504 = vld [vmem:[%s276 + $0x38] sm:$0xff]
        %v505 = vld [vmem:[%s276 + $0x40] sm:$0xff]
        %v506 = vld [vmem:[%s276 + $0x48] sm:$0xff]
        %v507 = vld [vmem:[%s276 + $0x50] sm:$0xff]
        %v508 = vld [vmem:[%s276 + $0x58] sm:$0xff]
        %v509 = vld [vmem:[%s276 + $0x60] sm:$0xff]
        %v510 = vld [vmem:[%s276 + $0x68] sm:$0xff]
        %v511 = vld [vmem:[%s276 + $0x70] sm:$0xff]
        %v512 = vld [vmem:[%s276 + $0x78] sm:$0xff]
        %v513 = vld [vmem:[%s276 + $0x80] sm:$0xff]
        %v514 = vld [vmem:[%s276 + $0x88] sm:$0xff]
        %v515 = vld [vmem:[%s276 + $0x90] sm:$0xff]
        %v516 = vld [vmem:[%s276 + $0x98] sm:$0xff]
        %v517 = vld [vmem:[%s276 + $0xa0] sm:$0xff]
        %v518 = vld [vmem:[%s276 + $0xa8] sm:$0xff]
        %v519 = vld [vmem:[%s276 + $0xb0] sm:$0xff]
        %v520 = vld [vmem:[%s276 + $0xb8] sm:$0xff]
        %v521 = vld [vmem:[%s276 + $0xc0] sm:$0xff]
        %v522 = vld [vmem:[%s276 + $0xc8] sm:$0xff]
        %v523 = vld [vmem:[%s276 + $0xd0] sm:$0xff]
        %v524 = vld [vmem:[%s276 + $0xd8] sm:$0xff]
        %v525 = vld [vmem:[%s276 + $0xe0] sm:$0xff]
        %v526 = vld [vmem:[%s276 + $0xe8] sm:$0xff]
        %v527 = vld [vmem:[%s276 + $0xf0] sm:$0xff]
        %v528 = vld [vmem:[%s276 + $0xf8] sm:$0xff]
        %v529 = vpack.c.bf16 %v498, %v497
        %v530 = vpack.c.bf16 %v500, %v499
        %v531 = vpack.c.bf16 %v502, %v501
        %v532 = vpack.c.bf16 %v504, %v503
        %v533 = vpack.c.bf16 %v506, %v505
        %v534 = vpack.c.bf16 %v508, %v507
        %v535 = vpack.c.bf16 %v510, %v509
        %v536 = vpack.c.bf16 %v512, %v511
        %v537 = vpack.c.bf16 %v514, %v513
        %v538 = vpack.c.bf16 %v516, %v515
        %v539 = vpack.c.bf16 %v518, %v517
        %v540 = vpack.c.bf16 %v520, %v519
        %v541 = vpack.c.bf16 %v522, %v521
        %v542 = vpack.c.bf16 %v524, %v523
        %v543 = vpack.c.bf16 %v526, %v525
        %v544 = vpack.c.bf16 %v528, %v527
        %545 = vst.msk [vmem:[%s286 + $0x8] sm:$0xff] %vm278, %v529
        %546 = vst.msk [vmem:[%s286 + $0x20] sm:$0xff] %vm278, %v530
        %547 = vst.msk [vmem:[%s286 + $0x38] sm:$0xff] %vm278, %v531
        %548 = vst.msk [vmem:[%s286 + $0x50] sm:$0xff] %vm278, %v532
        %549 = vst.msk [vmem:[%s286 + $0x68] sm:$0xff] %vm278, %v533
        %550 = vst.msk [vmem:[%s286 + $0x80] sm:$0xff] %vm278, %v534
        %551 = vst.msk [vmem:[%s286 + $0x98] sm:$0xff] %vm278, %v535
        %552 = vst.msk [vmem:[%s286 + $0xb0] sm:$0xff] %vm278, %v536
        %553 = vst.msk [vmem:[%s286 + $0xc8] sm:$0xff] %vm278, %v537
        %554 = vst.msk [vmem:[%s286 + $0xe0] sm:$0xff] %vm278, %v538
        %555 = vst.msk [vmem:[%s286 + $0xf8] sm:$0xff] %vm278, %v539
        %556 = vst.msk [vmem:[%s286 + $0x110] sm:$0xff] %vm278, %v540
        %557 = vst.msk [vmem:[%s286 + $0x128] sm:$0xff] %vm278, %v541
        %558 = vst.msk [vmem:[%s286 + $0x140] sm:$0xff] %vm278, %v542
        %559 = vst.msk [vmem:[%s286 + $0x158] sm:$0xff] %vm278, %v543
        %560 = vst.msk [vmem:[%s286 + $0x170] sm:$0xff] %vm278, %v544
        %v561 = vld [vmem:[#allocation2] sm:$0x80]
        %v562 = vld [vmem:[#allocation2 + $0x8] sm:$0xff]
        %v563 = vld [vmem:[#allocation2 + $0x18] sm:$0x80]
        %v564 = vld [vmem:[#allocation2 + $0x20] sm:$0xff]
        %v565 = vld [vmem:[#allocation2 + $0x30] sm:$0x80]
        %v566 = vld [vmem:[#allocation2 + $0x38] sm:$0xff]
        %v567 = vld [vmem:[#allocation2 + $0x48] sm:$0x80]
        %v568 = vld [vmem:[#allocation2 + $0x50] sm:$0xff]
        %v569 = vld [vmem:[#allocation2 + $0x60] sm:$0x80]
        %v570 = vld [vmem:[#allocation2 + $0x68] sm:$0xff]
        %v571 = vld [vmem:[#allocation2 + $0x78] sm:$0x80]
        %v572 = vld [vmem:[#allocation2 + $0x80] sm:$0xff]
        %v573 = vld [vmem:[#allocation2 + $0x90] sm:$0x80]
        %v574 = vld [vmem:[#allocation2 + $0x98] sm:$0xff]
        %v575 = vld [vmem:[#allocation2 + $0xa8] sm:$0x80]
        %v576 = vld [vmem:[#allocation2 + $0xb0] sm:$0xff]
        %v577 = vld [vmem:[#allocation2 + $0xc0] sm:$0x80]
        %v578 = vld [vmem:[#allocation2 + $0xc8] sm:$0xff]
        %v579 = vld [vmem:[#allocation2 + $0xd8] sm:$0x80]
        %v580 = vld [vmem:[#allocation2 + $0xe0] sm:$0xff]
        %v581 = vld [vmem:[#allocation2 + $0xf0] sm:$0x80]
        %v582 = vld [vmem:[#allocation2 + $0xf8] sm:$0xff]
        %v583 = vld [vmem:[#allocation2 + $0x108] sm:$0x80]
        %v584 = vld [vmem:[#allocation2 + $0x110] sm:$0xff]
        %v585 = vld [vmem:[#allocation2 + $0x120] sm:$0x80]
        %v586 = vld [vmem:[#allocation2 + $0x128] sm:$0xff]
        %v587 = vld [vmem:[#allocation2 + $0x138] sm:$0x80]
        %v588 = vld [vmem:[#allocation2 + $0x140] sm:$0xff]
        %v589 = vld [vmem:[#allocation2 + $0x150] sm:$0x80]
        %v590 = vld [vmem:[#allocation2 + $0x158] sm:$0xff]
        %v591 = vld [vmem:[#allocation2 + $0x168] sm:$0x80]
        %v592 = vld [vmem:[#allocation2 + $0x170] sm:$0xff]
        %v593 = vld [vmem:[#allocation2 + $0x10] sm:$0x1]
        %v594 = vld [vmem:[#allocation2 + $0x28] sm:$0x1]
        %v595 = vld [vmem:[#allocation2 + $0x40] sm:$0x1]
        %v596 = vld [vmem:[#allocation2 + $0x58] sm:$0x1]
        %v597 = vld [vmem:[#allocation2 + $0x70] sm:$0x1]
        %v598 = vld [vmem:[#allocation2 + $0x88] sm:$0x1]
        %v599 = vld [vmem:[#allocation2 + $0xa0] sm:$0x1]
        %v600 = vld [vmem:[#allocation2 + $0xb8] sm:$0x1]
        %v601 = vld [vmem:[#allocation2 + $0xd0] sm:$0x1]
        %v602 = vld [vmem:[#allocation2 + $0xe8] sm:$0x1]
        %v603 = vld [vmem:[#allocation2 + $0x100] sm:$0x1]
        %v604 = vld [vmem:[#allocation2 + $0x118] sm:$0x1]
        %v605 = vld [vmem:[#allocation2 + $0x130] sm:$0x1]
        %v606 = vld [vmem:[#allocation2 + $0x148] sm:$0x1]
        %v607 = vld [vmem:[#allocation2 + $0x160] sm:$0x1]
        %v608 = vld [vmem:[#allocation2 + $0x178] sm:$0x1]
        %v610 = vshll.u32 %v562, 16
        %v612 = vrot.slane %v610, 1
        %v613 = vshrl.u32 %v562, 16
        %v615 = vor.u32 %v613, %v612
        %v617 = vshll.u32 %v564, 16
        %v619 = vrot.slane %v617, 1
        %v620 = vshrl.u32 %v564, 16
        %v622 = vor.u32 %v620, %v619
        %v624 = vshll.u32 %v566, 16
        %v626 = vrot.slane %v624, 1
        %v627 = vshrl.u32 %v566, 16
        %v629 = vor.u32 %v627, %v626
        %v631 = vshll.u32 %v568, 16
        %v633 = vrot.slane %v631, 1
        %v634 = vshrl.u32 %v568, 16
        %v636 = vor.u32 %v634, %v633
        %v638 = vshll.u32 %v570, 16
        %v640 = vrot.slane %v638, 1
        %v641 = vshrl.u32 %v570, 16
        %v643 = vor.u32 %v641, %v640
        %v645 = vshll.u32 %v572, 16
        %v647 = vrot.slane %v645, 1
        %v648 = vshrl.u32 %v572, 16
        %v650 = vor.u32 %v648, %v647
        %v652 = vshll.u32 %v574, 16
        %v654 = vrot.slane %v652, 1
        %v655 = vshrl.u32 %v574, 16
        %v657 = vor.u32 %v655, %v654
        %v659 = vshll.u32 %v576, 16
        %v661 = vrot.slane %v659, 1
        %v662 = vshrl.u32 %v576, 16
        %v664 = vor.u32 %v662, %v661
        %v666 = vshll.u32 %v578, 16
        %v668 = vrot.slane %v666, 1
        %v669 = vshrl.u32 %v578, 16
        %v671 = vor.u32 %v669, %v668
        %v673 = vshll.u32 %v580, 16
        %v675 = vrot.slane %v673, 1
        %v676 = vshrl.u32 %v580, 16
        %v678 = vor.u32 %v676, %v675
        %v680 = vshll.u32 %v582, 16
        %v682 = vrot.slane %v680, 1
        %v683 = vshrl.u32 %v582, 16
        %v685 = vor.u32 %v683, %v682
        %v687 = vshll.u32 %v584, 16
        %v689 = vrot.slane %v687, 1
        %v690 = vshrl.u32 %v584, 16
        %v692 = vor.u32 %v690, %v689
        %v694 = vshll.u32 %v586, 16
        %v696 = vrot.slane %v694, 1
        %v697 = vshrl.u32 %v586, 16
        %v699 = vor.u32 %v697, %v696
        %v701 = vshll.u32 %v588, 16
        %v703 = vrot.slane %v701, 1
        %v704 = vshrl.u32 %v588, 16
        %v706 = vor.u32 %v704, %v703
        %v708 = vshll.u32 %v590, 16
        %v710 = vrot.slane %v708, 1
        %v711 = vshrl.u32 %v590, 16
        %v713 = vor.u32 %v711, %v710
        %v715 = vshll.u32 %v592, 16
        %v717 = vrot.slane %v715, 1
        %v718 = vshrl.u32 %v592, 16
        %v720 = vor.u32 %v718, %v717
        %721 = vrot.lane.b32.xlu0 %v612, 4
        %v722 = vpop.permute.xlu0 %721
        %723 = vrot.lane.b32.xlu0 %v615, 4
        %v724 = vpop.permute.xlu0 %723
        %725 = vrot.lane.b32.xlu0 %v619, 4
        %v726 = vpop.permute.xlu0 %725
        %727 = vrot.lane.b32.xlu0 %v622, 4
        %v728 = vpop.permute.xlu0 %727
        %729 = vrot.lane.b32.xlu0 %v626, 4
        %v730 = vpop.permute.xlu0 %729
        %731 = vrot.lane.b32.xlu0 %v629, 4
        %v732 = vpop.permute.xlu0 %731
        %733 = vrot.lane.b32.xlu0 %v633, 4
        %v734 = vpop.permute.xlu0 %733
        %735 = vrot.lane.b32.xlu0 %v636, 4
        %v736 = vpop.permute.xlu0 %735
        %737 = vrot.lane.b32.xlu0 %v640, 4
        %v738 = vpop.permute.xlu0 %737
        %739 = vrot.lane.b32.xlu0 %v643, 4
        %v740 = vpop.permute.xlu0 %739
        %741 = vrot.lane.b32.xlu0 %v647, 4
        %v742 = vpop.permute.xlu0 %741
        %743 = vrot.lane.b32.xlu0 %v650, 4
        %v744 = vpop.permute.xlu0 %743
        %745 = vrot.lane.b32.xlu0 %v654, 4
        %v746 = vpop.permute.xlu0 %745
        %747 = vrot.lane.b32.xlu0 %v657, 4
        %v748 = vpop.permute.xlu0 %747
        %749 = vrot.lane.b32.xlu0 %v661, 4
        %v750 = vpop.permute.xlu0 %749
        %751 = vrot.lane.b32.xlu0 %v664, 4
        %v752 = vpop.permute.xlu0 %751
        %753 = vrot.lane.b32.xlu0 %v668, 4
        %v754 = vpop.permute.xlu0 %753
        %755 = vrot.lane.b32.xlu0 %v671, 4
        %v756 = vpop.permute.xlu0 %755
        %757 = vrot.lane.b32.xlu0 %v675, 4
        %v758 = vpop.permute.xlu0 %757
        %759 = vrot.lane.b32.xlu0 %v678, 4
        %v760 = vpop.permute.xlu0 %759
        %761 = vrot.lane.b32.xlu0 %v682, 4
        %v762 = vpop.permute.xlu0 %761
        %763 = vrot.lane.b32.xlu0 %v685, 4
        %v764 = vpop.permute.xlu0 %763
        %765 = vrot.lane.b32.xlu0 %v689, 4
        %v766 = vpop.permute.xlu0 %765
        %767 = vrot.lane.b32.xlu0 %v692, 4
        %v768 = vpop.permute.xlu0 %767
        %769 = vrot.lane.b32.xlu0 %v696, 4
        %v770 = vpop.permute.xlu0 %769
        %771 = vrot.lane.b32.xlu0 %v699, 4
        %v772 = vpop.permute.xlu0 %771
        %773 = vrot.lane.b32.xlu0 %v703, 4
        %v774 = vpop.permute.xlu0 %773
        %775 = vrot.lane.b32.xlu0 %v706, 4
        %v776 = vpop.permute.xlu0 %775
        %777 = vrot.lane.b32.xlu0 %v710, 4
        %v778 = vpop.permute.xlu0 %777
        %779 = vrot.lane.b32.xlu0 %v713, 4
        %v780 = vpop.permute.xlu0 %779
        %781 = vrot.lane.b32.xlu0 %v717, 4
        %v782 = vpop.permute.xlu0 %781
        %783 = vrot.lane.b32.xlu0 %v720, 4
        %v784 = vpop.permute.xlu0 %783
        %vm817 = vcmask 1046528
        %v818 = vrot.slane %v562, 1
        %v819 = vrot.slane %v593, 1
        %v820 = vsel %vm817, %v818, %v819
        %v821 = vrot.slane %v564, 1
        %v822 = vrot.slane %v594, 1
        %v823 = vsel %vm817, %v821, %v822
        %v824 = vrot.slane %v566, 1
        %v825 = vrot.slane %v595, 1
        %v826 = vsel %vm817, %v824, %v825
        %v827 = vrot.slane %v568, 1
        %v828 = vrot.slane %v596, 1
        %v829 = vsel %vm817, %v827, %v828
        %v830 = vrot.slane %v570, 1
        %v831 = vrot.slane %v597, 1
        %v832 = vsel %vm817, %v830, %v831
        %v833 = vrot.slane %v572, 1
        %v834 = vrot.slane %v598, 1
        %v835 = vsel %vm817, %v833, %v834
        %v836 = vrot.slane %v574, 1
        %v837 = vrot.slane %v599, 1
        %v838 = vsel %vm817, %v836, %v837
        %v839 = vrot.slane %v576, 1
        %v840 = vrot.slane %v600, 1
        %v841 = vsel %vm817, %v839, %v840
        %v842 = vrot.slane %v578, 1
        %v843 = vrot.slane %v601, 1
        %v844 = vsel %vm817, %v842, %v843
        %v845 = vrot.slane %v580, 1
        %v846 = vrot.slane %v602, 1
        %v847 = vsel %vm817, %v845, %v846
        %v848 = vrot.slane %v582, 1
        %v849 = vrot.slane %v603, 1
        %v850 = vsel %vm817, %v848, %v849
        %v851 = vrot.slane %v584, 1
        %v852 = vrot.slane %v604, 1
        %v853 = vsel %vm817, %v851, %v852
        %v854 = vrot.slane %v586, 1
        %v855 = vrot.slane %v605, 1
        %v856 = vsel %vm817, %v854, %v855
        %v857 = vrot.slane %v588, 1
        %v858 = vrot.slane %v606, 1
        %v859 = vsel %vm817, %v857, %v858
        %v860 = vrot.slane %v590, 1
        %v861 = vrot.slane %v607, 1
        %v862 = vsel %vm817, %v860, %v861
        %v863 = vrot.slane %v592, 1
        %v864 = vrot.slane %v608, 1
        %v865 = vsel %vm817, %v863, %v864
        %866 = vrot.lane.b32.xlu0 %v818, 8
        %v867 = vpop.permute.xlu0 %866
        %868 = vrot.lane.b32.xlu0 %v820, 8
        %v869 = vpop.permute.xlu0 %868
        %870 = vrot.lane.b32.xlu0 %v821, 8
        %v871 = vpop.permute.xlu0 %870
        %872 = vrot.lane.b32.xlu0 %v823, 8
        %v873 = vpop.permute.xlu0 %872
        %874 = vrot.lane.b32.xlu0 %v824, 8
        %v875 = vpop.permute.xlu0 %874
        %876 = vrot.lane.b32.xlu0 %v826, 8
        %v877 = vpop.permute.xlu0 %876
        %878 = vrot.lane.b32.xlu0 %v827, 8
        %v879 = vpop.permute.xlu0 %878
        %880 = vrot.lane.b32.xlu0 %v829, 8
        %v881 = vpop.permute.xlu0 %880
        %882 = vrot.lane.b32.xlu0 %v830, 8
        %v883 = vpop.permute.xlu0 %882
        %884 = vrot.lane.b32.xlu0 %v832, 8
        %v885 = vpop.permute.xlu0 %884
        %886 = vrot.lane.b32.xlu0 %v833, 8
        %v887 = vpop.permute.xlu0 %886
        %888 = vrot.lane.b32.xlu0 %v835, 8
        %v889 = vpop.permute.xlu0 %888
        %890 = vrot.lane.b32.xlu0 %v836, 8
        %v891 = vpop.permute.xlu0 %890
        %892 = vrot.lane.b32.xlu0 %v838, 8
        %v893 = vpop.permute.xlu0 %892
        %894 = vrot.lane.b32.xlu0 %v839, 8
        %v895 = vpop.permute.xlu0 %894
        %896 = vrot.lane.b32.xlu0 %v841, 8
        %v897 = vpop.permute.xlu0 %896
        %898 = vrot.lane.b32.xlu0 %v842, 8
        %v899 = vpop.permute.xlu0 %898
        %900 = vrot.lane.b32.xlu0 %v844, 8
        %v901 = vpop.permute.xlu0 %900
        %902 = vrot.lane.b32.xlu0 %v845, 8
        %v903 = vpop.permute.xlu0 %902
        %904 = vrot.lane.b32.xlu0 %v847, 8
        %v905 = vpop.permute.xlu0 %904
        %906 = vrot.lane.b32.xlu0 %v848, 8
        %v907 = vpop.permute.xlu0 %906
        %908 = vrot.lane.b32.xlu0 %v850, 8
        %v909 = vpop.permute.xlu0 %908
        %910 = vrot.lane.b32.xlu0 %v851, 8
        %v911 = vpop.permute.xlu0 %910
        %912 = vrot.lane.b32.xlu0 %v853, 8
        %v913 = vpop.permute.xlu0 %912
        %914 = vrot.lane.b32.xlu0 %v854, 8
        %v915 = vpop.permute.xlu0 %914
        %916 = vrot.lane.b32.xlu0 %v856, 8
        %v917 = vpop.permute.xlu0 %916
        %918 = vrot.lane.b32.xlu0 %v857, 8
        %v919 = vpop.permute.xlu0 %918
        %920 = vrot.lane.b32.xlu0 %v859, 8
        %v921 = vpop.permute.xlu0 %920
        %922 = vrot.lane.b32.xlu0 %v860, 8
        %v923 = vpop.permute.xlu0 %922
        %924 = vrot.lane.b32.xlu0 %v862, 8
        %v925 = vpop.permute.xlu0 %924
        %926 = vrot.lane.b32.xlu0 %v863, 8
        %v927 = vpop.permute.xlu0 %926
        %928 = vrot.lane.b32.xlu0 %v865, 8
        %v929 = vpop.permute.xlu0 %928
        %v932 = vsel %vm278, %v561, %v722
        %v934 = vsel %vm278, %v562, %v724
        %v937 = vsel %vm278, %v563, %v726
        %v939 = vsel %vm278, %v564, %v728
        %v942 = vsel %vm278, %v565, %v730
        %v944 = vsel %vm278, %v566, %v732
        %v947 = vsel %vm278, %v567, %v734
        %v949 = vsel %vm278, %v568, %v736
        %v952 = vsel %vm278, %v569, %v738
        %v954 = vsel %vm278, %v570, %v740
        %v957 = vsel %vm278, %v571, %v742
        %v959 = vsel %vm278, %v572, %v744
        %v962 = vsel %vm278, %v573, %v746
        %v964 = vsel %vm278, %v574, %v748
        %v967 = vsel %vm278, %v575, %v750
        %v969 = vsel %vm278, %v576, %v752
        %v972 = vsel %vm278, %v577, %v754
        %v974 = vsel %vm278, %v578, %v756
        %v977 = vsel %vm278, %v579, %v758
        %v979 = vsel %vm278, %v580, %v760
        %v982 = vsel %vm278, %v581, %v762
        %v984 = vsel %vm278, %v582, %v764
        %v987 = vsel %vm278, %v583, %v766
        %v989 = vsel %vm278, %v584, %v768
        %v992 = vsel %vm278, %v585, %v770
        %v994 = vsel %vm278, %v586, %v772
        %v997 = vsel %vm278, %v587, %v774
        %v999 = vsel %vm278, %v588, %v776
        %v1002 = vsel %vm278, %v589, %v778
        %v1004 = vsel %vm278, %v590, %v780
        %v1007 = vsel %vm278, %v591, %v782
        %v1009 = vsel %vm278, %v592, %v784
        %vm1010 = vcmask 64512
        %v1012 = vsel %vm1010, %v932, %v867
        %v1014 = vsel %vm1010, %v934, %v869
        %v1016 = vsel %vm1010, %v937, %v871
        %v1018 = vsel %vm1010, %v939, %v873
        %v1020 = vsel %vm1010, %v942, %v875
        %v1022 = vsel %vm1010, %v944, %v877
        %v1024 = vsel %vm1010, %v947, %v879
        %v1026 = vsel %vm1010, %v949, %v881
        %v1028 = vsel %vm1010, %v952, %v883
        %v1030 = vsel %vm1010, %v954, %v885
        %v1032 = vsel %vm1010, %v957, %v887
        %v1034 = vsel %vm1010, %v959, %v889
        %v1036 = vsel %vm1010, %v962, %v891
        %v1038 = vsel %vm1010, %v964, %v893
        %v1040 = vsel %vm1010, %v967, %v895
        %v1042 = vsel %vm1010, %v969, %v897
        %v1044 = vsel %vm1010, %v972, %v899
        %v1046 = vsel %vm1010, %v974, %v901
        %v1048 = vsel %vm1010, %v977, %v903
        %v1050 = vsel %vm1010, %v979, %v905
        %v1052 = vsel %vm1010, %v982, %v907
        %v1054 = vsel %vm1010, %v984, %v909
        %v1056 = vsel %vm1010, %v987, %v911
        %v1058 = vsel %vm1010, %v989, %v913
        %v1060 = vsel %vm1010, %v992, %v915
        %v1062 = vsel %vm1010, %v994, %v917
        %v1064 = vsel %vm1010, %v997, %v919
        %v1066 = vsel %vm1010, %v999, %v921
        %v1068 = vsel %vm1010, %v1002, %v923
        %v1070 = vsel %vm1010, %v1004, %v925
        %v1072 = vsel %vm1010, %v1007, %v927
        %v1074 = vsel %vm1010, %v1009, %v929
        %v1075 = vshrl.u32 %v1012, 16
        %v1077 = vrot.slane %v1075, 7
        %v1078 = vshrl.u32 %v1014, 16
        %v1080 = vrot.slane %v1078, 7
        %v1081 = vshll.u32 %v1014, 16
        %v1083 = vor.u32 %v1080, %v1081
        %v1084 = vsel %vm339, %v1077, %v1083
        %v1085 = vshrl.u32 %v1016, 16
        %v1087 = vrot.slane %v1085, 7
        %v1088 = vshrl.u32 %v1018, 16
        %v1090 = vrot.slane %v1088, 7
        %v1091 = vshll.u32 %v1018, 16
        %v1093 = vor.u32 %v1090, %v1091
        %v1094 = vsel %vm339, %v1087, %v1093
        %v1095 = vshrl.u32 %v1020, 16
        %v1097 = vrot.slane %v1095, 7
        %v1098 = vshrl.u32 %v1022, 16
        %v1100 = vrot.slane %v1098, 7
        %v1101 = vshll.u32 %v1022, 16
        %v1103 = vor.u32 %v1100, %v1101
        %v1104 = vsel %vm339, %v1097, %v1103
        %v1105 = vshrl.u32 %v1024, 16
        %v1107 = vrot.slane %v1105, 7
        %v1108 = vshrl.u32 %v1026, 16
        %v1110 = vrot.slane %v1108, 7
        %v1111 = vshll.u32 %v1026, 16
        %v1113 = vor.u32 %v1110, %v1111
        %v1114 = vsel %vm339, %v1107, %v1113
        %v1115 = vshrl.u32 %v1028, 16
        %v1117 = vrot.slane %v1115, 7
        %v1118 = vshrl.u32 %v1030, 16
        %v1120 = vrot.slane %v1118, 7
        %v1121 = vshll.u32 %v1030, 16
        %v1123 = vor.u32 %v1120, %v1121
        %v1124 = vsel %vm339, %v1117, %v1123
        %v1125 = vshrl.u32 %v1032, 16
        %v1127 = vrot.slane %v1125, 7
        %v1128 = vshrl.u32 %v1034, 16
        %v1130 = vrot.slane %v1128, 7
        %v1131 = vshll.u32 %v1034, 16
        %v1133 = vor.u32 %v1130, %v1131
        %v1134 = vsel %vm339, %v1127, %v1133
        %v1135 = vshrl.u32 %v1036, 16
        %v1137 = vrot.slane %v1135, 7
        %v1138 = vshrl.u32 %v1038, 16
        %v1140 = vrot.slane %v1138, 7
        %v1141 = vshll.u32 %v1038, 16
        %v1143 = vor.u32 %v1140, %v1141
        %v1144 = vsel %vm339, %v1137, %v1143
        %v1145 = vshrl.u32 %v1040, 16
        %v1147 = vrot.slane %v1145, 7
        %v1148 = vshrl.u32 %v1042, 16
        %v1150 = vrot.slane %v1148, 7
        %v1151 = vshll.u32 %v1042, 16
        %v1153 = vor.u32 %v1150, %v1151
        %v1154 = vsel %vm339, %v1147, %v1153
        %v1155 = vshrl.u32 %v1044, 16
        %v1157 = vrot.slane %v1155, 7
        %v1158 = vshrl.u32 %v1046, 16
        %v1160 = vrot.slane %v1158, 7
        %v1161 = vshll.u32 %v1046, 16
        %v1163 = vor.u32 %v1160, %v1161
        %v1164 = vsel %vm339, %v1157, %v1163
        %v1165 = vshrl.u32 %v1048, 16
        %v1167 = vrot.slane %v1165, 7
        %v1168 = vshrl.u32 %v1050, 16
        %v1170 = vrot.slane %v1168, 7
        %v1171 = vshll.u32 %v1050, 16
        %v1173 = vor.u32 %v1170, %v1171
        %v1174 = vsel %vm339, %v1167, %v1173
        %v1175 = vshrl.u32 %v1052, 16
        %v1177 = vrot.slane %v1175, 7
        %v1178 = vshrl.u32 %v1054, 16
        %v1180 = vrot.slane %v1178, 7
        %v1181 = vshll.u32 %v1054, 16
        %v1183 = vor.u32 %v1180, %v1181
        %v1184 = vsel %vm339, %v1177, %v1183
        %v1185 = vshrl.u32 %v1056, 16
        %v1187 = vrot.slane %v1185, 7
        %v1188 = vshrl.u32 %v1058, 16
        %v1190 = vrot.slane %v1188, 7
        %v1191 = vshll.u32 %v1058, 16
        %v1193 = vor.u32 %v1190, %v1191
        %v1194 = vsel %vm339, %v1187, %v1193
        %v1195 = vshrl.u32 %v1060, 16
        %v1197 = vrot.slane %v1195, 7
        %v1198 = vshrl.u32 %v1062, 16
        %v1200 = vrot.slane %v1198, 7
        %v1201 = vshll.u32 %v1062, 16
        %v1203 = vor.u32 %v1200, %v1201
        %v1204 = vsel %vm339, %v1197, %v1203
        %v1205 = vshrl.u32 %v1064, 16
        %v1207 = vrot.slane %v1205, 7
        %v1208 = vshrl.u32 %v1066, 16
        %v1210 = vrot.slane %v1208, 7
        %v1211 = vshll.u32 %v1066, 16
        %v1213 = vor.u32 %v1210, %v1211
        %v1214 = vsel %vm339, %v1207, %v1213
        %v1215 = vshrl.u32 %v1068, 16
        %v1217 = vrot.slane %v1215, 7
        %v1218 = vshrl.u32 %v1070, 16
        %v1220 = vrot.slane %v1218, 7
        %v1221 = vshll.u32 %v1070, 16
        %v1223 = vor.u32 %v1220, %v1221
        %v1224 = vsel %vm339, %v1217, %v1223
        %v1225 = vshrl.u32 %v1072, 16
        %v1227 = vrot.slane %v1225, 7
        %v1228 = vshrl.u32 %v1074, 16
        %v1230 = vrot.slane %v1228, 7
        %v1231 = vshll.u32 %v1074, 16
        %v1233 = vor.u32 %v1230, %v1231
        %v1234 = vsel %vm339, %v1227, %v1233
        %v1235 = vld [vmem:[%s1] sm:$0xf]
        %v1236 = vld [vmem:[%s1 + $0x4] sm:$0x3]
        %v1239 = vunpack.c.l.b16 %v1235
        %v1240 = vunpack.c.l.b16 %v1236
        %v1241 = vpack.c.b16 %v1240, %v1239
        %vm1242 = vcmask 97280
        %v1244 = vsel %vm1242, %v1084, 0
        %v1247 = vsel %vm1242, %v1094, 0
        %v1250 = vsel %vm1242, %v1104, 0
        %v1253 = vsel %vm1242, %v1114, 0
        %v1256 = vsel %vm1242, %v1124, 0
        %v1259 = vsel %vm1242, %v1134, 0
        %v1262 = vsel %vm1242, %v1144, 0
        %v1265 = vsel %vm1242, %v1154, 0
        %v1268 = vsel %vm1242, %v1164, 0
        %v1271 = vsel %vm1242, %v1174, 0
        %v1274 = vsel %vm1242, %v1184, 0
        %v1277 = vsel %vm1242, %v1194, 0
        %v1280 = vsel %vm1242, %v1204, 0
        %v1283 = vsel %vm1242, %v1214, 0
        %v1286 = vsel %vm1242, %v1224, 0
        %v1289 = vsel %vm1242, %v1234, 0
        %vm1291 = vcmask 1045504
        %v1293 = vsel %vm1291, %v1241, 0
        %1295 = vmatprep.subr.bf16.mxu0 0
        %1296 = vmatpush1.bf16.msra.mxu0 %v1293
        %1297 = vmatprep.subr.bf16.mxu0 0
        %1298 = vmatpush1.bf16.msra.mxu0 0
        %1299 = vmatprep.subr.bf16.mxu0 0
        %1300 = vmatpush1.bf16.msra.mxu0 0
        %1301 = vmatprep.subr.bf16.mxu0 0
        %1302 = vmatpush1.bf16.msra.mxu0 0
        %1303 = vmatprep.subr.bf16.mxu0 0
        %1304 = vmatpush1.bf16.msra.mxu0 0
        %1305 = vmatprep.subr.bf16.mxu0 0
        %1306 = vmatpush1.bf16.msra.mxu0 0
        %1307 = vmatprep.subr.bf16.mxu0 0
        %1308 = vmatpush1.bf16.msra.mxu0 0
        %1309 = vmatprep.subr.bf16.mxu0 0
        %1310 = vmatpush1.bf16.msra.mxu0 0
        %1311 = vmatprep.subr.bf16.mxu0 0
        %1312 = vmatpush1.bf16.msra.mxu0 0
        %1313 = vmatprep.subr.bf16.mxu0 0
        %1314 = vmatpush1.bf16.msra.mxu0 0
        %1315 = vmatprep.subr.bf16.mxu0 0
        %1316 = vmatpush1.bf16.msra.mxu0 0
        %1317 = vmatprep.subr.bf16.mxu0 0
        %1318 = vmatpush1.bf16.msra.mxu0 0
        %1319 = vmatprep.subr.bf16.mxu0 0
        %1320 = vmatpush1.bf16.msra.mxu0 0
        %1321 = vmatprep.subr.bf16.mxu0 0
        %1322 = vmatpush1.bf16.msra.mxu0 0
        %1323 = vmatprep.subr.bf16.mxu0 0
        %1324 = vmatpush1.bf16.msra.mxu0 0
        %1325 = vmatprep.subr.bf16.mxu0 0
        %1326 = vmatpush1.bf16.msra.mxu0 0
        %1327 = vmatprep.mubr.bf16.mxu0 0
        %1328 = vmatmul.mubr.bf16.gmra.mrb[0].mxu0 %v1244
        %v1329 = vpop.f32.mrb[0].mxu0
        %v1330 = vadd.f32 0.0, %v1329
        %v1331 = vpop.f32.mrb[0].mxu0
        %v1332 = vpop.f32.mrb[0].mxu0
        %v1333 = vadd.f32 0.0, %v1332
        %v1334 = vpop.f32.mrb[0].mxu0
        %1335 = vmatprep.mubr.bf16.mxu0 0
        %1336 = vmatmul.mubr.bf16.gmra.mrb[0].mxu0 %v1247
        %v1337 = vpop.f32.mrb[0].mxu0
        %v1338 = vadd.f32 0.0, %v1337
        %v1339 = vpop.f32.mrb[0].mxu0
        %v1340 = vpop.f32.mrb[0].mxu0
        %v1341 = vadd.f32 0.0, %v1340
        %v1342 = vpop.f32.mrb[0].mxu0
        %1343 = vmatprep.mubr.bf16.mxu0 0
        %1344 = vmatmul.mubr.bf16.gmra.mrb[0].mxu0 %v1250
        %v1345 = vpop.f32.mrb[0].mxu0
        %v1346 = vadd.f32 0.0, %v1345
        %v1347 = vpop.f32.mrb[0].mxu0
        %v1348 = vpop.f32.mrb[0].mxu0
        %v1349 = vadd.f32 0.0, %v1348
        %v1350 = vpop.f32.mrb[0].mxu0
        %1351 = vmatprep.mubr.bf16.mxu0 0
        %1352 = vmatmul.mubr.bf16.gmra.mrb[0].mxu0 %v1253
        %v1353 = vpop.f32.mrb[0].mxu0
        %v1354 = vadd.f32 0.0, %v1353
        %v1355 = vpop.f32.mrb[0].mxu0
        %v1356 = vpop.f32.mrb[0].mxu0
        %v1357 = vadd.f32 0.0, %v1356
        %v1358 = vpop.f32.mrb[0].mxu0
        %1359 = vmatprep.mubr.bf16.mxu0 0
        %1360 = vmatmul.mubr.bf16.gmra.mrb[0].mxu0 %v1256
        %v1361 = vpop.f32.mrb[0].mxu0
        %v1362 = vadd.f32 0.0, %v1361
        %v1363 = vpop.f32.mrb[0].mxu0
        %v1364 = vpop.f32.mrb[0].mxu0
        %v1365 = vadd.f32 0.0, %v1364
        %v1366 = vpop.f32.mrb[0].mxu0
        %1367 = vmatprep.mubr.bf16.mxu0 0
        %1368 = vmatmul.mubr.bf16.gmra.mrb[0].mxu0 %v1259
        %v1369 = vpop.f32.mrb[0].mxu0
        %v1370 = vadd.f32 0.0, %v1369
        %v1371 = vpop.f32.mrb[0].mxu0
        %v1372 = vpop.f32.mrb[0].mxu0
        %v1373 = vadd.f32 0.0, %v1372
        %v1374 = vpop.f32.mrb[0].mxu0
        %1375 = vmatprep.mubr.bf16.mxu0 0
        %1376 = vmatmul.mubr.bf16.gmra.mrb[0].mxu0 %v1262
        %v1377 = vpop.f32.mrb[0].mxu0
        %v1378 = vadd.f32 0.0, %v1377
        %v1379 = vpop.f32.mrb[0].mxu0
        %v1380 = vpop.f32.mrb[0].mxu0
        %v1381 = vadd.f32 0.0, %v1380
        %v1382 = vpop.f32.mrb[0].mxu0
        %1383 = vmatprep.mubr.bf16.mxu0 0
        %1384 = vmatmul.mubr.bf16.gmra.mrb[0].mxu0 %v1265
        %v1385 = vpop.f32.mrb[0].mxu0
        %v1386 = vadd.f32 0.0, %v1385
        %v1387 = vpop.f32.mrb[0].mxu0
        %v1388 = vpop.f32.mrb[0].mxu0
        %v1389 = vadd.f32 0.0, %v1388
        %v1390 = vpop.f32.mrb[0].mxu0
        %1391 = vmatprep.mubr.bf16.mxu0 0
        %1392 = vmatmul.mubr.bf16.gmra.mrb[0].mxu0 %v1268
        %v1393 = vpop.f32.mrb[0].mxu0
        %v1394 = vadd.f32 0.0, %v1393
        %v1395 = vpop.f32.mrb[0].mxu0
        %v1396 = vpop.f32.mrb[0].mxu0
        %v1397 = vadd.f32 0.0, %v1396
        %v1398 = vpop.f32.mrb[0].mxu0
        %1399 = vmatprep.mubr.bf16.mxu0 0
        %1400 = vmatmul.mubr.bf16.gmra.mrb[0].mxu0 %v1271
        %v1401 = vpop.f32.mrb[0].mxu0
        %v1402 = vadd.f32 0.0, %v1401
        %v1403 = vpop.f32.mrb[0].mxu0
        %v1404 = vpop.f32.mrb[0].mxu0
        %v1405 = vadd.f32 0.0, %v1404
        %v1406 = vpop.f32.mrb[0].mxu0
        %1407 = vmatprep.mubr.bf16.mxu0 0
        %1408 = vmatmul.mubr.bf16.gmra.mrb[0].mxu0 %v1274
        %v1409 = vpop.f32.mrb[0].mxu0
        %v1410 = vadd.f32 0.0, %v1409
        %v1411 = vpop.f32.mrb[0].mxu0
        %v1412 = vpop.f32.mrb[0].mxu0
        %v1413 = vadd.f32 0.0, %v1412
        %v1414 = vpop.f32.mrb[0].mxu0
        %1415 = vmatprep.mubr.bf16.mxu0 0
        %1416 = vmatmul.mubr.bf16.gmra.mrb[0].mxu0 %v1277
        %v1417 = vpop.f32.mrb[0].mxu0
        %v1418 = vadd.f32 0.0, %v1417
        %v1419 = vpop.f32.mrb[0].mxu0
        %v1420 = vpop.f32.mrb[0].mxu0
        %v1421 = vadd.f32 0.0, %v1420
        %v1422 = vpop.f32.mrb[0].mxu0
        %1423 = vmatprep.mubr.bf16.mxu0 0
        %1424 = vmatmul.mubr.bf16.gmra.mrb[0].mxu0 %v1280
        %v1425 = vpop.f32.mrb[0].mxu0
        %v1426 = vadd.f32 0.0, %v1425
        %v1427 = vpop.f32.mrb[0].mxu0
        %v1428 = vpop.f32.mrb[0].mxu0
        %v1429 = vadd.f32 0.0, %v1428
        %v1430 = vpop.f32.mrb[0].mxu0
        %1431 = vmatprep.mubr.bf16.mxu0 0
        %1432 = vmatmul.mubr.bf16.gmra.mrb[0].mxu0 %v1283
        %v1433 = vpop.f32.mrb[0].mxu0
        %v1434 = vadd.f32 0.0, %v1433
        %v1435 = vpop.f32.mrb[0].mxu0
        %v1436 = vpop.f32.mrb[0].mxu0
        %v1437 = vadd.f32 0.0, %v1436
        %v1438 = vpop.f32.mrb[0].mxu0
        %1439 = vmatprep.mubr.bf16.mxu0 0
        %1440 = vmatmul.mubr.bf16.gmra.mrb[0].mxu0 %v1286
        %v1441 = vpop.f32.mrb[0].mxu0
        %v1442 = vadd.f32 0.0, %v1441
        %v1443 = vpop.f32.mrb[0].mxu0
        %v1444 = vpop.f32.mrb[0].mxu0
        %v1445 = vadd.f32 0.0, %v1444
        %v1446 = vpop.f32.mrb[0].mxu0
        %1447 = vmatprep.mubr.bf16.mxu0 0
        %1448 = vmatmul.mubr.bf16.gmra.mrb[0].mxu0 %v1289
        %v1449 = vpop.f32.mrb[0].mxu0
        %v1450 = vadd.f32 0.0, %v1449
        %v1451 = vpop.f32.mrb[0].mxu0
        %v1452 = vpop.f32.mrb[0].mxu0
        %v1453 = vadd.f32 0.0, %v1452
        %v1454 = vpop.f32.mrb[0].mxu0
        %1455 = vdwg.mxu0
        %1456 = vst [vmem:[#allocation4] sm:$0xff] %v1330
        %1457 = vst [vmem:[#allocation4 + $0x8] sm:$0xff] %v1333
        %1458 = vst [vmem:[#allocation4 + $0x10] sm:$0xff] %v1338
        %1459 = vst [vmem:[#allocation4 + $0x18] sm:$0xff] %v1341
        %1460 = vst [vmem:[#allocation4 + $0x20] sm:$0xff] %v1346
        %1461 = vst [vmem:[#allocation4 + $0x28] sm:$0xff] %v1349
        %1462 = vst [vmem:[#allocation4 + $0x30] sm:$0xff] %v1354
        %1463 = vst [vmem:[#allocation4 + $0x38] sm:$0xff] %v1357
        %1464 = vst [vmem:[#allocation4 + $0x40] sm:$0xff] %v1362
        %1465 = vst [vmem:[#allocation4 + $0x48] sm:$0xff] %v1365
        %1466 = vst [vmem:[#allocation4 + $0x50] sm:$0xff] %v1370
        %1467 = vst [vmem:[#allocation4 + $0x58] sm:$0xff] %v1373
        %1468 = vst [vmem:[#allocation4 + $0x60] sm:$0xff] %v1378
        %1469 = vst [vmem:[#allocation4 + $0x68] sm:$0xff] %v1381
        %1470 = vst [vmem:[#allocation4 + $0x70] sm:$0xff] %v1386
        %1471 = vst [vmem:[#allocation4 + $0x78] sm:$0xff] %v1389
        %1472 = vst [vmem:[#allocation4 + $0x80] sm:$0xff] %v1394
        %1473 = vst [vmem:[#allocation4 + $0x88] sm:$0xff] %v1397
        %1474 = vst [vmem:[#allocation4 + $0x90] sm:$0xff] %v1402
        %1475 = vst [vmem:[#allocation4 + $0x98] sm:$0xff] %v1405
        %1476 = vst [vmem:[#allocation4 + $0xa0] sm:$0xff] %v1410
        %1477 = vst [vmem:[#allocation4 + $0xa8] sm:$0xff] %v1413
        %1478 = vst [vmem:[#allocation4 + $0xb0] sm:$0xff] %v1418
        %1479 = vst [vmem:[#allocation4 + $0xb8] sm:$0xff] %v1421
        %1480 = vst [vmem:[#allocation4 + $0xc0] sm:$0xff] %v1426
        %1481 = vst [vmem:[#allocation4 + $0xc8] sm:$0xff] %v1429
        %1482 = vst [vmem:[#allocation4 + $0xd0] sm:$0xff] %v1434
        %1483 = vst [vmem:[#allocation4 + $0xd8] sm:$0xff] %v1437
        %1484 = vst [vmem:[#allocation4 + $0xe0] sm:$0xff] %v1442
        %1485 = vst [vmem:[#allocation4 + $0xe8] sm:$0xff] %v1445
        %1486 = vst [vmem:[#allocation4 + $0xf0] sm:$0xff] %v1450
        %1487 = vst [vmem:[#allocation4 + $0xf8] sm:$0xff] %v1453
        %v1488 = vld [vmem:[%s286] sm:$0x80]
        %v1489 = vld [vmem:[%s286 + $0x8] sm:$0xff]
        %v1490 = vld [vmem:[%s286 + $0x18] sm:$0x80]
        %v1491 = vld [vmem:[%s286 + $0x20] sm:$0xff]
        %v1492 = vld [vmem:[%s286 + $0x30] sm:$0x80]
        %v1493 = vld [vmem:[%s286 + $0x38] sm:$0xff]
        %v1494 = vld [vmem:[%s286 + $0x48] sm:$0x80]
        %v1495 = vld [vmem:[%s286 + $0x50] sm:$0xff]
        %v1496 = vld [vmem:[%s286 + $0x60] sm:$0x80]
        %v1497 = vld [vmem:[%s286 + $0x68] sm:$0xff]
        %v1498 = vld [vmem:[%s286 + $0x78] sm:$0x80]
        %v1499 = vld [vmem:[%s286 + $0x80] sm:$0xff]
        %v1500 = vld [vmem:[%s286 + $0x90] sm:$0x80]
        %v1501 = vld [vmem:[%s286 + $0x98] sm:$0xff]
        %v1502 = vld [vmem:[%s286 + $0xa8] sm:$0x80]
        %v1503 = vld [vmem:[%s286 + $0xb0] sm:$0xff]
        %v1504 = vld [vmem:[%s286 + $0xc0] sm:$0x80]
        %v1505 = vld [vmem:[%s286 + $0xc8] sm:$0xff]
        %v1506 = vld [vmem:[%s286 + $0xd8] sm:$0x80]
        %v1507 = vld [vmem:[%s286 + $0xe0] sm:$0xff]
        %v1508 = vld [vmem:[%s286 + $0xf0] sm:$0x80]
        %v1509 = vld [vmem:[%s286 + $0xf8] sm:$0xff]
        %v1510 = vld [vmem:[%s286 + $0x108] sm:$0x80]
        %v1511 = vld [vmem:[%s286 + $0x110] sm:$0xff]
        %v1512 = vld [vmem:[%s286 + $0x120] sm:$0x80]
        %v1513 = vld [vmem:[%s286 + $0x128] sm:$0xff]
        %v1514 = vld [vmem:[%s286 + $0x138] sm:$0x80]
        %v1515 = vld [vmem:[%s286 + $0x140] sm:$0xff]
        %v1516 = vld [vmem:[%s286 + $0x150] sm:$0x80]
        %v1517 = vld [vmem:[%s286 + $0x158] sm:$0xff]
        %v1518 = vld [vmem:[%s286 + $0x168] sm:$0x80]
        %v1519 = vld [vmem:[%s286 + $0x170] sm:$0xff]
        %v1520 = vld [vmem:[%s286 + $0x10] sm:$0x1]
        %v1521 = vld [vmem:[%s286 + $0x28] sm:$0x1]
        %v1522 = vld [vmem:[%s286 + $0x40] sm:$0x1]
        %v1523 = vld [vmem:[%s286 + $0x58] sm:$0x1]
        %v1524 = vld [vmem:[%s286 + $0x70] sm:$0x1]
        %v1525 = vld [vmem:[%s286 + $0x88] sm:$0x1]
        %v1526 = vld [vmem:[%s286 + $0xa0] sm:$0x1]
        %v1527 = vld [vmem:[%s286 + $0xb8] sm:$0x1]
        %v1528 = vld [vmem:[%s286 + $0xd0] sm:$0x1]
        %v1529 = vld [vmem:[%s286 + $0xe8] sm:$0x1]
        %v1530 = vld [vmem:[%s286 + $0x100] sm:$0x1]
        %v1531 = vld [vmem:[%s286 + $0x118] sm:$0x1]
        %v1532 = vld [vmem:[%s286 + $0x130] sm:$0x1]
        %v1533 = vld [vmem:[%s286 + $0x148] sm:$0x1]
        %v1534 = vld [vmem:[%s286 + $0x160] sm:$0x1]
        %v1535 = vld [vmem:[%s286 + $0x178] sm:$0x1]
        %v1537 = vshll.u32 %v1489, 16
        %v1539 = vrot.slane %v1537, 1
        %v1540 = vshrl.u32 %v1489, 16
        %v1542 = vor.u32 %v1540, %v1539
        %v1544 = vshll.u32 %v1491, 16
        %v1546 = vrot.slane %v1544, 1
        %v1547 = vshrl.u32 %v1491, 16
        %v1549 = vor.u32 %v1547, %v1546
        %v1551 = vshll.u32 %v1493, 16
        %v1553 = vrot.slane %v1551, 1
        %v1554 = vshrl.u32 %v1493, 16
        %v1556 = vor.u32 %v1554, %v1553
        %v1558 = vshll.u32 %v1495, 16
        %v1560 = vrot.slane %v1558, 1
        %v1561 = vshrl.u32 %v1495, 16
        %v1563 = vor.u32 %v1561, %v1560
        %v1565 = vshll.u32 %v1497, 16
        %v1567 = vrot.slane %v1565, 1
        %v1568 = vshrl.u32 %v1497, 16
        %v1570 = vor.u32 %v1568, %v1567
        %v1572 = vshll.u32 %v1499, 16
        %v1574 = vrot.slane %v1572, 1
        %v1575 = vshrl.u32 %v1499, 16
        %v1577 = vor.u32 %v1575, %v1574
        %v1579 = vshll.u32 %v1501, 16
        %v1581 = vrot.slane %v1579, 1
        %v1582 = vshrl.u32 %v1501, 16
        %v1584 = vor.u32 %v1582, %v1581
        %v1586 = vshll.u32 %v1503, 16
        %v1588 = vrot.slane %v1586, 1
        %v1589 = vshrl.u32 %v1503, 16
        %v1591 = vor.u32 %v1589, %v1588
        %v1593 = vshll.u32 %v1505, 16
        %v1595 = vrot.slane %v1593, 1
        %v1596 = vshrl.u32 %v1505, 16
        %v1598 = vor.u32 %v1596, %v1595
        %v1600 = vshll.u32 %v1507, 16
        %v1602 = vrot.slane %v1600, 1
        %v1603 = vshrl.u32 %v1507, 16
        %v1605 = vor.u32 %v1603, %v1602
        %v1607 = vshll.u32 %v1509, 16
        %v1609 = vrot.slane %v1607, 1
        %v1610 = vshrl.u32 %v1509, 16
        %v1612 = vor.u32 %v1610, %v1609
        %v1614 = vshll.u32 %v1511, 16
        %v1616 = vrot.slane %v1614, 1
        %v1617 = vshrl.u32 %v1511, 16
        %v1619 = vor.u32 %v1617, %v1616
        %v1621 = vshll.u32 %v1513, 16
        %v1623 = vrot.slane %v1621, 1
        %v1624 = vshrl.u32 %v1513, 16
        %v1626 = vor.u32 %v1624, %v1623
        %v1628 = vshll.u32 %v1515, 16
        %v1630 = vrot.slane %v1628, 1
        %v1631 = vshrl.u32 %v1515, 16
        %v1633 = vor.u32 %v1631, %v1630
        %v1635 = vshll.u32 %v1517, 16
        %v1637 = vrot.slane %v1635, 1
        %v1638 = vshrl.u32 %v1517, 16
        %v1640 = vor.u32 %v1638, %v1637
        %v1642 = vshll.u32 %v1519, 16
        %v1644 = vrot.slane %v1642, 1
        %v1645 = vshrl.u32 %v1519, 16
        %v1647 = vor.u32 %v1645, %v1644
        %1648 = vrot.lane.b32.xlu0 %v1539, 4
        %v1649 = vpop.permute.xlu0 %1648
        %1650 = vrot.lane.b32.xlu0 %v1542, 4
        %v1651 = vpop.permute.xlu0 %1650
        %1652 = vrot.lane.b32.xlu0 %v1546, 4
        %v1653 = vpop.permute.xlu0 %1652
        %1654 = vrot.lane.b32.xlu0 %v1549, 4
        %v1655 = vpop.permute.xlu0 %1654
        %1656 = vrot.lane.b32.xlu0 %v1553, 4
        %v1657 = vpop.permute.xlu0 %1656
        %1658 = vrot.lane.b32.xlu0 %v1556, 4
        %v1659 = vpop.permute.xlu0 %1658
        %1660 = vrot.lane.b32.xlu0 %v1560, 4
        %v1661 = vpop.permute.xlu0 %1660
        %1662 = vrot.lane.b32.xlu0 %v1563, 4
        %v1663 = vpop.permute.xlu0 %1662
        %1664 = vrot.lane.b32.xlu0 %v1567, 4
        %v1665 = vpop.permute.xlu0 %1664
        %1666 = vrot.lane.b32.xlu0 %v1570, 4
        %v1667 = vpop.permute.xlu0 %1666
        %1668 = vrot.lane.b32.xlu0 %v1574, 4
        %v1669 = vpop.permute.xlu0 %1668
        %1670 = vrot.lane.b32.xlu0 %v1577, 4
        %v1671 = vpop.permute.xlu0 %1670
        %1672 = vrot.lane.b32.xlu0 %v1581, 4
        %v1673 = vpop.permute.xlu0 %1672
        %1674 = vrot.lane.b32.xlu0 %v1584, 4
        %v1675 = vpop.permute.xlu0 %1674
        %1676 = vrot.lane.b32.xlu0 %v1588, 4
        %v1677 = vpop.permute.xlu0 %1676
        %1678 = vrot.lane.b32.xlu0 %v1591, 4
        %v1679 = vpop.permute.xlu0 %1678
        %1680 = vrot.lane.b32.xlu0 %v1595, 4
        %v1681 = vpop.permute.xlu0 %1680
        %1682 = vrot.lane.b32.xlu0 %v1598, 4
        %v1683 = vpop.permute.xlu0 %1682
        %1684 = vrot.lane.b32.xlu0 %v1602, 4
        %v1685 = vpop.permute.xlu0 %1684
        %1686 = vrot.lane.b32.xlu0 %v1605, 4
        %v1687 = vpop.permute.xlu0 %1686
        %1688 = vrot.lane.b32.xlu0 %v1609, 4
        %v1689 = vpop.permute.xlu0 %1688
        %1690 = vrot.lane.b32.xlu0 %v1612, 4
        %v1691 = vpop.permute.xlu0 %1690
        %1692 = vrot.lane.b32.xlu0 %v1616, 4
        %v1693 = vpop.permute.xlu0 %1692
        %1694 = vrot.lane.b32.xlu0 %v1619, 4
        %v1695 = vpop.permute.xlu0 %1694
        %1696 = vrot.lane.b32.xlu0 %v1623, 4
        %v1697 = vpop.permute.xlu0 %1696
        %1698 = vrot.lane.b32.xlu0 %v1626, 4
        %v1699 = vpop.permute.xlu0 %1698
        %1700 = vrot.lane.b32.xlu0 %v1630, 4
        %v1701 = vpop.permute.xlu0 %1700
        %1702 = vrot.lane.b32.xlu0 %v1633, 4
        %v1703 = vpop.permute.xlu0 %1702
        %1704 = vrot.lane.b32.xlu0 %v1637, 4
        %v1705 = vpop.permute.xlu0 %1704
        %1706 = vrot.lane.b32.xlu0 %v1640, 4
        %v1707 = vpop.permute.xlu0 %1706
        %1708 = vrot.lane.b32.xlu0 %v1644, 4
        %v1709 = vpop.permute.xlu0 %1708
        %1710 = vrot.lane.b32.xlu0 %v1647, 4
        %v1711 = vpop.permute.xlu0 %1710
        %v1744 = vrot.slane %v1489, 1
        %v1745 = vrot.slane %v1520, 1
        %v1746 = vsel %vm817, %v1744, %v1745
        %v1747 = vrot.slane %v1491, 1
        %v1748 = vrot.slane %v1521, 1
        %v1749 = vsel %vm817, %v1747, %v1748
        %v1750 = vrot.slane %v1493, 1
        %v1751 = vrot.slane %v1522, 1
        %v1752 = vsel %vm817, %v1750, %v1751
        %v1753 = vrot.slane %v1495, 1
        %v1754 = vrot.slane %v1523, 1
        %v1755 = vsel %vm817, %v1753, %v1754
        %v1756 = vrot.slane %v1497, 1
        %v1757 = vrot.slane %v1524, 1
        %v1758 = vsel %vm817, %v1756, %v1757
        %v1759 = vrot.slane %v1499, 1
        %v1760 = vrot.slane %v1525, 1
        %v1761 = vsel %vm817, %v1759, %v1760
        %v1762 = vrot.slane %v1501, 1
        %v1763 = vrot.slane %v1526, 1
        %v1764 = vsel %vm817, %v1762, %v1763
        %v1765 = vrot.slane %v1503, 1
        %v1766 = vrot.slane %v1527, 1
        %v1767 = vsel %vm817, %v1765, %v1766
        %v1768 = vrot.slane %v1505, 1
        %v1769 = vrot.slane %v1528, 1
        %v1770 = vsel %vm817, %v1768, %v1769
        %v1771 = vrot.slane %v1507, 1
        %v1772 = vrot.slane %v1529, 1
        %v1773 = vsel %vm817, %v1771, %v1772
        %v1774 = vrot.slane %v1509, 1
        %v1775 = vrot.slane %v1530, 1
        %v1776 = vsel %vm817, %v1774, %v1775
        %v1777 = vrot.slane %v1511, 1
        %v1778 = vrot.slane %v1531, 1
        %v1779 = vsel %vm817, %v1777, %v1778
        %v1780 = vrot.slane %v1513, 1
        %v1781 = vrot.slane %v1532, 1
        %v1782 = vsel %vm817, %v1780, %v1781
        %v1783 = vrot.slane %v1515, 1
        %v1784 = vrot.slane %v1533, 1
        %v1785 = vsel %vm817, %v1783, %v1784
        %v1786 = vrot.slane %v1517, 1
        %v1787 = vrot.slane %v1534, 1
        %v1788 = vsel %vm817, %v1786, %v1787
        %v1789 = vrot.slane %v1519, 1
        %v1790 = vrot.slane %v1535, 1
        %v1791 = vsel %vm817, %v1789, %v1790
        %1792 = vrot.lane.b32.xlu0 %v1744, 8
        %v1793 = vpop.permute.xlu0 %1792
        %1794 = vrot.lane.b32.xlu0 %v1746, 8
        %v1795 = vpop.permute.xlu0 %1794
        %1796 = vrot.lane.b32.xlu0 %v1747, 8
        %v1797 = vpop.permute.xlu0 %1796
        %1798 = vrot.lane.b32.xlu0 %v1749, 8
        %v1799 = vpop.permute.xlu0 %1798
        %1800 = vrot.lane.b32.xlu0 %v1750, 8
        %v1801 = vpop.permute.xlu0 %1800
        %1802 = vrot.lane.b32.xlu0 %v1752, 8
        %v1803 = vpop.permute.xlu0 %1802
        %1804 = vrot.lane.b32.xlu0 %v1753, 8
        %v1805 = vpop.permute.xlu0 %1804
        %1806 = vrot.lane.b32.xlu0 %v1755, 8
        %v1807 = vpop.permute.xlu0 %1806
        %1808 = vrot.lane.b32.xlu0 %v1756, 8
        %v1809 = vpop.permute.xlu0 %1808
        %1810 = vrot.lane.b32.xlu0 %v1758, 8
        %v1811 = vpop.permute.xlu0 %1810
        %1812 = vrot.lane.b32.xlu0 %v1759, 8
        %v1813 = vpop.permute.xlu0 %1812
        %1814 = vrot.lane.b32.xlu0 %v1761, 8
        %v1815 = vpop.permute.xlu0 %1814
        %1816 = vrot.lane.b32.xlu0 %v1762, 8
        %v1817 = vpop.permute.xlu0 %1816
        %1818 = vrot.lane.b32.xlu0 %v1764, 8
        %v1819 = vpop.permute.xlu0 %1818
        %1820 = vrot.lane.b32.xlu0 %v1765, 8
        %v1821 = vpop.permute.xlu0 %1820
        %1822 = vrot.lane.b32.xlu0 %v1767, 8
        %v1823 = vpop.permute.xlu0 %1822
        %1824 = vrot.lane.b32.xlu0 %v1768, 8
        %v1825 = vpop.permute.xlu0 %1824
        %1826 = vrot.lane.b32.xlu0 %v1770, 8
        %v1827 = vpop.permute.xlu0 %1826
        %1828 = vrot.lane.b32.xlu0 %v1771, 8
        %v1829 = vpop.permute.xlu0 %1828
        %1830 = vrot.lane.b32.xlu0 %v1773, 8
        %v1831 = vpop.permute.xlu0 %1830
        %1832 = vrot.lane.b32.xlu0 %v1774, 8
        %v1833 = vpop.permute.xlu0 %1832
        %1834 = vrot.lane.b32.xlu0 %v1776, 8
        %v1835 = vpop.permute.xlu0 %1834
        %1836 = vrot.lane.b32.xlu0 %v1777, 8
        %v1837 = vpop.permute.xlu0 %1836
        %1838 = vrot.lane.b32.xlu0 %v1779, 8
        %v1839 = vpop.permute.xlu0 %1838
        %1840 = vrot.lane.b32.xlu0 %v1780, 8
        %v1841 = vpop.permute.xlu0 %1840
        %1842 = vrot.lane.b32.xlu0 %v1782, 8
        %v1843 = vpop.permute.xlu0 %1842
        %1844 = vrot.lane.b32.xlu0 %v1783, 8
        %v1845 = vpop.permute.xlu0 %1844
        %1846 = vrot.lane.b32.xlu0 %v1785, 8
        %v1847 = vpop.permute.xlu0 %1846
        %1848 = vrot.lane.b32.xlu0 %v1786, 8
        %v1849 = vpop.permute.xlu0 %1848
        %1850 = vrot.lane.b32.xlu0 %v1788, 8
        %v1851 = vpop.permute.xlu0 %1850
        %1852 = vrot.lane.b32.xlu0 %v1789, 8
        %v1853 = vpop.permute.xlu0 %1852
        %1854 = vrot.lane.b32.xlu0 %v1791, 8
        %v1855 = vpop.permute.xlu0 %1854
        %v1858 = vsel %vm278, %v1488, %v1649
        %v1860 = vsel %vm278, %v1489, %v1651
        %v1863 = vsel %vm278, %v1490, %v1653
        %v1865 = vsel %vm278, %v1491, %v1655
        %v1868 = vsel %vm278, %v1492, %v1657
        %v1870 = vsel %vm278, %v1493, %v1659
        %v1873 = vsel %vm278, %v1494, %v1661
        %v1875 = vsel %vm278, %v1495, %v1663
        %v1878 = vsel %vm278, %v1496, %v1665
        %v1880 = vsel %vm278, %v1497, %v1667
        %v1883 = vsel %vm278, %v1498, %v1669
        %v1885 = vsel %vm278, %v1499, %v1671
        %v1888 = vsel %vm278, %v1500, %v1673
        %v1890 = vsel %vm278, %v1501, %v1675
        %v1893 = vsel %vm278, %v1502, %v1677
        %v1895 = vsel %vm278, %v1503, %v1679
        %v1898 = vsel %vm278, %v1504, %v1681
        %v1900 = vsel %vm278, %v1505, %v1683
        %v1903 = vsel %vm278, %v1506, %v1685
        %v1905 = vsel %vm278, %v1507, %v1687
        %v1908 = vsel %vm278, %v1508, %v1689
        %v1910 = vsel %vm278, %v1509, %v1691
        %v1913 = vsel %vm278, %v1510, %v1693
        %v1915 = vsel %vm278, %v1511, %v1695
        %v1918 = vsel %vm278, %v1512, %v1697
        %v1920 = vsel %vm278, %v1513, %v1699
        %v1923 = vsel %vm278, %v1514, %v1701
        %v1925 = vsel %vm278, %v1515, %v1703
        %v1928 = vsel %vm278, %v1516, %v1705
        %v1930 = vsel %vm278, %v1517, %v1707
        %v1933 = vsel %vm278, %v1518, %v1709
        %v1935 = vsel %vm278, %v1519, %v1711
        %v1937 = vsel %vm1010, %v1858, %v1793
        %v1939 = vsel %vm1010, %v1860, %v1795
        %v1941 = vsel %vm1010, %v1863, %v1797
        %v1943 = vsel %vm1010, %v1865, %v1799
        %v1945 = vsel %vm1010, %v1868, %v1801
        %v1947 = vsel %vm1010, %v1870, %v1803
        %v1949 = vsel %vm1010, %v1873, %v1805
        %v1951 = vsel %vm1010, %v1875, %v1807
        %v1953 = vsel %vm1010, %v1878, %v1809
        %v1955 = vsel %vm1010, %v1880, %v1811
        %v1957 = vsel %vm1010, %v1883, %v1813
        %v1959 = vsel %vm1010, %v1885, %v1815
        %v1961 = vsel %vm1010, %v1888, %v1817
        %v1963 = vsel %vm1010, %v1890, %v1819
        %v1965 = vsel %vm1010, %v1893, %v1821
        %v1967 = vsel %vm1010, %v1895, %v1823
        %v1969 = vsel %vm1010, %v1898, %v1825
        %v1971 = vsel %vm1010, %v1900, %v1827
        %v1973 = vsel %vm1010, %v1903, %v1829
        %v1975 = vsel %vm1010, %v1905, %v1831
        %v1977 = vsel %vm1010, %v1908, %v1833
        %v1979 = vsel %vm1010, %v1910, %v1835
        %v1981 = vsel %vm1010, %v1913, %v1837
        %v1983 = vsel %vm1010, %v1915, %v1839
        %v1985 = vsel %vm1010, %v1918, %v1841
        %v1987 = vsel %vm1010, %v1920, %v1843
        %v1989 = vsel %vm1010, %v1923, %v1845
        %v1991 = vsel %vm1010, %v1925, %v1847
        %v1993 = vsel %vm1010, %v1928, %v1849
        %v1995 = vsel %vm1010, %v1930, %v1851
        %v1997 = vsel %vm1010, %v1933, %v1853
        %v1999 = vsel %vm1010, %v1935, %v1855
        %v2000 = vshrl.u32 %v1937, 16
        %v2002 = vrot.slane %v2000, 7
        %v2003 = vshrl.u32 %v1939, 16
        %v2005 = vrot.slane %v2003, 7
        %v2006 = vshll.u32 %v1939, 16
        %v2008 = vor.u32 %v2005, %v2006
        %v2009 = vsel %vm339, %v2002, %v2008
        %v2010 = vshrl.u32 %v1941, 16
        %v2012 = vrot.slane %v2010, 7
        %v2013 = vshrl.u32 %v1943, 16
        %v2015 = vrot.slane %v2013, 7
        %v2016 = vshll.u32 %v1943, 16
        %v2018 = vor.u32 %v2015, %v2016
        %v2019 = vsel %vm339, %v2012, %v2018
        %v2020 = vshrl.u32 %v1945, 16
        %v2022 = vrot.slane %v2020, 7
        %v2023 = vshrl.u32 %v1947, 16
        %v2025 = vrot.slane %v2023, 7
        %v2026 = vshll.u32 %v1947, 16
        %v2028 = vor.u32 %v2025, %v2026
        %v2029 = vsel %vm339, %v2022, %v2028
        %v2030 = vshrl.u32 %v1949, 16
        %v2032 = vrot.slane %v2030, 7
        %v2033 = vshrl.u32 %v1951, 16
        %v2035 = vrot.slane %v2033, 7
        %v2036 = vshll.u32 %v1951, 16
        %v2038 = vor.u32 %v2035, %v2036
        %v2039 = vsel %vm339, %v2032, %v2038
        %v2040 = vshrl.u32 %v1953, 16
        %v2042 = vrot.slane %v2040, 7
        %v2043 = vshrl.u32 %v1955, 16
        %v2045 = vrot.slane %v2043, 7
        %v2046 = vshll.u32 %v1955, 16
        %v2048 = vor.u32 %v2045, %v2046
        %v2049 = vsel %vm339, %v2042, %v2048
        %v2050 = vshrl.u32 %v1957, 16
        %v2052 = vrot.slane %v2050, 7
        %v2053 = vshrl.u32 %v1959, 16
        %v2055 = vrot.slane %v2053, 7
        %v2056 = vshll.u32 %v1959, 16
        %v2058 = vor.u32 %v2055, %v2056
        %v2059 = vsel %vm339, %v2052, %v2058
        %v2060 = vshrl.u32 %v1961, 16
        %v2062 = vrot.slane %v2060, 7
        %v2063 = vshrl.u32 %v1963, 16
        %v2065 = vrot.slane %v2063, 7
        %v2066 = vshll.u32 %v1963, 16
        %v2068 = vor.u32 %v2065, %v2066
        %v2069 = vsel %vm339, %v2062, %v2068
        %v2070 = vshrl.u32 %v1965, 16
        %v2072 = vrot.slane %v2070, 7
        %v2073 = vshrl.u32 %v1967, 16
        %v2075 = vrot.slane %v2073, 7
        %v2076 = vshll.u32 %v1967, 16
        %v2078 = vor.u32 %v2075, %v2076
        %v2079 = vsel %vm339, %v2072, %v2078
        %v2080 = vshrl.u32 %v1969, 16
        %v2082 = vrot.slane %v2080, 7
        %v2083 = vshrl.u32 %v1971, 16
        %v2085 = vrot.slane %v2083, 7
        %v2086 = vshll.u32 %v1971, 16
        %v2088 = vor.u32 %v2085, %v2086
        %v2089 = vsel %vm339, %v2082, %v2088
        %v2090 = vshrl.u32 %v1973, 16
        %v2092 = vrot.slane %v2090, 7
        %v2093 = vshrl.u32 %v1975, 16
        %v2095 = vrot.slane %v2093, 7
        %v2096 = vshll.u32 %v1975, 16
        %v2098 = vor.u32 %v2095, %v2096
        %v2099 = vsel %vm339, %v2092, %v2098
        %v2100 = vshrl.u32 %v1977, 16
        %v2102 = vrot.slane %v2100, 7
        %v2103 = vshrl.u32 %v1979, 16
        %v2105 = vrot.slane %v2103, 7
        %v2106 = vshll.u32 %v1979, 16
        %v2108 = vor.u32 %v2105, %v2106
        %v2109 = vsel %vm339, %v2102, %v2108
        %v2110 = vshrl.u32 %v1981, 16
        %v2112 = vrot.slane %v2110, 7
        %v2113 = vshrl.u32 %v1983, 16
        %v2115 = vrot.slane %v2113, 7
        %v2116 = vshll.u32 %v1983, 16
        %v2118 = vor.u32 %v2115, %v2116
        %v2119 = vsel %vm339, %v2112, %v2118
        %v2120 = vshrl.u32 %v1985, 16
        %v2122 = vrot.slane %v2120, 7
        %v2123 = vshrl.u32 %v1987, 16
        %v2125 = vrot.slane %v2123, 7
        %v2126 = vshll.u32 %v1987, 16
        %v2128 = vor.u32 %v2125, %v2126
        %v2129 = vsel %vm339, %v2122, %v2128
        %v2130 = vshrl.u32 %v1989, 16
        %v2132 = vrot.slane %v2130, 7
        %v2133 = vshrl.u32 %v1991, 16
        %v2135 = vrot.slane %v2133, 7
        %v2136 = vshll.u32 %v1991, 16
        %v2138 = vor.u32 %v2135, %v2136
        %v2139 = vsel %vm339, %v2132, %v2138
        %v2140 = vshrl.u32 %v1993, 16
        %v2142 = vrot.slane %v2140, 7
        %v2143 = vshrl.u32 %v1995, 16
        %v2145 = vrot.slane %v2143, 7
        %v2146 = vshll.u32 %v1995, 16
        %v2148 = vor.u32 %v2145, %v2146
        %v2149 = vsel %vm339, %v2142, %v2148
        %v2150 = vshrl.u32 %v1997, 16
        %v2152 = vrot.slane %v2150, 7
        %v2153 = vshrl.u32 %v1999, 16
        %v2155 = vrot.slane %v2153, 7
        %v2156 = vshll.u32 %v1999, 16
        %v2158 = vor.u32 %v2155, %v2156
        %v2159 = vsel %vm339, %v2152, %v2158
        %s2160 = scalar_lea.vmem %s1, 8
        %v2161 = vld [vmem:[%s2160] sm:$0xf]
        %v2162 = vld [vmem:[%s2160 + $0x4] sm:$0x3]
        %v2165 = vunpack.c.l.b16 %v2161
        %v2166 = vunpack.c.l.b16 %v2162
        %v2167 = vpack.c.b16 %v2166, %v2165
        %v2169 = vsel %vm1242, %v2009, 0
        %v2172 = vsel %vm1242, %v2019, 0
        %v2175 = vsel %vm1242, %v2029, 0
        %v2178 = vsel %vm1242, %v2039, 0
        %v2181 = vsel %vm1242, %v2049, 0
        %v2184 = vsel %vm1242, %v2059, 0
        %v2187 = vsel %vm1242, %v2069, 0
        %v2190 = vsel %vm1242, %v2079, 0
        %v2193 = vsel %vm1242, %v2089, 0
        %v2196 = vsel %vm1242, %v2099, 0
        %v2199 = vsel %vm1242, %v2109, 0
        %v2202 = vsel %vm1242, %v2119, 0
        %v2205 = vsel %vm1242, %v2129, 0
        %v2208 = vsel %vm1242, %v2139, 0
        %v2211 = vsel %vm1242, %v2149, 0
        %v2214 = vsel %vm1242, %v2159, 0
        %v2217 = vsel %vm1291, %v2167, 0
        %2219 = vmatprep.subr.bf16.mxu0 0
        %2220 = vmatpush1.bf16.msra.mxu0 %v2217
        %2221 = vmatprep.subr.bf16.mxu0 0
        %2222 = vmatpush1.bf16.msra.mxu0 0
        %2223 = vmatprep.subr.bf16.mxu0 0
        %2224 = vmatpush1.bf16.msra.mxu0 0
        %2225 = vmatprep.subr.bf16.mxu0 0
        %2226 = vmatpush1.bf16.msra.mxu0 0
        %2227 = vmatprep.subr.bf16.mxu0 0
        %2228 = vmatpush1.bf16.msra.mxu0 0
        %2229 = vmatprep.subr.bf16.mxu0 0
        %2230 = vmatpush1.bf16.msra.mxu0 0
        %2231 = vmatprep.subr.bf16.mxu0 0
        %2232 = vmatpush1.bf16.msra.mxu0 0
        %2233 = vmatprep.subr.bf16.mxu0 0
        %2234 = vmatpush1.bf16.msra.mxu0 0
        %2235 = vmatprep.subr.bf16.mxu0 0
        %2236 = vmatpush1.bf16.msra.mxu0 0
        %2237 = vmatprep.subr.bf16.mxu0 0
        %2238 = vmatpush1.bf16.msra.mxu0 0
        %2239 = vmatprep.subr.bf16.mxu0 0
        %2240 = vmatpush1.bf16.msra.mxu0 0
        %2241 = vmatprep.subr.bf16.mxu0 0
        %2242 = vmatpush1.bf16.msra.mxu0 0
        %2243 = vmatprep.subr.bf16.mxu0 0
        %2244 = vmatpush1.bf16.msra.mxu0 0
        %2245 = vmatprep.subr.bf16.mxu0 0
        %2246 = vmatpush1.bf16.msra.mxu0 0
        %2247 = vmatprep.subr.bf16.mxu0 0
        %2248 = vmatpush1.bf16.msra.mxu0 0
        %2249 = vmatprep.subr.bf16.mxu0 0
        %2250 = vmatpush1.bf16.msra.mxu0 0
        %2251 = vmatprep.mubr.bf16.mxu0 0
        %2252 = vmatmul.mubr.bf16.gmra.mrb[0].mxu0 %v2169
        %v2253 = vpop.f32.mrb[0].mxu0
        %v2254 = vadd.f32 0.0, %v2253
        %v2255 = vpop.f32.mrb[0].mxu0
        %v2256 = vpop.f32.mrb[0].mxu0
        %v2257 = vadd.f32 0.0, %v2256
        %v2258 = vpop.f32.mrb[0].mxu0
        %2259 = vmatprep.mubr.bf16.mxu0 0
        %2260 = vmatmul.mubr.bf16.gmra.mrb[0].mxu0 %v2172
        %v2261 = vpop.f32.mrb[0].mxu0
        %v2262 = vadd.f32 0.0, %v2261
        %v2263 = vpop.f32.mrb[0].mxu0
        %v2264 = vpop.f32.mrb[0].mxu0
        %v2265 = vadd.f32 0.0, %v2264
        %v2266 = vpop.f32.mrb[0].mxu0
        %2267 = vmatprep.mubr.bf16.mxu0 0
        %2268 = vmatmul.mubr.bf16.gmra.mrb[0].mxu0 %v2175
        %v2269 = vpop.f32.mrb[0].mxu0
        %v2270 = vadd.f32 0.0, %v2269
        %v2271 = vpop.f32.mrb[0].mxu0
        %v2272 = vpop.f32.mrb[0].mxu0
        %v2273 = vadd.f32 0.0, %v2272
        %v2274 = vpop.f32.mrb[0].mxu0
        %2275 = vmatprep.mubr.bf16.mxu0 0
        %2276 = vmatmul.mubr.bf16.gmra.mrb[0].mxu0 %v2178
        %v2277 = vpop.f32.mrb[0].mxu0
        %v2278 = vadd.f32 0.0, %v2277
        %v2279 = vpop.f32.mrb[0].mxu0
        %v2280 = vpop.f32.mrb[0].mxu0
        %v2281 = vadd.f32 0.0, %v2280
        %v2282 = vpop.f32.mrb[0].mxu0
        %2283 = vmatprep.mubr.bf16.mxu0 0
        %2284 = vmatmul.mubr.bf16.gmra.mrb[0].mxu0 %v2181
        %v2285 = vpop.f32.mrb[0].mxu0
        %v2286 = vadd.f32 0.0, %v2285
        %v2287 = vpop.f32.mrb[0].mxu0
        %v2288 = vpop.f32.mrb[0].mxu0
        %v2289 = vadd.f32 0.0, %v2288
        %v2290 = vpop.f32.mrb[0].mxu0
        %2291 = vmatprep.mubr.bf16.mxu0 0
        %2292 = vmatmul.mubr.bf16.gmra.mrb[0].mxu0 %v2184
        %v2293 = vpop.f32.mrb[0].mxu0
        %v2294 = vadd.f32 0.0, %v2293
        %v2295 = vpop.f32.mrb[0].mxu0
        %v2296 = vpop.f32.mrb[0].mxu0
        %v2297 = vadd.f32 0.0, %v2296
        %v2298 = vpop.f32.mrb[0].mxu0
        %2299 = vmatprep.mubr.bf16.mxu0 0
        %2300 = vmatmul.mubr.bf16.gmra.mrb[0].mxu0 %v2187
        %v2301 = vpop.f32.mrb[0].mxu0
        %v2302 = vadd.f32 0.0, %v2301
        %v2303 = vpop.f32.mrb[0].mxu0
        %v2304 = vpop.f32.mrb[0].mxu0
        %v2305 = vadd.f32 0.0, %v2304
        %v2306 = vpop.f32.mrb[0].mxu0
        %2307 = vmatprep.mubr.bf16.mxu0 0
        %2308 = vmatmul.mubr.bf16.gmra.mrb[0].mxu0 %v2190
        %v2309 = vpop.f32.mrb[0].mxu0
        %v2310 = vadd.f32 0.0, %v2309
        %v2311 = vpop.f32.mrb[0].mxu0
        %v2312 = vpop.f32.mrb[0].mxu0
        %v2313 = vadd.f32 0.0, %v2312
        %v2314 = vpop.f32.mrb[0].mxu0
        %2315 = vmatprep.mubr.bf16.mxu0 0
        %2316 = vmatmul.mubr.bf16.gmra.mrb[0].mxu0 %v2193
        %v2317 = vpop.f32.mrb[0].mxu0
        %v2318 = vadd.f32 0.0, %v2317
        %v2319 = vpop.f32.mrb[0].mxu0
        %v2320 = vpop.f32.mrb[0].mxu0
        %v2321 = vadd.f32 0.0, %v2320
        %v2322 = vpop.f32.mrb[0].mxu0
        %2323 = vmatprep.mubr.bf16.mxu0 0
        %2324 = vmatmul.mubr.bf16.gmra.mrb[0].mxu0 %v2196
        %v2325 = vpop.f32.mrb[0].mxu0
        %v2326 = vadd.f32 0.0, %v2325
        %v2327 = vpop.f32.mrb[0].mxu0
        %v2328 = vpop.f32.mrb[0].mxu0
        %v2329 = vadd.f32 0.0, %v2328
        %v2330 = vpop.f32.mrb[0].mxu0
        %2331 = vmatprep.mubr.bf16.mxu0 0
        %2332 = vmatmul.mubr.bf16.gmra.mrb[0].mxu0 %v2199
        %v2333 = vpop.f32.mrb[0].mxu0
        %v2334 = vadd.f32 0.0, %v2333
        %v2335 = vpop.f32.mrb[0].mxu0
        %v2336 = vpop.f32.mrb[0].mxu0
        %v2337 = vadd.f32 0.0, %v2336
        %v2338 = vpop.f32.mrb[0].mxu0
        %2339 = vmatprep.mubr.bf16.mxu0 0
        %2340 = vmatmul.mubr.bf16.gmra.mrb[0].mxu0 %v2202
        %v2341 = vpop.f32.mrb[0].mxu0
        %v2342 = vadd.f32 0.0, %v2341
        %v2343 = vpop.f32.mrb[0].mxu0
        %v2344 = vpop.f32.mrb[0].mxu0
        %v2345 = vadd.f32 0.0, %v2344
        %v2346 = vpop.f32.mrb[0].mxu0
        %2347 = vmatprep.mubr.bf16.mxu0 0
        %2348 = vmatmul.mubr.bf16.gmra.mrb[0].mxu0 %v2205
        %v2349 = vpop.f32.mrb[0].mxu0
        %v2350 = vadd.f32 0.0, %v2349
        %v2351 = vpop.f32.mrb[0].mxu0
        %v2352 = vpop.f32.mrb[0].mxu0
        %v2353 = vadd.f32 0.0, %v2352
        %v2354 = vpop.f32.mrb[0].mxu0
        %2355 = vmatprep.mubr.bf16.mxu0 0
        %2356 = vmatmul.mubr.bf16.gmra.mrb[0].mxu0 %v2208
        %v2357 = vpop.f32.mrb[0].mxu0
        %v2358 = vadd.f32 0.0, %v2357
        %v2359 = vpop.f32.mrb[0].mxu0
        %v2360 = vpop.f32.mrb[0].mxu0
        %v2361 = vadd.f32 0.0, %v2360
        %v2362 = vpop.f32.mrb[0].mxu0
        %2363 = vmatprep.mubr.bf16.mxu0 0
        %2364 = vmatmul.mubr.bf16.gmra.mrb[0].mxu0 %v2211
        %v2365 = vpop.f32.mrb[0].mxu0
        %v2366 = vadd.f32 0.0, %v2365
        %v2367 = vpop.f32.mrb[0].mxu0
        %v2368 = vpop.f32.mrb[0].mxu0
        %v2369 = vadd.f32 0.0, %v2368
        %v2370 = vpop.f32.mrb[0].mxu0
        %2371 = vmatprep.mubr.bf16.mxu0 0
        %2372 = vmatmul.mubr.bf16.gmra.mrb[0].mxu0 %v2214
        %v2373 = vpop.f32.mrb[0].mxu0
        %v2374 = vadd.f32 0.0, %v2373
        %v2375 = vpop.f32.mrb[0].mxu0
        %v2376 = vpop.f32.mrb[0].mxu0
        %v2377 = vadd.f32 0.0, %v2376
        %v2378 = vpop.f32.mrb[0].mxu0
        %2379 = vdwg.mxu0
        %v2380 = vld [vmem:[#allocation4] sm:$0xff]
        %v2381 = vld [vmem:[#allocation4 + $0x8] sm:$0xff]
        %v2382 = vld [vmem:[#allocation4 + $0x10] sm:$0xff]
        %v2383 = vld [vmem:[#allocation4 + $0x18] sm:$0xff]
        %v2384 = vld [vmem:[#allocation4 + $0x20] sm:$0xff]
        %v2385 = vld [vmem:[#allocation4 + $0x28] sm:$0xff]
        %v2386 = vld [vmem:[#allocation4 + $0x30] sm:$0xff]
        %v2387 = vld [vmem:[#allocation4 + $0x38] sm:$0xff]
        %v2388 = vld [vmem:[#allocation4 + $0x40] sm:$0xff]
        %v2389 = vld [vmem:[#allocation4 + $0x48] sm:$0xff]
        %v2390 = vld [vmem:[#allocation4 + $0x50] sm:$0xff]
        %v2391 = vld [vmem:[#allocation4 + $0x58] sm:$0xff]
        %v2392 = vld [vmem:[#allocation4 + $0x60] sm:$0xff]
        %v2393 = vld [vmem:[#allocation4 + $0x68] sm:$0xff]
        %v2394 = vld [vmem:[#allocation4 + $0x70] sm:$0xff]
        %v2395 = vld [vmem:[#allocation4 + $0x78] sm:$0xff]
        %v2396 = vld [vmem:[#allocation4 + $0x80] sm:$0xff]
        %v2397 = vld [vmem:[#allocation4 + $0x88] sm:$0xff]
        %v2398 = vld [vmem:[#allocation4 + $0x90] sm:$0xff]
        %v2399 = vld [vmem:[#allocation4 + $0x98] sm:$0xff]
        %v2400 = vld [vmem:[#allocation4 + $0xa0] sm:$0xff]
        %v2401 = vld [vmem:[#allocation4 + $0xa8] sm:$0xff]
        %v2402 = vld [vmem:[#allocation4 + $0xb0] sm:$0xff]
        %v2403 = vld [vmem:[#allocation4 + $0xb8] sm:$0xff]
        %v2404 = vld [vmem:[#allocation4 + $0xc0] sm:$0xff]
        %v2405 = vld [vmem:[#allocation4 + $0xc8] sm:$0xff]
        %v2406 = vld [vmem:[#allocation4 + $0xd0] sm:$0xff]
        %v2407 = vld [vmem:[#allocation4 + $0xd8] sm:$0xff]
        %v2408 = vld [vmem:[#allocation4 + $0xe0] sm:$0xff]
        %v2409 = vld [vmem:[#allocation4 + $0xe8] sm:$0xff]
        %v2410 = vld [vmem:[#allocation4 + $0xf0] sm:$0xff]
        %v2411 = vld [vmem:[#allocation4 + $0xf8] sm:$0xff]
        %v2412 = vadd.f32 %v2380, %v2254
        %v2413 = vadd.f32 %v2381, %v2257
        %v2414 = vadd.f32 %v2382, %v2262
        %v2415 = vadd.f32 %v2383, %v2265
        %v2416 = vadd.f32 %v2384, %v2270
        %v2417 = vadd.f32 %v2385, %v2273
        %v2418 = vadd.f32 %v2386, %v2278
        %v2419 = vadd.f32 %v2387, %v2281
        %v2420 = vadd.f32 %v2388, %v2286
        %v2421 = vadd.f32 %v2389, %v2289
        %v2422 = vadd.f32 %v2390, %v2294
        %v2423 = vadd.f32 %v2391, %v2297
        %v2424 = vadd.f32 %v2392, %v2302
        %v2425 = vadd.f32 %v2393, %v2305
        %v2426 = vadd.f32 %v2394, %v2310
        %v2427 = vadd.f32 %v2395, %v2313
        %v2428 = vadd.f32 %v2396, %v2318
        %v2429 = vadd.f32 %v2397, %v2321
        %v2430 = vadd.f32 %v2398, %v2326
        %v2431 = vadd.f32 %v2399, %v2329
        %v2432 = vadd.f32 %v2400, %v2334
        %v2433 = vadd.f32 %v2401, %v2337
        %v2434 = vadd.f32 %v2402, %v2342
        %v2435 = vadd.f32 %v2403, %v2345
        %v2436 = vadd.f32 %v2404, %v2350
        %v2437 = vadd.f32 %v2405, %v2353
        %v2438 = vadd.f32 %v2406, %v2358
        %v2439 = vadd.f32 %v2407, %v2361
        %v2440 = vadd.f32 %v2408, %v2366
        %v2441 = vadd.f32 %v2409, %v2369
        %v2442 = vadd.f32 %v2410, %v2374
        %v2443 = vadd.f32 %v2411, %v2377
        %2444 = vst [vmem:[#allocation4] sm:$0xff] %v2412
        %2445 = vst [vmem:[#allocation4 + $0x8] sm:$0xff] %v2413
        %2446 = vst [vmem:[#allocation4 + $0x10] sm:$0xff] %v2414
        %2447 = vst [vmem:[#allocation4 + $0x18] sm:$0xff] %v2415
        %2448 = vst [vmem:[#allocation4 + $0x20] sm:$0xff] %v2416
        %2449 = vst [vmem:[#allocation4 + $0x28] sm:$0xff] %v2417
        %2450 = vst [vmem:[#allocation4 + $0x30] sm:$0xff] %v2418
        %2451 = vst [vmem:[#allocation4 + $0x38] sm:$0xff] %v2419
        %2452 = vst [vmem:[#allocation4 + $0x40] sm:$0xff] %v2420
        %2453 = vst [vmem:[#allocation4 + $0x48] sm:$0xff] %v2421
        %2454 = vst [vmem:[#allocation4 + $0x50] sm:$0xff] %v2422
        %2455 = vst [vmem:[#allocation4 + $0x58] sm:$0xff] %v2423
        %2456 = vst [vmem:[#allocation4 + $0x60] sm:$0xff] %v2424
        %2457 = vst [vmem:[#allocation4 + $0x68] sm:$0xff] %v2425
        %2458 = vst [vmem:[#allocation4 + $0x70] sm:$0xff] %v2426
        %2459 = vst [vmem:[#allocation4 + $0x78] sm:$0xff] %v2427
        %2460 = vst [vmem:[#allocation4 + $0x80] sm:$0xff] %v2428
        %2461 = vst [vmem:[#allocation4 + $0x88] sm:$0xff] %v2429
        %2462 = vst [vmem:[#allocation4 + $0x90] sm:$0xff] %v2430
        %2463 = vst [vmem:[#allocation4 + $0x98] sm:$0xff] %v2431
        %2464 = vst [vmem:[#allocation4 + $0xa0] sm:$0xff] %v2432
        %2465 = vst [vmem:[#allocation4 + $0xa8] sm:$0xff] %v2433
        %2466 = vst [vmem:[#allocation4 + $0xb0] sm:$0xff] %v2434
        %2467 = vst [vmem:[#allocation4 + $0xb8] sm:$0xff] %v2435
        %2468 = vst [vmem:[#allocation4 + $0xc0] sm:$0xff] %v2436
        %2469 = vst [vmem:[#allocation4 + $0xc8] sm:$0xff] %v2437
        %2470 = vst [vmem:[#allocation4 + $0xd0] sm:$0xff] %v2438
        %2471 = vst [vmem:[#allocation4 + $0xd8] sm:$0xff] %v2439
        %2472 = vst [vmem:[#allocation4 + $0xe0] sm:$0xff] %v2440
        %2473 = vst [vmem:[#allocation4 + $0xe8] sm:$0xff] %v2441
        %2474 = vst [vmem:[#allocation4 + $0xf0] sm:$0xff] %v2442
        %2475 = vst [vmem:[#allocation4 + $0xf8] sm:$0xff] %v2443
        %s2476 = scalar_lea.vmem [#allocation2], 48
        %v2477 = vld [vmem:[%s2476] sm:$0x80]
        %v2478 = vld [vmem:[%s2476 + $0x8] sm:$0xff]
        %v2479 = vld [vmem:[%s2476 + $0x18] sm:$0x80]
        %v2480 = vld [vmem:[%s2476 + $0x20] sm:$0xff]
        %v2481 = vld [vmem:[%s2476 + $0x30] sm:$0x80]
        %v2482 = vld [vmem:[%s2476 + $0x38] sm:$0xff]
        %v2483 = vld [vmem:[%s2476 + $0x48] sm:$0x80]
        %v2484 = vld [vmem:[%s2476 + $0x50] sm:$0xff]
        %v2485 = vld [vmem:[%s2476 + $0x60] sm:$0x80]
        %v2486 = vld [vmem:[%s2476 + $0x68] sm:$0xff]
        %v2487 = vld [vmem:[%s2476 + $0x78] sm:$0x80]
        %v2488 = vld [vmem:[%s2476 + $0x80] sm:$0xff]
        %v2489 = vld [vmem:[%s2476 + $0x90] sm:$0x80]
        %v2490 = vld [vmem:[%s2476 + $0x98] sm:$0xff]
        %v2491 = vld [vmem:[%s2476 + $0xa8] sm:$0x80]
        %v2492 = vld [vmem:[%s2476 + $0xb0] sm:$0xff]
        %v2493 = vld [vmem:[%s2476 + $0xc0] sm:$0x80]
        %v2494 = vld [vmem:[%s2476 + $0xc8] sm:$0xff]
        %v2495 = vld [vmem:[%s2476 + $0xd8] sm:$0x80]
        %v2496 = vld [vmem:[%s2476 + $0xe0] sm:$0xff]
        %v2497 = vld [vmem:[%s2476 + $0xf0] sm:$0x80]
        %v2498 = vld [vmem:[%s2476 + $0xf8] sm:$0xff]
        %v2499 = vld [vmem:[%s2476 + $0x108] sm:$0x80]
        %v2500 = vld [vmem:[%s2476 + $0x110] sm:$0xff]
        %v2501 = vld [vmem:[%s2476 + $0x120] sm:$0x80]
        %v2502 = vld [vmem:[%s2476 + $0x128] sm:$0xff]
        %v2503 = vld [vmem:[%s2476 + $0x138] sm:$0x80]
        %v2504 = vld [vmem:[%s2476 + $0x140] sm:$0xff]
        %v2505 = vld [vmem:[%s2476 + $0x150] sm:$0x80]
        %v2506 = vld [vmem:[%s2476 + $0x158] sm:$0xff]
        %v2507 = vld [vmem:[%s2476 + $0x168] sm:$0x80]
        %v2508 = vld [vmem:[%s2476 + $0x170] sm:$0xff]
        %v2509 = vld [vmem:[%s2476 + $0x10] sm:$0x1]
        %v2510 = vld [vmem:[%s2476 + $0x28] sm:$0x1]
        %v2511 = vld [vmem:[%s2476 + $0x40] sm:$0x1]
        %v2512 = vld [vmem:[%s2476 + $0x58] sm:$0x1]
        %v2513 = vld [vmem:[%s2476 + $0x70] sm:$0x1]
        %v2514 = vld [vmem:[%s2476 + $0x88] sm:$0x1]
        %v2515 = vld [vmem:[%s2476 + $0xa0] sm:$0x1]
        %v2516 = vld [vmem:[%s2476 + $0xb8] sm:$0x1]
        %v2517 = vld [vmem:[%s2476 + $0xd0] sm:$0x1]
        %v2518 = vld [vmem:[%s2476 + $0xe8] sm:$0x1]
        %v2519 = vld [vmem:[%s2476 + $0x100] sm:$0x1]
        %v2520 = vld [vmem:[%s2476 + $0x118] sm:$0x1]
        %v2521 = vld [vmem:[%s2476 + $0x130] sm:$0x1]
        %v2522 = vld [vmem:[%s2476 + $0x148] sm:$0x1]
        %v2523 = vld [vmem:[%s2476 + $0x160] sm:$0x1]
        %v2524 = vld [vmem:[%s2476 + $0x178] sm:$0x1]
        %v2526 = vshll.u32 %v2478, 16
        %v2528 = vrot.slane %v2526, 1
        %v2529 = vshrl.u32 %v2478, 16
        %v2531 = vor.u32 %v2529, %v2528
        %v2533 = vshll.u32 %v2480, 16
        %v2535 = vrot.slane %v2533, 1
        %v2536 = vshrl.u32 %v2480, 16
        %v2538 = vor.u32 %v2536, %v2535
        %v2540 = vshll.u32 %v2482, 16
        %v2542 = vrot.slane %v2540, 1
        %v2543 = vshrl.u32 %v2482, 16
        %v2545 = vor.u32 %v2543, %v2542
        %v2547 = vshll.u32 %v2484, 16
        %v2549 = vrot.slane %v2547, 1
        %v2550 = vshrl.u32 %v2484, 16
        %v2552 = vor.u32 %v2550, %v2549
        %v2554 = vshll.u32 %v2486, 16
        %v2556 = vrot.slane %v2554, 1
        %v2557 = vshrl.u32 %v2486, 16
        %v2559 = vor.u32 %v2557, %v2556
        %v2561 = vshll.u32 %v2488, 16
        %v2563 = vrot.slane %v2561, 1
        %v2564 = vshrl.u32 %v2488, 16
        %v2566 = vor.u32 %v2564, %v2563
        %v2568 = vshll.u32 %v2490, 16
        %v2570 = vrot.slane %v2568, 1
        %v2571 = vshrl.u32 %v2490, 16
        %v2573 = vor.u32 %v2571, %v2570
        %v2575 = vshll.u32 %v2492, 16
        %v2577 = vrot.slane %v2575, 1
        %v2578 = vshrl.u32 %v2492, 16
        %v2580 = vor.u32 %v2578, %v2577
        %v2582 = vshll.u32 %v2494, 16
        %v2584 = vrot.slane %v2582, 1
        %v2585 = vshrl.u32 %v2494, 16
        %v2587 = vor.u32 %v2585, %v2584
        %v2589 = vshll.u32 %v2496, 16
        %v2591 = vrot.slane %v2589, 1
        %v2592 = vshrl.u32 %v2496, 16
        %v2594 = vor.u32 %v2592, %v2591
        %v2596 = vshll.u32 %v2498, 16
        %v2598 = vrot.slane %v2596, 1
        %v2599 = vshrl.u32 %v2498, 16
        %v2601 = vor.u32 %v2599, %v2598
        %v2603 = vshll.u32 %v2500, 16
        %v2605 = vrot.slane %v2603, 1
        %v2606 = vshrl.u32 %v2500, 16
        %v2608 = vor.u32 %v2606, %v2605
        %v2610 = vshll.u32 %v2502, 16
        %v2612 = vrot.slane %v2610, 1
        %v2613 = vshrl.u32 %v2502, 16
        %v2615 = vor.u32 %v2613, %v2612
        %v2617 = vshll.u32 %v2504, 16
        %v2619 = vrot.slane %v2617, 1
        %v2620 = vshrl.u32 %v2504, 16
        %v2622 = vor.u32 %v2620, %v2619
        %v2624 = vshll.u32 %v2506, 16
        %v2626 = vrot.slane %v2624, 1
        %v2627 = vshrl.u32 %v2506, 16
        %v2629 = vor.u32 %v2627, %v2626
        %v2631 = vshll.u32 %v2508, 16
        %v2633 = vrot.slane %v2631, 1
        %v2634 = vshrl.u32 %v2508, 16
        %v2636 = vor.u32 %v2634, %v2633
        %2637 = vrot.lane.b32.xlu0 %v2528, 4
        %v2638 = vpop.permute.xlu0 %2637
        %2639 = vrot.lane.b32.xlu0 %v2531, 4
        %v2640 = vpop.permute.xlu0 %2639
        %2641 = vrot.lane.b32.xlu0 %v2535, 4
        %v2642 = vpop.permute.xlu0 %2641
        %2643 = vrot.lane.b32.xlu0 %v2538, 4
        %v2644 = vpop.permute.xlu0 %2643
        %2645 = vrot.lane.b32.xlu0 %v2542, 4
        %v2646 = vpop.permute.xlu0 %2645
        %2647 = vrot.lane.b32.xlu0 %v2545, 4
        %v2648 = vpop.permute.xlu0 %2647
        %2649 = vrot.lane.b32.xlu0 %v2549, 4
        %v2650 = vpop.permute.xlu0 %2649
        %2651 = vrot.lane.b32.xlu0 %v2552, 4
        %v2652 = vpop.permute.xlu0 %2651
        %2653 = vrot.lane.b32.xlu0 %v2556, 4
        %v2654 = vpop.permute.xlu0 %2653
        %2655 = vrot.lane.b32.xlu0 %v2559, 4
        %v2656 = vpop.permute.xlu0 %2655
        %2657 = vrot.lane.b32.xlu0 %v2563, 4
        %v2658 = vpop.permute.xlu0 %2657
        %2659 = vrot.lane.b32.xlu0 %v2566, 4
        %v2660 = vpop.permute.xlu0 %2659
        %2661 = vrot.lane.b32.xlu0 %v2570, 4
        %v2662 = vpop.permute.xlu0 %2661
        %2663 = vrot.lane.b32.xlu0 %v2573, 4
        %v2664 = vpop.permute.xlu0 %2663
        %2665 = vrot.lane.b32.xlu0 %v2577, 4
        %v2666 = vpop.permute.xlu0 %2665
        %2667 = vrot.lane.b32.xlu0 %v2580, 4
        %v2668 = vpop.permute.xlu0 %2667
        %2669 = vrot.lane.b32.xlu0 %v2584, 4
        %v2670 = vpop.permute.xlu0 %2669
        %2671 = vrot.lane.b32.xlu0 %v2587, 4
        %v2672 = vpop.permute.xlu0 %2671
        %2673 = vrot.lane.b32.xlu0 %v2591, 4
        %v2674 = vpop.permute.xlu0 %2673
        %2675 = vrot.lane.b32.xlu0 %v2594, 4
        %v2676 = vpop.permute.xlu0 %2675
        %2677 = vrot.lane.b32.xlu0 %v2598, 4
        %v2678 = vpop.permute.xlu0 %2677
        %2679 = vrot.lane.b32.xlu0 %v2601, 4
        %v2680 = vpop.permute.xlu0 %2679
        %2681 = vrot.lane.b32.xlu0 %v2605, 4
        %v2682 = vpop.permute.xlu0 %2681
        %2683 = vrot.lane.b32.xlu0 %v2608, 4
        %v2684 = vpop.permute.xlu0 %2683
        %2685 = vrot.lane.b32.xlu0 %v2612, 4
        %v2686 = vpop.permute.xlu0 %2685
        %2687 = vrot.lane.b32.xlu0 %v2615, 4
        %v2688 = vpop.permute.xlu0 %2687
        %2689 = vrot.lane.b32.xlu0 %v2619, 4
        %v2690 = vpop.permute.xlu0 %2689
        %2691 = vrot.lane.b32.xlu0 %v2622, 4
        %v2692 = vpop.permute.xlu0 %2691
        %2693 = vrot.lane.b32.xlu0 %v2626, 4
        %v2694 = vpop.permute.xlu0 %2693
        %2695 = vrot.lane.b32.xlu0 %v2629, 4
        %v2696 = vpop.permute.xlu0 %2695
        %2697 = vrot.lane.b32.xlu0 %v2633, 4
        %v2698 = vpop.permute.xlu0 %2697
        %2699 = vrot.lane.b32.xlu0 %v2636, 4
        %v2700 = vpop.permute.xlu0 %2699
        %v2733 = vrot.slane %v2478, 1
        %v2734 = vrot.slane %v2509, 1
        %v2735 = vsel %vm817, %v2733, %v2734
        %v2736 = vrot.slane %v2480, 1
        %v2737 = vrot.slane %v2510, 1
        %v2738 = vsel %vm817, %v2736, %v2737
        %v2739 = vrot.slane %v2482, 1
        %v2740 = vrot.slane %v2511, 1
        %v2741 = vsel %vm817, %v2739, %v2740
        %v2742 = vrot.slane %v2484, 1
        %v2743 = vrot.slane %v2512, 1
        %v2744 = vsel %vm817, %v2742, %v2743
        %v2745 = vrot.slane %v2486, 1
        %v2746 = vrot.slane %v2513, 1
        %v2747 = vsel %vm817, %v2745, %v2746
        %v2748 = vrot.slane %v2488, 1
        %v2749 = vrot.slane %v2514, 1
        %v2750 = vsel %vm817, %v2748, %v2749
        %v2751 = vrot.slane %v2490, 1
        %v2752 = vrot.slane %v2515, 1
        %v2753 = vsel %vm817, %v2751, %v2752
        %v2754 = vrot.slane %v2492, 1
        %v2755 = vrot.slane %v2516, 1
        %v2756 = vsel %vm817, %v2754, %v2755
        %v2757 = vrot.slane %v2494, 1
        %v2758 = vrot.slane %v2517, 1
        %v2759 = vsel %vm817, %v2757, %v2758
        %v2760 = vrot.slane %v2496, 1
        %v2761 = vrot.slane %v2518, 1
        %v2762 = vsel %vm817, %v2760, %v2761
        %v2763 = vrot.slane %v2498, 1
        %v2764 = vrot.slane %v2519, 1
        %v2765 = vsel %vm817, %v2763, %v2764
        %v2766 = vrot.slane %v2500, 1
        %v2767 = vrot.slane %v2520, 1
        %v2768 = vsel %vm817, %v2766, %v2767
        %v2769 = vrot.slane %v2502, 1
        %v2770 = vrot.slane %v2521, 1
        %v2771 = vsel %vm817, %v2769, %v2770
        %v2772 = vrot.slane %v2504, 1
        %v2773 = vrot.slane %v2522, 1
        %v2774 = vsel %vm817, %v2772, %v2773
        %v2775 = vrot.slane %v2506, 1
        %v2776 = vrot.slane %v2523, 1
        %v2777 = vsel %vm817, %v2775, %v2776
        %v2778 = vrot.slane %v2508, 1
        %v2779 = vrot.slane %v2524, 1
        %v2780 = vsel %vm817, %v2778, %v2779
        %2781 = vrot.lane.b32.xlu0 %v2733, 8
        %v2782 = vpop.permute.xlu0 %2781
        %2783 = vrot.lane.b32.xlu0 %v2735, 8
        %v2784 = vpop.permute.xlu0 %2783
        %2785 = vrot.lane.b32.xlu0 %v2736, 8
        %v2786 = vpop.permute.xlu0 %2785
        %2787 = vrot.lane.b32.xlu0 %v2738, 8
        %v2788 = vpop.permute.xlu0 %2787
        %2789 = vrot.lane.b32.xlu0 %v2739, 8
        %v2790 = vpop.permute.xlu0 %2789
        %2791 = vrot.lane.b32.xlu0 %v2741, 8
        %v2792 = vpop.permute.xlu0 %2791
        %2793 = vrot.lane.b32.xlu0 %v2742, 8
        %v2794 = vpop.permute.xlu0 %2793
        %2795 = vrot.lane.b32.xlu0 %v2744, 8
        %v2796 = vpop.permute.xlu0 %2795
        %2797 = vrot.lane.b32.xlu0 %v2745, 8
        %v2798 = vpop.permute.xlu0 %2797
        %2799 = vrot.lane.b32.xlu0 %v2747, 8
        %v2800 = vpop.permute.xlu0 %2799
        %2801 = vrot.lane.b32.xlu0 %v2748, 8
        %v2802 = vpop.permute.xlu0 %2801
        %2803 = vrot.lane.b32.xlu0 %v2750, 8
        %v2804 = vpop.permute.xlu0 %2803
        %2805 = vrot.lane.b32.xlu0 %v2751, 8
        %v2806 = vpop.permute.xlu0 %2805
        %2807 = vrot.lane.b32.xlu0 %v2753, 8
        %v2808 = vpop.permute.xlu0 %2807
        %2809 = vrot.lane.b32.xlu0 %v2754, 8
        %v2810 = vpop.permute.xlu0 %2809
        %2811 = vrot.lane.b32.xlu0 %v2756, 8
        %v2812 = vpop.permute.xlu0 %2811
        %2813 = vrot.lane.b32.xlu0 %v2757, 8
        %v2814 = vpop.permute.xlu0 %2813
        %2815 = vrot.lane.b32.xlu0 %v2759, 8
        %v2816 = vpop.permute.xlu0 %2815
        %2817 = vrot.lane.b32.xlu0 %v2760, 8
        %v2818 = vpop.permute.xlu0 %2817
        %2819 = vrot.lane.b32.xlu0 %v2762, 8
        %v2820 = vpop.permute.xlu0 %2819
        %2821 = vrot.lane.b32.xlu0 %v2763, 8
        %v2822 = vpop.permute.xlu0 %2821
        %2823 = vrot.lane.b32.xlu0 %v2765, 8
        %v2824 = vpop.permute.xlu0 %2823
        %2825 = vrot.lane.b32.xlu0 %v2766, 8
        %v2826 = vpop.permute.xlu0 %2825
        %2827 = vrot.lane.b32.xlu0 %v2768, 8
        %v2828 = vpop.permute.xlu0 %2827
        %2829 = vrot.lane.b32.xlu0 %v2769, 8
        %v2830 = vpop.permute.xlu0 %2829
        %2831 = vrot.lane.b32.xlu0 %v2771, 8
        %v2832 = vpop.permute.xlu0 %2831
        %2833 = vrot.lane.b32.xlu0 %v2772, 8
        %v2834 = vpop.permute.xlu0 %2833
        %2835 = vrot.lane.b32.xlu0 %v2774, 8
        %v2836 = vpop.permute.xlu0 %2835
        %2837 = vrot.lane.b32.xlu0 %v2775, 8
        %v2838 = vpop.permute.xlu0 %2837
        %2839 = vrot.lane.b32.xlu0 %v2777, 8
        %v2840 = vpop.permute.xlu0 %2839
        %2841 = vrot.lane.b32.xlu0 %v2778, 8
        %v2842 = vpop.permute.xlu0 %2841
        %2843 = vrot.lane.b32.xlu0 %v2780, 8
        %v2844 = vpop.permute.xlu0 %2843
        %v2847 = vsel %vm278, %v2477, %v2638
        %v2849 = vsel %vm278, %v2478, %v2640
        %v2852 = vsel %vm278, %v2479, %v2642
        %v2854 = vsel %vm278, %v2480, %v2644
        %v2857 = vsel %vm278, %v2481, %v2646
        %v2859 = vsel %vm278, %v2482, %v2648
        %v2862 = vsel %vm278, %v2483, %v2650
        %v2864 = vsel %vm278, %v2484, %v2652
        %v2867 = vsel %vm278, %v2485, %v2654
        %v2869 = vsel %vm278, %v2486, %v2656
        %v2872 = vsel %vm278, %v2487, %v2658
        %v2874 = vsel %vm278, %v2488, %v2660
        %v2877 = vsel %vm278, %v2489, %v2662
        %v2879 = vsel %vm278, %v2490, %v2664
        %v2882 = vsel %vm278, %v2491, %v2666
        %v2884 = vsel %vm278, %v2492, %v2668
        %v2887 = vsel %vm278, %v2493, %v2670
        %v2889 = vsel %vm278, %v2494, %v2672
        %v2892 = vsel %vm278, %v2495, %v2674
        %v2894 = vsel %vm278, %v2496, %v2676
        %v2897 = vsel %vm278, %v2497, %v2678
        %v2899 = vsel %vm278, %v2498, %v2680
        %v2902 = vsel %vm278, %v2499, %v2682
        %v2904 = vsel %vm278, %v2500, %v2684
        %v2907 = vsel %vm278, %v2501, %v2686
        %v2909 = vsel %vm278, %v2502, %v2688
        %v2912 = vsel %vm278, %v2503, %v2690
        %v2914 = vsel %vm278, %v2504, %v2692
        %v2917 = vsel %vm278, %v2505, %v2694
        %v2919 = vsel %vm278, %v2506, %v2696
        %v2922 = vsel %vm278, %v2507, %v2698
        %v2924 = vsel %vm278, %v2508, %v2700
        %v2926 = vsel %vm1010, %v2847, %v2782
        %v2928 = vsel %vm1010, %v2849, %v2784
        %v2930 = vsel %vm1010, %v2852, %v2786
        %v2932 = vsel %vm1010, %v2854, %v2788
        %v2934 = vsel %vm1010, %v2857, %v2790
        %v2936 = vsel %vm1010, %v2859, %v2792
        %v2938 = vsel %vm1010, %v2862, %v2794
        %v2940 = vsel %vm1010, %v2864, %v2796
        %v2942 = vsel %vm1010, %v2867, %v2798
        %v2944 = vsel %vm1010, %v2869, %v2800
        %v2946 = vsel %vm1010, %v2872, %v2802
        %v2948 = vsel %vm1010, %v2874, %v2804
        %v2950 = vsel %vm1010, %v2877, %v2806
        %v2952 = vsel %vm1010, %v2879, %v2808
        %v2954 = vsel %vm1010, %v2882, %v2810
        %v2956 = vsel %vm1010, %v2884, %v2812
        %v2958 = vsel %vm1010, %v2887, %v2814
        %v2960 = vsel %vm1010, %v2889, %v2816
        %v2962 = vsel %vm1010, %v2892, %v2818
        %v2964 = vsel %vm1010, %v2894, %v2820
        %v2966 = vsel %vm1010, %v2897, %v2822
        %v2968 = vsel %vm1010, %v2899, %v2824
        %v2970 = vsel %vm1010, %v2902, %v2826
        %v2972 = vsel %vm1010, %v2904, %v2828
        %v2974 = vsel %vm1010, %v2907, %v2830
        %v2976 = vsel %vm1010, %v2909, %v2832
        %v2978 = vsel %vm1010, %v2912, %v2834
        %v2980 = vsel %vm1010, %v2914, %v2836
        %v2982 = vsel %vm1010, %v2917, %v2838
        %v2984 = vsel %vm1010, %v2919, %v2840
        %v2986 = vsel %vm1010, %v2922, %v2842
        %v2988 = vsel %vm1010, %v2924, %v2844
        %v2989 = vshrl.u32 %v2926, 16
        %v2991 = vrot.slane %v2989, 7
        %v2992 = vshrl.u32 %v2928, 16
        %v2994 = vrot.slane %v2992, 7
        %v2995 = vshll.u32 %v2928, 16
        %v2997 = vor.u32 %v2994, %v2995
        %v2998 = vsel %vm339, %v2991, %v2997
        %v2999 = vshrl.u32 %v2930, 16
        %v3001 = vrot.slane %v2999, 7
        %v3002 = vshrl.u32 %v2932, 16
        %v3004 = vrot.slane %v3002, 7
        %v3005 = vshll.u32 %v2932, 16
        %v3007 = vor.u32 %v3004, %v3005
        %v3008 = vsel %vm339, %v3001, %v3007
        %v3009 = vshrl.u32 %v2934, 16
        %v3011 = vrot.slane %v3009, 7
        %v3012 = vshrl.u32 %v2936, 16
        %v3014 = vrot.slane %v3012, 7
        %v3015 = vshll.u32 %v2936, 16
        %v3017 = vor.u32 %v3014, %v3015
        %v3018 = vsel %vm339, %v3011, %v3017
        %v3019 = vshrl.u32 %v2938, 16
        %v3021 = vrot.slane %v3019, 7
        %v3022 = vshrl.u32 %v2940, 16
        %v3024 = vrot.slane %v3022, 7
        %v3025 = vshll.u32 %v2940, 16
        %v3027 = vor.u32 %v3024, %v3025
        %v3028 = vsel %vm339, %v3021, %v3027
        %v3029 = vshrl.u32 %v2942, 16
        %v3031 = vrot.slane %v3029, 7
        %v3032 = vshrl.u32 %v2944, 16
        %v3034 = vrot.slane %v3032, 7
        %v3035 = vshll.u32 %v2944, 16
        %v3037 = vor.u32 %v3034, %v3035
        %v3038 = vsel %vm339, %v3031, %v3037
        %v3039 = vshrl.u32 %v2946, 16
        %v3041 = vrot.slane %v3039, 7
        %v3042 = vshrl.u32 %v2948, 16
        %v3044 = vrot.slane %v3042, 7
        %v3045 = vshll.u32 %v2948, 16
        %v3047 = vor.u32 %v3044, %v3045
        %v3048 = vsel %vm339, %v3041, %v3047
        %v3049 = vshrl.u32 %v2950, 16
        %v3051 = vrot.slane %v3049, 7
        %v3052 = vshrl.u32 %v2952, 16
        %v3054 = vrot.slane %v3052, 7
        %v3055 = vshll.u32 %v2952, 16
        %v3057 = vor.u32 %v3054, %v3055
        %v3058 = vsel %vm339, %v3051, %v3057
        %v3059 = vshrl.u32 %v2954, 16
        %v3061 = vrot.slane %v3059, 7
        %v3062 = vshrl.u32 %v2956, 16
        %v3064 = vrot.slane %v3062, 7
        %v3065 = vshll.u32 %v2956, 16
        %v3067 = vor.u32 %v3064, %v3065
        %v3068 = vsel %vm339, %v3061, %v3067
        %v3069 = vshrl.u32 %v2958, 16
        %v3071 = vrot.slane %v3069, 7
        %v3072 = vshrl.u32 %v2960, 16
        %v3074 = vrot.slane %v3072, 7
        %v3075 = vshll.u32 %v2960, 16
        %v3077 = vor.u32 %v3074, %v3075
        %v3078 = vsel %vm339, %v3071, %v3077
        %v3079 = vshrl.u32 %v2962, 16
        %v3081 = vrot.slane %v3079, 7
        %v3082 = vshrl.u32 %v2964, 16
        %v3084 = vrot.slane %v3082, 7
        %v3085 = vshll.u32 %v2964, 16
        %v3087 = vor.u32 %v3084, %v3085
        %v3088 = vsel %vm339, %v3081, %v3087
        %v3089 = vshrl.u32 %v2966, 16
        %v3091 = vrot.slane %v3089, 7
        %v3092 = vshrl.u32 %v2968, 16
        %v3094 = vrot.slane %v3092, 7
        %v3095 = vshll.u32 %v2968, 16
        %v3097 = vor.u32 %v3094, %v3095
        %v3098 = vsel %vm339, %v3091, %v3097
        %v3099 = vshrl.u32 %v2970, 16
        %v3101 = vrot.slane %v3099, 7
        %v3102 = vshrl.u32 %v2972, 16
        %v3104 = vrot.slane %v3102, 7
        %v3105 = vshll.u32 %v2972, 16
        %v3107 = vor.u32 %v3104, %v3105
        %v3108 = vsel %vm339, %v3101, %v3107
        %v3109 = vshrl.u32 %v2974, 16
        %v3111 = vrot.slane %v3109, 7
        %v3112 = vshrl.u32 %v2976, 16
        %v3114 = vrot.slane %v3112, 7
        %v3115 = vshll.u32 %v2976, 16
        %v3117 = vor.u32 %v3114, %v3115
        %v3118 = vsel %vm339, %v3111, %v3117
        %v3119 = vshrl.u32 %v2978, 16
        %v3121 = vrot.slane %v3119, 7
        %v3122 = vshrl.u32 %v2980, 16
        %v3124 = vrot.slane %v3122, 7
        %v3125 = vshll.u32 %v2980, 16
        %v3127 = vor.u32 %v3124, %v3125
        %v3128 = vsel %vm339, %v3121, %v3127
        %v3129 = vshrl.u32 %v2982, 16
        %v3131 = vrot.slane %v3129, 7
        %v3132 = vshrl.u32 %v2984, 16
        %v3134 = vrot.slane %v3132, 7
        %v3135 = vshll.u32 %v2984, 16
        %v3137 = vor.u32 %v3134, %v3135
        %v3138 = vsel %vm339, %v3131, %v3137
        %v3139 = vshrl.u32 %v2986, 16
        %v3141 = vrot.slane %v3139, 7
        %v3142 = vshrl.u32 %v2988, 16
        %v3144 = vrot.slane %v3142, 7
        %v3145 = vshll.u32 %v2988, 16
        %v3147 = vor.u32 %v3144, %v3145
        %v3148 = vsel %vm339, %v3141, %v3147
        %s3149 = scalar_lea.vmem %s1, 16
        %v3150 = vld [vmem:[%s3149] sm:$0xf]
        %v3151 = vld [vmem:[%s3149 + $0x4] sm:$0x3]
        %v3154 = vunpack.c.l.b16 %v3150
        %v3155 = vunpack.c.l.b16 %v3151
        %v3156 = vpack.c.b16 %v3155, %v3154
        %v3158 = vsel %vm1242, %v2998, 0
        %v3161 = vsel %vm1242, %v3008, 0
        %v3164 = vsel %vm1242, %v3018, 0
        %v3167 = vsel %vm1242, %v3028, 0
        %v3170 = vsel %vm1242, %v3038, 0
        %v3173 = vsel %vm1242, %v3048, 0
        %v3176 = vsel %vm1242, %v3058, 0
        %v3179 = vsel %vm1242, %v3068, 0
        %v3182 = vsel %vm1242, %v3078, 0
        %v3185 = vsel %vm1242, %v3088, 0
        %v3188 = vsel %vm1242, %v3098, 0
        %v3191 = vsel %vm1242, %v3108, 0
        %v3194 = vsel %vm1242, %v3118, 0
        %v3197 = vsel %vm1242, %v3128, 0
        %v3200 = vsel %vm1242, %v3138, 0
        %v3203 = vsel %vm1242, %v3148, 0
        %v3206 = vsel %vm1291, %v3156, 0
        %3208 = vmatprep.subr.bf16.mxu0 0
        %3209 = vmatpush1.bf16.msra.mxu0 %v3206
        %3210 = vmatprep.subr.bf16.mxu0 0
        %3211 = vmatpush1.bf16.msra.mxu0 0
        %3212 = vmatprep.subr.bf16.mxu0 0
        %3213 = vmatpush1.bf16.msra.mxu0 0
        %3214 = vmatprep.subr.bf16.mxu0 0
        %3215 = vmatpush1.bf16.msra.mxu0 0
        %3216 = vmatprep.subr.bf16.mxu0 0
        %3217 = vmatpush1.bf16.msra.mxu0 0
        %3218 = vmatprep.subr.bf16.mxu0 0
        %3219 = vmatpush1.bf16.msra.mxu0 0
        %3220 = vmatprep.subr.bf16.mxu0 0
        %3221 = vmatpush1.bf16.msra.mxu0 0
        %3222 = vmatprep.subr.bf16.mxu0 0
        %3223 = vmatpush1.bf16.msra.mxu0 0
        %3224 = vmatprep.subr.bf16.mxu0 0
        %3225 = vmatpush1.bf16.msra.mxu0 0
        %3226 = vmatprep.subr.bf16.mxu0 0
        %3227 = vmatpush1.bf16.msra.mxu0 0
        %3228 = vmatprep.subr.bf16.mxu0 0
        %3229 = vmatpush1.bf16.msra.mxu0 0
        %3230 = vmatprep.subr.bf16.mxu0 0
        %3231 = vmatpush1.bf16.msra.mxu0 0
        %3232 = vmatprep.subr.bf16.mxu0 0
        %3233 = vmatpush1.bf16.msra.mxu0 0
        %3234 = vmatprep.subr.bf16.mxu0 0
        %3235 = vmatpush1.bf16.msra.mxu0 0
        %3236 = vmatprep.subr.bf16.mxu0 0
        %3237 = vmatpush1.bf16.msra.mxu0 0
        %3238 = vmatprep.subr.bf16.mxu0 0
        %3239 = vmatpush1.bf16.msra.mxu0 0
        %3240 = vmatprep.mubr.bf16.mxu0 0
        %3241 = vmatmul.mubr.bf16.gmra.mrb[0].mxu0 %v3158
        %v3242 = vpop.f32.mrb[0].mxu0
        %v3243 = vadd.f32 0.0, %v3242
        %v3244 = vpop.f32.mrb[0].mxu0
        %v3245 = vpop.f32.mrb[0].mxu0
        %v3246 = vadd.f32 0.0, %v3245
        %v3247 = vpop.f32.mrb[0].mxu0
        %3248 = vmatprep.mubr.bf16.mxu0 0
        %3249 = vmatmul.mubr.bf16.gmra.mrb[0].mxu0 %v3161
        %v3250 = vpop.f32.mrb[0].mxu0
        %v3251 = vadd.f32 0.0, %v3250
        %v3252 = vpop.f32.mrb[0].mxu0
        %v3253 = vpop.f32.mrb[0].mxu0
        %v3254 = vadd.f32 0.0, %v3253
        %v3255 = vpop.f32.mrb[0].mxu0
        %3256 = vmatprep.mubr.bf16.mxu0 0
        %3257 = vmatmul.mubr.bf16.gmra.mrb[0].mxu0 %v3164
        %v3258 = vpop.f32.mrb[0].mxu0
        %v3259 = vadd.f32 0.0, %v3258
        %v3260 = vpop.f32.mrb[0].mxu0
        %v3261 = vpop.f32.mrb[0].mxu0
        %v3262 = vadd.f32 0.0, %v3261
        %v3263 = vpop.f32.mrb[0].mxu0
        %3264 = vmatprep.mubr.bf16.mxu0 0
        %3265 = vmatmul.mubr.bf16.gmra.mrb[0].mxu0 %v3167
        %v3266 = vpop.f32.mrb[0].mxu0
        %v3267 = vadd.f32 0.0, %v3266
        %v3268 = vpop.f32.mrb[0].mxu0
        %v3269 = vpop.f32.mrb[0].mxu0
        %v3270 = vadd.f32 0.0, %v3269
        %v3271 = vpop.f32.mrb[0].mxu0
        %3272 = vmatprep.mubr.bf16.mxu0 0
        %3273 = vmatmul.mubr.bf16.gmra.mrb[0].mxu0 %v3170
        %v3274 = vpop.f32.mrb[0].mxu0
        %v3275 = vadd.f32 0.0, %v3274
        %v3276 = vpop.f32.mrb[0].mxu0
        %v3277 = vpop.f32.mrb[0].mxu0
        %v3278 = vadd.f32 0.0, %v3277
        %v3279 = vpop.f32.mrb[0].mxu0
        %3280 = vmatprep.mubr.bf16.mxu0 0
        %3281 = vmatmul.mubr.bf16.gmra.mrb[0].mxu0 %v3173
        %v3282 = vpop.f32.mrb[0].mxu0
        %v3283 = vadd.f32 0.0, %v3282
        %v3284 = vpop.f32.mrb[0].mxu0
        %v3285 = vpop.f32.mrb[0].mxu0
        %v3286 = vadd.f32 0.0, %v3285
        %v3287 = vpop.f32.mrb[0].mxu0
        %3288 = vmatprep.mubr.bf16.mxu0 0
        %3289 = vmatmul.mubr.bf16.gmra.mrb[0].mxu0 %v3176
        %v3290 = vpop.f32.mrb[0].mxu0
        %v3291 = vadd.f32 0.0, %v3290
        %v3292 = vpop.f32.mrb[0].mxu0
        %v3293 = vpop.f32.mrb[0].mxu0
        %v3294 = vadd.f32 0.0, %v3293
        %v3295 = vpop.f32.mrb[0].mxu0
        %3296 = vmatprep.mubr.bf16.mxu0 0
        %3297 = vmatmul.mubr.bf16.gmra.mrb[0].mxu0 %v3179
        %v3298 = vpop.f32.mrb[0].mxu0
        %v3299 = vadd.f32 0.0, %v3298
        %v3300 = vpop.f32.mrb[0].mxu0
        %v3301 = vpop.f32.mrb[0].mxu0
        %v3302 = vadd.f32 0.0, %v3301
        %v3303 = vpop.f32.mrb[0].mxu0
        %3304 = vmatprep.mubr.bf16.mxu0 0
        %3305 = vmatmul.mubr.bf16.gmra.mrb[0].mxu0 %v3182
        %v3306 = vpop.f32.mrb[0].mxu0
        %v3307 = vadd.f32 0.0, %v3306
        %v3308 = vpop.f32.mrb[0].mxu0
        %v3309 = vpop.f32.mrb[0].mxu0
        %v3310 = vadd.f32 0.0, %v3309
        %v3311 = vpop.f32.mrb[0].mxu0
        %3312 = vmatprep.mubr.bf16.mxu0 0
        %3313 = vmatmul.mubr.bf16.gmra.mrb[0].mxu0 %v3185
        %v3314 = vpop.f32.mrb[0].mxu0
        %v3315 = vadd.f32 0.0, %v3314
        %v3316 = vpop.f32.mrb[0].mxu0
        %v3317 = vpop.f32.mrb[0].mxu0
        %v3318 = vadd.f32 0.0, %v3317
        %v3319 = vpop.f32.mrb[0].mxu0
        %3320 = vmatprep.mubr.bf16.mxu0 0
        %3321 = vmatmul.mubr.bf16.gmra.mrb[0].mxu0 %v3188
        %v3322 = vpop.f32.mrb[0].mxu0
        %v3323 = vadd.f32 0.0, %v3322
        %v3324 = vpop.f32.mrb[0].mxu0
        %v3325 = vpop.f32.mrb[0].mxu0
        %v3326 = vadd.f32 0.0, %v3325
        %v3327 = vpop.f32.mrb[0].mxu0
        %3328 = vmatprep.mubr.bf16.mxu0 0
        %3329 = vmatmul.mubr.bf16.gmra.mrb[0].mxu0 %v3191
        %v3330 = vpop.f32.mrb[0].mxu0
        %v3331 = vadd.f32 0.0, %v3330
        %v3332 = vpop.f32.mrb[0].mxu0
        %v3333 = vpop.f32.mrb[0].mxu0
        %v3334 = vadd.f32 0.0, %v3333
        %v3335 = vpop.f32.mrb[0].mxu0
        %3336 = vmatprep.mubr.bf16.mxu0 0
        %3337 = vmatmul.mubr.bf16.gmra.mrb[0].mxu0 %v3194
        %v3338 = vpop.f32.mrb[0].mxu0
        %v3339 = vadd.f32 0.0, %v3338
        %v3340 = vpop.f32.mrb[0].mxu0
        %v3341 = vpop.f32.mrb[0].mxu0
        %v3342 = vadd.f32 0.0, %v3341
        %v3343 = vpop.f32.mrb[0].mxu0
        %3344 = vmatprep.mubr.bf16.mxu0 0
        %3345 = vmatmul.mubr.bf16.gmra.mrb[0].mxu0 %v3197
        %v3346 = vpop.f32.mrb[0].mxu0
        %v3347 = vadd.f32 0.0, %v3346
        %v3348 = vpop.f32.mrb[0].mxu0
        %v3349 = vpop.f32.mrb[0].mxu0
        %v3350 = vadd.f32 0.0, %v3349
        %v3351 = vpop.f32.mrb[0].mxu0
        %3352 = vmatprep.mubr.bf16.mxu0 0
        %3353 = vmatmul.mubr.bf16.gmra.mrb[0].mxu0 %v3200
        %v3354 = vpop.f32.mrb[0].mxu0
        %v3355 = vadd.f32 0.0, %v3354
        %v3356 = vpop.f32.mrb[0].mxu0
        %v3357 = vpop.f32.mrb[0].mxu0
        %v3358 = vadd.f32 0.0, %v3357
        %v3359 = vpop.f32.mrb[0].mxu0
        %3360 = vmatprep.mubr.bf16.mxu0 0
        %3361 = vmatmul.mubr.bf16.gmra.mrb[0].mxu0 %v3203
        %v3362 = vpop.f32.mrb[0].mxu0
        %v3363 = vadd.f32 0.0, %v3362
        %v3364 = vpop.f32.mrb[0].mxu0
        %v3365 = vpop.f32.mrb[0].mxu0
        %v3366 = vadd.f32 0.0, %v3365
        %v3367 = vpop.f32.mrb[0].mxu0
        %3368 = vdwg.mxu0
        %v3369 = vld [vmem:[#allocation4] sm:$0xff]
        %v3370 = vld [vmem:[#allocation4 + $0x8] sm:$0xff]
        %v3371 = vld [vmem:[#allocation4 + $0x10] sm:$0xff]
        %v3372 = vld [vmem:[#allocation4 + $0x18] sm:$0xff]
        %v3373 = vld [vmem:[#allocation4 + $0x20] sm:$0xff]
        %v3374 = vld [vmem:[#allocation4 + $0x28] sm:$0xff]
        %v3375 = vld [vmem:[#allocation4 + $0x30] sm:$0xff]
        %v3376 = vld [vmem:[#allocation4 + $0x38] sm:$0xff]
        %v3377 = vld [vmem:[#allocation4 + $0x40] sm:$0xff]
        %v3378 = vld [vmem:[#allocation4 + $0x48] sm:$0xff]
        %v3379 = vld [vmem:[#allocation4 + $0x50] sm:$0xff]
        %v3380 = vld [vmem:[#allocation4 + $0x58] sm:$0xff]
        %v3381 = vld [vmem:[#allocation4 + $0x60] sm:$0xff]
        %v3382 = vld [vmem:[#allocation4 + $0x68] sm:$0xff]
        %v3383 = vld [vmem:[#allocation4 + $0x70] sm:$0xff]
        %v3384 = vld [vmem:[#allocation4 + $0x78] sm:$0xff]
        %v3385 = vld [vmem:[#allocation4 + $0x80] sm:$0xff]
        %v3386 = vld [vmem:[#allocation4 + $0x88] sm:$0xff]
        %v3387 = vld [vmem:[#allocation4 + $0x90] sm:$0xff]
        %v3388 = vld [vmem:[#allocation4 + $0x98] sm:$0xff]
        %v3389 = vld [vmem:[#allocation4 + $0xa0] sm:$0xff]
        %v3390 = vld [vmem:[#allocation4 + $0xa8] sm:$0xff]
        %v3391 = vld [vmem:[#allocation4 + $0xb0] sm:$0xff]
        %v3392 = vld [vmem:[#allocation4 + $0xb8] sm:$0xff]
        %v3393 = vld [vmem:[#allocation4 + $0xc0] sm:$0xff]
        %v3394 = vld [vmem:[#allocation4 + $0xc8] sm:$0xff]
        %v3395 = vld [vmem:[#allocation4 + $0xd0] sm:$0xff]
        %v3396 = vld [vmem:[#allocation4 + $0xd8] sm:$0xff]
        %v3397 = vld [vmem:[#allocation4 + $0xe0] sm:$0xff]
        %v3398 = vld [vmem:[#allocation4 + $0xe8] sm:$0xff]
        %v3399 = vld [vmem:[#allocation4 + $0xf0] sm:$0xff]
        %v3400 = vld [vmem:[#allocation4 + $0xf8] sm:$0xff]
        %v3401 = vadd.f32 %v3369, %v3243
        %v3402 = vadd.f32 %v3370, %v3246
        %v3403 = vadd.f32 %v3371, %v3251
        %v3404 = vadd.f32 %v3372, %v3254
        %v3405 = vadd.f32 %v3373, %v3259
        %v3406 = vadd.f32 %v3374, %v3262
        %v3407 = vadd.f32 %v3375, %v3267
        %v3408 = vadd.f32 %v3376, %v3270
        %v3409 = vadd.f32 %v3377, %v3275
        %v3410 = vadd.f32 %v3378, %v3278
        %v3411 = vadd.f32 %v3379, %v3283
        %v3412 = vadd.f32 %v3380, %v3286
        %v3413 = vadd.f32 %v3381, %v3291
        %v3414 = vadd.f32 %v3382, %v3294
        %v3415 = vadd.f32 %v3383, %v3299
        %v3416 = vadd.f32 %v3384, %v3302
        %v3417 = vadd.f32 %v3385, %v3307
        %v3418 = vadd.f32 %v3386, %v3310
        %v3419 = vadd.f32 %v3387, %v3315
        %v3420 = vadd.f32 %v3388, %v3318
        %v3421 = vadd.f32 %v3389, %v3323
        %v3422 = vadd.f32 %v3390, %v3326
        %v3423 = vadd.f32 %v3391, %v3331
        %v3424 = vadd.f32 %v3392, %v3334
        %v3425 = vadd.f32 %v3393, %v3339
        %v3426 = vadd.f32 %v3394, %v3342
        %v3427 = vadd.f32 %v3395, %v3347
        %v3428 = vadd.f32 %v3396, %v3350
        %v3429 = vadd.f32 %v3397, %v3355
        %v3430 = vadd.f32 %v3398, %v3358
        %v3431 = vadd.f32 %v3399, %v3363
        %v3432 = vadd.f32 %v3400, %v3366
        %3433 = vst [vmem:[#allocation4] sm:$0xff] %v3401
        %3434 = vst [vmem:[#allocation4 + $0x8] sm:$0xff] %v3402
        %3435 = vst [vmem:[#allocation4 + $0x10] sm:$0xff] %v3403
        %3436 = vst [vmem:[#allocation4 + $0x18] sm:$0xff] %v3404
        %3437 = vst [vmem:[#allocation4 + $0x20] sm:$0xff] %v3405
        %3438 = vst [vmem:[#allocation4 + $0x28] sm:$0xff] %v3406
        %3439 = vst [vmem:[#allocation4 + $0x30] sm:$0xff] %v3407
        %3440 = vst [vmem:[#allocation4 + $0x38] sm:$0xff] %v3408
        %3441 = vst [vmem:[#allocation4 + $0x40] sm:$0xff] %v3409
        %3442 = vst [vmem:[#allocation4 + $0x48] sm:$0xff] %v3410
        %3443 = vst [vmem:[#allocation4 + $0x50] sm:$0xff] %v3411
        %3444 = vst [vmem:[#allocation4 + $0x58] sm:$0xff] %v3412
        %3445 = vst [vmem:[#allocation4 + $0x60] sm:$0xff] %v3413
        %3446 = vst [vmem:[#allocation4 + $0x68] sm:$0xff] %v3414
        %3447 = vst [vmem:[#allocation4 + $0x70] sm:$0xff] %v3415
        %3448 = vst [vmem:[#allocation4 + $0x78] sm:$0xff] %v3416
        %3449 = vst [vmem:[#allocation4 + $0x80] sm:$0xff] %v3417
        %3450 = vst [vmem:[#allocation4 + $0x88] sm:$0xff] %v3418
        %3451 = vst [vmem:[#allocation4 + $0x90] sm:$0xff] %v3419
        %3452 = vst [vmem:[#allocation4 + $0x98] sm:$0xff] %v3420
        %3453 = vst [vmem:[#allocation4 + $0xa0] sm:$0xff] %v3421
        %3454 = vst [vmem:[#allocation4 + $0xa8] sm:$0xff] %v3422
        %3455 = vst [vmem:[#allocation4 + $0xb0] sm:$0xff] %v3423
        %3456 = vst [vmem:[#allocation4 + $0xb8] sm:$0xff] %v3424
        %3457 = vst [vmem:[#allocation4 + $0xc0] sm:$0xff] %v3425
        %3458 = vst [vmem:[#allocation4 + $0xc8] sm:$0xff] %v3426
        %3459 = vst [vmem:[#allocation4 + $0xd0] sm:$0xff] %v3427
        %3460 = vst [vmem:[#allocation4 + $0xd8] sm:$0xff] %v3428
        %3461 = vst [vmem:[#allocation4 + $0xe0] sm:$0xff] %v3429
        %3462 = vst [vmem:[#allocation4 + $0xe8] sm:$0xff] %v3430
        %3463 = vst [vmem:[#allocation4 + $0xf0] sm:$0xff] %v3431
        %3464 = vst [vmem:[#allocation4 + $0xf8] sm:$0xff] %v3432
        %v3465 = vld [vmem:[#allocation4] sm:$0xff]
        %v3466 = vld [vmem:[#allocation4 + $0x8] sm:$0xff]
        %v3467 = vld [vmem:[#allocation4 + $0x10] sm:$0xff]
        %v3468 = vld [vmem:[#allocation4 + $0x18] sm:$0xff]
        %v3469 = vld [vmem:[#allocation4 + $0x20] sm:$0xff]
        %v3470 = vld [vmem:[#allocation4 + $0x28] sm:$0xff]
        %v3471 = vld [vmem:[#allocation4 + $0x30] sm:$0xff]
        %v3472 = vld [vmem:[#allocation4 + $0x38] sm:$0xff]
        %v3473 = vld [vmem:[#allocation4 + $0x40] sm:$0xff]
        %v3474 = vld [vmem:[#allocation4 + $0x48] sm:$0xff]
        %v3475 = vld [vmem:[#allocation4 + $0x50] sm:$0xff]
        %v3476 = vld [vmem:[#allocation4 + $0x58] sm:$0xff]
        %v3477 = vld [vmem:[#allocation4 + $0x60] sm:$0xff]
        %v3478 = vld [vmem:[#allocation4 + $0x68] sm:$0xff]
        %v3479 = vld [vmem:[#allocation4 + $0x70] sm:$0xff]
        %v3480 = vld [vmem:[#allocation4 + $0x78] sm:$0xff]
        %v3481 = vld [vmem:[#allocation4 + $0x80] sm:$0xff]
        %v3482 = vld [vmem:[#allocation4 + $0x88] sm:$0xff]
        %v3483 = vld [vmem:[#allocation4 + $0x90] sm:$0xff]
        %v3484 = vld [vmem:[#allocation4 + $0x98] sm:$0xff]
        %v3485 = vld [vmem:[#allocation4 + $0xa0] sm:$0xff]
        %v3486 = vld [vmem:[#allocation4 + $0xa8] sm:$0xff]
        %v3487 = vld [vmem:[#allocation4 + $0xb0] sm:$0xff]
        %v3488 = vld [vmem:[#allocation4 + $0xb8] sm:$0xff]
        %v3489 = vld [vmem:[#allocation4 + $0xc0] sm:$0xff]
        %v3490 = vld [vmem:[#allocation4 + $0xc8] sm:$0xff]
        %v3491 = vld [vmem:[#allocation4 + $0xd0] sm:$0xff]
        %v3492 = vld [vmem:[#allocation4 + $0xd8] sm:$0xff]
        %v3493 = vld [vmem:[#allocation4 + $0xe0] sm:$0xff]
        %v3494 = vld [vmem:[#allocation4 + $0xe8] sm:$0xff]
        %v3495 = vld [vmem:[#allocation4 + $0xf0] sm:$0xff]
        %v3496 = vld [vmem:[#allocation4 + $0xf8] sm:$0xff]
        %v3497 = vld [vmem:[%s2] sm:$0x1]
        %v3499 = vlaneseq
        %v3500 = vshrl.u32 %v3499, 7
        %v3501 = vsub.s32 0, %v3500
        %v3502 = vrot.slane %v3497, %v3501
        %v3504 = vmul.f32 %v3465, %v3502
        %v3505 = vmul.f32 %v3466, %v3502
        %v3506 = vmul.f32 %v3467, %v3502
        %v3507 = vmul.f32 %v3468, %v3502
        %v3508 = vmul.f32 %v3469, %v3502
        %v3509 = vmul.f32 %v3470, %v3502
        %v3510 = vmul.f32 %v3471, %v3502
        %v3511 = vmul.f32 %v3472, %v3502
        %v3512 = vmul.f32 %v3473, %v3502
        %v3513 = vmul.f32 %v3474, %v3502
        %v3514 = vmul.f32 %v3475, %v3502
        %v3515 = vmul.f32 %v3476, %v3502
        %v3516 = vmul.f32 %v3477, %v3502
        %v3517 = vmul.f32 %v3478, %v3502
        %v3518 = vmul.f32 %v3479, %v3502
        %v3519 = vmul.f32 %v3480, %v3502
        %v3520 = vmul.f32 %v3481, %v3502
        %v3521 = vmul.f32 %v3482, %v3502
        %v3522 = vmul.f32 %v3483, %v3502
        %v3523 = vmul.f32 %v3484, %v3502
        %v3524 = vmul.f32 %v3485, %v3502
        %v3525 = vmul.f32 %v3486, %v3502
        %v3526 = vmul.f32 %v3487, %v3502
        %v3527 = vmul.f32 %v3488, %v3502
        %v3528 = vmul.f32 %v3489, %v3502
        %v3529 = vmul.f32 %v3490, %v3502
        %v3530 = vmul.f32 %v3491, %v3502
        %v3531 = vmul.f32 %v3492, %v3502
        %v3532 = vmul.f32 %v3493, %v3502
        %v3533 = vmul.f32 %v3494, %v3502
        %v3534 = vmul.f32 %v3495, %v3502
        %v3535 = vmul.f32 %v3496, %v3502
        %v3536 = vld [vmem:[%s3] sm:$0x1]
        %v3538 = vlaneseq
        %v3539 = vshrl.u32 %v3538, 7
        %v3540 = vsub.s32 0, %v3539
        %v3541 = vrot.slane %v3536, %v3540
        %v3543 = vadd.f32 %v3504, %v3541
        %v3544 = vadd.f32 %v3505, %v3541
        %v3545 = vadd.f32 %v3506, %v3541
        %v3546 = vadd.f32 %v3507, %v3541
        %v3547 = vadd.f32 %v3508, %v3541
        %v3548 = vadd.f32 %v3509, %v3541
        %v3549 = vadd.f32 %v3510, %v3541
        %v3550 = vadd.f32 %v3511, %v3541
        %v3551 = vadd.f32 %v3512, %v3541
        %v3552 = vadd.f32 %v3513, %v3541
        %v3553 = vadd.f32 %v3514, %v3541
        %v3554 = vadd.f32 %v3515, %v3541
        %v3555 = vadd.f32 %v3516, %v3541
        %v3556 = vadd.f32 %v3517, %v3541
        %v3557 = vadd.f32 %v3518, %v3541
        %v3558 = vadd.f32 %v3519, %v3541
        %v3559 = vadd.f32 %v3520, %v3541
        %v3560 = vadd.f32 %v3521, %v3541
        %v3561 = vadd.f32 %v3522, %v3541
        %v3562 = vadd.f32 %v3523, %v3541
        %v3563 = vadd.f32 %v3524, %v3541
        %v3564 = vadd.f32 %v3525, %v3541
        %v3565 = vadd.f32 %v3526, %v3541
        %v3566 = vadd.f32 %v3527, %v3541
        %v3567 = vadd.f32 %v3528, %v3541
        %v3568 = vadd.f32 %v3529, %v3541
        %v3569 = vadd.f32 %v3530, %v3541
        %v3570 = vadd.f32 %v3531, %v3541
        %v3571 = vadd.f32 %v3532, %v3541
        %v3572 = vadd.f32 %v3533, %v3541
        %v3573 = vadd.f32 %v3534, %v3541
        %v3574 = vadd.f32 %v3535, %v3541
        %v3575 = vmax.f32 %v3543, 0.0
        %v3576 = vmax.f32 %v3544, 0.0
        %v3577 = vmax.f32 %v3545, 0.0
        %v3578 = vmax.f32 %v3546, 0.0
        %v3579 = vmax.f32 %v3547, 0.0
        %v3580 = vmax.f32 %v3548, 0.0
        %v3581 = vmax.f32 %v3549, 0.0
        %v3582 = vmax.f32 %v3550, 0.0
        %v3583 = vmax.f32 %v3551, 0.0
        %v3584 = vmax.f32 %v3552, 0.0
        %v3585 = vmax.f32 %v3553, 0.0
        %v3586 = vmax.f32 %v3554, 0.0
        %v3587 = vmax.f32 %v3555, 0.0
        %v3588 = vmax.f32 %v3556, 0.0
        %v3589 = vmax.f32 %v3557, 0.0
        %v3590 = vmax.f32 %v3558, 0.0
        %v3591 = vmax.f32 %v3559, 0.0
        %v3592 = vmax.f32 %v3560, 0.0
        %v3593 = vmax.f32 %v3561, 0.0
        %v3594 = vmax.f32 %v3562, 0.0
        %v3595 = vmax.f32 %v3563, 0.0
        %v3596 = vmax.f32 %v3564, 0.0
        %v3597 = vmax.f32 %v3565, 0.0
        %v3598 = vmax.f32 %v3566, 0.0
        %v3599 = vmax.f32 %v3567, 0.0
        %v3600 = vmax.f32 %v3568, 0.0
        %v3601 = vmax.f32 %v3569, 0.0
        %v3602 = vmax.f32 %v3570, 0.0
        %v3603 = vmax.f32 %v3571, 0.0
        %v3604 = vmax.f32 %v3572, 0.0
        %v3605 = vmax.f32 %v3573, 0.0
        %v3606 = vmax.f32 %v3574, 0.0
        %v3607 = vpack.c.bf16 %v3576, %v3575
        %v3608 = vpack.c.bf16 %v3578, %v3577
        %v3609 = vpack.c.bf16 %v3580, %v3579
        %v3610 = vpack.c.bf16 %v3582, %v3581
        %v3611 = vpack.c.bf16 %v3584, %v3583
        %v3612 = vpack.c.bf16 %v3586, %v3585
        %v3613 = vpack.c.bf16 %v3588, %v3587
        %v3614 = vpack.c.bf16 %v3590, %v3589
        %v3615 = vpack.c.bf16 %v3592, %v3591
        %v3616 = vpack.c.bf16 %v3594, %v3593
        %v3617 = vpack.c.bf16 %v3596, %v3595
        %v3618 = vpack.c.bf16 %v3598, %v3597
        %v3619 = vpack.c.bf16 %v3600, %v3599
        %v3620 = vpack.c.bf16 %v3602, %v3601
        %v3621 = vpack.c.bf16 %v3604, %v3603
        %v3622 = vpack.c.bf16 %v3606, %v3605
        %3623 = vst [vmem:[%s396 + $0x8] sm:$0xff] %v3607
        %3624 = vst [vmem:[%s396 + $0x20] sm:$0xff] %v3608
        %3625 = vst [vmem:[%s396 + $0x38] sm:$0xff] %v3609
        %3626 = vst [vmem:[%s396 + $0x50] sm:$0xff] %v3610
        %3627 = vst [vmem:[%s396 + $0x68] sm:$0xff] %v3611
        %3628 = vst [vmem:[%s396 + $0x80] sm:$0xff] %v3612
        %3629 = vst [vmem:[%s396 + $0x98] sm:$0xff] %v3613
        %3630 = vst [vmem:[%s396 + $0xb0] sm:$0xff] %v3614
        %3631 = vst [vmem:[%s396 + $0xc8] sm:$0xff] %v3615
        %3632 = vst [vmem:[%s396 + $0xe0] sm:$0xff] %v3616
        %3633 = vst [vmem:[%s396 + $0xf8] sm:$0xff] %v3617
        %3634 = vst [vmem:[%s396 + $0x110] sm:$0xff] %v3618
        %3635 = vst [vmem:[%s396 + $0x128] sm:$0xff] %v3619
        %3636 = vst [vmem:[%s396 + $0x140] sm:$0xff] %v3620
        %3637 = vst [vmem:[%s396 + $0x158] sm:$0xff] %v3621
        %3638 = vst [vmem:[%s396 + $0x170] sm:$0xff] %v3622
        %v3639 = vld [vmem:[#allocation3] sm:$0x80]
        %v3640 = vld [vmem:[#allocation3 + $0x8] sm:$0xff]
        %v3641 = vld [vmem:[#allocation3 + $0x18] sm:$0x80]
        %v3642 = vld [vmem:[#allocation3 + $0x20] sm:$0xff]
        %v3643 = vld [vmem:[#allocation3 + $0x30] sm:$0x80]
        %v3644 = vld [vmem:[#allocation3 + $0x38] sm:$0xff]
        %v3645 = vld [vmem:[#allocation3 + $0x48] sm:$0x80]
        %v3646 = vld [vmem:[#allocation3 + $0x50] sm:$0xff]
        %v3647 = vld [vmem:[#allocation3 + $0x60] sm:$0x80]
        %v3648 = vld [vmem:[#allocation3 + $0x68] sm:$0xff]
        %v3649 = vld [vmem:[#allocation3 + $0x78] sm:$0x80]
        %v3650 = vld [vmem:[#allocation3 + $0x80] sm:$0xff]
        %v3651 = vld [vmem:[#allocation3 + $0x90] sm:$0x80]
        %v3652 = vld [vmem:[#allocation3 + $0x98] sm:$0xff]
        %v3653 = vld [vmem:[#allocation3 + $0xa8] sm:$0x80]
        %v3654 = vld [vmem:[#allocation3 + $0xb0] sm:$0xff]
        %v3655 = vld [vmem:[#allocation3 + $0xc0] sm:$0x80]
        %v3656 = vld [vmem:[#allocation3 + $0xc8] sm:$0xff]
        %v3657 = vld [vmem:[#allocation3 + $0xd8] sm:$0x80]
        %v3658 = vld [vmem:[#allocation3 + $0xe0] sm:$0xff]
        %v3659 = vld [vmem:[#allocation3 + $0xf0] sm:$0x80]
        %v3660 = vld [vmem:[#allocation3 + $0xf8] sm:$0xff]
        %v3661 = vld [vmem:[#allocation3 + $0x108] sm:$0x80]
        %v3662 = vld [vmem:[#allocation3 + $0x110] sm:$0xff]
        %v3663 = vld [vmem:[#allocation3 + $0x120] sm:$0x80]
        %v3664 = vld [vmem:[#allocation3 + $0x128] sm:$0xff]
        %v3665 = vld [vmem:[#allocation3 + $0x138] sm:$0x80]
        %v3666 = vld [vmem:[#allocation3 + $0x140] sm:$0xff]
        %v3667 = vld [vmem:[#allocation3 + $0x150] sm:$0x80]
        %v3668 = vld [vmem:[#allocation3 + $0x158] sm:$0xff]
        %v3669 = vld [vmem:[#allocation3 + $0x168] sm:$0x80]
        %v3670 = vld [vmem:[#allocation3 + $0x170] sm:$0xff]
        %v3671 = vld [vmem:[#allocation3 + $0x10] sm:$0x1]
        %v3672 = vld [vmem:[#allocation3 + $0x28] sm:$0x1]
        %v3673 = vld [vmem:[#allocation3 + $0x40] sm:$0x1]
        %v3674 = vld [vmem:[#allocation3 + $0x58] sm:$0x1]
        %v3675 = vld [vmem:[#allocation3 + $0x70] sm:$0x1]
        %v3676 = vld [vmem:[#allocation3 + $0x88] sm:$0x1]
        %v3677 = vld [vmem:[#allocation3 + $0xa0] sm:$0x1]
        %v3678 = vld [vmem:[#allocation3 + $0xb8] sm:$0x1]
        %v3679 = vld [vmem:[#allocation3 + $0xd0] sm:$0x1]
        %v3680 = vld [vmem:[#allocation3 + $0xe8] sm:$0x1]
        %v3681 = vld [vmem:[#allocation3 + $0x100] sm:$0x1]
        %v3682 = vld [vmem:[#allocation3 + $0x118] sm:$0x1]
        %v3683 = vld [vmem:[#allocation3 + $0x130] sm:$0x1]
        %v3684 = vld [vmem:[#allocation3 + $0x148] sm:$0x1]
        %v3685 = vld [vmem:[#allocation3 + $0x160] sm:$0x1]
        %v3686 = vld [vmem:[#allocation3 + $0x178] sm:$0x1]
        %v3688 = vshll.u32 %v3640, 16
        %v3690 = vrot.slane %v3688, 1
        %v3691 = vshrl.u32 %v3640, 16
        %v3693 = vor.u32 %v3691, %v3690
        %v3695 = vshll.u32 %v3642, 16
        %v3697 = vrot.slane %v3695, 1
        %v3698 = vshrl.u32 %v3642, 16
        %v3700 = vor.u32 %v3698, %v3697
        %v3702 = vshll.u32 %v3644, 16
        %v3704 = vrot.slane %v3702, 1
        %v3705 = vshrl.u32 %v3644, 16
        %v3707 = vor.u32 %v3705, %v3704
        %v3709 = vshll.u32 %v3646, 16
        %v3711 = vrot.slane %v3709, 1
        %v3712 = vshrl.u32 %v3646, 16
        %v3714 = vor.u32 %v3712, %v3711
        %v3716 = vshll.u32 %v3648, 16
        %v3718 = vrot.slane %v3716, 1
        %v3719 = vshrl.u32 %v3648, 16
        %v3721 = vor.u32 %v3719, %v3718
        %v3723 = vshll.u32 %v3650, 16
        %v3725 = vrot.slane %v3723, 1
        %v3726 = vshrl.u32 %v3650, 16
        %v3728 = vor.u32 %v3726, %v3725
        %v3730 = vshll.u32 %v3652, 16
        %v3732 = vrot.slane %v3730, 1
        %v3733 = vshrl.u32 %v3652, 16
        %v3735 = vor.u32 %v3733, %v3732
        %v3737 = vshll.u32 %v3654, 16
        %v3739 = vrot.slane %v3737, 1
        %v3740 = vshrl.u32 %v3654, 16
        %v3742 = vor.u32 %v3740, %v3739
        %v3744 = vshll.u32 %v3656, 16
        %v3746 = vrot.slane %v3744, 1
        %v3747 = vshrl.u32 %v3656, 16
        %v3749 = vor.u32 %v3747, %v3746
        %v3751 = vshll.u32 %v3658, 16
        %v3753 = vrot.slane %v3751, 1
        %v3754 = vshrl.u32 %v3658, 16
        %v3756 = vor.u32 %v3754, %v3753
        %v3758 = vshll.u32 %v3660, 16
        %v3760 = vrot.slane %v3758, 1
        %v3761 = vshrl.u32 %v3660, 16
        %v3763 = vor.u32 %v3761, %v3760
        %v3765 = vshll.u32 %v3662, 16
        %v3767 = vrot.slane %v3765, 1
        %v3768 = vshrl.u32 %v3662, 16
        %v3770 = vor.u32 %v3768, %v3767
        %v3772 = vshll.u32 %v3664, 16
        %v3774 = vrot.slane %v3772, 1
        %v3775 = vshrl.u32 %v3664, 16
        %v3777 = vor.u32 %v3775, %v3774
        %v3779 = vshll.u32 %v3666, 16
        %v3781 = vrot.slane %v3779, 1
        %v3782 = vshrl.u32 %v3666, 16
        %v3784 = vor.u32 %v3782, %v3781
        %v3786 = vshll.u32 %v3668, 16
        %v3788 = vrot.slane %v3786, 1
        %v3789 = vshrl.u32 %v3668, 16
        %v3791 = vor.u32 %v3789, %v3788
        %v3793 = vshll.u32 %v3670, 16
        %v3795 = vrot.slane %v3793, 1
        %v3796 = vshrl.u32 %v3670, 16
        %v3798 = vor.u32 %v3796, %v3795
        %v3831 = vrot.slane %v3640, 1
        %v3832 = vrot.slane %v3671, 1
        %v3833 = vsel %vm817, %v3831, %v3832
        %v3834 = vrot.slane %v3642, 1
        %v3835 = vrot.slane %v3672, 1
        %v3836 = vsel %vm817, %v3834, %v3835
        %v3837 = vrot.slane %v3644, 1
        %v3838 = vrot.slane %v3673, 1
        %v3839 = vsel %vm817, %v3837, %v3838
        %v3840 = vrot.slane %v3646, 1
        %v3841 = vrot.slane %v3674, 1
        %v3842 = vsel %vm817, %v3840, %v3841
        %v3843 = vrot.slane %v3648, 1
        %v3844 = vrot.slane %v3675, 1
        %v3845 = vsel %vm817, %v3843, %v3844
        %v3846 = vrot.slane %v3650, 1
        %v3847 = vrot.slane %v3676, 1
        %v3848 = vsel %vm817, %v3846, %v3847
        %v3849 = vrot.slane %v3652, 1
        %v3850 = vrot.slane %v3677, 1
        %v3851 = vsel %vm817, %v3849, %v3850
        %v3852 = vrot.slane %v3654, 1
        %v3853 = vrot.slane %v3678, 1
        %v3854 = vsel %vm817, %v3852, %v3853
        %v3855 = vrot.slane %v3656, 1
        %v3856 = vrot.slane %v3679, 1
        %v3857 = vsel %vm817, %v3855, %v3856
        %v3858 = vrot.slane %v3658, 1
        %v3859 = vrot.slane %v3680, 1
        %v3860 = vsel %vm817, %v3858, %v3859
        %v3861 = vrot.slane %v3660, 1
        %v3862 = vrot.slane %v3681, 1
        %v3863 = vsel %vm817, %v3861, %v3862
        %v3864 = vrot.slane %v3662, 1
        %v3865 = vrot.slane %v3682, 1
        %v3866 = vsel %vm817, %v3864, %v3865
        %v3867 = vrot.slane %v3664, 1
        %v3868 = vrot.slane %v3683, 1
        %v3869 = vsel %vm817, %v3867, %v3868
        %v3870 = vrot.slane %v3666, 1
        %v3871 = vrot.slane %v3684, 1
        %v3872 = vsel %vm817, %v3870, %v3871
        %v3873 = vrot.slane %v3668, 1
        %v3874 = vrot.slane %v3685, 1
        %v3875 = vsel %vm817, %v3873, %v3874
        %v3876 = vrot.slane %v3670, 1
        %v3877 = vrot.slane %v3686, 1
        %v3878 = vsel %vm817, %v3876, %v3877
        %v3880 = vshrl.u32 %v3639, 16
        %v3882 = vrot.slane %v3880, 7
        %v3883 = vrot.slane %v3691, 7
        %v3884 = vor.u32 %v3883, %v3688
        %v3885 = vsel %vm339, %v3882, %v3884
        %v3887 = vshrl.u32 %v3690, 16
        %v3889 = vrot.slane %v3887, 7
        %v3891 = vshrl.u32 %v3693, 16
        %v3893 = vrot.slane %v3891, 7
        %v3894 = vshll.u32 %v3693, 16
        %v3896 = vor.u32 %v3893, %v3894
        %v3897 = vsel %vm339, %v3889, %v3896
        %v3899 = vshrl.u32 %v3831, 16
        %v3901 = vrot.slane %v3899, 7
        %v3903 = vshrl.u32 %v3833, 16
        %v3905 = vrot.slane %v3903, 7
        %v3906 = vshll.u32 %v3833, 16
        %v3908 = vor.u32 %v3905, %v3906
        %v3909 = vsel %vm339, %v3901, %v3908
        %v3911 = vshrl.u32 %v3641, 16
        %v3913 = vrot.slane %v3911, 7
        %v3914 = vrot.slane %v3698, 7
        %v3915 = vor.u32 %v3914, %v3695
        %v3916 = vsel %vm339, %v3913, %v3915
        %v3918 = vshrl.u32 %v3697, 16
        %v3920 = vrot.slane %v3918, 7
        %v3922 = vshrl.u32 %v3700, 16
        %v3924 = vrot.slane %v3922, 7
        %v3925 = vshll.u32 %v3700, 16
        %v3927 = vor.u32 %v3924, %v3925
        %v3928 = vsel %vm339, %v3920, %v3927
        %v3930 = vshrl.u32 %v3834, 16
        %v3932 = vrot.slane %v3930, 7
        %v3934 = vshrl.u32 %v3836, 16
        %v3936 = vrot.slane %v3934, 7
        %v3937 = vshll.u32 %v3836, 16
        %v3939 = vor.u32 %v3936, %v3937
        %v3940 = vsel %vm339, %v3932, %v3939
        %v3942 = vshrl.u32 %v3643, 16
        %v3944 = vrot.slane %v3942, 7
        %v3945 = vrot.slane %v3705, 7
        %v3946 = vor.u32 %v3945, %v3702
        %v3947 = vsel %vm339, %v3944, %v3946
        %v3949 = vshrl.u32 %v3704, 16
        %v3951 = vrot.slane %v3949, 7
        %v3953 = vshrl.u32 %v3707, 16
        %v3955 = vrot.slane %v3953, 7
        %v3956 = vshll.u32 %v3707, 16
        %v3958 = vor.u32 %v3955, %v3956
        %v3959 = vsel %vm339, %v3951, %v3958
        %v3961 = vshrl.u32 %v3837, 16
        %v3963 = vrot.slane %v3961, 7
        %v3965 = vshrl.u32 %v3839, 16
        %v3967 = vrot.slane %v3965, 7
        %v3968 = vshll.u32 %v3839, 16
        %v3970 = vor.u32 %v3967, %v3968
        %v3971 = vsel %vm339, %v3963, %v3970
        %v3973 = vshrl.u32 %v3645, 16
        %v3975 = vrot.slane %v3973, 7
        %v3976 = vrot.slane %v3712, 7
        %v3977 = vor.u32 %v3976, %v3709
        %v3978 = vsel %vm339, %v3975, %v3977
        %v3980 = vshrl.u32 %v3711, 16
        %v3982 = vrot.slane %v3980, 7
        %v3984 = vshrl.u32 %v3714, 16
        %v3986 = vrot.slane %v3984, 7
        %v3987 = vshll.u32 %v3714, 16
        %v3989 = vor.u32 %v3986, %v3987
        %v3990 = vsel %vm339, %v3982, %v3989
        %v3992 = vshrl.u32 %v3840, 16
        %v3994 = vrot.slane %v3992, 7
        %v3996 = vshrl.u32 %v3842, 16
        %v3998 = vrot.slane %v3996, 7
        %v3999 = vshll.u32 %v3842, 16
        %v4001 = vor.u32 %v3998, %v3999
        %v4002 = vsel %vm339, %v3994, %v4001
        %v4004 = vshrl.u32 %v3647, 16
        %v4006 = vrot.slane %v4004, 7
        %v4007 = vrot.slane %v3719, 7
        %v4008 = vor.u32 %v4007, %v3716
        %v4009 = vsel %vm339, %v4006, %v4008
        %v4011 = vshrl.u32 %v3718, 16
        %v4013 = vrot.slane %v4011, 7
        %v4015 = vshrl.u32 %v3721, 16
        %v4017 = vrot.slane %v4015, 7
        %v4018 = vshll.u32 %v3721, 16
        %v4020 = vor.u32 %v4017, %v4018
        %v4021 = vsel %vm339, %v4013, %v4020
        %v4023 = vshrl.u32 %v3843, 16
        %v4025 = vrot.slane %v4023, 7
        %v4027 = vshrl.u32 %v3845, 16
        %v4029 = vrot.slane %v4027, 7
        %v4030 = vshll.u32 %v3845, 16
        %v4032 = vor.u32 %v4029, %v4030
        %v4033 = vsel %vm339, %v4025, %v4032
        %v4035 = vshrl.u32 %v3649, 16
        %v4037 = vrot.slane %v4035, 7
        %v4038 = vrot.slane %v3726, 7
        %v4039 = vor.u32 %v4038, %v3723
        %v4040 = vsel %vm339, %v4037, %v4039
        %v4042 = vshrl.u32 %v3725, 16
        %v4044 = vrot.slane %v4042, 7
        %v4046 = vshrl.u32 %v3728, 16
        %v4048 = vrot.slane %v4046, 7
        %v4049 = vshll.u32 %v3728, 16
        %v4051 = vor.u32 %v4048, %v4049
        %v4052 = vsel %vm339, %v4044, %v4051
        %v4054 = vshrl.u32 %v3846, 16
        %v4056 = vrot.slane %v4054, 7
        %v4058 = vshrl.u32 %v3848, 16
        %v4060 = vrot.slane %v4058, 7
        %v4061 = vshll.u32 %v3848, 16
        %v4063 = vor.u32 %v4060, %v4061
        %v4064 = vsel %vm339, %v4056, %v4063
        %v4066 = vshrl.u32 %v3651, 16
        %v4068 = vrot.slane %v4066, 7
        %v4069 = vrot.slane %v3733, 7
        %v4070 = vor.u32 %v4069, %v3730
        %v4071 = vsel %vm339, %v4068, %v4070
        %v4073 = vshrl.u32 %v3732, 16
        %v4075 = vrot.slane %v4073, 7
        %v4077 = vshrl.u32 %v3735, 16
        %v4079 = vrot.slane %v4077, 7
        %v4080 = vshll.u32 %v3735, 16
        %v4082 = vor.u32 %v4079, %v4080
        %v4083 = vsel %vm339, %v4075, %v4082
        %v4085 = vshrl.u32 %v3849, 16
        %v4087 = vrot.slane %v4085, 7
        %v4089 = vshrl.u32 %v3851, 16
        %v4091 = vrot.slane %v4089, 7
        %v4092 = vshll.u32 %v3851, 16
        %v4094 = vor.u32 %v4091, %v4092
        %v4095 = vsel %vm339, %v4087, %v4094
        %v4097 = vshrl.u32 %v3653, 16
        %v4099 = vrot.slane %v4097, 7
        %v4100 = vrot.slane %v3740, 7
        %v4101 = vor.u32 %v4100, %v3737
        %v4102 = vsel %vm339, %v4099, %v4101
        %v4104 = vshrl.u32 %v3739, 16
        %v4106 = vrot.slane %v4104, 7
        %v4108 = vshrl.u32 %v3742, 16
        %v4110 = vrot.slane %v4108, 7
        %v4111 = vshll.u32 %v3742, 16
        %v4113 = vor.u32 %v4110, %v4111
        %v4114 = vsel %vm339, %v4106, %v4113
        %v4116 = vshrl.u32 %v3852, 16
        %v4118 = vrot.slane %v4116, 7
        %v4120 = vshrl.u32 %v3854, 16
        %v4122 = vrot.slane %v4120, 7
        %v4123 = vshll.u32 %v3854, 16
        %v4125 = vor.u32 %v4122, %v4123
        %v4126 = vsel %vm339, %v4118, %v4125
        %v4128 = vshrl.u32 %v3655, 16
        %v4130 = vrot.slane %v4128, 7
        %v4131 = vrot.slane %v3747, 7
        %v4132 = vor.u32 %v4131, %v3744
        %v4133 = vsel %vm339, %v4130, %v4132
        %v4135 = vshrl.u32 %v3746, 16
        %v4137 = vrot.slane %v4135, 7
        %v4139 = vshrl.u32 %v3749, 16
        %v4141 = vrot.slane %v4139, 7
        %v4142 = vshll.u32 %v3749, 16
        %v4144 = vor.u32 %v4141, %v4142
        %v4145 = vsel %vm339, %v4137, %v4144
        %v4147 = vshrl.u32 %v3855, 16
        %v4149 = vrot.slane %v4147, 7
        %v4151 = vshrl.u32 %v3857, 16
        %v4153 = vrot.slane %v4151, 7
        %v4154 = vshll.u32 %v3857, 16
        %v4156 = vor.u32 %v4153, %v4154
        %v4157 = vsel %vm339, %v4149, %v4156
        %v4159 = vshrl.u32 %v3657, 16
        %v4161 = vrot.slane %v4159, 7
        %v4162 = vrot.slane %v3754, 7
        %v4163 = vor.u32 %v4162, %v3751
        %v4164 = vsel %vm339, %v4161, %v4163
        %v4166 = vshrl.u32 %v3753, 16
        %v4168 = vrot.slane %v4166, 7
        %v4170 = vshrl.u32 %v3756, 16
        %v4172 = vrot.slane %v4170, 7
        %v4173 = vshll.u32 %v3756, 16
        %v4175 = vor.u32 %v4172, %v4173
        %v4176 = vsel %vm339, %v4168, %v4175
        %v4178 = vshrl.u32 %v3858, 16
        %v4180 = vrot.slane %v4178, 7
        %v4182 = vshrl.u32 %v3860, 16
        %v4184 = vrot.slane %v4182, 7
        %v4185 = vshll.u32 %v3860, 16
        %v4187 = vor.u32 %v4184, %v4185
        %v4188 = vsel %vm339, %v4180, %v4187
        %v4190 = vshrl.u32 %v3659, 16
        %v4192 = vrot.slane %v4190, 7
        %v4193 = vrot.slane %v3761, 7
        %v4194 = vor.u32 %v4193, %v3758
        %v4195 = vsel %vm339, %v4192, %v4194
        %v4197 = vshrl.u32 %v3760, 16
        %v4199 = vrot.slane %v4197, 7
        %v4201 = vshrl.u32 %v3763, 16
        %v4203 = vrot.slane %v4201, 7
        %v4204 = vshll.u32 %v3763, 16
        %v4206 = vor.u32 %v4203, %v4204
        %v4207 = vsel %vm339, %v4199, %v4206
        %v4209 = vshrl.u32 %v3861, 16
        %v4211 = vrot.slane %v4209, 7
        %v4213 = vshrl.u32 %v3863, 16
        %v4215 = vrot.slane %v4213, 7
        %v4216 = vshll.u32 %v3863, 16
        %v4218 = vor.u32 %v4215, %v4216
        %v4219 = vsel %vm339, %v4211, %v4218
        %v4221 = vshrl.u32 %v3661, 16
        %v4223 = vrot.slane %v4221, 7
        %v4224 = vrot.slane %v3768, 7
        %v4225 = vor.u32 %v4224, %v3765
        %v4226 = vsel %vm339, %v4223, %v4225
        %v4228 = vshrl.u32 %v3767, 16
        %v4230 = vrot.slane %v4228, 7
        %v4232 = vshrl.u32 %v3770, 16
        %v4234 = vrot.slane %v4232, 7
        %v4235 = vshll.u32 %v3770, 16
        %v4237 = vor.u32 %v4234, %v4235
        %v4238 = vsel %vm339, %v4230, %v4237
        %v4240 = vshrl.u32 %v3864, 16
        %v4242 = vrot.slane %v4240, 7
        %v4244 = vshrl.u32 %v3866, 16
        %v4246 = vrot.slane %v4244, 7
        %v4247 = vshll.u32 %v3866, 16
        %v4249 = vor.u32 %v4246, %v4247
        %v4250 = vsel %vm339, %v4242, %v4249
        %v4252 = vshrl.u32 %v3663, 16
        %v4254 = vrot.slane %v4252, 7
        %v4255 = vrot.slane %v3775, 7
        %v4256 = vor.u32 %v4255, %v3772
        %v4257 = vsel %vm339, %v4254, %v4256
        %v4259 = vshrl.u32 %v3774, 16
        %v4261 = vrot.slane %v4259, 7
        %v4263 = vshrl.u32 %v3777, 16
        %v4265 = vrot.slane %v4263, 7
        %v4266 = vshll.u32 %v3777, 16
        %v4268 = vor.u32 %v4265, %v4266
        %v4269 = vsel %vm339, %v4261, %v4268
        %v4271 = vshrl.u32 %v3867, 16
        %v4273 = vrot.slane %v4271, 7
        %v4275 = vshrl.u32 %v3869, 16
        %v4277 = vrot.slane %v4275, 7
        %v4278 = vshll.u32 %v3869, 16
        %v4280 = vor.u32 %v4277, %v4278
        %v4281 = vsel %vm339, %v4273, %v4280
        %v4283 = vshrl.u32 %v3665, 16
        %v4285 = vrot.slane %v4283, 7
        %v4286 = vrot.slane %v3782, 7
        %v4287 = vor.u32 %v4286, %v3779
        %v4288 = vsel %vm339, %v4285, %v4287
        %v4290 = vshrl.u32 %v3781, 16
        %v4292 = vrot.slane %v4290, 7
        %v4294 = vshrl.u32 %v3784, 16
        %v4296 = vrot.slane %v4294, 7
        %v4297 = vshll.u32 %v3784, 16
        %v4299 = vor.u32 %v4296, %v4297
        %v4300 = vsel %vm339, %v4292, %v4299
        %v4302 = vshrl.u32 %v3870, 16
        %v4304 = vrot.slane %v4302, 7
        %v4306 = vshrl.u32 %v3872, 16
        %v4308 = vrot.slane %v4306, 7
        %v4309 = vshll.u32 %v3872, 16
        %v4311 = vor.u32 %v4308, %v4309
        %v4312 = vsel %vm339, %v4304, %v4311
        %v4314 = vshrl.u32 %v3667, 16
        %v4316 = vrot.slane %v4314, 7
        %v4317 = vrot.slane %v3789, 7
        %v4318 = vor.u32 %v4317, %v3786
        %v4319 = vsel %vm339, %v4316, %v4318
        %v4321 = vshrl.u32 %v3788, 16
        %v4323 = vrot.slane %v4321, 7
        %v4325 = vshrl.u32 %v3791, 16
        %v4327 = vrot.slane %v4325, 7
        %v4328 = vshll.u32 %v3791, 16
        %v4330 = vor.u32 %v4327, %v4328
        %v4331 = vsel %vm339, %v4323, %v4330
        %v4333 = vshrl.u32 %v3873, 16
        %v4335 = vrot.slane %v4333, 7
        %v4337 = vshrl.u32 %v3875, 16
        %v4339 = vrot.slane %v4337, 7
        %v4340 = vshll.u32 %v3875, 16
        %v4342 = vor.u32 %v4339, %v4340
        %v4343 = vsel %vm339, %v4335, %v4342
        %v4345 = vshrl.u32 %v3669, 16
        %v4347 = vrot.slane %v4345, 7
        %v4348 = vrot.slane %v3796, 7
        %v4349 = vor.u32 %v4348, %v3793
        %v4350 = vsel %vm339, %v4347, %v4349
        %v4352 = vshrl.u32 %v3795, 16
        %v4354 = vrot.slane %v4352, 7
        %v4356 = vshrl.u32 %v3798, 16
        %v4358 = vrot.slane %v4356, 7
        %v4359 = vshll.u32 %v3798, 16
        %v4361 = vor.u32 %v4358, %v4359
        %v4362 = vsel %vm339, %v4354, %v4361
        %v4364 = vshrl.u32 %v3876, 16
        %v4366 = vrot.slane %v4364, 7
        %v4368 = vshrl.u32 %v3878, 16
        %v4370 = vrot.slane %v4368, 7
        %v4371 = vshll.u32 %v3878, 16
        %v4373 = vor.u32 %v4370, %v4371
        %v4374 = vsel %vm339, %v4366, %v4373
        %v4423 = vld [vmem:[%s4] sm:$0xf]
        %v4424 = vld [vmem:[%s4 + $0x4] sm:$0xf]
        %v4425 = vld [vmem:[%s4 + $0x8] sm:$0xf]
        %v4426 = vld [vmem:[%s4 + $0xc] sm:$0xf]
        %v4427 = vld [vmem:[%s4 + $0x10] sm:$0xf]
        %v4428 = vld [vmem:[%s4 + $0x14] sm:$0xf]
        %v4429 = vld [vmem:[%s4 + $0x18] sm:$0xf]
        %v4430 = vld [vmem:[%s4 + $0x1c] sm:$0xf]
        %v4431 = vld [vmem:[%s4 + $0x20] sm:$0xf]
        %v4432 = vld [vmem:[%s4 + $0x24] sm:$0xf]
        %v4433 = vld [vmem:[%s4 + $0x28] sm:$0xf]
        %v4434 = vld [vmem:[%s4 + $0x2c] sm:$0xf]
        %v4435 = vld [vmem:[%s4 + $0x30] sm:$0xf]
        %v4436 = vld [vmem:[%s4 + $0x34] sm:$0xf]
        %v4437 = vld [vmem:[%s4 + $0x38] sm:$0xf]
        %v4438 = vld [vmem:[%s4 + $0x3c] sm:$0xf]
        %v4439 = vld [vmem:[%s4 + $0x40] sm:$0xf]
        %v4440 = vld [vmem:[%s4 + $0x44] sm:$0xf]
        %v4441 = vld [vmem:[%s4 + $0x48] sm:$0xf]
        %v4442 = vld [vmem:[%s4 + $0x4c] sm:$0xf]
        %v4443 = vld [vmem:[%s4 + $0x50] sm:$0xf]
        %v4444 = vld [vmem:[%s4 + $0x54] sm:$0xf]
        %v4445 = vld [vmem:[%s4 + $0x58] sm:$0xf]
        %v4446 = vld [vmem:[%s4 + $0x5c] sm:$0xf]
        %v4447 = vld [vmem:[%s4 + $0x60] sm:$0xf]
        %v4448 = vld [vmem:[%s4 + $0x64] sm:$0xf]
        %v4449 = vld [vmem:[%s4 + $0x68] sm:$0xf]
        %v4450 = vld [vmem:[%s4 + $0x6c] sm:$0xf]
        %v4451 = vld [vmem:[%s4 + $0x70] sm:$0xf]
        %v4452 = vld [vmem:[%s4 + $0x74] sm:$0xf]
        %v4453 = vld [vmem:[%s4 + $0x78] sm:$0xf]
        %v4454 = vld [vmem:[%s4 + $0x7c] sm:$0xf]
        %v4455 = vld [vmem:[%s4 + $0x80] sm:$0xf]
        %v4456 = vld [vmem:[%s4 + $0x84] sm:$0xf]
        %v4457 = vld [vmem:[%s4 + $0x88] sm:$0xf]
        %v4458 = vld [vmem:[%s4 + $0x8c] sm:$0xf]
        %v4459 = vld [vmem:[%s4 + $0x90] sm:$0xf]
        %v4460 = vld [vmem:[%s4 + $0x94] sm:$0xf]
        %v4461 = vld [vmem:[%s4 + $0x98] sm:$0xf]
        %v4462 = vld [vmem:[%s4 + $0x9c] sm:$0xf]
        %v4463 = vld [vmem:[%s4 + $0xa0] sm:$0xf]
        %v4464 = vld [vmem:[%s4 + $0xa4] sm:$0xf]
        %v4465 = vld [vmem:[%s4 + $0xa8] sm:$0xf]
        %v4466 = vld [vmem:[%s4 + $0xac] sm:$0xf]
        %v4467 = vld [vmem:[%s4 + $0xb0] sm:$0xf]
        %v4468 = vld [vmem:[%s4 + $0xb4] sm:$0xf]
        %v4469 = vld [vmem:[%s4 + $0xb8] sm:$0xf]
        %v4470 = vld [vmem:[%s4 + $0xbc] sm:$0xf]
        %v4519 = vunpack.c.l.b16 %v4423
        %v4520 = vunpack.c.l.b16 %v4424
        %v4521 = vunpack.c.l.b16 %v4425
        %v4522 = vunpack.c.l.b16 %v4426
        %v4523 = vunpack.c.l.b16 %v4427
        %v4524 = vunpack.c.l.b16 %v4428
        %v4525 = vunpack.c.l.b16 %v4429
        %v4526 = vunpack.c.l.b16 %v4430
        %v4527 = vunpack.c.l.b16 %v4431
        %v4528 = vunpack.c.l.b16 %v4432
        %v4529 = vunpack.c.l.b16 %v4433
        %v4530 = vunpack.c.l.b16 %v4434
        %v4531 = vunpack.c.l.b16 %v4435
        %v4532 = vunpack.c.l.b16 %v4436
        %v4533 = vunpack.c.l.b16 %v4437
        %v4534 = vunpack.c.l.b16 %v4438
        %v4535 = vunpack.c.l.b16 %v4439
        %v4536 = vunpack.c.l.b16 %v4440
        %v4537 = vunpack.c.l.b16 %v4441
        %v4538 = vunpack.c.l.b16 %v4442
        %v4539 = vunpack.c.l.b16 %v4443
        %v4540 = vunpack.c.l.b16 %v4444
        %v4541 = vunpack.c.l.b16 %v4445
        %v4542 = vunpack.c.l.b16 %v4446
        %v4543 = vunpack.c.l.b16 %v4447
        %v4544 = vunpack.c.l.b16 %v4448
        %v4545 = vunpack.c.l.b16 %v4449
        %v4546 = vunpack.c.l.b16 %v4450
        %v4547 = vunpack.c.l.b16 %v4451
        %v4548 = vunpack.c.l.b16 %v4452
        %v4549 = vunpack.c.l.b16 %v4453
        %v4550 = vunpack.c.l.b16 %v4454
        %v4551 = vunpack.c.l.b16 %v4455
        %v4552 = vunpack.c.l.b16 %v4456
        %v4553 = vunpack.c.l.b16 %v4457
        %v4554 = vunpack.c.l.b16 %v4458
        %v4555 = vunpack.c.l.b16 %v4459
        %v4556 = vunpack.c.l.b16 %v4460
        %v4557 = vunpack.c.l.b16 %v4461
        %v4558 = vunpack.c.l.b16 %v4462
        %v4559 = vunpack.c.l.b16 %v4463
        %v4560 = vunpack.c.l.b16 %v4464
        %v4561 = vunpack.c.l.b16 %v4465
        %v4562 = vunpack.c.l.b16 %v4466
        %v4563 = vunpack.c.l.b16 %v4467
        %v4564 = vunpack.c.l.b16 %v4468
        %v4565 = vunpack.c.l.b16 %v4469
        %v4566 = vunpack.c.l.b16 %v4470
        %v4567 = vpack.c.b16 %v4520, %v4519
        %v4568 = vpack.c.b16 %v4522, %v4521
        %v4569 = vpack.c.b16 %v4524, %v4523
        %v4570 = vpack.c.b16 %v4526, %v4525
        %v4571 = vpack.c.b16 %v4528, %v4527
        %v4572 = vpack.c.b16 %v4530, %v4529
        %v4573 = vpack.c.b16 %v4532, %v4531
        %v4574 = vpack.c.b16 %v4534, %v4533
        %v4575 = vpack.c.b16 %v4536, %v4535
        %v4576 = vpack.c.b16 %v4538, %v4537
        %v4577 = vpack.c.b16 %v4540, %v4539
        %v4578 = vpack.c.b16 %v4542, %v4541
        %v4579 = vpack.c.b16 %v4544, %v4543
        %v4580 = vpack.c.b16 %v4546, %v4545
        %v4581 = vpack.c.b16 %v4548, %v4547
        %v4582 = vpack.c.b16 %v4550, %v4549
        %v4583 = vpack.c.b16 %v4552, %v4551
        %v4584 = vpack.c.b16 %v4554, %v4553
        %v4585 = vpack.c.b16 %v4556, %v4555
        %v4586 = vpack.c.b16 %v4558, %v4557
        %v4587 = vpack.c.b16 %v4560, %v4559
        %v4588 = vpack.c.b16 %v4562, %v4561
        %v4589 = vpack.c.b16 %v4564, %v4563
        %v4590 = vpack.c.b16 %v4566, %v4565
        %4615 = vmatprep.subr.bf16.mxu0 0
        %4616 = vmatpush1.bf16.msra.mxu0 %v4567
        %4617 = vmatprep.subr.bf16.mxu0 0
        %4618 = vmatpush1.bf16.msra.mxu0 %v4568
        %4619 = vmatprep.subr.bf16.mxu0 0
        %4620 = vmatpush1.bf16.msra.mxu0 %v4569
        %4621 = vmatprep.subr.bf16.mxu0 0
        %4622 = vmatpush1.bf16.msra.mxu0 %v4570
        %4623 = vmatprep.subr.bf16.mxu0 0
        %4624 = vmatpush1.bf16.msra.mxu0 %v4571
        %4625 = vmatprep.subr.bf16.mxu0 0
        %4626 = vmatpush1.bf16.msra.mxu0 %v4572
        %4627 = vmatprep.subr.bf16.mxu0 0
        %4628 = vmatpush1.bf16.msra.mxu0 %v4573
        %4629 = vmatprep.subr.bf16.mxu0 0
        %4630 = vmatpush1.bf16.msra.mxu0 %v4574
        %4631 = vmatprep.subr.bf16.mxu0 0
        %4632 = vmatpush1.bf16.msra.mxu0 %v4575
        %4633 = vmatprep.subr.bf16.mxu0 0
        %4634 = vmatpush1.bf16.msra.mxu0 %v4576
        %4635 = vmatprep.subr.bf16.mxu0 0
        %4636 = vmatpush1.bf16.msra.mxu0 %v4577
        %4637 = vmatprep.subr.bf16.mxu0 0
        %4638 = vmatpush1.bf16.msra.mxu0 %v4578
        %4639 = vmatprep.subr.bf16.mxu0 0
        %4640 = vmatpush1.bf16.msra.mxu0 %v4579
        %4641 = vmatprep.subr.bf16.mxu0 0
        %4642 = vmatpush1.bf16.msra.mxu0 %v4580
        %4643 = vmatprep.subr.bf16.mxu0 0
        %4644 = vmatpush1.bf16.msra.mxu0 %v4581
        %4645 = vmatprep.subr.bf16.mxu0 0
        %4646 = vmatpush1.bf16.msra.mxu0 %v4582
        %4647 = vmatprep.mubr.bf16.mxu0 %v3897
        %4648 = vmatmul.mubr.bf16.gmra.mrb[0].mxu0 %v3885
        %v4649 = vpop.f32.mrb[0].mxu0
        %v4650 = vadd.f32 0.0, %v4649
        %v4651 = vpop.f32.mrb[0].mxu0
        %v4652 = vpop.f32.mrb[0].mxu0
        %v4653 = vadd.f32 0.0, %v4652
        %v4654 = vpop.f32.mrb[0].mxu0
        %4655 = vmatprep.mubr.bf16.mxu0 %v3928
        %4656 = vmatmul.mubr.bf16.gmra.mrb[0].mxu0 %v3916
        %v4657 = vpop.f32.mrb[0].mxu0
        %v4658 = vadd.f32 0.0, %v4657
        %v4659 = vpop.f32.mrb[0].mxu0
        %v4660 = vpop.f32.mrb[0].mxu0
        %v4661 = vadd.f32 0.0, %v4660
        %v4662 = vpop.f32.mrb[0].mxu0
        %4663 = vmatprep.mubr.bf16.mxu0 %v3959
        %4664 = vmatmul.mubr.bf16.gmra.mrb[0].mxu0 %v3947
        %v4665 = vpop.f32.mrb[0].mxu0
        %v4666 = vadd.f32 0.0, %v4665
        %v4667 = vpop.f32.mrb[0].mxu0
        %v4668 = vpop.f32.mrb[0].mxu0
        %v4669 = vadd.f32 0.0, %v4668
        %v4670 = vpop.f32.mrb[0].mxu0
        %4671 = vmatprep.mubr.bf16.mxu0 %v3990
        %4672 = vmatmul.mubr.bf16.gmra.mrb[0].mxu0 %v3978
        %v4673 = vpop.f32.mrb[0].mxu0
        %v4674 = vadd.f32 0.0, %v4673
        %v4675 = vpop.f32.mrb[0].mxu0
        %v4676 = vpop.f32.mrb[0].mxu0
        %v4677 = vadd.f32 0.0, %v4676
        %v4678 = vpop.f32.mrb[0].mxu0
        %4679 = vmatprep.mubr.bf16.mxu0 %v4021
        %4680 = vmatmul.mubr.bf16.gmra.mrb[0].mxu0 %v4009
        %v4681 = vpop.f32.mrb[0].mxu0
        %v4682 = vadd.f32 0.0, %v4681
        %v4683 = vpop.f32.mrb[0].mxu0
        %v4684 = vpop.f32.mrb[0].mxu0
        %v4685 = vadd.f32 0.0, %v4684
        %v4686 = vpop.f32.mrb[0].mxu0
        %4687 = vmatprep.mubr.bf16.mxu0 %v4052
        %4688 = vmatmul.mubr.bf16.gmra.mrb[0].mxu0 %v4040
        %v4689 = vpop.f32.mrb[0].mxu0
        %v4690 = vadd.f32 0.0, %v4689
        %v4691 = vpop.f32.mrb[0].mxu0
        %v4692 = vpop.f32.mrb[0].mxu0
        %v4693 = vadd.f32 0.0, %v4692
        %v4694 = vpop.f32.mrb[0].mxu0
        %4695 = vmatprep.mubr.bf16.mxu0 %v4083
        %4696 = vmatmul.mubr.bf16.gmra.mrb[0].mxu0 %v4071
        %v4697 = vpop.f32.mrb[0].mxu0
        %v4698 = vadd.f32 0.0, %v4697
        %v4699 = vpop.f32.mrb[0].mxu0
        %v4700 = vpop.f32.mrb[0].mxu0
        %v4701 = vadd.f32 0.0, %v4700
        %v4702 = vpop.f32.mrb[0].mxu0
        %4703 = vmatprep.mubr.bf16.mxu0 %v4114
        %4704 = vmatmul.mubr.bf16.gmra.mrb[0].mxu0 %v4102
        %v4705 = vpop.f32.mrb[0].mxu0
        %v4706 = vadd.f32 0.0, %v4705
        %v4707 = vpop.f32.mrb[0].mxu0
        %v4708 = vpop.f32.mrb[0].mxu0
        %v4709 = vadd.f32 0.0, %v4708
        %v4710 = vpop.f32.mrb[0].mxu0
        %4711 = vmatprep.mubr.bf16.mxu0 %v4145
        %4712 = vmatmul.mubr.bf16.gmra.mrb[0].mxu0 %v4133
        %v4713 = vpop.f32.mrb[0].mxu0
        %v4714 = vadd.f32 0.0, %v4713
        %v4715 = vpop.f32.mrb[0].mxu0
        %v4716 = vpop.f32.mrb[0].mxu0
        %v4717 = vadd.f32 0.0, %v4716
        %v4718 = vpop.f32.mrb[0].mxu0
        %4719 = vmatprep.mubr.bf16.mxu0 %v4176
        %4720 = vmatmul.mubr.bf16.gmra.mrb[0].mxu0 %v4164
        %v4721 = vpop.f32.mrb[0].mxu0
        %v4722 = vadd.f32 0.0, %v4721
        %v4723 = vpop.f32.mrb[0].mxu0
        %v4724 = vpop.f32.mrb[0].mxu0
        %v4725 = vadd.f32 0.0, %v4724
        %v4726 = vpop.f32.mrb[0].mxu0
        %4727 = vmatprep.mubr.bf16.mxu0 %v4207
        %4728 = vmatmul.mubr.bf16.gmra.mrb[0].mxu0 %v4195
        %v4729 = vpop.f32.mrb[0].mxu0
        %v4730 = vadd.f32 0.0, %v4729
        %v4731 = vpop.f32.mrb[0].mxu0
        %v4732 = vpop.f32.mrb[0].mxu0
        %v4733 = vadd.f32 0.0, %v4732
        %v4734 = vpop.f32.mrb[0].mxu0
        %4735 = vmatprep.mubr.bf16.mxu0 %v4238
        %4736 = vmatmul.mubr.bf16.gmra.mrb[0].mxu0 %v4226
        %v4737 = vpop.f32.mrb[0].mxu0
        %v4738 = vadd.f32 0.0, %v4737
        %v4739 = vpop.f32.mrb[0].mxu0
        %v4740 = vpop.f32.mrb[0].mxu0
        %v4741 = vadd.f32 0.0, %v4740
        %v4742 = vpop.f32.mrb[0].mxu0
        %4743 = vmatprep.mubr.bf16.mxu0 %v4269
        %4744 = vmatmul.mubr.bf16.gmra.mrb[0].mxu0 %v4257
        %v4745 = vpop.f32.mrb[0].mxu0
        %v4746 = vadd.f32 0.0, %v4745
        %v4747 = vpop.f32.mrb[0].mxu0
        %v4748 = vpop.f32.mrb[0].mxu0
        %v4749 = vadd.f32 0.0, %v4748
        %v4750 = vpop.f32.mrb[0].mxu0
        %4751 = vmatprep.mubr.bf16.mxu0 %v4300
        %4752 = vmatmul.mubr.bf16.gmra.mrb[0].mxu0 %v4288
        %v4753 = vpop.f32.mrb[0].mxu0
        %v4754 = vadd.f32 0.0, %v4753
        %v4755 = vpop.f32.mrb[0].mxu0
        %v4756 = vpop.f32.mrb[0].mxu0
        %v4757 = vadd.f32 0.0, %v4756
        %v4758 = vpop.f32.mrb[0].mxu0
        %4759 = vmatprep.mubr.bf16.mxu0 %v4331
        %4760 = vmatmul.mubr.bf16.gmra.mrb[0].mxu0 %v4319
        %v4761 = vpop.f32.mrb[0].mxu0
        %v4762 = vadd.f32 0.0, %v4761
        %v4763 = vpop.f32.mrb[0].mxu0
        %v4764 = vpop.f32.mrb[0].mxu0
        %v4765 = vadd.f32 0.0, %v4764
        %v4766 = vpop.f32.mrb[0].mxu0
        %4767 = vmatprep.mubr.bf16.mxu0 %v4362
        %4768 = vmatmul.mubr.bf16.gmra.mrb[0].mxu0 %v4350
        %v4769 = vpop.f32.mrb[0].mxu0
        %v4770 = vadd.f32 0.0, %v4769
        %v4771 = vpop.f32.mrb[0].mxu0
        %v4772 = vpop.f32.mrb[0].mxu0
        %v4773 = vadd.f32 0.0, %v4772
        %v4774 = vpop.f32.mrb[0].mxu0
        %4775 = vdwg.mxu0
        %4776 = vmatprep.subr.bf16.mxu0 0
        %4777 = vmatpush1.bf16.msra.mxu0 %v4583
        %4778 = vmatprep.subr.bf16.mxu0 0
        %4779 = vmatpush1.bf16.msra.mxu0 %v4584
        %4780 = vmatprep.subr.bf16.mxu0 0
        %4781 = vmatpush1.bf16.msra.mxu0 %v4585
        %4782 = vmatprep.subr.bf16.mxu0 0
        %4783 = vmatpush1.bf16.msra.mxu0 %v4586
        %4784 = vmatprep.subr.bf16.mxu0 0
        %4785 = vmatpush1.bf16.msra.mxu0 %v4587
        %4786 = vmatprep.subr.bf16.mxu0 0
        %4787 = vmatpush1.bf16.msra.mxu0 %v4588
        %4788 = vmatprep.subr.bf16.mxu0 0
        %4789 = vmatpush1.bf16.msra.mxu0 %v4589
        %4790 = vmatprep.subr.bf16.mxu0 0
        %4791 = vmatpush1.bf16.msra.mxu0 %v4590
        %4792 = vmatprep.subr.bf16.mxu0 0
        %4793 = vmatpush1.bf16.msra.mxu0 0
        %4794 = vmatprep.subr.bf16.mxu0 0
        %4795 = vmatpush1.bf16.msra.mxu0 0
        %4796 = vmatprep.subr.bf16.mxu0 0
        %4797 = vmatpush1.bf16.msra.mxu0 0
        %4798 = vmatprep.subr.bf16.mxu0 0
        %4799 = vmatpush1.bf16.msra.mxu0 0
        %4800 = vmatprep.subr.bf16.mxu0 0
        %4801 = vmatpush1.bf16.msra.mxu0 0
        %4802 = vmatprep.subr.bf16.mxu0 0
        %4803 = vmatpush1.bf16.msra.mxu0 0
        %4804 = vmatprep.subr.bf16.mxu0 0
        %4805 = vmatpush1.bf16.msra.mxu0 0
        %4806 = vmatprep.subr.bf16.mxu0 0
        %4807 = vmatpush1.bf16.msra.mxu0 0
        %4808 = vmatprep.mubr.bf16.mxu0 0
        %4809 = vmatmul.mubr.bf16.gmra.mrb[0].mxu0 %v3909
        %v4810 = vpop.f32.mrb[0].mxu0
        %v4811 = vadd.f32 %v4650, %v4810
        %v4812 = vpop.f32.mrb[0].mxu0
        %v4813 = vpop.f32.mrb[0].mxu0
        %v4814 = vadd.f32 %v4653, %v4813
        %v4815 = vpop.f32.mrb[0].mxu0
        %4816 = vmatprep.mubr.bf16.mxu0 0
        %4817 = vmatmul.mubr.bf16.gmra.mrb[0].mxu0 %v3940
        %v4818 = vpop.f32.mrb[0].mxu0
        %v4819 = vadd.f32 %v4658, %v4818
        %v4820 = vpop.f32.mrb[0].mxu0
        %v4821 = vpop.f32.mrb[0].mxu0
        %v4822 = vadd.f32 %v4661, %v4821
        %v4823 = vpop.f32.mrb[0].mxu0
        %4824 = vmatprep.mubr.bf16.mxu0 0
        %4825 = vmatmul.mubr.bf16.gmra.mrb[0].mxu0 %v3971
        %v4826 = vpop.f32.mrb[0].mxu0
        %v4827 = vadd.f32 %v4666, %v4826
        %v4828 = vpop.f32.mrb[0].mxu0
        %v4829 = vpop.f32.mrb[0].mxu0
        %v4830 = vadd.f32 %v4669, %v4829
        %v4831 = vpop.f32.mrb[0].mxu0
        %4832 = vmatprep.mubr.bf16.mxu0 0
        %4833 = vmatmul.mubr.bf16.gmra.mrb[0].mxu0 %v4002
        %v4834 = vpop.f32.mrb[0].mxu0
        %v4835 = vadd.f32 %v4674, %v4834
        %v4836 = vpop.f32.mrb[0].mxu0
        %v4837 = vpop.f32.mrb[0].mxu0
        %v4838 = vadd.f32 %v4677, %v4837
        %v4839 = vpop.f32.mrb[0].mxu0
        %4840 = vmatprep.mubr.bf16.mxu0 0
        %4841 = vmatmul.mubr.bf16.gmra.mrb[0].mxu0 %v4033
        %v4842 = vpop.f32.mrb[0].mxu0
        %v4843 = vadd.f32 %v4682, %v4842
        %v4844 = vpop.f32.mrb[0].mxu0
        %v4845 = vpop.f32.mrb[0].mxu0
        %v4846 = vadd.f32 %v4685, %v4845
        %v4847 = vpop.f32.mrb[0].mxu0
        %4848 = vmatprep.mubr.bf16.mxu0 0
        %4849 = vmatmul.mubr.bf16.gmra.mrb[0].mxu0 %v4064
        %v4850 = vpop.f32.mrb[0].mxu0
        %v4851 = vadd.f32 %v4690, %v4850
        %v4852 = vpop.f32.mrb[0].mxu0
        %v4853 = vpop.f32.mrb[0].mxu0
        %v4854 = vadd.f32 %v4693, %v4853
        %v4855 = vpop.f32.mrb[0].mxu0
        %4856 = vmatprep.mubr.bf16.mxu0 0
        %4857 = vmatmul.mubr.bf16.gmra.mrb[0].mxu0 %v4095
        %v4858 = vpop.f32.mrb[0].mxu0
        %v4859 = vadd.f32 %v4698, %v4858
        %v4860 = vpop.f32.mrb[0].mxu0
        %v4861 = vpop.f32.mrb[0].mxu0
        %v4862 = vadd.f32 %v4701, %v4861
        %v4863 = vpop.f32.mrb[0].mxu0
        %4864 = vmatprep.mubr.bf16.mxu0 0
        %4865 = vmatmul.mubr.bf16.gmra.mrb[0].mxu0 %v4126
        %v4866 = vpop.f32.mrb[0].mxu0
        %v4867 = vadd.f32 %v4706, %v4866
        %v4868 = vpop.f32.mrb[0].mxu0
        %v4869 = vpop.f32.mrb[0].mxu0
        %v4870 = vadd.f32 %v4709, %v4869
        %v4871 = vpop.f32.mrb[0].mxu0
        %4872 = vmatprep.mubr.bf16.mxu0 0
        %4873 = vmatmul.mubr.bf16.gmra.mrb[0].mxu0 %v4157
        %v4874 = vpop.f32.mrb[0].mxu0
        %v4875 = vadd.f32 %v4714, %v4874
        %v4876 = vpop.f32.mrb[0].mxu0
        %v4877 = vpop.f32.mrb[0].mxu0
        %v4878 = vadd.f32 %v4717, %v4877
        %v4879 = vpop.f32.mrb[0].mxu0
        %4880 = vmatprep.mubr.bf16.mxu0 0
        %4881 = vmatmul.mubr.bf16.gmra.mrb[0].mxu0 %v4188
        %v4882 = vpop.f32.mrb[0].mxu0
        %v4883 = vadd.f32 %v4722, %v4882
        %v4884 = vpop.f32.mrb[0].mxu0
        %v4885 = vpop.f32.mrb[0].mxu0
        %v4886 = vadd.f32 %v4725, %v4885
        %v4887 = vpop.f32.mrb[0].mxu0
        %4888 = vmatprep.mubr.bf16.mxu0 0
        %4889 = vmatmul.mubr.bf16.gmra.mrb[0].mxu0 %v4219
        %v4890 = vpop.f32.mrb[0].mxu0
        %v4891 = vadd.f32 %v4730, %v4890
        %v4892 = vpop.f32.mrb[0].mxu0
        %v4893 = vpop.f32.mrb[0].mxu0
        %v4894 = vadd.f32 %v4733, %v4893
        %v4895 = vpop.f32.mrb[0].mxu0
        %4896 = vmatprep.mubr.bf16.mxu0 0
        %4897 = vmatmul.mubr.bf16.gmra.mrb[0].mxu0 %v4250
        %v4898 = vpop.f32.mrb[0].mxu0
        %v4899 = vadd.f32 %v4738, %v4898
        %v4900 = vpop.f32.mrb[0].mxu0
        %v4901 = vpop.f32.mrb[0].mxu0
        %v4902 = vadd.f32 %v4741, %v4901
        %v4903 = vpop.f32.mrb[0].mxu0
        %4904 = vmatprep.mubr.bf16.mxu0 0
        %4905 = vmatmul.mubr.bf16.gmra.mrb[0].mxu0 %v4281
        %v4906 = vpop.f32.mrb[0].mxu0
        %v4907 = vadd.f32 %v4746, %v4906
        %v4908 = vpop.f32.mrb[0].mxu0
        %v4909 = vpop.f32.mrb[0].mxu0
        %v4910 = vadd.f32 %v4749, %v4909
        %v4911 = vpop.f32.mrb[0].mxu0
        %4912 = vmatprep.mubr.bf16.mxu0 0
        %4913 = vmatmul.mubr.bf16.gmra.mrb[0].mxu0 %v4312
        %v4914 = vpop.f32.mrb[0].mxu0
        %v4915 = vadd.f32 %v4754, %v4914
        %v4916 = vpop.f32.mrb[0].mxu0
        %v4917 = vpop.f32.mrb[0].mxu0
        %v4918 = vadd.f32 %v4757, %v4917
        %v4919 = vpop.f32.mrb[0].mxu0
        %4920 = vmatprep.mubr.bf16.mxu0 0
        %4921 = vmatmul.mubr.bf16.gmra.mrb[0].mxu0 %v4343
        %v4922 = vpop.f32.mrb[0].mxu0
        %v4923 = vadd.f32 %v4762, %v4922
        %v4924 = vpop.f32.mrb[0].mxu0
        %v4925 = vpop.f32.mrb[0].mxu0
        %v4926 = vadd.f32 %v4765, %v4925
        %v4927 = vpop.f32.mrb[0].mxu0
        %4928 = vmatprep.mubr.bf16.mxu0 0
        %4929 = vmatmul.mubr.bf16.gmra.mrb[0].mxu0 %v4374
        %v4930 = vpop.f32.mrb[0].mxu0
        %v4931 = vadd.f32 %v4770, %v4930
        %v4932 = vpop.f32.mrb[0].mxu0
        %v4933 = vpop.f32.mrb[0].mxu0
        %v4934 = vadd.f32 %v4773, %v4933
        %v4935 = vpop.f32.mrb[0].mxu0
        %4936 = vdwg.mxu0
        %4937 = vst [vmem:[#allocation4] sm:$0xff] %v4811
        %4938 = vst [vmem:[#allocation4 + $0x8] sm:$0xff] %v4814
        %4939 = vst [vmem:[#allocation4 + $0x10] sm:$0xff] %v4819
        %4940 = vst [vmem:[#allocation4 + $0x18] sm:$0xff] %v4822
        %4941 = vst [vmem:[#allocation4 + $0x20] sm:$0xff] %v4827
        %4942 = vst [vmem:[#allocation4 + $0x28] sm:$0xff] %v4830
        %4943 = vst [vmem:[#allocation4 + $0x30] sm:$0xff] %v4835
        %4944 = vst [vmem:[#allocation4 + $0x38] sm:$0xff] %v4838
        %4945 = vst [vmem:[#allocation4 + $0x40] sm:$0xff] %v4843
        %4946 = vst [vmem:[#allocation4 + $0x48] sm:$0xff] %v4846
        %4947 = vst [vmem:[#allocation4 + $0x50] sm:$0xff] %v4851
        %4948 = vst [vmem:[#allocation4 + $0x58] sm:$0xff] %v4854
        %4949 = vst [vmem:[#allocation4 + $0x60] sm:$0xff] %v4859
        %4950 = vst [vmem:[#allocation4 + $0x68] sm:$0xff] %v4862
        %4951 = vst [vmem:[#allocation4 + $0x70] sm:$0xff] %v4867
        %4952 = vst [vmem:[#allocation4 + $0x78] sm:$0xff] %v4870
        %4953 = vst [vmem:[#allocation4 + $0x80] sm:$0xff] %v4875
        %4954 = vst [vmem:[#allocation4 + $0x88] sm:$0xff] %v4878
        %4955 = vst [vmem:[#allocation4 + $0x90] sm:$0xff] %v4883
        %4956 = vst [vmem:[#allocation4 + $0x98] sm:$0xff] %v4886
        %4957 = vst [vmem:[#allocation4 + $0xa0] sm:$0xff] %v4891
        %4958 = vst [vmem:[#allocation4 + $0xa8] sm:$0xff] %v4894
        %4959 = vst [vmem:[#allocation4 + $0xb0] sm:$0xff] %v4899
        %4960 = vst [vmem:[#allocation4 + $0xb8] sm:$0xff] %v4902
        %4961 = vst [vmem:[#allocation4 + $0xc0] sm:$0xff] %v4907
        %4962 = vst [vmem:[#allocation4 + $0xc8] sm:$0xff] %v4910
        %4963 = vst [vmem:[#allocation4 + $0xd0] sm:$0xff] %v4915
        %4964 = vst [vmem:[#allocation4 + $0xd8] sm:$0xff] %v4918
        %4965 = vst [vmem:[#allocation4 + $0xe0] sm:$0xff] %v4923
        %4966 = vst [vmem:[#allocation4 + $0xe8] sm:$0xff] %v4926
        %4967 = vst [vmem:[#allocation4 + $0xf0] sm:$0xff] %v4931
        %4968 = vst [vmem:[#allocation4 + $0xf8] sm:$0xff] %v4934
        %v4969 = vld [vmem:[%s396] sm:$0x80]
        %v4970 = vld [vmem:[%s396 + $0x8] sm:$0xff]
        %v4971 = vld [vmem:[%s396 + $0x18] sm:$0x80]
        %v4972 = vld [vmem:[%s396 + $0x20] sm:$0xff]
        %v4973 = vld [vmem:[%s396 + $0x30] sm:$0x80]
        %v4974 = vld [vmem:[%s396 + $0x38] sm:$0xff]
        %v4975 = vld [vmem:[%s396 + $0x48] sm:$0x80]
        %v4976 = vld [vmem:[%s396 + $0x50] sm:$0xff]
        %v4977 = vld [vmem:[%s396 + $0x60] sm:$0x80]
        %v4978 = vld [vmem:[%s396 + $0x68] sm:$0xff]
        %v4979 = vld [vmem:[%s396 + $0x78] sm:$0x80]
        %v4980 = vld [vmem:[%s396 + $0x80] sm:$0xff]
        %v4981 = vld [vmem:[%s396 + $0x90] sm:$0x80]
        %v4982 = vld [vmem:[%s396 + $0x98] sm:$0xff]
        %v4983 = vld [vmem:[%s396 + $0xa8] sm:$0x80]
        %v4984 = vld [vmem:[%s396 + $0xb0] sm:$0xff]
        %v4985 = vld [vmem:[%s396 + $0xc0] sm:$0x80]
        %v4986 = vld [vmem:[%s396 + $0xc8] sm:$0xff]
        %v4987 = vld [vmem:[%s396 + $0xd8] sm:$0x80]
        %v4988 = vld [vmem:[%s396 + $0xe0] sm:$0xff]
        %v4989 = vld [vmem:[%s396 + $0xf0] sm:$0x80]
        %v4990 = vld [vmem:[%s396 + $0xf8] sm:$0xff]
        %v4991 = vld [vmem:[%s396 + $0x108] sm:$0x80]
        %v4992 = vld [vmem:[%s396 + $0x110] sm:$0xff]
        %v4993 = vld [vmem:[%s396 + $0x120] sm:$0x80]
        %v4994 = vld [vmem:[%s396 + $0x128] sm:$0xff]
        %v4995 = vld [vmem:[%s396 + $0x138] sm:$0x80]
        %v4996 = vld [vmem:[%s396 + $0x140] sm:$0xff]
        %v4997 = vld [vmem:[%s396 + $0x150] sm:$0x80]
        %v4998 = vld [vmem:[%s396 + $0x158] sm:$0xff]
        %v4999 = vld [vmem:[%s396 + $0x168] sm:$0x80]
        %v5000 = vld [vmem:[%s396 + $0x170] sm:$0xff]
        %v5001 = vld [vmem:[%s396 + $0x10] sm:$0x1]
        %v5002 = vld [vmem:[%s396 + $0x28] sm:$0x1]
        %v5003 = vld [vmem:[%s396 + $0x40] sm:$0x1]
        %v5004 = vld [vmem:[%s396 + $0x58] sm:$0x1]
        %v5005 = vld [vmem:[%s396 + $0x70] sm:$0x1]
        %v5006 = vld [vmem:[%s396 + $0x88] sm:$0x1]
        %v5007 = vld [vmem:[%s396 + $0xa0] sm:$0x1]
        %v5008 = vld [vmem:[%s396 + $0xb8] sm:$0x1]
        %v5009 = vld [vmem:[%s396 + $0xd0] sm:$0x1]
        %v5010 = vld [vmem:[%s396 + $0xe8] sm:$0x1]
        %v5011 = vld [vmem:[%s396 + $0x100] sm:$0x1]
        %v5012 = vld [vmem:[%s396 + $0x118] sm:$0x1]
        %v5013 = vld [vmem:[%s396 + $0x130] sm:$0x1]
        %v5014 = vld [vmem:[%s396 + $0x148] sm:$0x1]
        %v5015 = vld [vmem:[%s396 + $0x160] sm:$0x1]
        %v5016 = vld [vmem:[%s396 + $0x178] sm:$0x1]
        %v5018 = vshll.u32 %v4970, 16
        %v5020 = vrot.slane %v5018, 1
        %v5021 = vshrl.u32 %v4970, 16
        %v5023 = vor.u32 %v5021, %v5020
        %v5025 = vshll.u32 %v4972, 16
        %v5027 = vrot.slane %v5025, 1
        %v5028 = vshrl.u32 %v4972, 16
        %v5030 = vor.u32 %v5028, %v5027
        %v5032 = vshll.u32 %v4974, 16
        %v5034 = vrot.slane %v5032, 1
        %v5035 = vshrl.u32 %v4974, 16
        %v5037 = vor.u32 %v5035, %v5034
        %v5039 = vshll.u32 %v4976, 16
        %v5041 = vrot.slane %v5039, 1
        %v5042 = vshrl.u32 %v4976, 16
        %v5044 = vor.u32 %v5042, %v5041
        %v5046 = vshll.u32 %v4978, 16
        %v5048 = vrot.slane %v5046, 1
        %v5049 = vshrl.u32 %v4978, 16
        %v5051 = vor.u32 %v5049, %v5048
        %v5053 = vshll.u32 %v4980, 16
        %v5055 = vrot.slane %v5053, 1
        %v5056 = vshrl.u32 %v4980, 16
        %v5058 = vor.u32 %v5056, %v5055
        %v5060 = vshll.u32 %v4982, 16
        %v5062 = vrot.slane %v5060, 1
        %v5063 = vshrl.u32 %v4982, 16
        %v5065 = vor.u32 %v5063, %v5062
        %v5067 = vshll.u32 %v4984, 16
        %v5069 = vrot.slane %v5067, 1
        %v5070 = vshrl.u32 %v4984, 16
        %v5072 = vor.u32 %v5070, %v5069
        %v5074 = vshll.u32 %v4986, 16
        %v5076 = vrot.slane %v5074, 1
        %v5077 = vshrl.u32 %v4986, 16
        %v5079 = vor.u32 %v5077, %v5076
        %v5081 = vshll.u32 %v4988, 16
        %v5083 = vrot.slane %v5081, 1
        %v5084 = vshrl.u32 %v4988, 16
        %v5086 = vor.u32 %v5084, %v5083
        %v5088 = vshll.u32 %v4990, 16
        %v5090 = vrot.slane %v5088, 1
        %v5091 = vshrl.u32 %v4990, 16
        %v5093 = vor.u32 %v5091, %v5090
        %v5095 = vshll.u32 %v4992, 16
        %v5097 = vrot.slane %v5095, 1
        %v5098 = vshrl.u32 %v4992, 16
        %v5100 = vor.u32 %v5098, %v5097
        %v5102 = vshll.u32 %v4994, 16
        %v5104 = vrot.slane %v5102, 1
        %v5105 = vshrl.u32 %v4994, 16
        %v5107 = vor.u32 %v5105, %v5104
        %v5109 = vshll.u32 %v4996, 16
        %v5111 = vrot.slane %v5109, 1
        %v5112 = vshrl.u32 %v4996, 16
        %v5114 = vor.u32 %v5112, %v5111
        %v5116 = vshll.u32 %v4998, 16
        %v5118 = vrot.slane %v5116, 1
        %v5119 = vshrl.u32 %v4998, 16
        %v5121 = vor.u32 %v5119, %v5118
        %v5123 = vshll.u32 %v5000, 16
        %v5125 = vrot.slane %v5123, 1
        %v5126 = vshrl.u32 %v5000, 16
        %v5128 = vor.u32 %v5126, %v5125
        %v5161 = vrot.slane %v4970, 1
        %v5162 = vrot.slane %v5001, 1
        %v5163 = vsel %vm817, %v5161, %v5162
        %v5164 = vrot.slane %v4972, 1
        %v5165 = vrot.slane %v5002, 1
        %v5166 = vsel %vm817, %v5164, %v5165
        %v5167 = vrot.slane %v4974, 1
        %v5168 = vrot.slane %v5003, 1
        %v5169 = vsel %vm817, %v5167, %v5168
        %v5170 = vrot.slane %v4976, 1
        %v5171 = vrot.slane %v5004, 1
        %v5172 = vsel %vm817, %v5170, %v5171
        %v5173 = vrot.slane %v4978, 1
        %v5174 = vrot.slane %v5005, 1
        %v5175 = vsel %vm817, %v5173, %v5174
        %v5176 = vrot.slane %v4980, 1
        %v5177 = vrot.slane %v5006, 1
        %v5178 = vsel %vm817, %v5176, %v5177
        %v5179 = vrot.slane %v4982, 1
        %v5180 = vrot.slane %v5007, 1
        %v5181 = vsel %vm817, %v5179, %v5180
        %v5182 = vrot.slane %v4984, 1
        %v5183 = vrot.slane %v5008, 1
        %v5184 = vsel %vm817, %v5182, %v5183
        %v5185 = vrot.slane %v4986, 1
        %v5186 = vrot.slane %v5009, 1
        %v5187 = vsel %vm817, %v5185, %v5186
        %v5188 = vrot.slane %v4988, 1
        %v5189 = vrot.slane %v5010, 1
        %v5190 = vsel %vm817, %v5188, %v5189
        %v5191 = vrot.slane %v4990, 1
        %v5192 = vrot.slane %v5011, 1
        %v5193 = vsel %vm817, %v5191, %v5192
        %v5194 = vrot.slane %v4992, 1
        %v5195 = vrot.slane %v5012, 1
        %v5196 = vsel %vm817, %v5194, %v5195
        %v5197 = vrot.slane %v4994, 1
        %v5198 = vrot.slane %v5013, 1
        %v5199 = vsel %vm817, %v5197, %v5198
        %v5200 = vrot.slane %v4996, 1
        %v5201 = vrot.slane %v5014, 1
        %v5202 = vsel %vm817, %v5200, %v5201
        %v5203 = vrot.slane %v4998, 1
        %v5204 = vrot.slane %v5015, 1
        %v5205 = vsel %vm817, %v5203, %v5204
        %v5206 = vrot.slane %v5000, 1
        %v5207 = vrot.slane %v5016, 1
        %v5208 = vsel %vm817, %v5206, %v5207
        %v5210 = vshrl.u32 %v4969, 16
        %v5212 = vrot.slane %v5210, 7
        %v5213 = vrot.slane %v5021, 7
        %v5214 = vor.u32 %v5213, %v5018
        %v5215 = vsel %vm339, %v5212, %v5214
        %v5217 = vshrl.u32 %v5020, 16
        %v5219 = vrot.slane %v5217, 7
        %v5221 = vshrl.u32 %v5023, 16
        %v5223 = vrot.slane %v5221, 7
        %v5224 = vshll.u32 %v5023, 16
        %v5226 = vor.u32 %v5223, %v5224
        %v5227 = vsel %vm339, %v5219, %v5226
        %v5229 = vshrl.u32 %v5161, 16
        %v5231 = vrot.slane %v5229, 7
        %v5233 = vshrl.u32 %v5163, 16
        %v5235 = vrot.slane %v5233, 7
        %v5236 = vshll.u32 %v5163, 16
        %v5238 = vor.u32 %v5235, %v5236
        %v5239 = vsel %vm339, %v5231, %v5238
        %v5241 = vshrl.u32 %v4971, 16
        %v5243 = vrot.slane %v5241, 7
        %v5244 = vrot.slane %v5028, 7
        %v5245 = vor.u32 %v5244, %v5025
        %v5246 = vsel %vm339, %v5243, %v5245
        %v5248 = vshrl.u32 %v5027, 16
        %v5250 = vrot.slane %v5248, 7
        %v5252 = vshrl.u32 %v5030, 16
        %v5254 = vrot.slane %v5252, 7
        %v5255 = vshll.u32 %v5030, 16
        %v5257 = vor.u32 %v5254, %v5255
        %v5258 = vsel %vm339, %v5250, %v5257
        %v5260 = vshrl.u32 %v5164, 16
        %v5262 = vrot.slane %v5260, 7
        %v5264 = vshrl.u32 %v5166, 16
        %v5266 = vrot.slane %v5264, 7
        %v5267 = vshll.u32 %v5166, 16
        %v5269 = vor.u32 %v5266, %v5267
        %v5270 = vsel %vm339, %v5262, %v5269
        %v5272 = vshrl.u32 %v4973, 16
        %v5274 = vrot.slane %v5272, 7
        %v5275 = vrot.slane %v5035, 7
        %v5276 = vor.u32 %v5275, %v5032
        %v5277 = vsel %vm339, %v5274, %v5276
        %v5279 = vshrl.u32 %v5034, 16
        %v5281 = vrot.slane %v5279, 7
        %v5283 = vshrl.u32 %v5037, 16
        %v5285 = vrot.slane %v5283, 7
        %v5286 = vshll.u32 %v5037, 16
        %v5288 = vor.u32 %v5285, %v5286
        %v5289 = vsel %vm339, %v5281, %v5288
        %v5291 = vshrl.u32 %v5167, 16
        %v5293 = vrot.slane %v5291, 7
        %v5295 = vshrl.u32 %v5169, 16
        %v5297 = vrot.slane %v5295, 7
        %v5298 = vshll.u32 %v5169, 16
        %v5300 = vor.u32 %v5297, %v5298
        %v5301 = vsel %vm339, %v5293, %v5300
        %v5303 = vshrl.u32 %v4975, 16
        %v5305 = vrot.slane %v5303, 7
        %v5306 = vrot.slane %v5042, 7
        %v5307 = vor.u32 %v5306, %v5039
        %v5308 = vsel %vm339, %v5305, %v5307
        %v5310 = vshrl.u32 %v5041, 16
        %v5312 = vrot.slane %v5310, 7
        %v5314 = vshrl.u32 %v5044, 16
        %v5316 = vrot.slane %v5314, 7
        %v5317 = vshll.u32 %v5044, 16
        %v5319 = vor.u32 %v5316, %v5317
        %v5320 = vsel %vm339, %v5312, %v5319
        %v5322 = vshrl.u32 %v5170, 16
        %v5324 = vrot.slane %v5322, 7
        %v5326 = vshrl.u32 %v5172, 16
        %v5328 = vrot.slane %v5326, 7
        %v5329 = vshll.u32 %v5172, 16
        %v5331 = vor.u32 %v5328, %v5329
        %v5332 = vsel %vm339, %v5324, %v5331
        %v5334 = vshrl.u32 %v4977, 16
        %v5336 = vrot.slane %v5334, 7
        %v5337 = vrot.slane %v5049, 7
        %v5338 = vor.u32 %v5337, %v5046
        %v5339 = vsel %vm339, %v5336, %v5338
        %v5341 = vshrl.u32 %v5048, 16
        %v5343 = vrot.slane %v5341, 7
        %v5345 = vshrl.u32 %v5051, 16
        %v5347 = vrot.slane %v5345, 7
        %v5348 = vshll.u32 %v5051, 16
        %v5350 = vor.u32 %v5347, %v5348
        %v5351 = vsel %vm339, %v5343, %v5350
        %v5353 = vshrl.u32 %v5173, 16
        %v5355 = vrot.slane %v5353, 7
        %v5357 = vshrl.u32 %v5175, 16
        %v5359 = vrot.slane %v5357, 7
        %v5360 = vshll.u32 %v5175, 16
        %v5362 = vor.u32 %v5359, %v5360
        %v5363 = vsel %vm339, %v5355, %v5362
        %v5365 = vshrl.u32 %v4979, 16
        %v5367 = vrot.slane %v5365, 7
        %v5368 = vrot.slane %v5056, 7
        %v5369 = vor.u32 %v5368, %v5053
        %v5370 = vsel %vm339, %v5367, %v5369
        %v5372 = vshrl.u32 %v5055, 16
        %v5374 = vrot.slane %v5372, 7
        %v5376 = vshrl.u32 %v5058, 16
        %v5378 = vrot.slane %v5376, 7
        %v5379 = vshll.u32 %v5058, 16
        %v5381 = vor.u32 %v5378, %v5379
        %v5382 = vsel %vm339, %v5374, %v5381
        %v5384 = vshrl.u32 %v5176, 16
        %v5386 = vrot.slane %v5384, 7
        %v5388 = vshrl.u32 %v5178, 16
        %v5390 = vrot.slane %v5388, 7
        %v5391 = vshll.u32 %v5178, 16
        %v5393 = vor.u32 %v5390, %v5391
        %v5394 = vsel %vm339, %v5386, %v5393
        %v5396 = vshrl.u32 %v4981, 16
        %v5398 = vrot.slane %v5396, 7
        %v5399 = vrot.slane %v5063, 7
        %v5400 = vor.u32 %v5399, %v5060
        %v5401 = vsel %vm339, %v5398, %v5400
        %v5403 = vshrl.u32 %v5062, 16
        %v5405 = vrot.slane %v5403, 7
        %v5407 = vshrl.u32 %v5065, 16
        %v5409 = vrot.slane %v5407, 7
        %v5410 = vshll.u32 %v5065, 16
        %v5412 = vor.u32 %v5409, %v5410
        %v5413 = vsel %vm339, %v5405, %v5412
        %v5415 = vshrl.u32 %v5179, 16
        %v5417 = vrot.slane %v5415, 7
        %v5419 = vshrl.u32 %v5181, 16
        %v5421 = vrot.slane %v5419, 7
        %v5422 = vshll.u32 %v5181, 16
        %v5424 = vor.u32 %v5421, %v5422
        %v5425 = vsel %vm339, %v5417, %v5424
        %v5427 = vshrl.u32 %v4983, 16
        %v5429 = vrot.slane %v5427, 7
        %v5430 = vrot.slane %v5070, 7
        %v5431 = vor.u32 %v5430, %v5067
        %v5432 = vsel %vm339, %v5429, %v5431
        %v5434 = vshrl.u32 %v5069, 16
        %v5436 = vrot.slane %v5434, 7
        %v5438 = vshrl.u32 %v5072, 16
        %v5440 = vrot.slane %v5438, 7
        %v5441 = vshll.u32 %v5072, 16
        %v5443 = vor.u32 %v5440, %v5441
        %v5444 = vsel %vm339, %v5436, %v5443
        %v5446 = vshrl.u32 %v5182, 16
        %v5448 = vrot.slane %v5446, 7
        %v5450 = vshrl.u32 %v5184, 16
        %v5452 = vrot.slane %v5450, 7
        %v5453 = vshll.u32 %v5184, 16
        %v5455 = vor.u32 %v5452, %v5453
        %v5456 = vsel %vm339, %v5448, %v5455
        %v5458 = vshrl.u32 %v4985, 16
        %v5460 = vrot.slane %v5458, 7
        %v5461 = vrot.slane %v5077, 7
        %v5462 = vor.u32 %v5461, %v5074
        %v5463 = vsel %vm339, %v5460, %v5462
        %v5465 = vshrl.u32 %v5076, 16
        %v5467 = vrot.slane %v5465, 7
        %v5469 = vshrl.u32 %v5079, 16
        %v5471 = vrot.slane %v5469, 7
        %v5472 = vshll.u32 %v5079, 16
        %v5474 = vor.u32 %v5471, %v5472
        %v5475 = vsel %vm339, %v5467, %v5474
        %v5477 = vshrl.u32 %v5185, 16
        %v5479 = vrot.slane %v5477, 7
        %v5481 = vshrl.u32 %v5187, 16
        %v5483 = vrot.slane %v5481, 7
        %v5484 = vshll.u32 %v5187, 16
        %v5486 = vor.u32 %v5483, %v5484
        %v5487 = vsel %vm339, %v5479, %v5486
        %v5489 = vshrl.u32 %v4987, 16
        %v5491 = vrot.slane %v5489, 7
        %v5492 = vrot.slane %v5084, 7
        %v5493 = vor.u32 %v5492, %v5081
        %v5494 = vsel %vm339, %v5491, %v5493
        %v5496 = vshrl.u32 %v5083, 16
        %v5498 = vrot.slane %v5496, 7
        %v5500 = vshrl.u32 %v5086, 16
        %v5502 = vrot.slane %v5500, 7
        %v5503 = vshll.u32 %v5086, 16
        %v5505 = vor.u32 %v5502, %v5503
        %v5506 = vsel %vm339, %v5498, %v5505
        %v5508 = vshrl.u32 %v5188, 16
        %v5510 = vrot.slane %v5508, 7
        %v5512 = vshrl.u32 %v5190, 16
        %v5514 = vrot.slane %v5512, 7
        %v5515 = vshll.u32 %v5190, 16
        %v5517 = vor.u32 %v5514, %v5515
        %v5518 = vsel %vm339, %v5510, %v5517
        %v5520 = vshrl.u32 %v4989, 16
        %v5522 = vrot.slane %v5520, 7
        %v5523 = vrot.slane %v5091, 7
        %v5524 = vor.u32 %v5523, %v5088
        %v5525 = vsel %vm339, %v5522, %v5524
        %v5527 = vshrl.u32 %v5090, 16
        %v5529 = vrot.slane %v5527, 7
        %v5531 = vshrl.u32 %v5093, 16
        %v5533 = vrot.slane %v5531, 7
        %v5534 = vshll.u32 %v5093, 16
        %v5536 = vor.u32 %v5533, %v5534
        %v5537 = vsel %vm339, %v5529, %v5536
        %v5539 = vshrl.u32 %v5191, 16
        %v5541 = vrot.slane %v5539, 7
        %v5543 = vshrl.u32 %v5193, 16
        %v5545 = vrot.slane %v5543, 7
        %v5546 = vshll.u32 %v5193, 16
        %v5548 = vor.u32 %v5545, %v5546
        %v5549 = vsel %vm339, %v5541, %v5548
        %v5551 = vshrl.u32 %v4991, 16
        %v5553 = vrot.slane %v5551, 7
        %v5554 = vrot.slane %v5098, 7
        %v5555 = vor.u32 %v5554, %v5095
        %v5556 = vsel %vm339, %v5553, %v5555
        %v5558 = vshrl.u32 %v5097, 16
        %v5560 = vrot.slane %v5558, 7
        %v5562 = vshrl.u32 %v5100, 16
        %v5564 = vrot.slane %v5562, 7
        %v5565 = vshll.u32 %v5100, 16
        %v5567 = vor.u32 %v5564, %v5565
        %v5568 = vsel %vm339, %v5560, %v5567
        %v5570 = vshrl.u32 %v5194, 16
        %v5572 = vrot.slane %v5570, 7
        %v5574 = vshrl.u32 %v5196, 16
        %v5576 = vrot.slane %v5574, 7
        %v5577 = vshll.u32 %v5196, 16
        %v5579 = vor.u32 %v5576, %v5577
        %v5580 = vsel %vm339, %v5572, %v5579
        %v5582 = vshrl.u32 %v4993, 16
        %v5584 = vrot.slane %v5582, 7
        %v5585 = vrot.slane %v5105, 7
        %v5586 = vor.u32 %v5585, %v5102
        %v5587 = vsel %vm339, %v5584, %v5586
        %v5589 = vshrl.u32 %v5104, 16
        %v5591 = vrot.slane %v5589, 7
        %v5593 = vshrl.u32 %v5107, 16
        %v5595 = vrot.slane %v5593, 7
        %v5596 = vshll.u32 %v5107, 16
        %v5598 = vor.u32 %v5595, %v5596
        %v5599 = vsel %vm339, %v5591, %v5598
        %v5601 = vshrl.u32 %v5197, 16
        %v5603 = vrot.slane %v5601, 7
        %v5605 = vshrl.u32 %v5199, 16
        %v5607 = vrot.slane %v5605, 7
        %v5608 = vshll.u32 %v5199, 16
        %v5610 = vor.u32 %v5607, %v5608
        %v5611 = vsel %vm339, %v5603, %v5610
        %v5613 = vshrl.u32 %v4995, 16
        %v5615 = vrot.slane %v5613, 7
        %v5616 = vrot.slane %v5112, 7
        %v5617 = vor.u32 %v5616, %v5109
        %v5618 = vsel %vm339, %v5615, %v5617
        %v5620 = vshrl.u32 %v5111, 16
        %v5622 = vrot.slane %v5620, 7
        %v5624 = vshrl.u32 %v5114, 16
        %v5626 = vrot.slane %v5624, 7
        %v5627 = vshll.u32 %v5114, 16
        %v5629 = vor.u32 %v5626, %v5627
        %v5630 = vsel %vm339, %v5622, %v5629
        %v5632 = vshrl.u32 %v5200, 16
        %v5634 = vrot.slane %v5632, 7
        %v5636 = vshrl.u32 %v5202, 16
        %v5638 = vrot.slane %v5636, 7
        %v5639 = vshll.u32 %v5202, 16
        %v5641 = vor.u32 %v5638, %v5639
        %v5642 = vsel %vm339, %v5634, %v5641
        %v5644 = vshrl.u32 %v4997, 16
        %v5646 = vrot.slane %v5644, 7
        %v5647 = vrot.slane %v5119, 7
        %v5648 = vor.u32 %v5647, %v5116
        %v5649 = vsel %vm339, %v5646, %v5648
        %v5651 = vshrl.u32 %v5118, 16
        %v5653 = vrot.slane %v5651, 7
        %v5655 = vshrl.u32 %v5121, 16
        %v5657 = vrot.slane %v5655, 7
        %v5658 = vshll.u32 %v5121, 16
        %v5660 = vor.u32 %v5657, %v5658
        %v5661 = vsel %vm339, %v5653, %v5660
        %v5663 = vshrl.u32 %v5203, 16
        %v5665 = vrot.slane %v5663, 7
        %v5667 = vshrl.u32 %v5205, 16
        %v5669 = vrot.slane %v5667, 7
        %v5670 = vshll.u32 %v5205, 16
        %v5672 = vor.u32 %v5669, %v5670
        %v5673 = vsel %vm339, %v5665, %v5672
        %v5675 = vshrl.u32 %v4999, 16
        %v5677 = vrot.slane %v5675, 7
        %v5678 = vrot.slane %v5126, 7
        %v5679 = vor.u32 %v5678, %v5123
        %v5680 = vsel %vm339, %v5677, %v5679
        %v5682 = vshrl.u32 %v5125, 16
        %v5684 = vrot.slane %v5682, 7
        %v5686 = vshrl.u32 %v5128, 16
        %v5688 = vrot.slane %v5686, 7
        %v5689 = vshll.u32 %v5128, 16
        %v5691 = vor.u32 %v5688, %v5689
        %v5692 = vsel %vm339, %v5684, %v5691
        %v5694 = vshrl.u32 %v5206, 16
        %v5696 = vrot.slane %v5694, 7
        %v5698 = vshrl.u32 %v5208, 16
        %v5700 = vrot.slane %v5698, 7
        %v5701 = vshll.u32 %v5208, 16
        %v5703 = vor.u32 %v5700, %v5701
        %v5704 = vsel %vm339, %v5696, %v5703
        %s5753 = scalar_lea.vmem %s4, 192
        %v5754 = vld [vmem:[%s5753] sm:$0xf]
        %v5755 = vld [vmem:[%s5753 + $0x4] sm:$0xf]
        %v5756 = vld [vmem:[%s5753 + $0x8] sm:$0xf]
        %v5757 = vld [vmem:[%s5753 + $0xc] sm:$0xf]
        %v5758 = vld [vmem:[%s5753 + $0x10] sm:$0xf]
        %v5759 = vld [vmem:[%s5753 + $0x14] sm:$0xf]
        %v5760 = vld [vmem:[%s5753 + $0x18] sm:$0xf]
        %v5761 = vld [vmem:[%s5753 + $0x1c] sm:$0xf]
        %v5762 = vld [vmem:[%s5753 + $0x20] sm:$0xf]
        %v5763 = vld [vmem:[%s5753 + $0x24] sm:$0xf]
        %v5764 = vld [vmem:[%s5753 + $0x28] sm:$0xf]
        %v5765 = vld [vmem:[%s5753 + $0x2c] sm:$0xf]
        %v5766 = vld [vmem:[%s5753 + $0x30] sm:$0xf]
        %v5767 = vld [vmem:[%s5753 + $0x34] sm:$0xf]
        %v5768 = vld [vmem:[%s5753 + $0x38] sm:$0xf]
        %v5769 = vld [vmem:[%s5753 + $0x3c] sm:$0xf]
        %v5770 = vld [vmem:[%s5753 + $0x40] sm:$0xf]
        %v5771 = vld [vmem:[%s5753 + $0x44] sm:$0xf]
        %v5772 = vld [vmem:[%s5753 + $0x48] sm:$0xf]
        %v5773 = vld [vmem:[%s5753 + $0x4c] sm:$0xf]
        %v5774 = vld [vmem:[%s5753 + $0x50] sm:$0xf]
        %v5775 = vld [vmem:[%s5753 + $0x54] sm:$0xf]
        %v5776 = vld [vmem:[%s5753 + $0x58] sm:$0xf]
        %v5777 = vld [vmem:[%s5753 + $0x5c] sm:$0xf]
        %v5778 = vld [vmem:[%s5753 + $0x60] sm:$0xf]
        %v5779 = vld [vmem:[%s5753 + $0x64] sm:$0xf]
        %v5780 = vld [vmem:[%s5753 + $0x68] sm:$0xf]
        %v5781 = vld [vmem:[%s5753 + $0x6c] sm:$0xf]
        %v5782 = vld [vmem:[%s5753 + $0x70] sm:$0xf]
        %v5783 = vld [vmem:[%s5753 + $0x74] sm:$0xf]
        %v5784 = vld [vmem:[%s5753 + $0x78] sm:$0xf]
        %v5785 = vld [vmem:[%s5753 + $0x7c] sm:$0xf]
        %v5786 = vld [vmem:[%s5753 + $0x80] sm:$0xf]
        %v5787 = vld [vmem:[%s5753 + $0x84] sm:$0xf]
        %v5788 = vld [vmem:[%s5753 + $0x88] sm:$0xf]
        %v5789 = vld [vmem:[%s5753 + $0x8c] sm:$0xf]
        %v5790 = vld [vmem:[%s5753 + $0x90] sm:$0xf]
        %v5791 = vld [vmem:[%s5753 + $0x94] sm:$0xf]
        %v5792 = vld [vmem:[%s5753 + $0x98] sm:$0xf]
        %v5793 = vld [vmem:[%s5753 + $0x9c] sm:$0xf]
        %v5794 = vld [vmem:[%s5753 + $0xa0] sm:$0xf]
        %v5795 = vld [vmem:[%s5753 + $0xa4] sm:$0xf]
        %v5796 = vld [vmem:[%s5753 + $0xa8] sm:$0xf]
        %v5797 = vld [vmem:[%s5753 + $0xac] sm:$0xf]
        %v5798 = vld [vmem:[%s5753 + $0xb0] sm:$0xf]
        %v5799 = vld [vmem:[%s5753 + $0xb4] sm:$0xf]
        %v5800 = vld [vmem:[%s5753 + $0xb8] sm:$0xf]
        %v5801 = vld [vmem:[%s5753 + $0xbc] sm:$0xf]
        %v5850 = vunpack.c.l.b16 %v5754
        %v5851 = vunpack.c.l.b16 %v5755
        %v5852 = vunpack.c.l.b16 %v5756
        %v5853 = vunpack.c.l.b16 %v5757
        %v5854 = vunpack.c.l.b16 %v5758
        %v5855 = vunpack.c.l.b16 %v5759
        %v5856 = vunpack.c.l.b16 %v5760
        %v5857 = vunpack.c.l.b16 %v5761
        %v5858 = vunpack.c.l.b16 %v5762
        %v5859 = vunpack.c.l.b16 %v5763
        %v5860 = vunpack.c.l.b16 %v5764
        %v5861 = vunpack.c.l.b16 %v5765
        %v5862 = vunpack.c.l.b16 %v5766
        %v5863 = vunpack.c.l.b16 %v5767
        %v5864 = vunpack.c.l.b16 %v5768
        %v5865 = vunpack.c.l.b16 %v5769
        %v5866 = vunpack.c.l.b16 %v5770
        %v5867 = vunpack.c.l.b16 %v5771
        %v5868 = vunpack.c.l.b16 %v5772
        %v5869 = vunpack.c.l.b16 %v5773
        %v5870 = vunpack.c.l.b16 %v5774
        %v5871 = vunpack.c.l.b16 %v5775
        %v5872 = vunpack.c.l.b16 %v5776
        %v5873 = vunpack.c.l.b16 %v5777
        %v5874 = vunpack.c.l.b16 %v5778
        %v5875 = vunpack.c.l.b16 %v5779
        %v5876 = vunpack.c.l.b16 %v5780
        %v5877 = vunpack.c.l.b16 %v5781
        %v5878 = vunpack.c.l.b16 %v5782
        %v5879 = vunpack.c.l.b16 %v5783
        %v5880 = vunpack.c.l.b16 %v5784
        %v5881 = vunpack.c.l.b16 %v5785
        %v5882 = vunpack.c.l.b16 %v5786
        %v5883 = vunpack.c.l.b16 %v5787
        %v5884 = vunpack.c.l.b16 %v5788
        %v5885 = vunpack.c.l.b16 %v5789
        %v5886 = vunpack.c.l.b16 %v5790
        %v5887 = vunpack.c.l.b16 %v5791
        %v5888 = vunpack.c.l.b16 %v5792
        %v5889 = vunpack.c.l.b16 %v5793
        %v5890 = vunpack.c.l.b16 %v5794
        %v5891 = vunpack.c.l.b16 %v5795
        %v5892 = vunpack.c.l.b16 %v5796
        %v5893 = vunpack.c.l.b16 %v5797
        %v5894 = vunpack.c.l.b16 %v5798
        %v5895 = vunpack.c.l.b16 %v5799
        %v5896 = vunpack.c.l.b16 %v5800
        %v5897 = vunpack.c.l.b16 %v5801
        %v5898 = vpack.c.b16 %v5851, %v5850
        %v5899 = vpack.c.b16 %v5853, %v5852
        %v5900 = vpack.c.b16 %v5855, %v5854
        %v5901 = vpack.c.b16 %v5857, %v5856
        %v5902 = vpack.c.b16 %v5859, %v5858
        %v5903 = vpack.c.b16 %v5861, %v5860
        %v5904 = vpack.c.b16 %v5863, %v5862
        %v5905 = vpack.c.b16 %v5865, %v5864
        %v5906 = vpack.c.b16 %v5867, %v5866
        %v5907 = vpack.c.b16 %v5869, %v5868
        %v5908 = vpack.c.b16 %v5871, %v5870
        %v5909 = vpack.c.b16 %v5873, %v5872
        %v5910 = vpack.c.b16 %v5875, %v5874
        %v5911 = vpack.c.b16 %v5877, %v5876
        %v5912 = vpack.c.b16 %v5879, %v5878
        %v5913 = vpack.c.b16 %v5881, %v5880
        %v5914 = vpack.c.b16 %v5883, %v5882
        %v5915 = vpack.c.b16 %v5885, %v5884
        %v5916 = vpack.c.b16 %v5887, %v5886
        %v5917 = vpack.c.b16 %v5889, %v5888
        %v5918 = vpack.c.b16 %v5891, %v5890
        %v5919 = vpack.c.b16 %v5893, %v5892
        %v5920 = vpack.c.b16 %v5895, %v5894
        %v5921 = vpack.c.b16 %v5897, %v5896
        %5946 = vmatprep.subr.bf16.mxu0 0
        %5947 = vmatpush1.bf16.msra.mxu0 %v5898
        %5948 = vmatprep.subr.bf16.mxu0 0
        %5949 = vmatpush1.bf16.msra.mxu0 %v5899
        %5950 = vmatprep.subr.bf16.mxu0 0
        %5951 = vmatpush1.bf16.msra.mxu0 %v5900
        %5952 = vmatprep.subr.bf16.mxu0 0
        %5953 = vmatpush1.bf16.msra.mxu0 %v5901
        %5954 = vmatprep.subr.bf16.mxu0 0
        %5955 = vmatpush1.bf16.msra.mxu0 %v5902
        %5956 = vmatprep.subr.bf16.mxu0 0
        %5957 = vmatpush1.bf16.msra.mxu0 %v5903
        %5958 = vmatprep.subr.bf16.mxu0 0
        %5959 = vmatpush1.bf16.msra.mxu0 %v5904
        %5960 = vmatprep.subr.bf16.mxu0 0
        %5961 = vmatpush1.bf16.msra.mxu0 %v5905
        %5962 = vmatprep.subr.bf16.mxu0 0
        %5963 = vmatpush1.bf16.msra.mxu0 %v5906
        %5964 = vmatprep.subr.bf16.mxu0 0
        %5965 = vmatpush1.bf16.msra.mxu0 %v5907
        %5966 = vmatprep.subr.bf16.mxu0 0
        %5967 = vmatpush1.bf16.msra.mxu0 %v5908
        %5968 = vmatprep.subr.bf16.mxu0 0
        %5969 = vmatpush1.bf16.msra.mxu0 %v5909
        %5970 = vmatprep.subr.bf16.mxu0 0
        %5971 = vmatpush1.bf16.msra.mxu0 %v5910
        %5972 = vmatprep.subr.bf16.mxu0 0
        %5973 = vmatpush1.bf16.msra.mxu0 %v5911
        %5974 = vmatprep.subr.bf16.mxu0 0
        %5975 = vmatpush1.bf16.msra.mxu0 %v5912
        %5976 = vmatprep.subr.bf16.mxu0 0
        %5977 = vmatpush1.bf16.msra.mxu0 %v5913
        %5978 = vmatprep.mubr.bf16.mxu0 %v5227
        %5979 = vmatmul.mubr.bf16.gmra.mrb[0].mxu0 %v5215
        %v5980 = vpop.f32.mrb[0].mxu0
        %v5981 = vadd.f32 0.0, %v5980
        %v5982 = vpop.f32.mrb[0].mxu0
        %v5983 = vpop.f32.mrb[0].mxu0
        %v5984 = vadd.f32 0.0, %v5983
        %v5985 = vpop.f32.mrb[0].mxu0
        %5986 = vmatprep.mubr.bf16.mxu0 %v5258
        %5987 = vmatmul.mubr.bf16.gmra.mrb[0].mxu0 %v5246
        %v5988 = vpop.f32.mrb[0].mxu0
        %v5989 = vadd.f32 0.0, %v5988
        %v5990 = vpop.f32.mrb[0].mxu0
        %v5991 = vpop.f32.mrb[0].mxu0
        %v5992 = vadd.f32 0.0, %v5991
        %v5993 = vpop.f32.mrb[0].mxu0
        %5994 = vmatprep.mubr.bf16.mxu0 %v5289
        %5995 = vmatmul.mubr.bf16.gmra.mrb[0].mxu0 %v5277
        %v5996 = vpop.f32.mrb[0].mxu0
        %v5997 = vadd.f32 0.0, %v5996
        %v5998 = vpop.f32.mrb[0].mxu0
        %v5999 = vpop.f32.mrb[0].mxu0
        %v6000 = vadd.f32 0.0, %v5999
        %v6001 = vpop.f32.mrb[0].mxu0
        %6002 = vmatprep.mubr.bf16.mxu0 %v5320
        %6003 = vmatmul.mubr.bf16.gmra.mrb[0].mxu0 %v5308
        %v6004 = vpop.f32.mrb[0].mxu0
        %v6005 = vadd.f32 0.0, %v6004
        %v6006 = vpop.f32.mrb[0].mxu0
        %v6007 = vpop.f32.mrb[0].mxu0
        %v6008 = vadd.f32 0.0, %v6007
        %v6009 = vpop.f32.mrb[0].mxu0
        %6010 = vmatprep.mubr.bf16.mxu0 %v5351
        %6011 = vmatmul.mubr.bf16.gmra.mrb[0].mxu0 %v5339
        %v6012 = vpop.f32.mrb[0].mxu0
        %v6013 = vadd.f32 0.0, %v6012
        %v6014 = vpop.f32.mrb[0].mxu0
        %v6015 = vpop.f32.mrb[0].mxu0
        %v6016 = vadd.f32 0.0, %v6015
        %v6017 = vpop.f32.mrb[0].mxu0
        %6018 = vmatprep.mubr.bf16.mxu0 %v5382
        %6019 = vmatmul.mubr.bf16.gmra.mrb[0].mxu0 %v5370
        %v6020 = vpop.f32.mrb[0].mxu0
        %v6021 = vadd.f32 0.0, %v6020
        %v6022 = vpop.f32.mrb[0].mxu0
        %v6023 = vpop.f32.mrb[0].mxu0
        %v6024 = vadd.f32 0.0, %v6023
        %v6025 = vpop.f32.mrb[0].mxu0
        %6026 = vmatprep.mubr.bf16.mxu0 %v5413
        %6027 = vmatmul.mubr.bf16.gmra.mrb[0].mxu0 %v5401
        %v6028 = vpop.f32.mrb[0].mxu0
        %v6029 = vadd.f32 0.0, %v6028
        %v6030 = vpop.f32.mrb[0].mxu0
        %v6031 = vpop.f32.mrb[0].mxu0
        %v6032 = vadd.f32 0.0, %v6031
        %v6033 = vpop.f32.mrb[0].mxu0
        %6034 = vmatprep.mubr.bf16.mxu0 %v5444
        %6035 = vmatmul.mubr.bf16.gmra.mrb[0].mxu0 %v5432
        %v6036 = vpop.f32.mrb[0].mxu0
        %v6037 = vadd.f32 0.0, %v6036
        %v6038 = vpop.f32.mrb[0].mxu0
        %v6039 = vpop.f32.mrb[0].mxu0
        %v6040 = vadd.f32 0.0, %v6039
        %v6041 = vpop.f32.mrb[0].mxu0
        %6042 = vmatprep.mubr.bf16.mxu0 %v5475
        %6043 = vmatmul.mubr.bf16.gmra.mrb[0].mxu0 %v5463
        %v6044 = vpop.f32.mrb[0].mxu0
        %v6045 = vadd.f32 0.0, %v6044
        %v6046 = vpop.f32.mrb[0].mxu0
        %v6047 = vpop.f32.mrb[0].mxu0
        %v6048 = vadd.f32 0.0, %v6047
        %v6049 = vpop.f32.mrb[0].mxu0
        %6050 = vmatprep.mubr.bf16.mxu0 %v5506
        %6051 = vmatmul.mubr.bf16.gmra.mrb[0].mxu0 %v5494
        %v6052 = vpop.f32.mrb[0].mxu0
        %v6053 = vadd.f32 0.0, %v6052
        %v6054 = vpop.f32.mrb[0].mxu0
        %v6055 = vpop.f32.mrb[0].mxu0
        %v6056 = vadd.f32 0.0, %v6055
        %v6057 = vpop.f32.mrb[0].mxu0
        %6058 = vmatprep.mubr.bf16.mxu0 %v5537
        %6059 = vmatmul.mubr.bf16.gmra.mrb[0].mxu0 %v5525
        %v6060 = vpop.f32.mrb[0].mxu0
        %v6061 = vadd.f32 0.0, %v6060
        %v6062 = vpop.f32.mrb[0].mxu0
        %v6063 = vpop.f32.mrb[0].mxu0
        %v6064 = vadd.f32 0.0, %v6063
        %v6065 = vpop.f32.mrb[0].mxu0
        %6066 = vmatprep.mubr.bf16.mxu0 %v5568
        %6067 = vmatmul.mubr.bf16.gmra.mrb[0].mxu0 %v5556
        %v6068 = vpop.f32.mrb[0].mxu0
        %v6069 = vadd.f32 0.0, %v6068
        %v6070 = vpop.f32.mrb[0].mxu0
        %v6071 = vpop.f32.mrb[0].mxu0
        %v6072 = vadd.f32 0.0, %v6071
        %v6073 = vpop.f32.mrb[0].mxu0
        %6074 = vmatprep.mubr.bf16.mxu0 %v5599
        %6075 = vmatmul.mubr.bf16.gmra.mrb[0].mxu0 %v5587
        %v6076 = vpop.f32.mrb[0].mxu0
        %v6077 = vadd.f32 0.0, %v6076
        %v6078 = vpop.f32.mrb[0].mxu0
        %v6079 = vpop.f32.mrb[0].mxu0
        %v6080 = vadd.f32 0.0, %v6079
        %v6081 = vpop.f32.mrb[0].mxu0
        %6082 = vmatprep.mubr.bf16.mxu0 %v5630
        %6083 = vmatmul.mubr.bf16.gmra.mrb[0].mxu0 %v5618
        %v6084 = vpop.f32.mrb[0].mxu0
        %v6085 = vadd.f32 0.0, %v6084
        %v6086 = vpop.f32.mrb[0].mxu0
        %v6087 = vpop.f32.mrb[0].mxu0
        %v6088 = vadd.f32 0.0, %v6087
        %v6089 = vpop.f32.mrb[0].mxu0
        %6090 = vmatprep.mubr.bf16.mxu0 %v5661
        %6091 = vmatmul.mubr.bf16.gmra.mrb[0].mxu0 %v5649
        %v6092 = vpop.f32.mrb[0].mxu0
        %v6093 = vadd.f32 0.0, %v6092
        %v6094 = vpop.f32.mrb[0].mxu0
        %v6095 = vpop.f32.mrb[0].mxu0
        %v6096 = vadd.f32 0.0, %v6095
        %v6097 = vpop.f32.mrb[0].mxu0
        %6098 = vmatprep.mubr.bf16.mxu0 %v5692
        %6099 = vmatmul.mubr.bf16.gmra.mrb[0].mxu0 %v5680
        %v6100 = vpop.f32.mrb[0].mxu0
        %v6101 = vadd.f32 0.0, %v6100
        %v6102 = vpop.f32.mrb[0].mxu0
        %v6103 = vpop.f32.mrb[0].mxu0
        %v6104 = vadd.f32 0.0, %v6103
        %v6105 = vpop.f32.mrb[0].mxu0
        %6106 = vdwg.mxu0
        %6107 = vmatprep.subr.bf16.mxu0 0
        %6108 = vmatpush1.bf16.msra.mxu0 %v5914
        %6109 = vmatprep.subr.bf16.mxu0 0
        %6110 = vmatpush1.bf16.msra.mxu0 %v5915
        %6111 = vmatprep.subr.bf16.mxu0 0
        %6112 = vmatpush1.bf16.msra.mxu0 %v5916
        %6113 = vmatprep.subr.bf16.mxu0 0
        %6114 = vmatpush1.bf16.msra.mxu0 %v5917
        %6115 = vmatprep.subr.bf16.mxu0 0
        %6116 = vmatpush1.bf16.msra.mxu0 %v5918
        %6117 = vmatprep.subr.bf16.mxu0 0
        %6118 = vmatpush1.bf16.msra.mxu0 %v5919
        %6119 = vmatprep.subr.bf16.mxu0 0
        %6120 = vmatpush1.bf16.msra.mxu0 %v5920
        %6121 = vmatprep.subr.bf16.mxu0 0
        %6122 = vmatpush1.bf16.msra.mxu0 %v5921
        %6123 = vmatprep.subr.bf16.mxu0 0
        %6124 = vmatpush1.bf16.msra.mxu0 0
        %6125 = vmatprep.subr.bf16.mxu0 0
        %6126 = vmatpush1.bf16.msra.mxu0 0
        %6127 = vmatprep.subr.bf16.mxu0 0
        %6128 = vmatpush1.bf16.msra.mxu0 0
        %6129 = vmatprep.subr.bf16.mxu0 0
        %6130 = vmatpush1.bf16.msra.mxu0 0
        %6131 = vmatprep.subr.bf16.mxu0 0
        %6132 = vmatpush1.bf16.msra.mxu0 0
        %6133 = vmatprep.subr.bf16.mxu0 0
        %6134 = vmatpush1.bf16.msra.mxu0 0
        %6135 = vmatprep.subr.bf16.mxu0 0
        %6136 = vmatpush1.bf16.msra.mxu0 0
        %6137 = vmatprep.subr.bf16.mxu0 0
        %6138 = vmatpush1.bf16.msra.mxu0 0
        %6139 = vmatprep.mubr.bf16.mxu0 0
        %6140 = vmatmul.mubr.bf16.gmra.mrb[0].mxu0 %v5239
        %v6141 = vpop.f32.mrb[0].mxu0
        %v6142 = vadd.f32 %v5981, %v6141
        %v6143 = vpop.f32.mrb[0].mxu0
        %v6144 = vpop.f32.mrb[0].mxu0
        %v6145 = vadd.f32 %v5984, %v6144
        %v6146 = vpop.f32.mrb[0].mxu0
        %6147 = vmatprep.mubr.bf16.mxu0 0
        %6148 = vmatmul.mubr.bf16.gmra.mrb[0].mxu0 %v5270
        %v6149 = vpop.f32.mrb[0].mxu0
        %v6150 = vadd.f32 %v5989, %v6149
        %v6151 = vpop.f32.mrb[0].mxu0
        %v6152 = vpop.f32.mrb[0].mxu0
        %v6153 = vadd.f32 %v5992, %v6152
        %v6154 = vpop.f32.mrb[0].mxu0
        %6155 = vmatprep.mubr.bf16.mxu0 0
        %6156 = vmatmul.mubr.bf16.gmra.mrb[0].mxu0 %v5301
        %v6157 = vpop.f32.mrb[0].mxu0
        %v6158 = vadd.f32 %v5997, %v6157
        %v6159 = vpop.f32.mrb[0].mxu0
        %v6160 = vpop.f32.mrb[0].mxu0
        %v6161 = vadd.f32 %v6000, %v6160
        %v6162 = vpop.f32.mrb[0].mxu0
        %6163 = vmatprep.mubr.bf16.mxu0 0
        %6164 = vmatmul.mubr.bf16.gmra.mrb[0].mxu0 %v5332
        %v6165 = vpop.f32.mrb[0].mxu0
        %v6166 = vadd.f32 %v6005, %v6165
        %v6167 = vpop.f32.mrb[0].mxu0
        %v6168 = vpop.f32.mrb[0].mxu0
        %v6169 = vadd.f32 %v6008, %v6168
        %v6170 = vpop.f32.mrb[0].mxu0
        %6171 = vmatprep.mubr.bf16.mxu0 0
        %6172 = vmatmul.mubr.bf16.gmra.mrb[0].mxu0 %v5363
        %v6173 = vpop.f32.mrb[0].mxu0
        %v6174 = vadd.f32 %v6013, %v6173
        %v6175 = vpop.f32.mrb[0].mxu0
        %v6176 = vpop.f32.mrb[0].mxu0
        %v6177 = vadd.f32 %v6016, %v6176
        %v6178 = vpop.f32.mrb[0].mxu0
        %6179 = vmatprep.mubr.bf16.mxu0 0
        %6180 = vmatmul.mubr.bf16.gmra.mrb[0].mxu0 %v5394
        %v6181 = vpop.f32.mrb[0].mxu0
        %v6182 = vadd.f32 %v6021, %v6181
        %v6183 = vpop.f32.mrb[0].mxu0
        %v6184 = vpop.f32.mrb[0].mxu0
        %v6185 = vadd.f32 %v6024, %v6184
        %v6186 = vpop.f32.mrb[0].mxu0
        %6187 = vmatprep.mubr.bf16.mxu0 0
        %6188 = vmatmul.mubr.bf16.gmra.mrb[0].mxu0 %v5425
        %v6189 = vpop.f32.mrb[0].mxu0
        %v6190 = vadd.f32 %v6029, %v6189
        %v6191 = vpop.f32.mrb[0].mxu0
        %v6192 = vpop.f32.mrb[0].mxu0
        %v6193 = vadd.f32 %v6032, %v6192
        %v6194 = vpop.f32.mrb[0].mxu0
        %6195 = vmatprep.mubr.bf16.mxu0 0
        %6196 = vmatmul.mubr.bf16.gmra.mrb[0].mxu0 %v5456
        %v6197 = vpop.f32.mrb[0].mxu0
        %v6198 = vadd.f32 %v6037, %v6197
        %v6199 = vpop.f32.mrb[0].mxu0
        %v6200 = vpop.f32.mrb[0].mxu0
        %v6201 = vadd.f32 %v6040, %v6200
        %v6202 = vpop.f32.mrb[0].mxu0
        %6203 = vmatprep.mubr.bf16.mxu0 0
        %6204 = vmatmul.mubr.bf16.gmra.mrb[0].mxu0 %v5487
        %v6205 = vpop.f32.mrb[0].mxu0
        %v6206 = vadd.f32 %v6045, %v6205
        %v6207 = vpop.f32.mrb[0].mxu0
        %v6208 = vpop.f32.mrb[0].mxu0
        %v6209 = vadd.f32 %v6048, %v6208
        %v6210 = vpop.f32.mrb[0].mxu0
        %6211 = vmatprep.mubr.bf16.mxu0 0
        %6212 = vmatmul.mubr.bf16.gmra.mrb[0].mxu0 %v5518
        %v6213 = vpop.f32.mrb[0].mxu0
        %v6214 = vadd.f32 %v6053, %v6213
        %v6215 = vpop.f32.mrb[0].mxu0
        %v6216 = vpop.f32.mrb[0].mxu0
        %v6217 = vadd.f32 %v6056, %v6216
        %v6218 = vpop.f32.mrb[0].mxu0
        %6219 = vmatprep.mubr.bf16.mxu0 0
        %6220 = vmatmul.mubr.bf16.gmra.mrb[0].mxu0 %v5549
        %v6221 = vpop.f32.mrb[0].mxu0
        %v6222 = vadd.f32 %v6061, %v6221
        %v6223 = vpop.f32.mrb[0].mxu0
        %v6224 = vpop.f32.mrb[0].mxu0
        %v6225 = vadd.f32 %v6064, %v6224
        %v6226 = vpop.f32.mrb[0].mxu0
        %6227 = vmatprep.mubr.bf16.mxu0 0
        %6228 = vmatmul.mubr.bf16.gmra.mrb[0].mxu0 %v5580
        %v6229 = vpop.f32.mrb[0].mxu0
        %v6230 = vadd.f32 %v6069, %v6229
        %v6231 = vpop.f32.mrb[0].mxu0
        %v6232 = vpop.f32.mrb[0].mxu0
        %v6233 = vadd.f32 %v6072, %v6232
        %v6234 = vpop.f32.mrb[0].mxu0
        %6235 = vmatprep.mubr.bf16.mxu0 0
        %6236 = vmatmul.mubr.bf16.gmra.mrb[0].mxu0 %v5611
        %v6237 = vpop.f32.mrb[0].mxu0
        %v6238 = vadd.f32 %v6077, %v6237
        %v6239 = vpop.f32.mrb[0].mxu0
        %v6240 = vpop.f32.mrb[0].mxu0
        %v6241 = vadd.f32 %v6080, %v6240
        %v6242 = vpop.f32.mrb[0].mxu0
        %6243 = vmatprep.mubr.bf16.mxu0 0
        %6244 = vmatmul.mubr.bf16.gmra.mrb[0].mxu0 %v5642
        %v6245 = vpop.f32.mrb[0].mxu0
        %v6246 = vadd.f32 %v6085, %v6245
        %v6247 = vpop.f32.mrb[0].mxu0
        %v6248 = vpop.f32.mrb[0].mxu0
        %v6249 = vadd.f32 %v6088, %v6248
        %v6250 = vpop.f32.mrb[0].mxu0
        %6251 = vmatprep.mubr.bf16.mxu0 0
        %6252 = vmatmul.mubr.bf16.gmra.mrb[0].mxu0 %v5673
        %v6253 = vpop.f32.mrb[0].mxu0
        %v6254 = vadd.f32 %v6093, %v6253
        %v6255 = vpop.f32.mrb[0].mxu0
        %v6256 = vpop.f32.mrb[0].mxu0
        %v6257 = vadd.f32 %v6096, %v6256
        %v6258 = vpop.f32.mrb[0].mxu0
        %6259 = vmatprep.mubr.bf16.mxu0 0
        %6260 = vmatmul.mubr.bf16.gmra.mrb[0].mxu0 %v5704
        %v6261 = vpop.f32.mrb[0].mxu0
        %v6262 = vadd.f32 %v6101, %v6261
        %v6263 = vpop.f32.mrb[0].mxu0
        %v6264 = vpop.f32.mrb[0].mxu0
        %v6265 = vadd.f32 %v6104, %v6264
        %v6266 = vpop.f32.mrb[0].mxu0
        %6267 = vdwg.mxu0
        %v6268 = vld [vmem:[#allocation4] sm:$0xff]
        %v6269 = vld [vmem:[#allocation4 + $0x8] sm:$0xff]
        %v6270 = vld [vmem:[#allocation4 + $0x10] sm:$0xff]
        %v6271 = vld [vmem:[#allocation4 + $0x18] sm:$0xff]
        %v6272 = vld [vmem:[#allocation4 + $0x20] sm:$0xff]
        %v6273 = vld [vmem:[#allocation4 + $0x28] sm:$0xff]
        %v6274 = vld [vmem:[#allocation4 + $0x30] sm:$0xff]
        %v6275 = vld [vmem:[#allocation4 + $0x38] sm:$0xff]
        %v6276 = vld [vmem:[#allocation4 + $0x40] sm:$0xff]
        %v6277 = vld [vmem:[#allocation4 + $0x48] sm:$0xff]
        %v6278 = vld [vmem:[#allocation4 + $0x50] sm:$0xff]
        %v6279 = vld [vmem:[#allocation4 + $0x58] sm:$0xff]
        %v6280 = vld [vmem:[#allocation4 + $0x60] sm:$0xff]
        %v6281 = vld [vmem:[#allocation4 + $0x68] sm:$0xff]
        %v6282 = vld [vmem:[#allocation4 + $0x70] sm:$0xff]
        %v6283 = vld [vmem:[#allocation4 + $0x78] sm:$0xff]
        %v6284 = vld [vmem:[#allocation4 + $0x80] sm:$0xff]
        %v6285 = vld [vmem:[#allocation4 + $0x88] sm:$0xff]
        %v6286 = vld [vmem:[#allocation4 + $0x90] sm:$0xff]
        %v6287 = vld [vmem:[#allocation4 + $0x98] sm:$0xff]
        %v6288 = vld [vmem:[#allocation4 + $0xa0] sm:$0xff]
        %v6289 = vld [vmem:[#allocation4 + $0xa8] sm:$0xff]
        %v6290 = vld [vmem:[#allocation4 + $0xb0] sm:$0xff]
        %v6291 = vld [vmem:[#allocation4 + $0xb8] sm:$0xff]
        %v6292 = vld [vmem:[#allocation4 + $0xc0] sm:$0xff]
        %v6293 = vld [vmem:[#allocation4 + $0xc8] sm:$0xff]
        %v6294 = vld [vmem:[#allocation4 + $0xd0] sm:$0xff]
        %v6295 = vld [vmem:[#allocation4 + $0xd8] sm:$0xff]
        %v6296 = vld [vmem:[#allocation4 + $0xe0] sm:$0xff]
        %v6297 = vld [vmem:[#allocation4 + $0xe8] sm:$0xff]
        %v6298 = vld [vmem:[#allocation4 + $0xf0] sm:$0xff]
        %v6299 = vld [vmem:[#allocation4 + $0xf8] sm:$0xff]
        %v6300 = vadd.f32 %v6268, %v6142
        %v6301 = vadd.f32 %v6269, %v6145
        %v6302 = vadd.f32 %v6270, %v6150
        %v6303 = vadd.f32 %v6271, %v6153
        %v6304 = vadd.f32 %v6272, %v6158
        %v6305 = vadd.f32 %v6273, %v6161
        %v6306 = vadd.f32 %v6274, %v6166
        %v6307 = vadd.f32 %v6275, %v6169
        %v6308 = vadd.f32 %v6276, %v6174
        %v6309 = vadd.f32 %v6277, %v6177
        %v6310 = vadd.f32 %v6278, %v6182
        %v6311 = vadd.f32 %v6279, %v6185
        %v6312 = vadd.f32 %v6280, %v6190
        %v6313 = vadd.f32 %v6281, %v6193
        %v6314 = vadd.f32 %v6282, %v6198
        %v6315 = vadd.f32 %v6283, %v6201
        %v6316 = vadd.f32 %v6284, %v6206
        %v6317 = vadd.f32 %v6285, %v6209
        %v6318 = vadd.f32 %v6286, %v6214
        %v6319 = vadd.f32 %v6287, %v6217
        %v6320 = vadd.f32 %v6288, %v6222
        %v6321 = vadd.f32 %v6289, %v6225
        %v6322 = vadd.f32 %v6290, %v6230
        %v6323 = vadd.f32 %v6291, %v6233
        %v6324 = vadd.f32 %v6292, %v6238
        %v6325 = vadd.f32 %v6293, %v6241
        %v6326 = vadd.f32 %v6294, %v6246
        %v6327 = vadd.f32 %v6295, %v6249
        %v6328 = vadd.f32 %v6296, %v6254
        %v6329 = vadd.f32 %v6297, %v6257
        %v6330 = vadd.f32 %v6298, %v6262
        %v6331 = vadd.f32 %v6299, %v6265
        %6332 = vst [vmem:[#allocation4] sm:$0xff] %v6300
        %6333 = vst [vmem:[#allocation4 + $0x8] sm:$0xff] %v6301
        %6334 = vst [vmem:[#allocation4 + $0x10] sm:$0xff] %v6302
        %6335 = vst [vmem:[#allocation4 + $0x18] sm:$0xff] %v6303
        %6336 = vst [vmem:[#allocation4 + $0x20] sm:$0xff] %v6304
        %6337 = vst [vmem:[#allocation4 + $0x28] sm:$0xff] %v6305
        %6338 = vst [vmem:[#allocation4 + $0x30] sm:$0xff] %v6306
        %6339 = vst [vmem:[#allocation4 + $0x38] sm:$0xff] %v6307
        %6340 = vst [vmem:[#allocation4 + $0x40] sm:$0xff] %v6308
        %6341 = vst [vmem:[#allocation4 + $0x48] sm:$0xff] %v6309
        %6342 = vst [vmem:[#allocation4 + $0x50] sm:$0xff] %v6310
        %6343 = vst [vmem:[#allocation4 + $0x58] sm:$0xff] %v6311
        %6344 = vst [vmem:[#allocation4 + $0x60] sm:$0xff] %v6312
        %6345 = vst [vmem:[#allocation4 + $0x68] sm:$0xff] %v6313
        %6346 = vst [vmem:[#allocation4 + $0x70] sm:$0xff] %v6314
        %6347 = vst [vmem:[#allocation4 + $0x78] sm:$0xff] %v6315
        %6348 = vst [vmem:[#allocation4 + $0x80] sm:$0xff] %v6316
        %6349 = vst [vmem:[#allocation4 + $0x88] sm:$0xff] %v6317
        %6350 = vst [vmem:[#allocation4 + $0x90] sm:$0xff] %v6318
        %6351 = vst [vmem:[#allocation4 + $0x98] sm:$0xff] %v6319
        %6352 = vst [vmem:[#allocation4 + $0xa0] sm:$0xff] %v6320
        %6353 = vst [vmem:[#allocation4 + $0xa8] sm:$0xff] %v6321
        %6354 = vst [vmem:[#allocation4 + $0xb0] sm:$0xff] %v6322
        %6355 = vst [vmem:[#allocation4 + $0xb8] sm:$0xff] %v6323
        %6356 = vst [vmem:[#allocation4 + $0xc0] sm:$0xff] %v6324
        %6357 = vst [vmem:[#allocation4 + $0xc8] sm:$0xff] %v6325
        %6358 = vst [vmem:[#allocation4 + $0xd0] sm:$0xff] %v6326
        %6359 = vst [vmem:[#allocation4 + $0xd8] sm:$0xff] %v6327
        %6360 = vst [vmem:[#allocation4 + $0xe0] sm:$0xff] %v6328
        %6361 = vst [vmem:[#allocation4 + $0xe8] sm:$0xff] %v6329
        %6362 = vst [vmem:[#allocation4 + $0xf0] sm:$0xff] %v6330
        %6363 = vst [vmem:[#allocation4 + $0xf8] sm:$0xff] %v6331
        %s6364 = scalar_lea.vmem [#allocation3], 48
        %v6365 = vld [vmem:[%s6364] sm:$0x80]
        %v6366 = vld [vmem:[%s6364 + $0x8] sm:$0xff]
        %v6367 = vld [vmem:[%s6364 + $0x18] sm:$0x80]
        %v6368 = vld [vmem:[%s6364 + $0x20] sm:$0xff]
        %v6369 = vld [vmem:[%s6364 + $0x30] sm:$0x80]
        %v6370 = vld [vmem:[%s6364 + $0x38] sm:$0xff]
        %v6371 = vld [vmem:[%s6364 + $0x48] sm:$0x80]
        %v6372 = vld [vmem:[%s6364 + $0x50] sm:$0xff]
        %v6373 = vld [vmem:[%s6364 + $0x60] sm:$0x80]
        %v6374 = vld [vmem:[%s6364 + $0x68] sm:$0xff]
        %v6375 = vld [vmem:[%s6364 + $0x78] sm:$0x80]
        %v6376 = vld [vmem:[%s6364 + $0x80] sm:$0xff]
        %v6377 = vld [vmem:[%s6364 + $0x90] sm:$0x80]
        %v6378 = vld [vmem:[%s6364 + $0x98] sm:$0xff]
        %v6379 = vld [vmem:[%s6364 + $0xa8] sm:$0x80]
        %v6380 = vld [vmem:[%s6364 + $0xb0] sm:$0xff]
        %v6381 = vld [vmem:[%s6364 + $0xc0] sm:$0x80]
        %v6382 = vld [vmem:[%s6364 + $0xc8] sm:$0xff]
        %v6383 = vld [vmem:[%s6364 + $0xd8] sm:$0x80]
        %v6384 = vld [vmem:[%s6364 + $0xe0] sm:$0xff]
        %v6385 = vld [vmem:[%s6364 + $0xf0] sm:$0x80]
        %v6386 = vld [vmem:[%s6364 + $0xf8] sm:$0xff]
        %v6387 = vld [vmem:[%s6364 + $0x108] sm:$0x80]
        %v6388 = vld [vmem:[%s6364 + $0x110] sm:$0xff]
        %v6389 = vld [vmem:[%s6364 + $0x120] sm:$0x80]
        %v6390 = vld [vmem:[%s6364 + $0x128] sm:$0xff]
        %v6391 = vld [vmem:[%s6364 + $0x138] sm:$0x80]
        %v6392 = vld [vmem:[%s6364 + $0x140] sm:$0xff]
        %v6393 = vld [vmem:[%s6364 + $0x150] sm:$0x80]
        %v6394 = vld [vmem:[%s6364 + $0x158] sm:$0xff]
        %v6395 = vld [vmem:[%s6364 + $0x168] sm:$0x80]
        %v6396 = vld [vmem:[%s6364 + $0x170] sm:$0xff]
        %v6397 = vld [vmem:[%s6364 + $0x10] sm:$0x1]
        %v6398 = vld [vmem:[%s6364 + $0x28] sm:$0x1]
        %v6399 = vld [vmem:[%s6364 + $0x40] sm:$0x1]
        %v6400 = vld [vmem:[%s6364 + $0x58] sm:$0x1]
        %v6401 = vld [vmem:[%s6364 + $0x70] sm:$0x1]
        %v6402 = vld [vmem:[%s6364 + $0x88] sm:$0x1]
        %v6403 = vld [vmem:[%s6364 + $0xa0] sm:$0x1]
        %v6404 = vld [vmem:[%s6364 + $0xb8] sm:$0x1]
        %v6405 = vld [vmem:[%s6364 + $0xd0] sm:$0x1]
        %v6406 = vld [vmem:[%s6364 + $0xe8] sm:$0x1]
        %v6407 = vld [vmem:[%s6364 + $0x100] sm:$0x1]
        %v6408 = vld [vmem:[%s6364 + $0x118] sm:$0x1]
        %v6409 = vld [vmem:[%s6364 + $0x130] sm:$0x1]
        %v6410 = vld [vmem:[%s6364 + $0x148] sm:$0x1]
        %v6411 = vld [vmem:[%s6364 + $0x160] sm:$0x1]
        %v6412 = vld [vmem:[%s6364 + $0x178] sm:$0x1]
        %v6414 = vshll.u32 %v6366, 16
        %v6416 = vrot.slane %v6414, 1
        %v6417 = vshrl.u32 %v6366, 16
        %v6419 = vor.u32 %v6417, %v6416
        %v6421 = vshll.u32 %v6368, 16
        %v6423 = vrot.slane %v6421, 1
        %v6424 = vshrl.u32 %v6368, 16
        %v6426 = vor.u32 %v6424, %v6423
        %v6428 = vshll.u32 %v6370, 16
        %v6430 = vrot.slane %v6428, 1
        %v6431 = vshrl.u32 %v6370, 16
        %v6433 = vor.u32 %v6431, %v6430
        %v6435 = vshll.u32 %v6372, 16
        %v6437 = vrot.slane %v6435, 1
        %v6438 = vshrl.u32 %v6372, 16
        %v6440 = vor.u32 %v6438, %v6437
        %v6442 = vshll.u32 %v6374, 16
        %v6444 = vrot.slane %v6442, 1
        %v6445 = vshrl.u32 %v6374, 16
        %v6447 = vor.u32 %v6445, %v6444
        %v6449 = vshll.u32 %v6376, 16
        %v6451 = vrot.slane %v6449, 1
        %v6452 = vshrl.u32 %v6376, 16
        %v6454 = vor.u32 %v6452, %v6451
        %v6456 = vshll.u32 %v6378, 16
        %v6458 = vrot.slane %v6456, 1
        %v6459 = vshrl.u32 %v6378, 16
        %v6461 = vor.u32 %v6459, %v6458
        %v6463 = vshll.u32 %v6380, 16
        %v6465 = vrot.slane %v6463, 1
        %v6466 = vshrl.u32 %v6380, 16
        %v6468 = vor.u32 %v6466, %v6465
        %v6470 = vshll.u32 %v6382, 16
        %v6472 = vrot.slane %v6470, 1
        %v6473 = vshrl.u32 %v6382, 16
        %v6475 = vor.u32 %v6473, %v6472
        %v6477 = vshll.u32 %v6384, 16
        %v6479 = vrot.slane %v6477, 1
        %v6480 = vshrl.u32 %v6384, 16
        %v6482 = vor.u32 %v6480, %v6479
        %v6484 = vshll.u32 %v6386, 16
        %v6486 = vrot.slane %v6484, 1
        %v6487 = vshrl.u32 %v6386, 16
        %v6489 = vor.u32 %v6487, %v6486
        %v6491 = vshll.u32 %v6388, 16
        %v6493 = vrot.slane %v6491, 1
        %v6494 = vshrl.u32 %v6388, 16
        %v6496 = vor.u32 %v6494, %v6493
        %v6498 = vshll.u32 %v6390, 16
        %v6500 = vrot.slane %v6498, 1
        %v6501 = vshrl.u32 %v6390, 16
        %v6503 = vor.u32 %v6501, %v6500
        %v6505 = vshll.u32 %v6392, 16
        %v6507 = vrot.slane %v6505, 1
        %v6508 = vshrl.u32 %v6392, 16
        %v6510 = vor.u32 %v6508, %v6507
        %v6512 = vshll.u32 %v6394, 16
        %v6514 = vrot.slane %v6512, 1
        %v6515 = vshrl.u32 %v6394, 16
        %v6517 = vor.u32 %v6515, %v6514
        %v6519 = vshll.u32 %v6396, 16
        %v6521 = vrot.slane %v6519, 1
        %v6522 = vshrl.u32 %v6396, 16
        %v6524 = vor.u32 %v6522, %v6521
        %v6557 = vrot.slane %v6366, 1
        %v6558 = vrot.slane %v6397, 1
        %v6559 = vsel %vm817, %v6557, %v6558
        %v6560 = vrot.slane %v6368, 1
        %v6561 = vrot.slane %v6398, 1
        %v6562 = vsel %vm817, %v6560, %v6561
        %v6563 = vrot.slane %v6370, 1
        %v6564 = vrot.slane %v6399, 1
        %v6565 = vsel %vm817, %v6563, %v6564
        %v6566 = vrot.slane %v6372, 1
        %v6567 = vrot.slane %v6400, 1
        %v6568 = vsel %vm817, %v6566, %v6567
        %v6569 = vrot.slane %v6374, 1
        %v6570 = vrot.slane %v6401, 1
        %v6571 = vsel %vm817, %v6569, %v6570
        %v6572 = vrot.slane %v6376, 1
        %v6573 = vrot.slane %v6402, 1
        %v6574 = vsel %vm817, %v6572, %v6573
        %v6575 = vrot.slane %v6378, 1
        %v6576 = vrot.slane %v6403, 1
        %v6577 = vsel %vm817, %v6575, %v6576
        %v6578 = vrot.slane %v6380, 1
        %v6579 = vrot.slane %v6404, 1
        %v6580 = vsel %vm817, %v6578, %v6579
        %v6581 = vrot.slane %v6382, 1
        %v6582 = vrot.slane %v6405, 1
        %v6583 = vsel %vm817, %v6581, %v6582
        %v6584 = vrot.slane %v6384, 1
        %v6585 = vrot.slane %v6406, 1
        %v6586 = vsel %vm817, %v6584, %v6585
        %v6587 = vrot.slane %v6386, 1
        %v6588 = vrot.slane %v6407, 1
        %v6589 = vsel %vm817, %v6587, %v6588
        %v6590 = vrot.slane %v6388, 1
        %v6591 = vrot.slane %v6408, 1
        %v6592 = vsel %vm817, %v6590, %v6591
        %v6593 = vrot.slane %v6390, 1
        %v6594 = vrot.slane %v6409, 1
        %v6595 = vsel %vm817, %v6593, %v6594
        %v6596 = vrot.slane %v6392, 1
        %v6597 = vrot.slane %v6410, 1
        %v6598 = vsel %vm817, %v6596, %v6597
        %v6599 = vrot.slane %v6394, 1
        %v6600 = vrot.slane %v6411, 1
        %v6601 = vsel %vm817, %v6599, %v6600
        %v6602 = vrot.slane %v6396, 1
        %v6603 = vrot.slane %v6412, 1
        %v6604 = vsel %vm817, %v6602, %v6603
        %v6606 = vshrl.u32 %v6365, 16
        %v6608 = vrot.slane %v6606, 7
        %v6609 = vrot.slane %v6417, 7
        %v6610 = vor.u32 %v6609, %v6414
        %v6611 = vsel %vm339, %v6608, %v6610
        %v6613 = vshrl.u32 %v6416, 16
        %v6615 = vrot.slane %v6613, 7
        %v6617 = vshrl.u32 %v6419, 16
        %v6619 = vrot.slane %v6617, 7
        %v6620 = vshll.u32 %v6419, 16
        %v6622 = vor.u32 %v6619, %v6620
        %v6623 = vsel %vm339, %v6615, %v6622
        %v6625 = vshrl.u32 %v6557, 16
        %v6627 = vrot.slane %v6625, 7
        %v6629 = vshrl.u32 %v6559, 16
        %v6631 = vrot.slane %v6629, 7
        %v6632 = vshll.u32 %v6559, 16
        %v6634 = vor.u32 %v6631, %v6632
        %v6635 = vsel %vm339, %v6627, %v6634
        %v6637 = vshrl.u32 %v6367, 16
        %v6639 = vrot.slane %v6637, 7
        %v6640 = vrot.slane %v6424, 7
        %v6641 = vor.u32 %v6640, %v6421
        %v6642 = vsel %vm339, %v6639, %v6641
        %v6644 = vshrl.u32 %v6423, 16
        %v6646 = vrot.slane %v6644, 7
        %v6648 = vshrl.u32 %v6426, 16
        %v6650 = vrot.slane %v6648, 7
        %v6651 = vshll.u32 %v6426, 16
        %v6653 = vor.u32 %v6650, %v6651
        %v6654 = vsel %vm339, %v6646, %v6653
        %v6656 = vshrl.u32 %v6560, 16
        %v6658 = vrot.slane %v6656, 7
        %v6660 = vshrl.u32 %v6562, 16
        %v6662 = vrot.slane %v6660, 7
        %v6663 = vshll.u32 %v6562, 16
        %v6665 = vor.u32 %v6662, %v6663
        %v6666 = vsel %vm339, %v6658, %v6665
        %v6668 = vshrl.u32 %v6369, 16
        %v6670 = vrot.slane %v6668, 7
        %v6671 = vrot.slane %v6431, 7
        %v6672 = vor.u32 %v6671, %v6428
        %v6673 = vsel %vm339, %v6670, %v6672
        %v6675 = vshrl.u32 %v6430, 16
        %v6677 = vrot.slane %v6675, 7
        %v6679 = vshrl.u32 %v6433, 16
        %v6681 = vrot.slane %v6679, 7
        %v6682 = vshll.u32 %v6433, 16
        %v6684 = vor.u32 %v6681, %v6682
        %v6685 = vsel %vm339, %v6677, %v6684
        %v6687 = vshrl.u32 %v6563, 16
        %v6689 = vrot.slane %v6687, 7
        %v6691 = vshrl.u32 %v6565, 16
        %v6693 = vrot.slane %v6691, 7
        %v6694 = vshll.u32 %v6565, 16
        %v6696 = vor.u32 %v6693, %v6694
        %v6697 = vsel %vm339, %v6689, %v6696
        %v6699 = vshrl.u32 %v6371, 16
        %v6701 = vrot.slane %v6699, 7
        %v6702 = vrot.slane %v6438, 7
        %v6703 = vor.u32 %v6702, %v6435
        %v6704 = vsel %vm339, %v6701, %v6703
        %v6706 = vshrl.u32 %v6437, 16
        %v6708 = vrot.slane %v6706, 7
        %v6710 = vshrl.u32 %v6440, 16
        %v6712 = vrot.slane %v6710, 7
        %v6713 = vshll.u32 %v6440, 16
        %v6715 = vor.u32 %v6712, %v6713
        %v6716 = vsel %vm339, %v6708, %v6715
        %v6718 = vshrl.u32 %v6566, 16
        %v6720 = vrot.slane %v6718, 7
        %v6722 = vshrl.u32 %v6568, 16
        %v6724 = vrot.slane %v6722, 7
        %v6725 = vshll.u32 %v6568, 16
        %v6727 = vor.u32 %v6724, %v6725
        %v6728 = vsel %vm339, %v6720, %v6727
        %v6730 = vshrl.u32 %v6373, 16
        %v6732 = vrot.slane %v6730, 7
        %v6733 = vrot.slane %v6445, 7
        %v6734 = vor.u32 %v6733, %v6442
        %v6735 = vsel %vm339, %v6732, %v6734
        %v6737 = vshrl.u32 %v6444, 16
        %v6739 = vrot.slane %v6737, 7
        %v6741 = vshrl.u32 %v6447, 16
        %v6743 = vrot.slane %v6741, 7
        %v6744 = vshll.u32 %v6447, 16
        %v6746 = vor.u32 %v6743, %v6744
        %v6747 = vsel %vm339, %v6739, %v6746
        %v6749 = vshrl.u32 %v6569, 16
        %v6751 = vrot.slane %v6749, 7
        %v6753 = vshrl.u32 %v6571, 16
        %v6755 = vrot.slane %v6753, 7
        %v6756 = vshll.u32 %v6571, 16
        %v6758 = vor.u32 %v6755, %v6756
        %v6759 = vsel %vm339, %v6751, %v6758
        %v6761 = vshrl.u32 %v6375, 16
        %v6763 = vrot.slane %v6761, 7
        %v6764 = vrot.slane %v6452, 7
        %v6765 = vor.u32 %v6764, %v6449
        %v6766 = vsel %vm339, %v6763, %v6765
        %v6768 = vshrl.u32 %v6451, 16
        %v6770 = vrot.slane %v6768, 7
        %v6772 = vshrl.u32 %v6454, 16
        %v6774 = vrot.slane %v6772, 7
        %v6775 = vshll.u32 %v6454, 16
        %v6777 = vor.u32 %v6774, %v6775
        %v6778 = vsel %vm339, %v6770, %v6777
        %v6780 = vshrl.u32 %v6572, 16
        %v6782 = vrot.slane %v6780, 7
        %v6784 = vshrl.u32 %v6574, 16
        %v6786 = vrot.slane %v6784, 7
        %v6787 = vshll.u32 %v6574, 16
        %v6789 = vor.u32 %v6786, %v6787
        %v6790 = vsel %vm339, %v6782, %v6789
        %v6792 = vshrl.u32 %v6377, 16
        %v6794 = vrot.slane %v6792, 7
        %v6795 = vrot.slane %v6459, 7
        %v6796 = vor.u32 %v6795, %v6456
        %v6797 = vsel %vm339, %v6794, %v6796
        %v6799 = vshrl.u32 %v6458, 16
        %v6801 = vrot.slane %v6799, 7
        %v6803 = vshrl.u32 %v6461, 16
        %v6805 = vrot.slane %v6803, 7
        %v6806 = vshll.u32 %v6461, 16
        %v6808 = vor.u32 %v6805, %v6806
        %v6809 = vsel %vm339, %v6801, %v6808
        %v6811 = vshrl.u32 %v6575, 16
        %v6813 = vrot.slane %v6811, 7
        %v6815 = vshrl.u32 %v6577, 16
        %v6817 = vrot.slane %v6815, 7
        %v6818 = vshll.u32 %v6577, 16
        %v6820 = vor.u32 %v6817, %v6818
        %v6821 = vsel %vm339, %v6813, %v6820
        %v6823 = vshrl.u32 %v6379, 16
        %v6825 = vrot.slane %v6823, 7
        %v6826 = vrot.slane %v6466, 7
        %v6827 = vor.u32 %v6826, %v6463
        %v6828 = vsel %vm339, %v6825, %v6827
        %v6830 = vshrl.u32 %v6465, 16
        %v6832 = vrot.slane %v6830, 7
        %v6834 = vshrl.u32 %v6468, 16
        %v6836 = vrot.slane %v6834, 7
        %v6837 = vshll.u32 %v6468, 16
        %v6839 = vor.u32 %v6836, %v6837
        %v6840 = vsel %vm339, %v6832, %v6839
        %v6842 = vshrl.u32 %v6578, 16
        %v6844 = vrot.slane %v6842, 7
        %v6846 = vshrl.u32 %v6580, 16
        %v6848 = vrot.slane %v6846, 7
        %v6849 = vshll.u32 %v6580, 16
        %v6851 = vor.u32 %v6848, %v6849
        %v6852 = vsel %vm339, %v6844, %v6851
        %v6854 = vshrl.u32 %v6381, 16
        %v6856 = vrot.slane %v6854, 7
        %v6857 = vrot.slane %v6473, 7
        %v6858 = vor.u32 %v6857, %v6470
        %v6859 = vsel %vm339, %v6856, %v6858
        %v6861 = vshrl.u32 %v6472, 16
        %v6863 = vrot.slane %v6861, 7
        %v6865 = vshrl.u32 %v6475, 16
        %v6867 = vrot.slane %v6865, 7
        %v6868 = vshll.u32 %v6475, 16
        %v6870 = vor.u32 %v6867, %v6868
        %v6871 = vsel %vm339, %v6863, %v6870
        %v6873 = vshrl.u32 %v6581, 16
        %v6875 = vrot.slane %v6873, 7
        %v6877 = vshrl.u32 %v6583, 16
        %v6879 = vrot.slane %v6877, 7
        %v6880 = vshll.u32 %v6583, 16
        %v6882 = vor.u32 %v6879, %v6880
        %v6883 = vsel %vm339, %v6875, %v6882
        %v6885 = vshrl.u32 %v6383, 16
        %v6887 = vrot.slane %v6885, 7
        %v6888 = vrot.slane %v6480, 7
        %v6889 = vor.u32 %v6888, %v6477
        %v6890 = vsel %vm339, %v6887, %v6889
        %v6892 = vshrl.u32 %v6479, 16
        %v6894 = vrot.slane %v6892, 7
        %v6896 = vshrl.u32 %v6482, 16
        %v6898 = vrot.slane %v6896, 7
        %v6899 = vshll.u32 %v6482, 16
        %v6901 = vor.u32 %v6898, %v6899
        %v6902 = vsel %vm339, %v6894, %v6901
        %v6904 = vshrl.u32 %v6584, 16
        %v6906 = vrot.slane %v6904, 7
        %v6908 = vshrl.u32 %v6586, 16
        %v6910 = vrot.slane %v6908, 7
        %v6911 = vshll.u32 %v6586, 16
        %v6913 = vor.u32 %v6910, %v6911
        %v6914 = vsel %vm339, %v6906, %v6913
        %v6916 = vshrl.u32 %v6385, 16
        %v6918 = vrot.slane %v6916, 7
        %v6919 = vrot.slane %v6487, 7
        %v6920 = vor.u32 %v6919, %v6484
        %v6921 = vsel %vm339, %v6918, %v6920
        %v6923 = vshrl.u32 %v6486, 16
        %v6925 = vrot.slane %v6923, 7
        %v6927 = vshrl.u32 %v6489, 16
        %v6929 = vrot.slane %v6927, 7
        %v6930 = vshll.u32 %v6489, 16
        %v6932 = vor.u32 %v6929, %v6930
        %v6933 = vsel %vm339, %v6925, %v6932
        %v6935 = vshrl.u32 %v6587, 16
        %v6937 = vrot.slane %v6935, 7
        %v6939 = vshrl.u32 %v6589, 16
        %v6941 = vrot.slane %v6939, 7
        %v6942 = vshll.u32 %v6589, 16
        %v6944 = vor.u32 %v6941, %v6942
        %v6945 = vsel %vm339, %v6937, %v6944
        %v6947 = vshrl.u32 %v6387, 16
        %v6949 = vrot.slane %v6947, 7
        %v6950 = vrot.slane %v6494, 7
        %v6951 = vor.u32 %v6950, %v6491
        %v6952 = vsel %vm339, %v6949, %v6951
        %v6954 = vshrl.u32 %v6493, 16
        %v6956 = vrot.slane %v6954, 7
        %v6958 = vshrl.u32 %v6496, 16
        %v6960 = vrot.slane %v6958, 7
        %v6961 = vshll.u32 %v6496, 16
        %v6963 = vor.u32 %v6960, %v6961
        %v6964 = vsel %vm339, %v6956, %v6963
        %v6966 = vshrl.u32 %v6590, 16
        %v6968 = vrot.slane %v6966, 7
        %v6970 = vshrl.u32 %v6592, 16
        %v6972 = vrot.slane %v6970, 7
        %v6973 = vshll.u32 %v6592, 16
        %v6975 = vor.u32 %v6972, %v6973
        %v6976 = vsel %vm339, %v6968, %v6975
        %v6978 = vshrl.u32 %v6389, 16
        %v6980 = vrot.slane %v6978, 7
        %v6981 = vrot.slane %v6501, 7
        %v6982 = vor.u32 %v6981, %v6498
        %v6983 = vsel %vm339, %v6980, %v6982
        %v6985 = vshrl.u32 %v6500, 16
        %v6987 = vrot.slane %v6985, 7
        %v6989 = vshrl.u32 %v6503, 16
        %v6991 = vrot.slane %v6989, 7
        %v6992 = vshll.u32 %v6503, 16
        %v6994 = vor.u32 %v6991, %v6992
        %v6995 = vsel %vm339, %v6987, %v6994
        %v6997 = vshrl.u32 %v6593, 16
        %v6999 = vrot.slane %v6997, 7
        %v7001 = vshrl.u32 %v6595, 16
        %v7003 = vrot.slane %v7001, 7
        %v7004 = vshll.u32 %v6595, 16
        %v7006 = vor.u32 %v7003, %v7004
        %v7007 = vsel %vm339, %v6999, %v7006
        %v7009 = vshrl.u32 %v6391, 16
        %v7011 = vrot.slane %v7009, 7
        %v7012 = vrot.slane %v6508, 7
        %v7013 = vor.u32 %v7012, %v6505
        %v7014 = vsel %vm339, %v7011, %v7013
        %v7016 = vshrl.u32 %v6507, 16
        %v7018 = vrot.slane %v7016, 7
        %v7020 = vshrl.u32 %v6510, 16
        %v7022 = vrot.slane %v7020, 7
        %v7023 = vshll.u32 %v6510, 16
        %v7025 = vor.u32 %v7022, %v7023
        %v7026 = vsel %vm339, %v7018, %v7025
        %v7028 = vshrl.u32 %v6596, 16
        %v7030 = vrot.slane %v7028, 7
        %v7032 = vshrl.u32 %v6598, 16
        %v7034 = vrot.slane %v7032, 7
        %v7035 = vshll.u32 %v6598, 16
        %v7037 = vor.u32 %v7034, %v7035
        %v7038 = vsel %vm339, %v7030, %v7037
        %v7040 = vshrl.u32 %v6393, 16
        %v7042 = vrot.slane %v7040, 7
        %v7043 = vrot.slane %v6515, 7
        %v7044 = vor.u32 %v7043, %v6512
        %v7045 = vsel %vm339, %v7042, %v7044
        %v7047 = vshrl.u32 %v6514, 16
        %v7049 = vrot.slane %v7047, 7
        %v7051 = vshrl.u32 %v6517, 16
        %v7053 = vrot.slane %v7051, 7
        %v7054 = vshll.u32 %v6517, 16
        %v7056 = vor.u32 %v7053, %v7054
        %v7057 = vsel %vm339, %v7049, %v7056
        %v7059 = vshrl.u32 %v6599, 16
        %v7061 = vrot.slane %v7059, 7
        %v7063 = vshrl.u32 %v6601, 16
        %v7065 = vrot.slane %v7063, 7
        %v7066 = vshll.u32 %v6601, 16
        %v7068 = vor.u32 %v7065, %v7066
        %v7069 = vsel %vm339, %v7061, %v7068
        %v7071 = vshrl.u32 %v6395, 16
        %v7073 = vrot.slane %v7071, 7
        %v7074 = vrot.slane %v6522, 7
        %v7075 = vor.u32 %v7074, %v6519
        %v7076 = vsel %vm339, %v7073, %v7075
        %v7078 = vshrl.u32 %v6521, 16
        %v7080 = vrot.slane %v7078, 7
        %v7082 = vshrl.u32 %v6524, 16
        %v7084 = vrot.slane %v7082, 7
        %v7085 = vshll.u32 %v6524, 16
        %v7087 = vor.u32 %v7084, %v7085
        %v7088 = vsel %vm339, %v7080, %v7087
        %v7090 = vshrl.u32 %v6602, 16
        %v7092 = vrot.slane %v7090, 7
        %v7094 = vshrl.u32 %v6604, 16
        %v7096 = vrot.slane %v7094, 7
        %v7097 = vshll.u32 %v6604, 16
        %v7099 = vor.u32 %v7096, %v7097
        %v7100 = vsel %vm339, %v7092, %v7099
        %s7149 = scalar_lea.vmem %s4, 384
        %v7150 = vld [vmem:[%s7149] sm:$0xf]
        %v7151 = vld [vmem:[%s7149 + $0x4] sm:$0xf]
        %v7152 = vld [vmem:[%s7149 + $0x8] sm:$0xf]
        %v7153 = vld [vmem:[%s7149 + $0xc] sm:$0xf]
        %v7154 = vld [vmem:[%s7149 + $0x10] sm:$0xf]
        %v7155 = vld [vmem:[%s7149 + $0x14] sm:$0xf]
        %v7156 = vld [vmem:[%s7149 + $0x18] sm:$0xf]
        %v7157 = vld [vmem:[%s7149 + $0x1c] sm:$0xf]
        %v7158 = vld [vmem:[%s7149 + $0x20] sm:$0xf]
        %v7159 = vld [vmem:[%s7149 + $0x24] sm:$0xf]
        %v7160 = vld [vmem:[%s7149 + $0x28] sm:$0xf]
        %v7161 = vld [vmem:[%s7149 + $0x2c] sm:$0xf]
        %v7162 = vld [vmem:[%s7149 + $0x30] sm:$0xf]
        %v7163 = vld [vmem:[%s7149 + $0x34] sm:$0xf]
        %v7164 = vld [vmem:[%s7149 + $0x38] sm:$0xf]
        %v7165 = vld [vmem:[%s7149 + $0x3c] sm:$0xf]
        %v7166 = vld [vmem:[%s7149 + $0x40] sm:$0xf]
        %v7167 = vld [vmem:[%s7149 + $0x44] sm:$0xf]
        %v7168 = vld [vmem:[%s7149 + $0x48] sm:$0xf]
        %v7169 = vld [vmem:[%s7149 + $0x4c] sm:$0xf]
        %v7170 = vld [vmem:[%s7149 + $0x50] sm:$0xf]
        %v7171 = vld [vmem:[%s7149 + $0x54] sm:$0xf]
        %v7172 = vld [vmem:[%s7149 + $0x58] sm:$0xf]
        %v7173 = vld [vmem:[%s7149 + $0x5c] sm:$0xf]
        %v7174 = vld [vmem:[%s7149 + $0x60] sm:$0xf]
        %v7175 = vld [vmem:[%s7149 + $0x64] sm:$0xf]
        %v7176 = vld [vmem:[%s7149 + $0x68] sm:$0xf]
        %v7177 = vld [vmem:[%s7149 + $0x6c] sm:$0xf]
        %v7178 = vld [vmem:[%s7149 + $0x70] sm:$0xf]
        %v7179 = vld [vmem:[%s7149 + $0x74] sm:$0xf]
        %v7180 = vld [vmem:[%s7149 + $0x78] sm:$0xf]
        %v7181 = vld [vmem:[%s7149 + $0x7c] sm:$0xf]
        %v7182 = vld [vmem:[%s7149 + $0x80] sm:$0xf]
        %v7183 = vld [vmem:[%s7149 + $0x84] sm:$0xf]
        %v7184 = vld [vmem:[%s7149 + $0x88] sm:$0xf]
        %v7185 = vld [vmem:[%s7149 + $0x8c] sm:$0xf]
        %v7186 = vld [vmem:[%s7149 + $0x90] sm:$0xf]
        %v7187 = vld [vmem:[%s7149 + $0x94] sm:$0xf]
        %v7188 = vld [vmem:[%s7149 + $0x98] sm:$0xf]
        %v7189 = vld [vmem:[%s7149 + $0x9c] sm:$0xf]
        %v7190 = vld [vmem:[%s7149 + $0xa0] sm:$0xf]
        %v7191 = vld [vmem:[%s7149 + $0xa4] sm:$0xf]
        %v7192 = vld [vmem:[%s7149 + $0xa8] sm:$0xf]
        %v7193 = vld [vmem:[%s7149 + $0xac] sm:$0xf]
        %v7194 = vld [vmem:[%s7149 + $0xb0] sm:$0xf]
        %v7195 = vld [vmem:[%s7149 + $0xb4] sm:$0xf]
        %v7196 = vld [vmem:[%s7149 + $0xb8] sm:$0xf]
        %v7197 = vld [vmem:[%s7149 + $0xbc] sm:$0xf]
        %v7246 = vunpack.c.l.b16 %v7150
        %v7247 = vunpack.c.l.b16 %v7151
        %v7248 = vunpack.c.l.b16 %v7152
        %v7249 = vunpack.c.l.b16 %v7153
        %v7250 = vunpack.c.l.b16 %v7154
        %v7251 = vunpack.c.l.b16 %v7155
        %v7252 = vunpack.c.l.b16 %v7156
        %v7253 = vunpack.c.l.b16 %v7157
        %v7254 = vunpack.c.l.b16 %v7158
        %v7255 = vunpack.c.l.b16 %v7159
        %v7256 = vunpack.c.l.b16 %v7160
        %v7257 = vunpack.c.l.b16 %v7161
        %v7258 = vunpack.c.l.b16 %v7162
        %v7259 = vunpack.c.l.b16 %v7163
        %v7260 = vunpack.c.l.b16 %v7164
        %v7261 = vunpack.c.l.b16 %v7165
        %v7262 = vunpack.c.l.b16 %v7166
        %v7263 = vunpack.c.l.b16 %v7167
        %v7264 = vunpack.c.l.b16 %v7168
        %v7265 = vunpack.c.l.b16 %v7169
        %v7266 = vunpack.c.l.b16 %v7170
        %v7267 = vunpack.c.l.b16 %v7171
        %v7268 = vunpack.c.l.b16 %v7172
        %v7269 = vunpack.c.l.b16 %v7173
        %v7270 = vunpack.c.l.b16 %v7174
        %v7271 = vunpack.c.l.b16 %v7175
        %v7272 = vunpack.c.l.b16 %v7176
        %v7273 = vunpack.c.l.b16 %v7177
        %v7274 = vunpack.c.l.b16 %v7178
        %v7275 = vunpack.c.l.b16 %v7179
        %v7276 = vunpack.c.l.b16 %v7180
        %v7277 = vunpack.c.l.b16 %v7181
        %v7278 = vunpack.c.l.b16 %v7182
        %v7279 = vunpack.c.l.b16 %v7183
        %v7280 = vunpack.c.l.b16 %v7184
        %v7281 = vunpack.c.l.b16 %v7185
        %v7282 = vunpack.c.l.b16 %v7186
        %v7283 = vunpack.c.l.b16 %v7187
        %v7284 = vunpack.c.l.b16 %v7188
        %v7285 = vunpack.c.l.b16 %v7189
        %v7286 = vunpack.c.l.b16 %v7190
        %v7287 = vunpack.c.l.b16 %v7191
        %v7288 = vunpack.c.l.b16 %v7192
        %v7289 = vunpack.c.l.b16 %v7193
        %v7290 = vunpack.c.l.b16 %v7194
        %v7291 = vunpack.c.l.b16 %v7195
        %v7292 = vunpack.c.l.b16 %v7196
        %v7293 = vunpack.c.l.b16 %v7197
        %v7294 = vpack.c.b16 %v7247, %v7246
        %v7295 = vpack.c.b16 %v7249, %v7248
        %v7296 = vpack.c.b16 %v7251, %v7250
        %v7297 = vpack.c.b16 %v7253, %v7252
        %v7298 = vpack.c.b16 %v7255, %v7254
        %v7299 = vpack.c.b16 %v7257, %v7256
        %v7300 = vpack.c.b16 %v7259, %v7258
        %v7301 = vpack.c.b16 %v7261, %v7260
        %v7302 = vpack.c.b16 %v7263, %v7262
        %v7303 = vpack.c.b16 %v7265, %v7264
        %v7304 = vpack.c.b16 %v7267, %v7266
        %v7305 = vpack.c.b16 %v7269, %v7268
        %v7306 = vpack.c.b16 %v7271, %v7270
        %v7307 = vpack.c.b16 %v7273, %v7272
        %v7308 = vpack.c.b16 %v7275, %v7274
        %v7309 = vpack.c.b16 %v7277, %v7276
        %v7310 = vpack.c.b16 %v7279, %v7278
        %v7311 = vpack.c.b16 %v7281, %v7280
        %v7312 = vpack.c.b16 %v7283, %v7282
        %v7313 = vpack.c.b16 %v7285, %v7284
        %v7314 = vpack.c.b16 %v7287, %v7286
        %v7315 = vpack.c.b16 %v7289, %v7288
        %v7316 = vpack.c.b16 %v7291, %v7290
        %v7317 = vpack.c.b16 %v7293, %v7292
        %7342 = vmatprep.subr.bf16.mxu0 0
        %7343 = vmatpush1.bf16.msra.mxu0 %v7294
        %7344 = vmatprep.subr.bf16.mxu0 0
        %7345 = vmatpush1.bf16.msra.mxu0 %v7295
        %7346 = vmatprep.subr.bf16.mxu0 0
        %7347 = vmatpush1.bf16.msra.mxu0 %v7296
        %7348 = vmatprep.subr.bf16.mxu0 0
        %7349 = vmatpush1.bf16.msra.mxu0 %v7297
        %7350 = vmatprep.subr.bf16.mxu0 0
        %7351 = vmatpush1.bf16.msra.mxu0 %v7298
        %7352 = vmatprep.subr.bf16.mxu0 0
        %7353 = vmatpush1.bf16.msra.mxu0 %v7299
        %7354 = vmatprep.subr.bf16.mxu0 0
        %7355 = vmatpush1.bf16.msra.mxu0 %v7300
        %7356 = vmatprep.subr.bf16.mxu0 0
        %7357 = vmatpush1.bf16.msra.mxu0 %v7301
        %7358 = vmatprep.subr.bf16.mxu0 0
        %7359 = vmatpush1.bf16.msra.mxu0 %v7302
        %7360 = vmatprep.subr.bf16.mxu0 0
        %7361 = vmatpush1.bf16.msra.mxu0 %v7303
        %7362 = vmatprep.subr.bf16.mxu0 0
        %7363 = vmatpush1.bf16.msra.mxu0 %v7304
        %7364 = vmatprep.subr.bf16.mxu0 0
        %7365 = vmatpush1.bf16.msra.mxu0 %v7305
        %7366 = vmatprep.subr.bf16.mxu0 0
        %7367 = vmatpush1.bf16.msra.mxu0 %v7306
        %7368 = vmatprep.subr.bf16.mxu0 0
        %7369 = vmatpush1.bf16.msra.mxu0 %v7307
        %7370 = vmatprep.subr.bf16.mxu0 0
        %7371 = vmatpush1.bf16.msra.mxu0 %v7308
        %7372 = vmatprep.subr.bf16.mxu0 0
        %7373 = vmatpush1.bf16.msra.mxu0 %v7309
        %7374 = vmatprep.mubr.bf16.mxu0 %v6623
        %7375 = vmatmul.mubr.bf16.gmra.mrb[0].mxu0 %v6611
        %v7376 = vpop.f32.mrb[0].mxu0
        %v7377 = vadd.f32 0.0, %v7376
        %v7378 = vpop.f32.mrb[0].mxu0
        %v7379 = vpop.f32.mrb[0].mxu0
        %v7380 = vadd.f32 0.0, %v7379
        %v7381 = vpop.f32.mrb[0].mxu0
        %7382 = vmatprep.mubr.bf16.mxu0 %v6654
        %7383 = vmatmul.mubr.bf16.gmra.mrb[0].mxu0 %v6642
        %v7384 = vpop.f32.mrb[0].mxu0
        %v7385 = vadd.f32 0.0, %v7384
        %v7386 = vpop.f32.mrb[0].mxu0
        %v7387 = vpop.f32.mrb[0].mxu0
        %v7388 = vadd.f32 0.0, %v7387
        %v7389 = vpop.f32.mrb[0].mxu0
        %7390 = vmatprep.mubr.bf16.mxu0 %v6685
        %7391 = vmatmul.mubr.bf16.gmra.mrb[0].mxu0 %v6673
        %v7392 = vpop.f32.mrb[0].mxu0
        %v7393 = vadd.f32 0.0, %v7392
        %v7394 = vpop.f32.mrb[0].mxu0
        %v7395 = vpop.f32.mrb[0].mxu0
        %v7396 = vadd.f32 0.0, %v7395
        %v7397 = vpop.f32.mrb[0].mxu0
        %7398 = vmatprep.mubr.bf16.mxu0 %v6716
        %7399 = vmatmul.mubr.bf16.gmra.mrb[0].mxu0 %v6704
        %v7400 = vpop.f32.mrb[0].mxu0
        %v7401 = vadd.f32 0.0, %v7400
        %v7402 = vpop.f32.mrb[0].mxu0
        %v7403 = vpop.f32.mrb[0].mxu0
        %v7404 = vadd.f32 0.0, %v7403
        %v7405 = vpop.f32.mrb[0].mxu0
        %7406 = vmatprep.mubr.bf16.mxu0 %v6747
        %7407 = vmatmul.mubr.bf16.gmra.mrb[0].mxu0 %v6735
        %v7408 = vpop.f32.mrb[0].mxu0
        %v7409 = vadd.f32 0.0, %v7408
        %v7410 = vpop.f32.mrb[0].mxu0
        %v7411 = vpop.f32.mrb[0].mxu0
        %v7412 = vadd.f32 0.0, %v7411
        %v7413 = vpop.f32.mrb[0].mxu0
        %7414 = vmatprep.mubr.bf16.mxu0 %v6778
        %7415 = vmatmul.mubr.bf16.gmra.mrb[0].mxu0 %v6766
        %v7416 = vpop.f32.mrb[0].mxu0
        %v7417 = vadd.f32 0.0, %v7416
        %v7418 = vpop.f32.mrb[0].mxu0
        %v7419 = vpop.f32.mrb[0].mxu0
        %v7420 = vadd.f32 0.0, %v7419
        %v7421 = vpop.f32.mrb[0].mxu0
        %7422 = vmatprep.mubr.bf16.mxu0 %v6809
        %7423 = vmatmul.mubr.bf16.gmra.mrb[0].mxu0 %v6797
        %v7424 = vpop.f32.mrb[0].mxu0
        %v7425 = vadd.f32 0.0, %v7424
        %v7426 = vpop.f32.mrb[0].mxu0
        %v7427 = vpop.f32.mrb[0].mxu0
        %v7428 = vadd.f32 0.0, %v7427
        %v7429 = vpop.f32.mrb[0].mxu0
        %7430 = vmatprep.mubr.bf16.mxu0 %v6840
        %7431 = vmatmul.mubr.bf16.gmra.mrb[0].mxu0 %v6828
        %v7432 = vpop.f32.mrb[0].mxu0
        %v7433 = vadd.f32 0.0, %v7432
        %v7434 = vpop.f32.mrb[0].mxu0
        %v7435 = vpop.f32.mrb[0].mxu0
        %v7436 = vadd.f32 0.0, %v7435
        %v7437 = vpop.f32.mrb[0].mxu0
        %7438 = vmatprep.mubr.bf16.mxu0 %v6871
        %7439 = vmatmul.mubr.bf16.gmra.mrb[0].mxu0 %v6859
        %v7440 = vpop.f32.mrb[0].mxu0
        %v7441 = vadd.f32 0.0, %v7440
        %v7442 = vpop.f32.mrb[0].mxu0
        %v7443 = vpop.f32.mrb[0].mxu0
        %v7444 = vadd.f32 0.0, %v7443
        %v7445 = vpop.f32.mrb[0].mxu0
        %7446 = vmatprep.mubr.bf16.mxu0 %v6902
        %7447 = vmatmul.mubr.bf16.gmra.mrb[0].mxu0 %v6890
        %v7448 = vpop.f32.mrb[0].mxu0
        %v7449 = vadd.f32 0.0, %v7448
        %v7450 = vpop.f32.mrb[0].mxu0
        %v7451 = vpop.f32.mrb[0].mxu0
        %v7452 = vadd.f32 0.0, %v7451
        %v7453 = vpop.f32.mrb[0].mxu0
        %7454 = vmatprep.mubr.bf16.mxu0 %v6933
        %7455 = vmatmul.mubr.bf16.gmra.mrb[0].mxu0 %v6921
        %v7456 = vpop.f32.mrb[0].mxu0
        %v7457 = vadd.f32 0.0, %v7456
        %v7458 = vpop.f32.mrb[0].mxu0
        %v7459 = vpop.f32.mrb[0].mxu0
        %v7460 = vadd.f32 0.0, %v7459
        %v7461 = vpop.f32.mrb[0].mxu0
        %7462 = vmatprep.mubr.bf16.mxu0 %v6964
        %7463 = vmatmul.mubr.bf16.gmra.mrb[0].mxu0 %v6952
        %v7464 = vpop.f32.mrb[0].mxu0
        %v7465 = vadd.f32 0.0, %v7464
        %v7466 = vpop.f32.mrb[0].mxu0
        %v7467 = vpop.f32.mrb[0].mxu0
        %v7468 = vadd.f32 0.0, %v7467
        %v7469 = vpop.f32.mrb[0].mxu0
        %7470 = vmatprep.mubr.bf16.mxu0 %v6995
        %7471 = vmatmul.mubr.bf16.gmra.mrb[0].mxu0 %v6983
        %v7472 = vpop.f32.mrb[0].mxu0
        %v7473 = vadd.f32 0.0, %v7472
        %v7474 = vpop.f32.mrb[0].mxu0
        %v7475 = vpop.f32.mrb[0].mxu0
        %v7476 = vadd.f32 0.0, %v7475
        %v7477 = vpop.f32.mrb[0].mxu0
        %7478 = vmatprep.mubr.bf16.mxu0 %v7026
        %7479 = vmatmul.mubr.bf16.gmra.mrb[0].mxu0 %v7014
        %v7480 = vpop.f32.mrb[0].mxu0
        %v7481 = vadd.f32 0.0, %v7480
        %v7482 = vpop.f32.mrb[0].mxu0
        %v7483 = vpop.f32.mrb[0].mxu0
        %v7484 = vadd.f32 0.0, %v7483
        %v7485 = vpop.f32.mrb[0].mxu0
        %7486 = vmatprep.mubr.bf16.mxu0 %v7057
        %7487 = vmatmul.mubr.bf16.gmra.mrb[0].mxu0 %v7045
        %v7488 = vpop.f32.mrb[0].mxu0
        %v7489 = vadd.f32 0.0, %v7488
        %v7490 = vpop.f32.mrb[0].mxu0
        %v7491 = vpop.f32.mrb[0].mxu0
        %v7492 = vadd.f32 0.0, %v7491
        %v7493 = vpop.f32.mrb[0].mxu0
        %7494 = vmatprep.mubr.bf16.mxu0 %v7088
        %7495 = vmatmul.mubr.bf16.gmra.mrb[0].mxu0 %v7076
        %v7496 = vpop.f32.mrb[0].mxu0
        %v7497 = vadd.f32 0.0, %v7496
        %v7498 = vpop.f32.mrb[0].mxu0
        %v7499 = vpop.f32.mrb[0].mxu0
        %v7500 = vadd.f32 0.0, %v7499
        %v7501 = vpop.f32.mrb[0].mxu0
        %7502 = vdwg.mxu0
        %7503 = vmatprep.subr.bf16.mxu0 0
        %7504 = vmatpush1.bf16.msra.mxu0 %v7310
        %7505 = vmatprep.subr.bf16.mxu0 0
        %7506 = vmatpush1.bf16.msra.mxu0 %v7311
        %7507 = vmatprep.subr.bf16.mxu0 0
        %7508 = vmatpush1.bf16.msra.mxu0 %v7312
        %7509 = vmatprep.subr.bf16.mxu0 0
        %7510 = vmatpush1.bf16.msra.mxu0 %v7313
        %7511 = vmatprep.subr.bf16.mxu0 0
        %7512 = vmatpush1.bf16.msra.mxu0 %v7314
        %7513 = vmatprep.subr.bf16.mxu0 0
        %7514 = vmatpush1.bf16.msra.mxu0 %v7315
        %7515 = vmatprep.subr.bf16.mxu0 0
        %7516 = vmatpush1.bf16.msra.mxu0 %v7316
        %7517 = vmatprep.subr.bf16.mxu0 0
        %7518 = vmatpush1.bf16.msra.mxu0 %v7317
        %7519 = vmatprep.subr.bf16.mxu0 0
        %7520 = vmatpush1.bf16.msra.mxu0 0
        %7521 = vmatprep.subr.bf16.mxu0 0
        %7522 = vmatpush1.bf16.msra.mxu0 0
        %7523 = vmatprep.subr.bf16.mxu0 0
        %7524 = vmatpush1.bf16.msra.mxu0 0
        %7525 = vmatprep.subr.bf16.mxu0 0
        %7526 = vmatpush1.bf16.msra.mxu0 0
        %7527 = vmatprep.subr.bf16.mxu0 0
        %7528 = vmatpush1.bf16.msra.mxu0 0
        %7529 = vmatprep.subr.bf16.mxu0 0
        %7530 = vmatpush1.bf16.msra.mxu0 0
        %7531 = vmatprep.subr.bf16.mxu0 0
        %7532 = vmatpush1.bf16.msra.mxu0 0
        %7533 = vmatprep.subr.bf16.mxu0 0
        %7534 = vmatpush1.bf16.msra.mxu0 0
        %7535 = vmatprep.mubr.bf16.mxu0 0
        %7536 = vmatmul.mubr.bf16.gmra.mrb[0].mxu0 %v6635
        %v7537 = vpop.f32.mrb[0].mxu0
        %v7538 = vadd.f32 %v7377, %v7537
        %v7539 = vpop.f32.mrb[0].mxu0
        %v7540 = vpop.f32.mrb[0].mxu0
        %v7541 = vadd.f32 %v7380, %v7540
        %v7542 = vpop.f32.mrb[0].mxu0
        %7543 = vmatprep.mubr.bf16.mxu0 0
        %7544 = vmatmul.mubr.bf16.gmra.mrb[0].mxu0 %v6666
        %v7545 = vpop.f32.mrb[0].mxu0
        %v7546 = vadd.f32 %v7385, %v7545
        %v7547 = vpop.f32.mrb[0].mxu0
        %v7548 = vpop.f32.mrb[0].mxu0
        %v7549 = vadd.f32 %v7388, %v7548
        %v7550 = vpop.f32.mrb[0].mxu0
        %7551 = vmatprep.mubr.bf16.mxu0 0
        %7552 = vmatmul.mubr.bf16.gmra.mrb[0].mxu0 %v6697
        %v7553 = vpop.f32.mrb[0].mxu0
        %v7554 = vadd.f32 %v7393, %v7553
        %v7555 = vpop.f32.mrb[0].mxu0
        %v7556 = vpop.f32.mrb[0].mxu0
        %v7557 = vadd.f32 %v7396, %v7556
        %v7558 = vpop.f32.mrb[0].mxu0
        %7559 = vmatprep.mubr.bf16.mxu0 0
        %7560 = vmatmul.mubr.bf16.gmra.mrb[0].mxu0 %v6728
        %v7561 = vpop.f32.mrb[0].mxu0
        %v7562 = vadd.f32 %v7401, %v7561
        %v7563 = vpop.f32.mrb[0].mxu0
        %v7564 = vpop.f32.mrb[0].mxu0
        %v7565 = vadd.f32 %v7404, %v7564
        %v7566 = vpop.f32.mrb[0].mxu0
        %7567 = vmatprep.mubr.bf16.mxu0 0
        %7568 = vmatmul.mubr.bf16.gmra.mrb[0].mxu0 %v6759
        %v7569 = vpop.f32.mrb[0].mxu0
        %v7570 = vadd.f32 %v7409, %v7569
        %v7571 = vpop.f32.mrb[0].mxu0
        %v7572 = vpop.f32.mrb[0].mxu0
        %v7573 = vadd.f32 %v7412, %v7572
        %v7574 = vpop.f32.mrb[0].mxu0
        %7575 = vmatprep.mubr.bf16.mxu0 0
        %7576 = vmatmul.mubr.bf16.gmra.mrb[0].mxu0 %v6790
        %v7577 = vpop.f32.mrb[0].mxu0
        %v7578 = vadd.f32 %v7417, %v7577
        %v7579 = vpop.f32.mrb[0].mxu0
        %v7580 = vpop.f32.mrb[0].mxu0
        %v7581 = vadd.f32 %v7420, %v7580
        %v7582 = vpop.f32.mrb[0].mxu0
        %7583 = vmatprep.mubr.bf16.mxu0 0
        %7584 = vmatmul.mubr.bf16.gmra.mrb[0].mxu0 %v6821
        %v7585 = vpop.f32.mrb[0].mxu0
        %v7586 = vadd.f32 %v7425, %v7585
        %v7587 = vpop.f32.mrb[0].mxu0
        %v7588 = vpop.f32.mrb[0].mxu0
        %v7589 = vadd.f32 %v7428, %v7588
        %v7590 = vpop.f32.mrb[0].mxu0
        %7591 = vmatprep.mubr.bf16.mxu0 0
        %7592 = vmatmul.mubr.bf16.gmra.mrb[0].mxu0 %v6852
        %v7593 = vpop.f32.mrb[0].mxu0
        %v7594 = vadd.f32 %v7433, %v7593
        %v7595 = vpop.f32.mrb[0].mxu0
        %v7596 = vpop.f32.mrb[0].mxu0
        %v7597 = vadd.f32 %v7436, %v7596
        %v7598 = vpop.f32.mrb[0].mxu0
        %7599 = vmatprep.mubr.bf16.mxu0 0
        %7600 = vmatmul.mubr.bf16.gmra.mrb[0].mxu0 %v6883
        %v7601 = vpop.f32.mrb[0].mxu0
        %v7602 = vadd.f32 %v7441, %v7601
        %v7603 = vpop.f32.mrb[0].mxu0
        %v7604 = vpop.f32.mrb[0].mxu0
        %v7605 = vadd.f32 %v7444, %v7604
        %v7606 = vpop.f32.mrb[0].mxu0
        %7607 = vmatprep.mubr.bf16.mxu0 0
        %7608 = vmatmul.mubr.bf16.gmra.mrb[0].mxu0 %v6914
        %v7609 = vpop.f32.mrb[0].mxu0
        %v7610 = vadd.f32 %v7449, %v7609
        %v7611 = vpop.f32.mrb[0].mxu0
        %v7612 = vpop.f32.mrb[0].mxu0
        %v7613 = vadd.f32 %v7452, %v7612
        %v7614 = vpop.f32.mrb[0].mxu0
        %7615 = vmatprep.mubr.bf16.mxu0 0
        %7616 = vmatmul.mubr.bf16.gmra.mrb[0].mxu0 %v6945
        %v7617 = vpop.f32.mrb[0].mxu0
        %v7618 = vadd.f32 %v7457, %v7617
        %v7619 = vpop.f32.mrb[0].mxu0
        %v7620 = vpop.f32.mrb[0].mxu0
        %v7621 = vadd.f32 %v7460, %v7620
        %v7622 = vpop.f32.mrb[0].mxu0
        %7623 = vmatprep.mubr.bf16.mxu0 0
        %7624 = vmatmul.mubr.bf16.gmra.mrb[0].mxu0 %v6976
        %v7625 = vpop.f32.mrb[0].mxu0
        %v7626 = vadd.f32 %v7465, %v7625
        %v7627 = vpop.f32.mrb[0].mxu0
        %v7628 = vpop.f32.mrb[0].mxu0
        %v7629 = vadd.f32 %v7468, %v7628
        %v7630 = vpop.f32.mrb[0].mxu0
        %7631 = vmatprep.mubr.bf16.mxu0 0
        %7632 = vmatmul.mubr.bf16.gmra.mrb[0].mxu0 %v7007
        %v7633 = vpop.f32.mrb[0].mxu0
        %v7634 = vadd.f32 %v7473, %v7633
        %v7635 = vpop.f32.mrb[0].mxu0
        %v7636 = vpop.f32.mrb[0].mxu0
        %v7637 = vadd.f32 %v7476, %v7636
        %v7638 = vpop.f32.mrb[0].mxu0
        %7639 = vmatprep.mubr.bf16.mxu0 0
        %7640 = vmatmul.mubr.bf16.gmra.mrb[0].mxu0 %v7038
        %v7641 = vpop.f32.mrb[0].mxu0
        %v7642 = vadd.f32 %v7481, %v7641
        %v7643 = vpop.f32.mrb[0].mxu0
        %v7644 = vpop.f32.mrb[0].mxu0
        %v7645 = vadd.f32 %v7484, %v7644
        %v7646 = vpop.f32.mrb[0].mxu0
        %7647 = vmatprep.mubr.bf16.mxu0 0
        %7648 = vmatmul.mubr.bf16.gmra.mrb[0].mxu0 %v7069
        %v7649 = vpop.f32.mrb[0].mxu0
        %v7650 = vadd.f32 %v7489, %v7649
        %v7651 = vpop.f32.mrb[0].mxu0
        %v7652 = vpop.f32.mrb[0].mxu0
        %v7653 = vadd.f32 %v7492, %v7652
        %v7654 = vpop.f32.mrb[0].mxu0
        %7655 = vmatprep.mubr.bf16.mxu0 0
        %7656 = vmatmul.mubr.bf16.gmra.mrb[0].mxu0 %v7100
        %v7657 = vpop.f32.mrb[0].mxu0
        %v7658 = vadd.f32 %v7497, %v7657
        %v7659 = vpop.f32.mrb[0].mxu0
        %v7660 = vpop.f32.mrb[0].mxu0
        %v7661 = vadd.f32 %v7500, %v7660
        %v7662 = vpop.f32.mrb[0].mxu0
        %7663 = vdwg.mxu0
        %v7664 = vld [vmem:[#allocation4] sm:$0xff]
        %v7665 = vld [vmem:[#allocation4 + $0x8] sm:$0xff]
        %v7666 = vld [vmem:[#allocation4 + $0x10] sm:$0xff]
        %v7667 = vld [vmem:[#allocation4 + $0x18] sm:$0xff]
        %v7668 = vld [vmem:[#allocation4 + $0x20] sm:$0xff]
        %v7669 = vld [vmem:[#allocation4 + $0x28] sm:$0xff]
        %v7670 = vld [vmem:[#allocation4 + $0x30] sm:$0xff]
        %v7671 = vld [vmem:[#allocation4 + $0x38] sm:$0xff]
        %v7672 = vld [vmem:[#allocation4 + $0x40] sm:$0xff]
        %v7673 = vld [vmem:[#allocation4 + $0x48] sm:$0xff]
        %v7674 = vld [vmem:[#allocation4 + $0x50] sm:$0xff]
        %v7675 = vld [vmem:[#allocation4 + $0x58] sm:$0xff]
        %v7676 = vld [vmem:[#allocation4 + $0x60] sm:$0xff]
        %v7677 = vld [vmem:[#allocation4 + $0x68] sm:$0xff]
        %v7678 = vld [vmem:[#allocation4 + $0x70] sm:$0xff]
        %v7679 = vld [vmem:[#allocation4 + $0x78] sm:$0xff]
        %v7680 = vld [vmem:[#allocation4 + $0x80] sm:$0xff]
        %v7681 = vld [vmem:[#allocation4 + $0x88] sm:$0xff]
        %v7682 = vld [vmem:[#allocation4 + $0x90] sm:$0xff]
        %v7683 = vld [vmem:[#allocation4 + $0x98] sm:$0xff]
        %v7684 = vld [vmem:[#allocation4 + $0xa0] sm:$0xff]
        %v7685 = vld [vmem:[#allocation4 + $0xa8] sm:$0xff]
        %v7686 = vld [vmem:[#allocation4 + $0xb0] sm:$0xff]
        %v7687 = vld [vmem:[#allocation4 + $0xb8] sm:$0xff]
        %v7688 = vld [vmem:[#allocation4 + $0xc0] sm:$0xff]
        %v7689 = vld [vmem:[#allocation4 + $0xc8] sm:$0xff]
        %v7690 = vld [vmem:[#allocation4 + $0xd0] sm:$0xff]
        %v7691 = vld [vmem:[#allocation4 + $0xd8] sm:$0xff]
        %v7692 = vld [vmem:[#allocation4 + $0xe0] sm:$0xff]
        %v7693 = vld [vmem:[#allocation4 + $0xe8] sm:$0xff]
        %v7694 = vld [vmem:[#allocation4 + $0xf0] sm:$0xff]
        %v7695 = vld [vmem:[#allocation4 + $0xf8] sm:$0xff]
        %v7696 = vadd.f32 %v7664, %v7538
        %v7697 = vadd.f32 %v7665, %v7541
        %v7698 = vadd.f32 %v7666, %v7546
        %v7699 = vadd.f32 %v7667, %v7549
        %v7700 = vadd.f32 %v7668, %v7554
        %v7701 = vadd.f32 %v7669, %v7557
        %v7702 = vadd.f32 %v7670, %v7562
        %v7703 = vadd.f32 %v7671, %v7565
        %v7704 = vadd.f32 %v7672, %v7570
        %v7705 = vadd.f32 %v7673, %v7573
        %v7706 = vadd.f32 %v7674, %v7578
        %v7707 = vadd.f32 %v7675, %v7581
        %v7708 = vadd.f32 %v7676, %v7586
        %v7709 = vadd.f32 %v7677, %v7589
        %v7710 = vadd.f32 %v7678, %v7594
        %v7711 = vadd.f32 %v7679, %v7597
        %v7712 = vadd.f32 %v7680, %v7602
        %v7713 = vadd.f32 %v7681, %v7605
        %v7714 = vadd.f32 %v7682, %v7610
        %v7715 = vadd.f32 %v7683, %v7613
        %v7716 = vadd.f32 %v7684, %v7618
        %v7717 = vadd.f32 %v7685, %v7621
        %v7718 = vadd.f32 %v7686, %v7626
        %v7719 = vadd.f32 %v7687, %v7629
        %v7720 = vadd.f32 %v7688, %v7634
        %v7721 = vadd.f32 %v7689, %v7637
        %v7722 = vadd.f32 %v7690, %v7642
        %v7723 = vadd.f32 %v7691, %v7645
        %v7724 = vadd.f32 %v7692, %v7650
        %v7725 = vadd.f32 %v7693, %v7653
        %v7726 = vadd.f32 %v7694, %v7658
        %v7727 = vadd.f32 %v7695, %v7661
        %7728 = vst [vmem:[#allocation4] sm:$0xff] %v7696
        %7729 = vst [vmem:[#allocation4 + $0x8] sm:$0xff] %v7697
        %7730 = vst [vmem:[#allocation4 + $0x10] sm:$0xff] %v7698
        %7731 = vst [vmem:[#allocation4 + $0x18] sm:$0xff] %v7699
        %7732 = vst [vmem:[#allocation4 + $0x20] sm:$0xff] %v7700
        %7733 = vst [vmem:[#allocation4 + $0x28] sm:$0xff] %v7701
        %7734 = vst [vmem:[#allocation4 + $0x30] sm:$0xff] %v7702
        %7735 = vst [vmem:[#allocation4 + $0x38] sm:$0xff] %v7703
        %7736 = vst [vmem:[#allocation4 + $0x40] sm:$0xff] %v7704
        %7737 = vst [vmem:[#allocation4 + $0x48] sm:$0xff] %v7705
        %7738 = vst [vmem:[#allocation4 + $0x50] sm:$0xff] %v7706
        %7739 = vst [vmem:[#allocation4 + $0x58] sm:$0xff] %v7707
        %7740 = vst [vmem:[#allocation4 + $0x60] sm:$0xff] %v7708
        %7741 = vst [vmem:[#allocation4 + $0x68] sm:$0xff] %v7709
        %7742 = vst [vmem:[#allocation4 + $0x70] sm:$0xff] %v7710
        %7743 = vst [vmem:[#allocation4 + $0x78] sm:$0xff] %v7711
        %7744 = vst [vmem:[#allocation4 + $0x80] sm:$0xff] %v7712
        %7745 = vst [vmem:[#allocation4 + $0x88] sm:$0xff] %v7713
        %7746 = vst [vmem:[#allocation4 + $0x90] sm:$0xff] %v7714
        %7747 = vst [vmem:[#allocation4 + $0x98] sm:$0xff] %v7715
        %7748 = vst [vmem:[#allocation4 + $0xa0] sm:$0xff] %v7716
        %7749 = vst [vmem:[#allocation4 + $0xa8] sm:$0xff] %v7717
        %7750 = vst [vmem:[#allocation4 + $0xb0] sm:$0xff] %v7718
        %7751 = vst [vmem:[#allocation4 + $0xb8] sm:$0xff] %v7719
        %7752 = vst [vmem:[#allocation4 + $0xc0] sm:$0xff] %v7720
        %7753 = vst [vmem:[#allocation4 + $0xc8] sm:$0xff] %v7721
        %7754 = vst [vmem:[#allocation4 + $0xd0] sm:$0xff] %v7722
        %7755 = vst [vmem:[#allocation4 + $0xd8] sm:$0xff] %v7723
        %7756 = vst [vmem:[#allocation4 + $0xe0] sm:$0xff] %v7724
        %7757 = vst [vmem:[#allocation4 + $0xe8] sm:$0xff] %v7725
        %7758 = vst [vmem:[#allocation4 + $0xf0] sm:$0xff] %v7726
        %7759 = vst [vmem:[#allocation4 + $0xf8] sm:$0xff] %v7727
        %v7760 = vld [vmem:[#allocation4] sm:$0xff]
        %v7761 = vld [vmem:[#allocation4 + $0x8] sm:$0xff]
        %v7762 = vld [vmem:[#allocation4 + $0x10] sm:$0xff]
        %v7763 = vld [vmem:[#allocation4 + $0x18] sm:$0xff]
        %v7764 = vld [vmem:[#allocation4 + $0x20] sm:$0xff]
        %v7765 = vld [vmem:[#allocation4 + $0x28] sm:$0xff]
        %v7766 = vld [vmem:[#allocation4 + $0x30] sm:$0xff]
        %v7767 = vld [vmem:[#allocation4 + $0x38] sm:$0xff]
        %v7768 = vld [vmem:[#allocation4 + $0x40] sm:$0xff]
        %v7769 = vld [vmem:[#allocation4 + $0x48] sm:$0xff]
        %v7770 = vld [vmem:[#allocation4 + $0x50] sm:$0xff]
        %v7771 = vld [vmem:[#allocation4 + $0x58] sm:$0xff]
        %v7772 = vld [vmem:[#allocation4 + $0x60] sm:$0xff]
        %v7773 = vld [vmem:[#allocation4 + $0x68] sm:$0xff]
        %v7774 = vld [vmem:[#allocation4 + $0x70] sm:$0xff]
        %v7775 = vld [vmem:[#allocation4 + $0x78] sm:$0xff]
        %v7776 = vld [vmem:[#allocation4 + $0x80] sm:$0xff]
        %v7777 = vld [vmem:[#allocation4 + $0x88] sm:$0xff]
        %v7778 = vld [vmem:[#allocation4 + $0x90] sm:$0xff]
        %v7779 = vld [vmem:[#allocation4 + $0x98] sm:$0xff]
        %v7780 = vld [vmem:[#allocation4 + $0xa0] sm:$0xff]
        %v7781 = vld [vmem:[#allocation4 + $0xa8] sm:$0xff]
        %v7782 = vld [vmem:[#allocation4 + $0xb0] sm:$0xff]
        %v7783 = vld [vmem:[#allocation4 + $0xb8] sm:$0xff]
        %v7784 = vld [vmem:[#allocation4 + $0xc0] sm:$0xff]
        %v7785 = vld [vmem:[#allocation4 + $0xc8] sm:$0xff]
        %v7786 = vld [vmem:[#allocation4 + $0xd0] sm:$0xff]
        %v7787 = vld [vmem:[#allocation4 + $0xd8] sm:$0xff]
        %v7788 = vld [vmem:[#allocation4 + $0xe0] sm:$0xff]
        %v7789 = vld [vmem:[#allocation4 + $0xe8] sm:$0xff]
        %v7790 = vld [vmem:[#allocation4 + $0xf0] sm:$0xff]
        %v7791 = vld [vmem:[#allocation4 + $0xf8] sm:$0xff]
        %v7792 = vld [vmem:[%s5] sm:$0x1]
        %v7794 = vlaneseq
        %v7795 = vshrl.u32 %v7794, 7
        %v7796 = vsub.s32 0, %v7795
        %v7797 = vrot.slane %v7792, %v7796
        %v7799 = vmul.f32 %v7760, %v7797
        %v7800 = vmul.f32 %v7761, %v7797
        %v7801 = vmul.f32 %v7762, %v7797
        %v7802 = vmul.f32 %v7763, %v7797
        %v7803 = vmul.f32 %v7764, %v7797
        %v7804 = vmul.f32 %v7765, %v7797
        %v7805 = vmul.f32 %v7766, %v7797
        %v7806 = vmul.f32 %v7767, %v7797
        %v7807 = vmul.f32 %v7768, %v7797
        %v7808 = vmul.f32 %v7769, %v7797
        %v7809 = vmul.f32 %v7770, %v7797
        %v7810 = vmul.f32 %v7771, %v7797
        %v7811 = vmul.f32 %v7772, %v7797
        %v7812 = vmul.f32 %v7773, %v7797
        %v7813 = vmul.f32 %v7774, %v7797
        %v7814 = vmul.f32 %v7775, %v7797
        %v7815 = vmul.f32 %v7776, %v7797
        %v7816 = vmul.f32 %v7777, %v7797
        %v7817 = vmul.f32 %v7778, %v7797
        %v7818 = vmul.f32 %v7779, %v7797
        %v7819 = vmul.f32 %v7780, %v7797
        %v7820 = vmul.f32 %v7781, %v7797
        %v7821 = vmul.f32 %v7782, %v7797
        %v7822 = vmul.f32 %v7783, %v7797
        %v7823 = vmul.f32 %v7784, %v7797
        %v7824 = vmul.f32 %v7785, %v7797
        %v7825 = vmul.f32 %v7786, %v7797
        %v7826 = vmul.f32 %v7787, %v7797
        %v7827 = vmul.f32 %v7788, %v7797
        %v7828 = vmul.f32 %v7789, %v7797
        %v7829 = vmul.f32 %v7790, %v7797
        %v7830 = vmul.f32 %v7791, %v7797
        %v7831 = vld [vmem:[%s6] sm:$0x1]
        %v7833 = vlaneseq
        %v7834 = vshrl.u32 %v7833, 7
        %v7835 = vsub.s32 0, %v7834
        %v7836 = vrot.slane %v7831, %v7835
        %v7838 = vadd.f32 %v7799, %v7836
        %v7839 = vadd.f32 %v7800, %v7836
        %v7840 = vadd.f32 %v7801, %v7836
        %v7841 = vadd.f32 %v7802, %v7836
        %v7842 = vadd.f32 %v7803, %v7836
        %v7843 = vadd.f32 %v7804, %v7836
        %v7844 = vadd.f32 %v7805, %v7836
        %v7845 = vadd.f32 %v7806, %v7836
        %v7846 = vadd.f32 %v7807, %v7836
        %v7847 = vadd.f32 %v7808, %v7836
        %v7848 = vadd.f32 %v7809, %v7836
        %v7849 = vadd.f32 %v7810, %v7836
        %v7850 = vadd.f32 %v7811, %v7836
        %v7851 = vadd.f32 %v7812, %v7836
        %v7852 = vadd.f32 %v7813, %v7836
        %v7853 = vadd.f32 %v7814, %v7836
        %v7854 = vadd.f32 %v7815, %v7836
        %v7855 = vadd.f32 %v7816, %v7836
        %v7856 = vadd.f32 %v7817, %v7836
        %v7857 = vadd.f32 %v7818, %v7836
        %v7858 = vadd.f32 %v7819, %v7836
        %v7859 = vadd.f32 %v7820, %v7836
        %v7860 = vadd.f32 %v7821, %v7836
        %v7861 = vadd.f32 %v7822, %v7836
        %v7862 = vadd.f32 %v7823, %v7836
        %v7863 = vadd.f32 %v7824, %v7836
        %v7864 = vadd.f32 %v7825, %v7836
        %v7865 = vadd.f32 %v7826, %v7836
        %v7866 = vadd.f32 %v7827, %v7836
        %v7867 = vadd.f32 %v7828, %v7836
        %v7868 = vadd.f32 %v7829, %v7836
        %v7869 = vadd.f32 %v7830, %v7836
        %v7870 = vmax.f32 %v7838, 0.0
        %v7871 = vmax.f32 %v7839, 0.0
        %v7872 = vmax.f32 %v7840, 0.0
        %v7873 = vmax.f32 %v7841, 0.0
        %v7874 = vmax.f32 %v7842, 0.0
        %v7875 = vmax.f32 %v7843, 0.0
        %v7876 = vmax.f32 %v7844, 0.0
        %v7877 = vmax.f32 %v7845, 0.0
        %v7878 = vmax.f32 %v7846, 0.0
        %v7879 = vmax.f32 %v7847, 0.0
        %v7880 = vmax.f32 %v7848, 0.0
        %v7881 = vmax.f32 %v7849, 0.0
        %v7882 = vmax.f32 %v7850, 0.0
        %v7883 = vmax.f32 %v7851, 0.0
        %v7884 = vmax.f32 %v7852, 0.0
        %v7885 = vmax.f32 %v7853, 0.0
        %v7886 = vmax.f32 %v7854, 0.0
        %v7887 = vmax.f32 %v7855, 0.0
        %v7888 = vmax.f32 %v7856, 0.0
        %v7889 = vmax.f32 %v7857, 0.0
        %v7890 = vmax.f32 %v7858, 0.0
        %v7891 = vmax.f32 %v7859, 0.0
        %v7892 = vmax.f32 %v7860, 0.0
        %v7893 = vmax.f32 %v7861, 0.0
        %v7894 = vmax.f32 %v7862, 0.0
        %v7895 = vmax.f32 %v7863, 0.0
        %v7896 = vmax.f32 %v7864, 0.0
        %v7897 = vmax.f32 %v7865, 0.0
        %v7898 = vmax.f32 %v7866, 0.0
        %v7899 = vmax.f32 %v7867, 0.0
        %v7900 = vmax.f32 %v7868, 0.0
        %v7901 = vmax.f32 %v7869, 0.0
        %v7934 = vcombine.high %v7870, %v7870
        %v7936 = vunpack.c.l.s4 1983009808
        %v7937 = vunpack.c.0.s8 %v7936
        %v7938 = vlaneseq
        %v7939 = vshrl.u32 %v7938, 7
        %v7940 = vsub.s32 %v7937, %v7939
        %v7941 = vrot.slane %v7870, %v7940
        %v7943 = vunpack.c.l.s4 1983009808
        %v7944 = vunpack.c.0.s8 %v7943
        %v7945 = vlaneseq
        %v7946 = vshrl.u32 %v7945, 7
        %v7947 = vsub.s32 %v7944, %v7946
        %v7948 = vrot.slane %v7934, %v7947
        %v7949 = vcombine.high %v7941, %v7941
        %v7950 = vcombine.high %v7948, %v7948
        %v7951 = vcombine.high %v7871, %v7871
        %v7953 = vunpack.c.l.s4 1983009808
        %v7954 = vunpack.c.0.s8 %v7953
        %v7955 = vlaneseq
        %v7956 = vshrl.u32 %v7955, 7
        %v7957 = vsub.s32 %v7954, %v7956
        %v7958 = vrot.slane %v7871, %v7957
        %v7960 = vunpack.c.l.s4 1983009808
        %v7961 = vunpack.c.0.s8 %v7960
        %v7962 = vlaneseq
        %v7963 = vshrl.u32 %v7962, 7
        %v7964 = vsub.s32 %v7961, %v7963
        %v7965 = vrot.slane %v7951, %v7964
        %v7966 = vcombine.high %v7958, %v7958
        %v7967 = vcombine.high %v7965, %v7965
        %v7968 = vcombine.high %v7872, %v7872
        %v7970 = vunpack.c.l.s4 1983009808
        %v7971 = vunpack.c.0.s8 %v7970
        %v7972 = vlaneseq
        %v7973 = vshrl.u32 %v7972, 7
        %v7974 = vsub.s32 %v7971, %v7973
        %v7975 = vrot.slane %v7872, %v7974
        %v7977 = vunpack.c.l.s4 1983009808
        %v7978 = vunpack.c.0.s8 %v7977
        %v7979 = vlaneseq
        %v7980 = vshrl.u32 %v7979, 7
        %v7981 = vsub.s32 %v7978, %v7980
        %v7982 = vrot.slane %v7968, %v7981
        %v7983 = vcombine.high %v7975, %v7975
        %v7984 = vcombine.high %v7982, %v7982
        %v7985 = vcombine.high %v7873, %v7873
        %v7987 = vunpack.c.l.s4 1983009808
        %v7988 = vunpack.c.0.s8 %v7987
        %v7989 = vlaneseq
        %v7990 = vshrl.u32 %v7989, 7
        %v7991 = vsub.s32 %v7988, %v7990
        %v7992 = vrot.slane %v7873, %v7991
        %v7994 = vunpack.c.l.s4 1983009808
        %v7995 = vunpack.c.0.s8 %v7994
        %v7996 = vlaneseq
        %v7997 = vshrl.u32 %v7996, 7
        %v7998 = vsub.s32 %v7995, %v7997
        %v7999 = vrot.slane %v7985, %v7998
        %v8000 = vcombine.high %v7992, %v7992
        %v8001 = vcombine.high %v7999, %v7999
        %v8002 = vcombine.high %v7874, %v7874
        %v8004 = vunpack.c.l.s4 1983009808
        %v8005 = vunpack.c.0.s8 %v8004
        %v8006 = vlaneseq
        %v8007 = vshrl.u32 %v8006, 7
        %v8008 = vsub.s32 %v8005, %v8007
        %v8009 = vrot.slane %v7874, %v8008
        %v8011 = vunpack.c.l.s4 1983009808
        %v8012 = vunpack.c.0.s8 %v8011
        %v8013 = vlaneseq
        %v8014 = vshrl.u32 %v8013, 7
        %v8015 = vsub.s32 %v8012, %v8014
        %v8016 = vrot.slane %v8002, %v8015
        %v8017 = vcombine.high %v8009, %v8009
        %v8018 = vcombine.high %v8016, %v8016
        %v8019 = vcombine.high %v7875, %v7875
        %v8021 = vunpack.c.l.s4 1983009808
        %v8022 = vunpack.c.0.s8 %v8021
        %v8023 = vlaneseq
        %v8024 = vshrl.u32 %v8023, 7
        %v8025 = vsub.s32 %v8022, %v8024
        %v8026 = vrot.slane %v7875, %v8025
        %v8028 = vunpack.c.l.s4 1983009808
        %v8029 = vunpack.c.0.s8 %v8028
        %v8030 = vlaneseq
        %v8031 = vshrl.u32 %v8030, 7
        %v8032 = vsub.s32 %v8029, %v8031
        %v8033 = vrot.slane %v8019, %v8032
        %v8034 = vcombine.high %v8026, %v8026
        %v8035 = vcombine.high %v8033, %v8033
        %v8036 = vcombine.high %v7876, %v7876
        %v8038 = vunpack.c.l.s4 1983009808
        %v8039 = vunpack.c.0.s8 %v8038
        %v8040 = vlaneseq
        %v8041 = vshrl.u32 %v8040, 7
        %v8042 = vsub.s32 %v8039, %v8041
        %v8043 = vrot.slane %v7876, %v8042
        %v8045 = vunpack.c.l.s4 1983009808
        %v8046 = vunpack.c.0.s8 %v8045
        %v8047 = vlaneseq
        %v8048 = vshrl.u32 %v8047, 7
        %v8049 = vsub.s32 %v8046, %v8048
        %v8050 = vrot.slane %v8036, %v8049
        %v8051 = vcombine.high %v8043, %v8043
        %v8052 = vcombine.high %v8050, %v8050
        %v8053 = vcombine.high %v7877, %v7877
        %v8055 = vunpack.c.l.s4 1983009808
        %v8056 = vunpack.c.0.s8 %v8055
        %v8057 = vlaneseq
        %v8058 = vshrl.u32 %v8057, 7
        %v8059 = vsub.s32 %v8056, %v8058
        %v8060 = vrot.slane %v7877, %v8059
        %v8062 = vunpack.c.l.s4 1983009808
        %v8063 = vunpack.c.0.s8 %v8062
        %v8064 = vlaneseq
        %v8065 = vshrl.u32 %v8064, 7
        %v8066 = vsub.s32 %v8063, %v8065
        %v8067 = vrot.slane %v8053, %v8066
        %v8068 = vcombine.high %v8060, %v8060
        %v8069 = vcombine.high %v8067, %v8067
        %v8070 = vcombine.high %v7878, %v7878
        %v8072 = vunpack.c.l.s4 1983009808
        %v8073 = vunpack.c.0.s8 %v8072
        %v8074 = vlaneseq
        %v8075 = vshrl.u32 %v8074, 7
        %v8076 = vsub.s32 %v8073, %v8075
        %v8077 = vrot.slane %v7878, %v8076
        %v8079 = vunpack.c.l.s4 1983009808
        %v8080 = vunpack.c.0.s8 %v8079
        %v8081 = vlaneseq
        %v8082 = vshrl.u32 %v8081, 7
        %v8083 = vsub.s32 %v8080, %v8082
        %v8084 = vrot.slane %v8070, %v8083
        %v8085 = vcombine.high %v8077, %v8077
        %v8086 = vcombine.high %v8084, %v8084
        %v8087 = vcombine.high %v7879, %v7879
        %v8089 = vunpack.c.l.s4 1983009808
        %v8090 = vunpack.c.0.s8 %v8089
        %v8091 = vlaneseq
        %v8092 = vshrl.u32 %v8091, 7
        %v8093 = vsub.s32 %v8090, %v8092
        %v8094 = vrot.slane %v7879, %v8093
        %v8096 = vunpack.c.l.s4 1983009808
        %v8097 = vunpack.c.0.s8 %v8096
        %v8098 = vlaneseq
        %v8099 = vshrl.u32 %v8098, 7
        %v8100 = vsub.s32 %v8097, %v8099
        %v8101 = vrot.slane %v8087, %v8100
        %v8102 = vcombine.high %v8094, %v8094
        %v8103 = vcombine.high %v8101, %v8101
        %v8104 = vcombine.high %v7880, %v7880
        %v8106 = vunpack.c.l.s4 1983009808
        %v8107 = vunpack.c.0.s8 %v8106
        %v8108 = vlaneseq
        %v8109 = vshrl.u32 %v8108, 7
        %v8110 = vsub.s32 %v8107, %v8109
        %v8111 = vrot.slane %v7880, %v8110
        %v8113 = vunpack.c.l.s4 1983009808
        %v8114 = vunpack.c.0.s8 %v8113
        %v8115 = vlaneseq
        %v8116 = vshrl.u32 %v8115, 7
        %v8117 = vsub.s32 %v8114, %v8116
        %v8118 = vrot.slane %v8104, %v8117
        %v8119 = vcombine.high %v8111, %v8111
        %v8120 = vcombine.high %v8118, %v8118
        %v8121 = vcombine.high %v7881, %v7881
        %v8123 = vunpack.c.l.s4 1983009808
        %v8124 = vunpack.c.0.s8 %v8123
        %v8125 = vlaneseq
        %v8126 = vshrl.u32 %v8125, 7
        %v8127 = vsub.s32 %v8124, %v8126
        %v8128 = vrot.slane %v7881, %v8127
        %v8130 = vunpack.c.l.s4 1983009808
        %v8131 = vunpack.c.0.s8 %v8130
        %v8132 = vlaneseq
        %v8133 = vshrl.u32 %v8132, 7
        %v8134 = vsub.s32 %v8131, %v8133
        %v8135 = vrot.slane %v8121, %v8134
        %v8136 = vcombine.high %v8128, %v8128
        %v8137 = vcombine.high %v8135, %v8135
        %v8138 = vcombine.high %v7882, %v7882
        %v8140 = vunpack.c.l.s4 1983009808
        %v8141 = vunpack.c.0.s8 %v8140
        %v8142 = vlaneseq
        %v8143 = vshrl.u32 %v8142, 7
        %v8144 = vsub.s32 %v8141, %v8143
        %v8145 = vrot.slane %v7882, %v8144
        %v8147 = vunpack.c.l.s4 1983009808
        %v8148 = vunpack.c.0.s8 %v8147
        %v8149 = vlaneseq
        %v8150 = vshrl.u32 %v8149, 7
        %v8151 = vsub.s32 %v8148, %v8150
        %v8152 = vrot.slane %v8138, %v8151
        %v8153 = vcombine.high %v8145, %v8145
        %v8154 = vcombine.high %v8152, %v8152
        %v8155 = vcombine.high %v7883, %v7883
        %v8157 = vunpack.c.l.s4 1983009808
        %v8158 = vunpack.c.0.s8 %v8157
        %v8159 = vlaneseq
        %v8160 = vshrl.u32 %v8159, 7
        %v8161 = vsub.s32 %v8158, %v8160
        %v8162 = vrot.slane %v7883, %v8161
        %v8164 = vunpack.c.l.s4 1983009808
        %v8165 = vunpack.c.0.s8 %v8164
        %v8166 = vlaneseq
        %v8167 = vshrl.u32 %v8166, 7
        %v8168 = vsub.s32 %v8165, %v8167
        %v8169 = vrot.slane %v8155, %v8168
        %v8170 = vcombine.high %v8162, %v8162
        %v8171 = vcombine.high %v8169, %v8169
        %v8172 = vcombine.high %v7884, %v7884
        %v8174 = vunpack.c.l.s4 1983009808
        %v8175 = vunpack.c.0.s8 %v8174
        %v8176 = vlaneseq
        %v8177 = vshrl.u32 %v8176, 7
        %v8178 = vsub.s32 %v8175, %v8177
        %v8179 = vrot.slane %v7884, %v8178
        %v8181 = vunpack.c.l.s4 1983009808
        %v8182 = vunpack.c.0.s8 %v8181
        %v8183 = vlaneseq
        %v8184 = vshrl.u32 %v8183, 7
        %v8185 = vsub.s32 %v8182, %v8184
        %v8186 = vrot.slane %v8172, %v8185
        %v8187 = vcombine.high %v8179, %v8179
        %v8188 = vcombine.high %v8186, %v8186
        %v8189 = vcombine.high %v7885, %v7885
        %v8191 = vunpack.c.l.s4 1983009808
        %v8192 = vunpack.c.0.s8 %v8191
        %v8193 = vlaneseq
        %v8194 = vshrl.u32 %v8193, 7
        %v8195 = vsub.s32 %v8192, %v8194
        %v8196 = vrot.slane %v7885, %v8195
        %v8198 = vunpack.c.l.s4 1983009808
        %v8199 = vunpack.c.0.s8 %v8198
        %v8200 = vlaneseq
        %v8201 = vshrl.u32 %v8200, 7
        %v8202 = vsub.s32 %v8199, %v8201
        %v8203 = vrot.slane %v8189, %v8202
        %v8204 = vcombine.high %v8196, %v8196
        %v8205 = vcombine.high %v8203, %v8203
        %v8206 = vcombine.high %v7886, %v7886
        %v8208 = vunpack.c.l.s4 1983009808
        %v8209 = vunpack.c.0.s8 %v8208
        %v8210 = vlaneseq
        %v8211 = vshrl.u32 %v8210, 7
        %v8212 = vsub.s32 %v8209, %v8211
        %v8213 = vrot.slane %v7886, %v8212
        %v8215 = vunpack.c.l.s4 1983009808
        %v8216 = vunpack.c.0.s8 %v8215
        %v8217 = vlaneseq
        %v8218 = vshrl.u32 %v8217, 7
        %v8219 = vsub.s32 %v8216, %v8218
        %v8220 = vrot.slane %v8206, %v8219
        %v8221 = vcombine.high %v8213, %v8213
        %v8222 = vcombine.high %v8220, %v8220
        %v8223 = vcombine.high %v7887, %v7887
        %v8225 = vunpack.c.l.s4 1983009808
        %v8226 = vunpack.c.0.s8 %v8225
        %v8227 = vlaneseq
        %v8228 = vshrl.u32 %v8227, 7
        %v8229 = vsub.s32 %v8226, %v8228
        %v8230 = vrot.slane %v7887, %v8229
        %v8232 = vunpack.c.l.s4 1983009808
        %v8233 = vunpack.c.0.s8 %v8232
        %v8234 = vlaneseq
        %v8235 = vshrl.u32 %v8234, 7
        %v8236 = vsub.s32 %v8233, %v8235
        %v8237 = vrot.slane %v8223, %v8236
        %v8238 = vcombine.high %v8230, %v8230
        %v8239 = vcombine.high %v8237, %v8237
        %v8240 = vcombine.high %v7888, %v7888
        %v8242 = vunpack.c.l.s4 1983009808
        %v8243 = vunpack.c.0.s8 %v8242
        %v8244 = vlaneseq
        %v8245 = vshrl.u32 %v8244, 7
        %v8246 = vsub.s32 %v8243, %v8245
        %v8247 = vrot.slane %v7888, %v8246
        %v8249 = vunpack.c.l.s4 1983009808
        %v8250 = vunpack.c.0.s8 %v8249
        %v8251 = vlaneseq
        %v8252 = vshrl.u32 %v8251, 7
        %v8253 = vsub.s32 %v8250, %v8252
        %v8254 = vrot.slane %v8240, %v8253
        %v8255 = vcombine.high %v8247, %v8247
        %v8256 = vcombine.high %v8254, %v8254
        %v8257 = vcombine.high %v7889, %v7889
        %v8259 = vunpack.c.l.s4 1983009808
        %v8260 = vunpack.c.0.s8 %v8259
        %v8261 = vlaneseq
        %v8262 = vshrl.u32 %v8261, 7
        %v8263 = vsub.s32 %v8260, %v8262
        %v8264 = vrot.slane %v7889, %v8263
        %v8266 = vunpack.c.l.s4 1983009808
        %v8267 = vunpack.c.0.s8 %v8266
        %v8268 = vlaneseq
        %v8269 = vshrl.u32 %v8268, 7
        %v8270 = vsub.s32 %v8267, %v8269
        %v8271 = vrot.slane %v8257, %v8270
        %v8272 = vcombine.high %v8264, %v8264
        %v8273 = vcombine.high %v8271, %v8271
        %v8274 = vcombine.high %v7890, %v7890
        %v8276 = vunpack.c.l.s4 1983009808
        %v8277 = vunpack.c.0.s8 %v8276
        %v8278 = vlaneseq
        %v8279 = vshrl.u32 %v8278, 7
        %v8280 = vsub.s32 %v8277, %v8279
        %v8281 = vrot.slane %v7890, %v8280
        %v8283 = vunpack.c.l.s4 1983009808
        %v8284 = vunpack.c.0.s8 %v8283
        %v8285 = vlaneseq
        %v8286 = vshrl.u32 %v8285, 7
        %v8287 = vsub.s32 %v8284, %v8286
        %v8288 = vrot.slane %v8274, %v8287
        %v8289 = vcombine.high %v8281, %v8281
        %v8290 = vcombine.high %v8288, %v8288
        %v8291 = vcombine.high %v7891, %v7891
        %v8293 = vunpack.c.l.s4 1983009808
        %v8294 = vunpack.c.0.s8 %v8293
        %v8295 = vlaneseq
        %v8296 = vshrl.u32 %v8295, 7
        %v8297 = vsub.s32 %v8294, %v8296
        %v8298 = vrot.slane %v7891, %v8297
        %v8300 = vunpack.c.l.s4 1983009808
        %v8301 = vunpack.c.0.s8 %v8300
        %v8302 = vlaneseq
        %v8303 = vshrl.u32 %v8302, 7
        %v8304 = vsub.s32 %v8301, %v8303
        %v8305 = vrot.slane %v8291, %v8304
        %v8306 = vcombine.high %v8298, %v8298
        %v8307 = vcombine.high %v8305, %v8305
        %v8308 = vcombine.high %v7892, %v7892
        %v8310 = vunpack.c.l.s4 1983009808
        %v8311 = vunpack.c.0.s8 %v8310
        %v8312 = vlaneseq
        %v8313 = vshrl.u32 %v8312, 7
        %v8314 = vsub.s32 %v8311, %v8313
        %v8315 = vrot.slane %v7892, %v8314
        %v8317 = vunpack.c.l.s4 1983009808
        %v8318 = vunpack.c.0.s8 %v8317
        %v8319 = vlaneseq
        %v8320 = vshrl.u32 %v8319, 7
        %v8321 = vsub.s32 %v8318, %v8320
        %v8322 = vrot.slane %v8308, %v8321
        %v8323 = vcombine.high %v8315, %v8315
        %v8324 = vcombine.high %v8322, %v8322
        %v8325 = vcombine.high %v7893, %v7893
        %v8327 = vunpack.c.l.s4 1983009808
        %v8328 = vunpack.c.0.s8 %v8327
        %v8329 = vlaneseq
        %v8330 = vshrl.u32 %v8329, 7
        %v8331 = vsub.s32 %v8328, %v8330
        %v8332 = vrot.slane %v7893, %v8331
        %v8334 = vunpack.c.l.s4 1983009808
        %v8335 = vunpack.c.0.s8 %v8334
        %v8336 = vlaneseq
        %v8337 = vshrl.u32 %v8336, 7
        %v8338 = vsub.s32 %v8335, %v8337
        %v8339 = vrot.slane %v8325, %v8338
        %v8340 = vcombine.high %v8332, %v8332
        %v8341 = vcombine.high %v8339, %v8339
        %v8342 = vcombine.high %v7894, %v7894
        %v8344 = vunpack.c.l.s4 1983009808
        %v8345 = vunpack.c.0.s8 %v8344
        %v8346 = vlaneseq
        %v8347 = vshrl.u32 %v8346, 7
        %v8348 = vsub.s32 %v8345, %v8347
        %v8349 = vrot.slane %v7894, %v8348
        %v8351 = vunpack.c.l.s4 1983009808
        %v8352 = vunpack.c.0.s8 %v8351
        %v8353 = vlaneseq
        %v8354 = vshrl.u32 %v8353, 7
        %v8355 = vsub.s32 %v8352, %v8354
        %v8356 = vrot.slane %v8342, %v8355
        %v8357 = vcombine.high %v8349, %v8349
        %v8358 = vcombine.high %v8356, %v8356
        %v8359 = vcombine.high %v7895, %v7895
        %v8361 = vunpack.c.l.s4 1983009808
        %v8362 = vunpack.c.0.s8 %v8361
        %v8363 = vlaneseq
        %v8364 = vshrl.u32 %v8363, 7
        %v8365 = vsub.s32 %v8362, %v8364
        %v8366 = vrot.slane %v7895, %v8365
        %v8368 = vunpack.c.l.s4 1983009808
        %v8369 = vunpack.c.0.s8 %v8368
        %v8370 = vlaneseq
        %v8371 = vshrl.u32 %v8370, 7
        %v8372 = vsub.s32 %v8369, %v8371
        %v8373 = vrot.slane %v8359, %v8372
        %v8374 = vcombine.high %v8366, %v8366
        %v8375 = vcombine.high %v8373, %v8373
        %v8376 = vcombine.high %v7896, %v7896
        %v8378 = vunpack.c.l.s4 1983009808
        %v8379 = vunpack.c.0.s8 %v8378
        %v8380 = vlaneseq
        %v8381 = vshrl.u32 %v8380, 7
        %v8382 = vsub.s32 %v8379, %v8381
        %v8383 = vrot.slane %v7896, %v8382
        %v8385 = vunpack.c.l.s4 1983009808
        %v8386 = vunpack.c.0.s8 %v8385
        %v8387 = vlaneseq
        %v8388 = vshrl.u32 %v8387, 7
        %v8389 = vsub.s32 %v8386, %v8388
        %v8390 = vrot.slane %v8376, %v8389
        %v8391 = vcombine.high %v8383, %v8383
        %v8392 = vcombine.high %v8390, %v8390
        %v8393 = vcombine.high %v7897, %v7897
        %v8395 = vunpack.c.l.s4 1983009808
        %v8396 = vunpack.c.0.s8 %v8395
        %v8397 = vlaneseq
        %v8398 = vshrl.u32 %v8397, 7
        %v8399 = vsub.s32 %v8396, %v8398
        %v8400 = vrot.slane %v7897, %v8399
        %v8402 = vunpack.c.l.s4 1983009808
        %v8403 = vunpack.c.0.s8 %v8402
        %v8404 = vlaneseq
        %v8405 = vshrl.u32 %v8404, 7
        %v8406 = vsub.s32 %v8403, %v8405
        %v8407 = vrot.slane %v8393, %v8406
        %v8408 = vcombine.high %v8400, %v8400
        %v8409 = vcombine.high %v8407, %v8407
        %v8410 = vcombine.high %v7898, %v7898
        %v8412 = vunpack.c.l.s4 1983009808
        %v8413 = vunpack.c.0.s8 %v8412
        %v8414 = vlaneseq
        %v8415 = vshrl.u32 %v8414, 7
        %v8416 = vsub.s32 %v8413, %v8415
        %v8417 = vrot.slane %v7898, %v8416
        %v8419 = vunpack.c.l.s4 1983009808
        %v8420 = vunpack.c.0.s8 %v8419
        %v8421 = vlaneseq
        %v8422 = vshrl.u32 %v8421, 7
        %v8423 = vsub.s32 %v8420, %v8422
        %v8424 = vrot.slane %v8410, %v8423
        %v8425 = vcombine.high %v8417, %v8417
        %v8426 = vcombine.high %v8424, %v8424
        %v8427 = vcombine.high %v7899, %v7899
        %v8429 = vunpack.c.l.s4 1983009808
        %v8430 = vunpack.c.0.s8 %v8429
        %v8431 = vlaneseq
        %v8432 = vshrl.u32 %v8431, 7
        %v8433 = vsub.s32 %v8430, %v8432
        %v8434 = vrot.slane %v7899, %v8433
        %v8436 = vunpack.c.l.s4 1983009808
        %v8437 = vunpack.c.0.s8 %v8436
        %v8438 = vlaneseq
        %v8439 = vshrl.u32 %v8438, 7
        %v8440 = vsub.s32 %v8437, %v8439
        %v8441 = vrot.slane %v8427, %v8440
        %v8442 = vcombine.high %v8434, %v8434
        %v8443 = vcombine.high %v8441, %v8441
        %v8444 = vcombine.high %v7900, %v7900
        %v8446 = vunpack.c.l.s4 1983009808
        %v8447 = vunpack.c.0.s8 %v8446
        %v8448 = vlaneseq
        %v8449 = vshrl.u32 %v8448, 7
        %v8450 = vsub.s32 %v8447, %v8449
        %v8451 = vrot.slane %v7900, %v8450
        %v8453 = vunpack.c.l.s4 1983009808
        %v8454 = vunpack.c.0.s8 %v8453
        %v8455 = vlaneseq
        %v8456 = vshrl.u32 %v8455, 7
        %v8457 = vsub.s32 %v8454, %v8456
        %v8458 = vrot.slane %v8444, %v8457
        %v8459 = vcombine.high %v8451, %v8451
        %v8460 = vcombine.high %v8458, %v8458
        %v8461 = vcombine.high %v7901, %v7901
        %v8463 = vunpack.c.l.s4 1983009808
        %v8464 = vunpack.c.0.s8 %v8463
        %v8465 = vlaneseq
        %v8466 = vshrl.u32 %v8465, 7
        %v8467 = vsub.s32 %v8464, %v8466
        %v8468 = vrot.slane %v7901, %v8467
        %v8470 = vunpack.c.l.s4 1983009808
        %v8471 = vunpack.c.0.s8 %v8470
        %v8472 = vlaneseq
        %v8473 = vshrl.u32 %v8472, 7
        %v8474 = vsub.s32 %v8471, %v8473
        %v8475 = vrot.slane %v8461, %v8474
        %v8476 = vcombine.high %v8468, %v8468
        %v8477 = vcombine.high %v8475, %v8475
        %v8606 = vrot.slane %v7941, 7
        %v8607 = vrot.slane %v8606, 2
        %v8608 = vrot.slane %v7949, 7
        %v8609 = vrot.slane %v8608, 2
        %v8610 = vrot.slane %v7948, 7
        %v8611 = vrot.slane %v8610, 2
        %v8612 = vrot.slane %v7950, 7
        %v8613 = vrot.slane %v8612, 2
        %v8614 = vrot.slane %v7958, 7
        %v8615 = vrot.slane %v8614, 2
        %v8616 = vrot.slane %v7966, 7
        %v8617 = vrot.slane %v8616, 2
        %v8618 = vrot.slane %v7965, 7
        %v8619 = vrot.slane %v8618, 2
        %v8620 = vrot.slane %v7967, 7
        %v8621 = vrot.slane %v8620, 2
        %v8622 = vrot.slane %v8009, 7
        %v8623 = vrot.slane %v8622, 2
        %v8624 = vrot.slane %v8017, 7
        %v8625 = vrot.slane %v8624, 2
        %v8626 = vrot.slane %v8016, 7
        %v8627 = vrot.slane %v8626, 2
        %v8628 = vrot.slane %v8018, 7
        %v8629 = vrot.slane %v8628, 2
        %v8630 = vrot.slane %v8026, 7
        %v8631 = vrot.slane %v8630, 2
        %v8632 = vrot.slane %v8034, 7
        %v8633 = vrot.slane %v8632, 2
        %v8634 = vrot.slane %v8033, 7
        %v8635 = vrot.slane %v8634, 2
        %v8636 = vrot.slane %v8035, 7
        %v8637 = vrot.slane %v8636, 2
        %v8638 = vrot.slane %v8077, 7
        %v8639 = vrot.slane %v8638, 2
        %v8640 = vrot.slane %v8085, 7
        %v8641 = vrot.slane %v8640, 2
        %v8642 = vrot.slane %v8084, 7
        %v8643 = vrot.slane %v8642, 2
        %v8644 = vrot.slane %v8086, 7
        %v8645 = vrot.slane %v8644, 2
        %v8646 = vrot.slane %v8094, 7
        %v8647 = vrot.slane %v8646, 2
        %v8648 = vrot.slane %v8102, 7
        %v8649 = vrot.slane %v8648, 2
        %v8650 = vrot.slane %v8101, 7
        %v8651 = vrot.slane %v8650, 2
        %v8652 = vrot.slane %v8103, 7
        %v8653 = vrot.slane %v8652, 2
        %v8654 = vrot.slane %v8145, 7
        %v8655 = vrot.slane %v8654, 2
        %v8656 = vrot.slane %v8153, 7
        %v8657 = vrot.slane %v8656, 2
        %v8658 = vrot.slane %v8152, 7
        %v8659 = vrot.slane %v8658, 2
        %v8660 = vrot.slane %v8154, 7
        %v8661 = vrot.slane %v8660, 2
        %v8662 = vrot.slane %v8162, 7
        %v8663 = vrot.slane %v8662, 2
        %v8664 = vrot.slane %v8170, 7
        %v8665 = vrot.slane %v8664, 2
        %v8666 = vrot.slane %v8169, 7
        %v8667 = vrot.slane %v8666, 2
        %v8668 = vrot.slane %v8171, 7
        %v8669 = vrot.slane %v8668, 2
        %v8670 = vrot.slane %v8213, 7
        %v8671 = vrot.slane %v8670, 2
        %v8672 = vrot.slane %v8221, 7
        %v8673 = vrot.slane %v8672, 2
        %v8674 = vrot.slane %v8220, 7
        %v8675 = vrot.slane %v8674, 2
        %v8676 = vrot.slane %v8222, 7
        %v8677 = vrot.slane %v8676, 2
        %v8678 = vrot.slane %v8230, 7
        %v8679 = vrot.slane %v8678, 2
        %v8680 = vrot.slane %v8238, 7
        %v8681 = vrot.slane %v8680, 2
        %v8682 = vrot.slane %v8237, 7
        %v8683 = vrot.slane %v8682, 2
        %v8684 = vrot.slane %v8239, 7
        %v8685 = vrot.slane %v8684, 2
        %v8686 = vrot.slane %v8281, 7
        %v8687 = vrot.slane %v8686, 2
        %v8688 = vrot.slane %v8289, 7
        %v8689 = vrot.slane %v8688, 2
        %v8690 = vrot.slane %v8288, 7
        %v8691 = vrot.slane %v8690, 2
        %v8692 = vrot.slane %v8290, 7
        %v8693 = vrot.slane %v8692, 2
        %v8694 = vrot.slane %v8298, 7
        %v8695 = vrot.slane %v8694, 2
        %v8696 = vrot.slane %v8306, 7
        %v8697 = vrot.slane %v8696, 2
        %v8698 = vrot.slane %v8305, 7
        %v8699 = vrot.slane %v8698, 2
        %v8700 = vrot.slane %v8307, 7
        %v8701 = vrot.slane %v8700, 2
        %v8702 = vrot.slane %v8349, 7
        %v8703 = vrot.slane %v8702, 2
        %v8704 = vrot.slane %v8357, 7
        %v8705 = vrot.slane %v8704, 2
        %v8706 = vrot.slane %v8356, 7
        %v8707 = vrot.slane %v8706, 2
        %v8708 = vrot.slane %v8358, 7
        %v8709 = vrot.slane %v8708, 2
        %v8710 = vrot.slane %v8366, 7
        %v8711 = vrot.slane %v8710, 2
        %v8712 = vrot.slane %v8374, 7
        %v8713 = vrot.slane %v8712, 2
        %v8714 = vrot.slane %v8373, 7
        %v8715 = vrot.slane %v8714, 2
        %v8716 = vrot.slane %v8375, 7
        %v8717 = vrot.slane %v8716, 2
        %v8718 = vrot.slane %v8417, 7
        %v8719 = vrot.slane %v8718, 2
        %v8720 = vrot.slane %v8425, 7
        %v8721 = vrot.slane %v8720, 2
        %v8722 = vrot.slane %v8424, 7
        %v8723 = vrot.slane %v8722, 2
        %v8724 = vrot.slane %v8426, 7
        %v8725 = vrot.slane %v8724, 2
        %v8726 = vrot.slane %v8434, 7
        %v8727 = vrot.slane %v8726, 2
        %v8728 = vrot.slane %v8442, 7
        %v8729 = vrot.slane %v8728, 2
        %v8730 = vrot.slane %v8441, 7
        %v8731 = vrot.slane %v8730, 2
        %v8732 = vrot.slane %v8443, 7
        %v8733 = vrot.slane %v8732, 2
        %v8798 = vadd.f32 %v7941, %v8607
        %v8799 = vadd.f32 %v7949, %v8609
        %v8800 = vadd.f32 %v7948, %v8611
        %v8801 = vadd.f32 %v7950, %v8613
        %v8802 = vadd.f32 %v7958, %v8615
        %v8803 = vadd.f32 %v7966, %v8617
        %v8804 = vadd.f32 %v7965, %v8619
        %v8805 = vadd.f32 %v7967, %v8621
        %v8806 = vadd.f32 %v8009, %v8623
        %v8807 = vadd.f32 %v8017, %v8625
        %v8808 = vadd.f32 %v8016, %v8627
        %v8809 = vadd.f32 %v8018, %v8629
        %v8810 = vadd.f32 %v8026, %v8631
        %v8811 = vadd.f32 %v8034, %v8633
        %v8812 = vadd.f32 %v8033, %v8635
        %v8813 = vadd.f32 %v8035, %v8637
        %v8814 = vadd.f32 %v8077, %v8639
        %v8815 = vadd.f32 %v8085, %v8641
        %v8816 = vadd.f32 %v8084, %v8643
        %v8817 = vadd.f32 %v8086, %v8645
        %v8818 = vadd.f32 %v8094, %v8647
        %v8819 = vadd.f32 %v8102, %v8649
        %v8820 = vadd.f32 %v8101, %v8651
        %v8821 = vadd.f32 %v8103, %v8653
        %v8822 = vadd.f32 %v8145, %v8655
        %v8823 = vadd.f32 %v8153, %v8657
        %v8824 = vadd.f32 %v8152, %v8659
        %v8825 = vadd.f32 %v8154, %v8661
        %v8826 = vadd.f32 %v8162, %v8663
        %v8827 = vadd.f32 %v8170, %v8665
        %v8828 = vadd.f32 %v8169, %v8667
        %v8829 = vadd.f32 %v8171, %v8669
        %v8830 = vadd.f32 %v8213, %v8671
        %v8831 = vadd.f32 %v8221, %v8673
        %v8832 = vadd.f32 %v8220, %v8675
        %v8833 = vadd.f32 %v8222, %v8677
        %v8834 = vadd.f32 %v8230, %v8679
        %v8835 = vadd.f32 %v8238, %v8681
        %v8836 = vadd.f32 %v8237, %v8683
        %v8837 = vadd.f32 %v8239, %v8685
        %v8838 = vadd.f32 %v8281, %v8687
        %v8839 = vadd.f32 %v8289, %v8689
        %v8840 = vadd.f32 %v8288, %v8691
        %v8841 = vadd.f32 %v8290, %v8693
        %v8842 = vadd.f32 %v8298, %v8695
        %v8843 = vadd.f32 %v8306, %v8697
        %v8844 = vadd.f32 %v8305, %v8699
        %v8845 = vadd.f32 %v8307, %v8701
        %v8846 = vadd.f32 %v8349, %v8703
        %v8847 = vadd.f32 %v8357, %v8705
        %v8848 = vadd.f32 %v8356, %v8707
        %v8849 = vadd.f32 %v8358, %v8709
        %v8850 = vadd.f32 %v8366, %v8711
        %v8851 = vadd.f32 %v8374, %v8713
        %v8852 = vadd.f32 %v8373, %v8715
        %v8853 = vadd.f32 %v8375, %v8717
        %v8854 = vadd.f32 %v8417, %v8719
        %v8855 = vadd.f32 %v8425, %v8721
        %v8856 = vadd.f32 %v8424, %v8723
        %v8857 = vadd.f32 %v8426, %v8725
        %v8858 = vadd.f32 %v8434, %v8727
        %v8859 = vadd.f32 %v8442, %v8729
        %v8860 = vadd.f32 %v8441, %v8731
        %v8861 = vadd.f32 %v8443, %v8733
        %v8862 = vadd.f32 %v8798, %v7975
        %v8863 = vadd.f32 %v8799, %v7983
        %v8864 = vadd.f32 %v8800, %v7982
        %v8865 = vadd.f32 %v8801, %v7984
        %v8866 = vadd.f32 %v8802, %v7992
        %v8867 = vadd.f32 %v8803, %v8000
        %v8868 = vadd.f32 %v8804, %v7999
        %v8869 = vadd.f32 %v8805, %v8001
        %v8870 = vadd.f32 %v8806, %v8043
        %v8871 = vadd.f32 %v8807, %v8051
        %v8872 = vadd.f32 %v8808, %v8050
        %v8873 = vadd.f32 %v8809, %v8052
        %v8874 = vadd.f32 %v8810, %v8060
        %v8875 = vadd.f32 %v8811, %v8068
        %v8876 = vadd.f32 %v8812, %v8067
        %v8877 = vadd.f32 %v8813, %v8069
        %v8878 = vadd.f32 %v8814, %v8111
        %v8879 = vadd.f32 %v8815, %v8119
        %v8880 = vadd.f32 %v8816, %v8118
        %v8881 = vadd.f32 %v8817, %v8120
        %v8882 = vadd.f32 %v8818, %v8128
        %v8883 = vadd.f32 %v8819, %v8136
        %v8884 = vadd.f32 %v8820, %v8135
        %v8885 = vadd.f32 %v8821, %v8137
        %v8886 = vadd.f32 %v8822, %v8179
        %v8887 = vadd.f32 %v8823, %v8187
        %v8888 = vadd.f32 %v8824, %v8186
        %v8889 = vadd.f32 %v8825, %v8188
        %v8890 = vadd.f32 %v8826, %v8196
        %v8891 = vadd.f32 %v8827, %v8204
        %v8892 = vadd.f32 %v8828, %v8203
        %v8893 = vadd.f32 %v8829, %v8205
        %v8894 = vadd.f32 %v8830, %v8247
        %v8895 = vadd.f32 %v8831, %v8255
        %v8896 = vadd.f32 %v8832, %v8254
        %v8897 = vadd.f32 %v8833, %v8256
        %v8898 = vadd.f32 %v8834, %v8264
        %v8899 = vadd.f32 %v8835, %v8272
        %v8900 = vadd.f32 %v8836, %v8271
        %v8901 = vadd.f32 %v8837, %v8273
        %v8902 = vadd.f32 %v8838, %v8315
        %v8903 = vadd.f32 %v8839, %v8323
        %v8904 = vadd.f32 %v8840, %v8322
        %v8905 = vadd.f32 %v8841, %v8324
        %v8906 = vadd.f32 %v8842, %v8332
        %v8907 = vadd.f32 %v8843, %v8340
        %v8908 = vadd.f32 %v8844, %v8339
        %v8909 = vadd.f32 %v8845, %v8341
        %v8910 = vadd.f32 %v8846, %v8383
        %v8911 = vadd.f32 %v8847, %v8391
        %v8912 = vadd.f32 %v8848, %v8390
        %v8913 = vadd.f32 %v8849, %v8392
        %v8914 = vadd.f32 %v8850, %v8400
        %v8915 = vadd.f32 %v8851, %v8408
        %v8916 = vadd.f32 %v8852, %v8407
        %v8917 = vadd.f32 %v8853, %v8409
        %v8918 = vadd.f32 %v8854, %v8451
        %v8919 = vadd.f32 %v8855, %v8459
        %v8920 = vadd.f32 %v8856, %v8458
        %v8921 = vadd.f32 %v8857, %v8460
        %v8922 = vadd.f32 %v8858, %v8468
        %v8923 = vadd.f32 %v8859, %v8476
        %v8924 = vadd.f32 %v8860, %v8475
        %v8925 = vadd.f32 %v8861, %v8477
        %v8926 = vrot.slane %v7975, 7
        %v8927 = vrot.slane %v8926, 2
        %v8928 = vrot.slane %v7983, 7
        %v8929 = vrot.slane %v8928, 2
        %v8930 = vrot.slane %v7982, 7
        %v8931 = vrot.slane %v8930, 2
        %v8932 = vrot.slane %v7984, 7
        %v8933 = vrot.slane %v8932, 2
        %v8934 = vrot.slane %v7992, 7
        %v8935 = vrot.slane %v8934, 2
        %v8936 = vrot.slane %v8000, 7
        %v8937 = vrot.slane %v8936, 2
        %v8938 = vrot.slane %v7999, 7
        %v8939 = vrot.slane %v8938, 2
        %v8940 = vrot.slane %v8001, 7
        %v8941 = vrot.slane %v8940, 2
        %v8942 = vrot.slane %v8043, 7
        %v8943 = vrot.slane %v8942, 2
        %v8944 = vrot.slane %v8051, 7
        %v8945 = vrot.slane %v8944, 2
        %v8946 = vrot.slane %v8050, 7
        %v8947 = vrot.slane %v8946, 2
        %v8948 = vrot.slane %v8052, 7
        %v8949 = vrot.slane %v8948, 2
        %v8950 = vrot.slane %v8060, 7
        %v8951 = vrot.slane %v8950, 2
        %v8952 = vrot.slane %v8068, 7
        %v8953 = vrot.slane %v8952, 2
        %v8954 = vrot.slane %v8067, 7
        %v8955 = vrot.slane %v8954, 2
        %v8956 = vrot.slane %v8069, 7
        %v8957 = vrot.slane %v8956, 2
        %v8958 = vrot.slane %v8111, 7
        %v8959 = vrot.slane %v8958, 2
        %v8960 = vrot.slane %v8119, 7
        %v8961 = vrot.slane %v8960, 2
        %v8962 = vrot.slane %v8118, 7
        %v8963 = vrot.slane %v8962, 2
        %v8964 = vrot.slane %v8120, 7
        %v8965 = vrot.slane %v8964, 2
        %v8966 = vrot.slane %v8128, 7
        %v8967 = vrot.slane %v8966, 2
        %v8968 = vrot.slane %v8136, 7
        %v8969 = vrot.slane %v8968, 2
        %v8970 = vrot.slane %v8135, 7
        %v8971 = vrot.slane %v8970, 2
        %v8972 = vrot.slane %v8137, 7
        %v8973 = vrot.slane %v8972, 2
        %v8974 = vrot.slane %v8179, 7
        %v8975 = vrot.slane %v8974, 2
        %v8976 = vrot.slane %v8187, 7
        %v8977 = vrot.slane %v8976, 2
        %v8978 = vrot.slane %v8186, 7
        %v8979 = vrot.slane %v8978, 2
        %v8980 = vrot.slane %v8188, 7
        %v8981 = vrot.slane %v8980, 2
        %v8982 = vrot.slane %v8196, 7
        %v8983 = vrot.slane %v8982, 2
        %v8984 = vrot.slane %v8204, 7
        %v8985 = vrot.slane %v8984, 2
        %v8986 = vrot.slane %v8203, 7
        %v8987 = vrot.slane %v8986, 2
        %v8988 = vrot.slane %v8205, 7
        %v8989 = vrot.slane %v8988, 2
        %v8990 = vrot.slane %v8247, 7
        %v8991 = vrot.slane %v8990, 2
        %v8992 = vrot.slane %v8255, 7
        %v8993 = vrot.slane %v8992, 2
        %v8994 = vrot.slane %v8254, 7
        %v8995 = vrot.slane %v8994, 2
        %v8996 = vrot.slane %v8256, 7
        %v8997 = vrot.slane %v8996, 2
        %v8998 = vrot.slane %v8264, 7
        %v8999 = vrot.slane %v8998, 2
        %v9000 = vrot.slane %v8272, 7
        %v9001 = vrot.slane %v9000, 2
        %v9002 = vrot.slane %v8271, 7
        %v9003 = vrot.slane %v9002, 2
        %v9004 = vrot.slane %v8273, 7
        %v9005 = vrot.slane %v9004, 2
        %v9006 = vrot.slane %v8315, 7
        %v9007 = vrot.slane %v9006, 2
        %v9008 = vrot.slane %v8323, 7
        %v9009 = vrot.slane %v9008, 2
        %v9010 = vrot.slane %v8322, 7
        %v9011 = vrot.slane %v9010, 2
        %v9012 = vrot.slane %v8324, 7
        %v9013 = vrot.slane %v9012, 2
        %v9014 = vrot.slane %v8332, 7
        %v9015 = vrot.slane %v9014, 2
        %v9016 = vrot.slane %v8340, 7
        %v9017 = vrot.slane %v9016, 2
        %v9018 = vrot.slane %v8339, 7
        %v9019 = vrot.slane %v9018, 2
        %v9020 = vrot.slane %v8341, 7
        %v9021 = vrot.slane %v9020, 2
        %v9022 = vrot.slane %v8383, 7
        %v9023 = vrot.slane %v9022, 2
        %v9024 = vrot.slane %v8391, 7
        %v9025 = vrot.slane %v9024, 2
        %v9026 = vrot.slane %v8390, 7
        %v9027 = vrot.slane %v9026, 2
        %v9028 = vrot.slane %v8392, 7
        %v9029 = vrot.slane %v9028, 2
        %v9030 = vrot.slane %v8400, 7
        %v9031 = vrot.slane %v9030, 2
        %v9032 = vrot.slane %v8408, 7
        %v9033 = vrot.slane %v9032, 2
        %v9034 = vrot.slane %v8407, 7
        %v9035 = vrot.slane %v9034, 2
        %v9036 = vrot.slane %v8409, 7
        %v9037 = vrot.slane %v9036, 2
        %v9038 = vrot.slane %v8451, 7
        %v9039 = vrot.slane %v9038, 2
        %v9040 = vrot.slane %v8459, 7
        %v9041 = vrot.slane %v9040, 2
        %v9042 = vrot.slane %v8458, 7
        %v9043 = vrot.slane %v9042, 2
        %v9044 = vrot.slane %v8460, 7
        %v9045 = vrot.slane %v9044, 2
        %v9046 = vrot.slane %v8468, 7
        %v9047 = vrot.slane %v9046, 2
        %v9048 = vrot.slane %v8476, 7
        %v9049 = vrot.slane %v9048, 2
        %v9050 = vrot.slane %v8475, 7
        %v9051 = vrot.slane %v9050, 2
        %v9052 = vrot.slane %v8477, 7
        %v9053 = vrot.slane %v9052, 2
        %v9118 = vadd.f32 %v8862, %v8927
        %v9119 = vadd.f32 %v8863, %v8929
        %v9120 = vadd.f32 %v8864, %v8931
        %v9121 = vadd.f32 %v8865, %v8933
        %v9122 = vadd.f32 %v8866, %v8935
        %v9123 = vadd.f32 %v8867, %v8937
        %v9124 = vadd.f32 %v8868, %v8939
        %v9125 = vadd.f32 %v8869, %v8941
        %v9126 = vadd.f32 %v8870, %v8943
        %v9127 = vadd.f32 %v8871, %v8945
        %v9128 = vadd.f32 %v8872, %v8947
        %v9129 = vadd.f32 %v8873, %v8949
        %v9130 = vadd.f32 %v8874, %v8951
        %v9131 = vadd.f32 %v8875, %v8953
        %v9132 = vadd.f32 %v8876, %v8955
        %v9133 = vadd.f32 %v8877, %v8957
        %v9134 = vadd.f32 %v8878, %v8959
        %v9135 = vadd.f32 %v8879, %v8961
        %v9136 = vadd.f32 %v8880, %v8963
        %v9137 = vadd.f32 %v8881, %v8965
        %v9138 = vadd.f32 %v8882, %v8967
        %v9139 = vadd.f32 %v8883, %v8969
        %v9140 = vadd.f32 %v8884, %v8971
        %v9141 = vadd.f32 %v8885, %v8973
        %v9142 = vadd.f32 %v8886, %v8975
        %v9143 = vadd.f32 %v8887, %v8977
        %v9144 = vadd.f32 %v8888, %v8979
        %v9145 = vadd.f32 %v8889, %v8981
        %v9146 = vadd.f32 %v8890, %v8983
        %v9147 = vadd.f32 %v8891, %v8985
        %v9148 = vadd.f32 %v8892, %v8987
        %v9149 = vadd.f32 %v8893, %v8989
        %v9150 = vadd.f32 %v8894, %v8991
        %v9151 = vadd.f32 %v8895, %v8993
        %v9152 = vadd.f32 %v8896, %v8995
        %v9153 = vadd.f32 %v8897, %v8997
        %v9154 = vadd.f32 %v8898, %v8999
        %v9155 = vadd.f32 %v8899, %v9001
        %v9156 = vadd.f32 %v8900, %v9003
        %v9157 = vadd.f32 %v8901, %v9005
        %v9158 = vadd.f32 %v8902, %v9007
        %v9159 = vadd.f32 %v8903, %v9009
        %v9160 = vadd.f32 %v8904, %v9011
        %v9161 = vadd.f32 %v8905, %v9013
        %v9162 = vadd.f32 %v8906, %v9015
        %v9163 = vadd.f32 %v8907, %v9017
        %v9164 = vadd.f32 %v8908, %v9019
        %v9165 = vadd.f32 %v8909, %v9021
        %v9166 = vadd.f32 %v8910, %v9023
        %v9167 = vadd.f32 %v8911, %v9025
        %v9168 = vadd.f32 %v8912, %v9027
        %v9169 = vadd.f32 %v8913, %v9029
        %v9170 = vadd.f32 %v8914, %v9031
        %v9171 = vadd.f32 %v8915, %v9033
        %v9172 = vadd.f32 %v8916, %v9035
        %v9173 = vadd.f32 %v8917, %v9037
        %v9174 = vadd.f32 %v8918, %v9039
        %v9175 = vadd.f32 %v8919, %v9041
        %v9176 = vadd.f32 %v8920, %v9043
        %v9177 = vadd.f32 %v8921, %v9045
        %v9178 = vadd.f32 %v8922, %v9047
        %v9179 = vadd.f32 %v8923, %v9049
        %v9180 = vadd.f32 %v8924, %v9051
        %v9181 = vadd.f32 %v8925, %v9053
        %v9182 = vmul.f32 %v9118, 0.25
        %v9183 = vmul.f32 %v9119, 0.25
        %v9184 = vmul.f32 %v9120, 0.25
        %v9185 = vmul.f32 %v9121, 0.25
        %v9186 = vmul.f32 %v9122, 0.25
        %v9187 = vmul.f32 %v9123, 0.25
        %v9188 = vmul.f32 %v9124, 0.25
        %v9189 = vmul.f32 %v9125, 0.25
        %v9190 = vmul.f32 %v9126, 0.25
        %v9191 = vmul.f32 %v9127, 0.25
        %v9192 = vmul.f32 %v9128, 0.25
        %v9193 = vmul.f32 %v9129, 0.25
        %v9194 = vmul.f32 %v9130, 0.25
        %v9195 = vmul.f32 %v9131, 0.25
        %v9196 = vmul.f32 %v9132, 0.25
        %v9197 = vmul.f32 %v9133, 0.25
        %v9198 = vmul.f32 %v9134, 0.25
        %v9199 = vmul.f32 %v9135, 0.25
        %v9200 = vmul.f32 %v9136, 0.25
        %v9201 = vmul.f32 %v9137, 0.25
        %v9202 = vmul.f32 %v9138, 0.25
        %v9203 = vmul.f32 %v9139, 0.25
        %v9204 = vmul.f32 %v9140, 0.25
        %v9205 = vmul.f32 %v9141, 0.25
        %v9206 = vmul.f32 %v9142, 0.25
        %v9207 = vmul.f32 %v9143, 0.25
        %v9208 = vmul.f32 %v9144, 0.25
        %v9209 = vmul.f32 %v9145, 0.25
        %v9210 = vmul.f32 %v9146, 0.25
        %v9211 = vmul.f32 %v9147, 0.25
        %v9212 = vmul.f32 %v9148, 0.25
        %v9213 = vmul.f32 %v9149, 0.25
        %v9214 = vmul.f32 %v9150, 0.25
        %v9215 = vmul.f32 %v9151, 0.25
        %v9216 = vmul.f32 %v9152, 0.25
        %v9217 = vmul.f32 %v9153, 0.25
        %v9218 = vmul.f32 %v9154, 0.25
        %v9219 = vmul.f32 %v9155, 0.25
        %v9220 = vmul.f32 %v9156, 0.25
        %v9221 = vmul.f32 %v9157, 0.25
        %v9222 = vmul.f32 %v9158, 0.25
        %v9223 = vmul.f32 %v9159, 0.25
        %v9224 = vmul.f32 %v9160, 0.25
        %v9225 = vmul.f32 %v9161, 0.25
        %v9226 = vmul.f32 %v9162, 0.25
        %v9227 = vmul.f32 %v9163, 0.25
        %v9228 = vmul.f32 %v9164, 0.25
        %v9229 = vmul.f32 %v9165, 0.25
        %v9230 = vmul.f32 %v9166, 0.25
        %v9231 = vmul.f32 %v9167, 0.25
        %v9232 = vmul.f32 %v9168, 0.25
        %v9233 = vmul.f32 %v9169, 0.25
        %v9234 = vmul.f32 %v9170, 0.25
        %v9235 = vmul.f32 %v9171, 0.25
        %v9236 = vmul.f32 %v9172, 0.25
        %v9237 = vmul.f32 %v9173, 0.25
        %v9238 = vmul.f32 %v9174, 0.25
        %v9239 = vmul.f32 %v9175, 0.25
        %v9240 = vmul.f32 %v9176, 0.25
        %v9241 = vmul.f32 %v9177, 0.25
        %v9242 = vmul.f32 %v9178, 0.25
        %v9243 = vmul.f32 %v9179, 0.25
        %v9244 = vmul.f32 %v9180, 0.25
        %v9245 = vmul.f32 %v9181, 0.25
        %v9310 = vlaneseq
        %v9311 = vshrl.u32 %v9310, 7
        %v9312 = vsub.s32 0, %v9311
        %v9313 = vrot.slane %v9182, %v9312
        %v9314 = vlaneseq
        %v9315 = vshrl.u32 %v9314, 7
        %v9316 = vsub.s32 0, %v9315
        %v9317 = vrot.slane %v9183, %v9316
        %v9318 = vlaneseq
        %v9319 = vshrl.u32 %v9318, 7
        %v9320 = vsub.s32 0, %v9319
        %v9321 = vrot.slane %v9184, %v9320
        %v9322 = vlaneseq
        %v9323 = vshrl.u32 %v9322, 7
        %v9324 = vsub.s32 0, %v9323
        %v9325 = vrot.slane %v9185, %v9324
        %v9326 = vlaneseq
        %v9327 = vshrl.u32 %v9326, 7
        %v9328 = vsub.s32 0, %v9327
        %v9329 = vrot.slane %v9186, %v9328
        %v9330 = vlaneseq
        %v9331 = vshrl.u32 %v9330, 7
        %v9332 = vsub.s32 0, %v9331
        %v9333 = vrot.slane %v9187, %v9332
        %v9334 = vlaneseq
        %v9335 = vshrl.u32 %v9334, 7
        %v9336 = vsub.s32 0, %v9335
        %v9337 = vrot.slane %v9188, %v9336
        %v9338 = vlaneseq
        %v9339 = vshrl.u32 %v9338, 7
        %v9340 = vsub.s32 0, %v9339
        %v9341 = vrot.slane %v9189, %v9340
        %v9342 = vlaneseq
        %v9343 = vshrl.u32 %v9342, 7
        %v9344 = vsub.s32 0, %v9343
        %v9345 = vrot.slane %v9190, %v9344
        %v9346 = vlaneseq
        %v9347 = vshrl.u32 %v9346, 7
        %v9348 = vsub.s32 0, %v9347
        %v9349 = vrot.slane %v9191, %v9348
        %v9350 = vlaneseq
        %v9351 = vshrl.u32 %v9350, 7
        %v9352 = vsub.s32 0, %v9351
        %v9353 = vrot.slane %v9192, %v9352
        %v9354 = vlaneseq
        %v9355 = vshrl.u32 %v9354, 7
        %v9356 = vsub.s32 0, %v9355
        %v9357 = vrot.slane %v9193, %v9356
        %v9358 = vlaneseq
        %v9359 = vshrl.u32 %v9358, 7
        %v9360 = vsub.s32 0, %v9359
        %v9361 = vrot.slane %v9194, %v9360
        %v9362 = vlaneseq
        %v9363 = vshrl.u32 %v9362, 7
        %v9364 = vsub.s32 0, %v9363
        %v9365 = vrot.slane %v9195, %v9364
        %v9366 = vlaneseq
        %v9367 = vshrl.u32 %v9366, 7
        %v9368 = vsub.s32 0, %v9367
        %v9369 = vrot.slane %v9196, %v9368
        %v9370 = vlaneseq
        %v9371 = vshrl.u32 %v9370, 7
        %v9372 = vsub.s32 0, %v9371
        %v9373 = vrot.slane %v9197, %v9372
        %v9374 = vlaneseq
        %v9375 = vshrl.u32 %v9374, 7
        %v9376 = vsub.s32 0, %v9375
        %v9377 = vrot.slane %v9198, %v9376
        %v9378 = vlaneseq
        %v9379 = vshrl.u32 %v9378, 7
        %v9380 = vsub.s32 0, %v9379
        %v9381 = vrot.slane %v9199, %v9380
        %v9382 = vlaneseq
        %v9383 = vshrl.u32 %v9382, 7
        %v9384 = vsub.s32 0, %v9383
        %v9385 = vrot.slane %v9200, %v9384
        %v9386 = vlaneseq
        %v9387 = vshrl.u32 %v9386, 7
        %v9388 = vsub.s32 0, %v9387
        %v9389 = vrot.slane %v9201, %v9388
        %v9390 = vlaneseq
        %v9391 = vshrl.u32 %v9390, 7
        %v9392 = vsub.s32 0, %v9391
        %v9393 = vrot.slane %v9202, %v9392
        %v9394 = vlaneseq
        %v9395 = vshrl.u32 %v9394, 7
        %v9396 = vsub.s32 0, %v9395
        %v9397 = vrot.slane %v9203, %v9396
        %v9398 = vlaneseq
        %v9399 = vshrl.u32 %v9398, 7
        %v9400 = vsub.s32 0, %v9399
        %v9401 = vrot.slane %v9204, %v9400
        %v9402 = vlaneseq
        %v9403 = vshrl.u32 %v9402, 7
        %v9404 = vsub.s32 0, %v9403
        %v9405 = vrot.slane %v9205, %v9404
        %v9406 = vlaneseq
        %v9407 = vshrl.u32 %v9406, 7
        %v9408 = vsub.s32 0, %v9407
        %v9409 = vrot.slane %v9206, %v9408
        %v9410 = vlaneseq
        %v9411 = vshrl.u32 %v9410, 7
        %v9412 = vsub.s32 0, %v9411
        %v9413 = vrot.slane %v9207, %v9412
        %v9414 = vlaneseq
        %v9415 = vshrl.u32 %v9414, 7
        %v9416 = vsub.s32 0, %v9415
        %v9417 = vrot.slane %v9208, %v9416
        %v9418 = vlaneseq
        %v9419 = vshrl.u32 %v9418, 7
        %v9420 = vsub.s32 0, %v9419
        %v9421 = vrot.slane %v9209, %v9420
        %v9422 = vlaneseq
        %v9423 = vshrl.u32 %v9422, 7
        %v9424 = vsub.s32 0, %v9423
        %v9425 = vrot.slane %v9210, %v9424
        %v9426 = vlaneseq
        %v9427 = vshrl.u32 %v9426, 7
        %v9428 = vsub.s32 0, %v9427
        %v9429 = vrot.slane %v9211, %v9428
        %v9430 = vlaneseq
        %v9431 = vshrl.u32 %v9430, 7
        %v9432 = vsub.s32 0, %v9431
        %v9433 = vrot.slane %v9212, %v9432
        %v9434 = vlaneseq
        %v9435 = vshrl.u32 %v9434, 7
        %v9436 = vsub.s32 0, %v9435
        %v9437 = vrot.slane %v9213, %v9436
        %v9438 = vlaneseq
        %v9439 = vshrl.u32 %v9438, 7
        %v9440 = vsub.s32 0, %v9439
        %v9441 = vrot.slane %v9214, %v9440
        %v9442 = vlaneseq
        %v9443 = vshrl.u32 %v9442, 7
        %v9444 = vsub.s32 0, %v9443
        %v9445 = vrot.slane %v9215, %v9444
        %v9446 = vlaneseq
        %v9447 = vshrl.u32 %v9446, 7
        %v9448 = vsub.s32 0, %v9447
        %v9449 = vrot.slane %v9216, %v9448
        %v9450 = vlaneseq
        %v9451 = vshrl.u32 %v9450, 7
        %v9452 = vsub.s32 0, %v9451
        %v9453 = vrot.slane %v9217, %v9452
        %v9454 = vlaneseq
        %v9455 = vshrl.u32 %v9454, 7
        %v9456 = vsub.s32 0, %v9455
        %v9457 = vrot.slane %v9218, %v9456
        %v9458 = vlaneseq
        %v9459 = vshrl.u32 %v9458, 7
        %v9460 = vsub.s32 0, %v9459
        %v9461 = vrot.slane %v9219, %v9460
        %v9462 = vlaneseq
        %v9463 = vshrl.u32 %v9462, 7
        %v9464 = vsub.s32 0, %v9463
        %v9465 = vrot.slane %v9220, %v9464
        %v9466 = vlaneseq
        %v9467 = vshrl.u32 %v9466, 7
        %v9468 = vsub.s32 0, %v9467
        %v9469 = vrot.slane %v9221, %v9468
        %v9470 = vlaneseq
        %v9471 = vshrl.u32 %v9470, 7
        %v9472 = vsub.s32 0, %v9471
        %v9473 = vrot.slane %v9222, %v9472
        %v9474 = vlaneseq
        %v9475 = vshrl.u32 %v9474, 7
        %v9476 = vsub.s32 0, %v9475
        %v9477 = vrot.slane %v9223, %v9476
        %v9478 = vlaneseq
        %v9479 = vshrl.u32 %v9478, 7
        %v9480 = vsub.s32 0, %v9479
        %v9481 = vrot.slane %v9224, %v9480
        %v9482 = vlaneseq
        %v9483 = vshrl.u32 %v9482, 7
        %v9484 = vsub.s32 0, %v9483
        %v9485 = vrot.slane %v9225, %v9484
        %v9486 = vlaneseq
        %v9487 = vshrl.u32 %v9486, 7
        %v9488 = vsub.s32 0, %v9487
        %v9489 = vrot.slane %v9226, %v9488
        %v9490 = vlaneseq
        %v9491 = vshrl.u32 %v9490, 7
        %v9492 = vsub.s32 0, %v9491
        %v9493 = vrot.slane %v9227, %v9492
        %v9494 = vlaneseq
        %v9495 = vshrl.u32 %v9494, 7
        %v9496 = vsub.s32 0, %v9495
        %v9497 = vrot.slane %v9228, %v9496
        %v9498 = vlaneseq
        %v9499 = vshrl.u32 %v9498, 7
        %v9500 = vsub.s32 0, %v9499
        %v9501 = vrot.slane %v9229, %v9500
        %v9502 = vlaneseq
        %v9503 = vshrl.u32 %v9502, 7
        %v9504 = vsub.s32 0, %v9503
        %v9505 = vrot.slane %v9230, %v9504
        %v9506 = vlaneseq
        %v9507 = vshrl.u32 %v9506, 7
        %v9508 = vsub.s32 0, %v9507
        %v9509 = vrot.slane %v9231, %v9508
        %v9510 = vlaneseq
        %v9511 = vshrl.u32 %v9510, 7
        %v9512 = vsub.s32 0, %v9511
        %v9513 = vrot.slane %v9232, %v9512
        %v9514 = vlaneseq
        %v9515 = vshrl.u32 %v9514, 7
        %v9516 = vsub.s32 0, %v9515
        %v9517 = vrot.slane %v9233, %v9516
        %v9518 = vlaneseq
        %v9519 = vshrl.u32 %v9518, 7
        %v9520 = vsub.s32 0, %v9519
        %v9521 = vrot.slane %v9234, %v9520
        %v9522 = vlaneseq
        %v9523 = vshrl.u32 %v9522, 7
        %v9524 = vsub.s32 0, %v9523
        %v9525 = vrot.slane %v9235, %v9524
        %v9526 = vlaneseq
        %v9527 = vshrl.u32 %v9526, 7
        %v9528 = vsub.s32 0, %v9527
        %v9529 = vrot.slane %v9236, %v9528
        %v9530 = vlaneseq
        %v9531 = vshrl.u32 %v9530, 7
        %v9532 = vsub.s32 0, %v9531
        %v9533 = vrot.slane %v9237, %v9532
        %v9534 = vlaneseq
        %v9535 = vshrl.u32 %v9534, 7
        %v9536 = vsub.s32 0, %v9535
        %v9537 = vrot.slane %v9238, %v9536
        %v9538 = vlaneseq
        %v9539 = vshrl.u32 %v9538, 7
        %v9540 = vsub.s32 0, %v9539
        %v9541 = vrot.slane %v9239, %v9540
        %v9542 = vlaneseq
        %v9543 = vshrl.u32 %v9542, 7
        %v9544 = vsub.s32 0, %v9543
        %v9545 = vrot.slane %v9240, %v9544
        %v9546 = vlaneseq
        %v9547 = vshrl.u32 %v9546, 7
        %v9548 = vsub.s32 0, %v9547
        %v9549 = vrot.slane %v9241, %v9548
        %v9550 = vlaneseq
        %v9551 = vshrl.u32 %v9550, 7
        %v9552 = vsub.s32 0, %v9551
        %v9553 = vrot.slane %v9242, %v9552
        %v9554 = vlaneseq
        %v9555 = vshrl.u32 %v9554, 7
        %v9556 = vsub.s32 0, %v9555
        %v9557 = vrot.slane %v9243, %v9556
        %v9558 = vlaneseq
        %v9559 = vshrl.u32 %v9558, 7
        %v9560 = vsub.s32 0, %v9559
        %v9561 = vrot.slane %v9244, %v9560
        %v9562 = vlaneseq
        %v9563 = vshrl.u32 %v9562, 7
        %v9564 = vsub.s32 0, %v9563
        %v9565 = vrot.slane %v9245, %v9564
        %vm9566 = vcmask 1041409
        %v9567 = vsel %vm9566, %v9317, %v9313
        %vm9568 = vcmask 1042434
        %v9569 = vsel %vm9568, %v9321, %v9567
        %vm9570 = vcmask 1043459
        %v9571 = vsel %vm9570, %v9325, %v9569
        %vm9572 = vcmask 1044484
        %v9573 = vsel %vm9572, %v9329, %v9571
        %vm9574 = vcmask 1045509
        %v9575 = vsel %vm9574, %v9333, %v9573
        %vm9576 = vcmask 1046534
        %v9577 = vsel %vm9576, %v9337, %v9575
        %vm9578 = vcmask 1047559
        %v9579 = vsel %vm9578, %v9341, %v9577
        %v9580 = vsel %vm9566, %v9349, %v9345
        %v9581 = vsel %vm9568, %v9353, %v9580
        %v9582 = vsel %vm9570, %v9357, %v9581
        %v9583 = vsel %vm9572, %v9361, %v9582
        %v9584 = vsel %vm9574, %v9365, %v9583
        %v9585 = vsel %vm9576, %v9369, %v9584
        %v9586 = vsel %vm9578, %v9373, %v9585
        %v9587 = vsel %vm9566, %v9381, %v9377
        %v9588 = vsel %vm9568, %v9385, %v9587
        %v9589 = vsel %vm9570, %v9389, %v9588
        %v9590 = vsel %vm9572, %v9393, %v9589
        %v9591 = vsel %vm9574, %v9397, %v9590
        %v9592 = vsel %vm9576, %v9401, %v9591
        %v9593 = vsel %vm9578, %v9405, %v9592
        %v9594 = vsel %vm9566, %v9413, %v9409
        %v9595 = vsel %vm9568, %v9417, %v9594
        %v9596 = vsel %vm9570, %v9421, %v9595
        %v9597 = vsel %vm9572, %v9425, %v9596
        %v9598 = vsel %vm9574, %v9429, %v9597
        %v9599 = vsel %vm9576, %v9433, %v9598
        %v9600 = vsel %vm9578, %v9437, %v9599
        %v9601 = vsel %vm9566, %v9445, %v9441
        %v9602 = vsel %vm9568, %v9449, %v9601
        %v9603 = vsel %vm9570, %v9453, %v9602
        %v9604 = vsel %vm9572, %v9457, %v9603
        %v9605 = vsel %vm9574, %v9461, %v9604
        %v9606 = vsel %vm9576, %v9465, %v9605
        %v9607 = vsel %vm9578, %v9469, %v9606
        %v9608 = vsel %vm9566, %v9477, %v9473
        %v9609 = vsel %vm9568, %v9481, %v9608
        %v9610 = vsel %vm9570, %v9485, %v9609
        %v9611 = vsel %vm9572, %v9489, %v9610
        %v9612 = vsel %vm9574, %v9493, %v9611
        %v9613 = vsel %vm9576, %v9497, %v9612
        %v9614 = vsel %vm9578, %v9501, %v9613
        %v9615 = vsel %vm9566, %v9509, %v9505
        %v9616 = vsel %vm9568, %v9513, %v9615
        %v9617 = vsel %vm9570, %v9517, %v9616
        %v9618 = vsel %vm9572, %v9521, %v9617
        %v9619 = vsel %vm9574, %v9525, %v9618
        %v9620 = vsel %vm9576, %v9529, %v9619
        %v9621 = vsel %vm9578, %v9533, %v9620
        %v9622 = vsel %vm9566, %v9541, %v9537
        %v9623 = vsel %vm9568, %v9545, %v9622
        %v9624 = vsel %vm9570, %v9549, %v9623
        %v9625 = vsel %vm9572, %v9553, %v9624
        %v9626 = vsel %vm9574, %v9557, %v9625
        %v9627 = vsel %vm9576, %v9561, %v9626
        %v9628 = vsel %vm9578, %v9565, %v9627
        %9637 = vst [vmem:[%s271] sm:$0xff] %v9579
        %9638 = vst [vmem:[%s271 + $0x8] sm:$0xff] %v9586
        %9639 = vst [vmem:[%s271 + $0x10] sm:$0xff] %v9593
        %9640 = vst [vmem:[%s271 + $0x18] sm:$0xff] %v9600
        %9641 = vst [vmem:[%s271 + $0x20] sm:$0xff] %v9607
        %9642 = vst [vmem:[%s271 + $0x28] sm:$0xff] %v9614
        %9643 = vst [vmem:[%s271 + $0x30] sm:$0xff] %v9621
        %9644 = vst [vmem:[%s271 + $0x38] sm:$0xff] %v9628
        %s9645 = sand.u32 %s181, 1
        %s9646 = scalar_lea.sflag [#allocation6], %s9645
        %s9647 = sand.u32 %s181, 1
        %s9648 = smul.addr %s9647, 64
        %s9649 = scalar_lea.vmem [#allocation5], %s9648
        // Predicated region
        $region49: #{tpu_custom_call.1} parent=47 // pred_check
          %p9650 = pneg %p191
        $region50: #{tpu_custom_call.1} parent=47 // pred_check_branch
          %9652 = sbr.rel (%p9650) target = $region52
        $region51: #{tpu_custom_call.1} parent=47 // pred_region
          %s9654 = ssub.s32 1024, 1024
          %9655 = vsyncadd %s9646, %s9654
          %s9656 = smul.addr %s21, 8
          %s9657 = smul.addr %s9656, 128
          %s9658 = scalar_lea.hbm %s7, %s9657
          %s9659 = sshll.u32 %s9649, 4
          %s9660 = int_to_ptr.vmem [resolvable:$true] %s9659
          %9665 = dma.vmem_to_hbm [thread:$0]  %s9660, 1024, %s9658, %s9646, 128, 128, 8
        $region52: #{tpu_custom_call.1} parent=47 // pred_fallthru
          _
      $region48: #{tpu_custom_call.1} parent=5 // pred_fallthru
        _
      %p9666 = scmp.le.s32.totalorder 2, %s16
      // Predicated region
      $region53: #{tpu_custom_call.1} parent=5 // pred_check
        %p9667 = pneg %p9666
      $region54: #{tpu_custom_call.1} parent=5 // pred_check_branch
        %9669 = sbr.rel (%p9667) target = $region56
      $region55: #{tpu_custom_call.1} parent=5 // pred_region
        %s9670 = ssub.s32 %s16, 2
        // Predicated region
        $region57: #{tpu_custom_call.1} parent=55 // pred_check
          %p9671 = pneg %p197
        $region58: #{tpu_custom_call.1} parent=55 // pred_check_branch
          %9673 = sbr.rel (%p9671) target = $region60
        $region59: #{tpu_custom_call.1} parent=55 // pred_region
          %s9674 = sand.u32 %s182, 1
          %s9675 = scalar_lea.sflag [#allocation6], %s9674
          %s9676 = sand.u32 %s182, 1
          %s9677 = smul.addr %s9676, 64
          %s9678 = scalar_lea.vmem [#allocation5], %s9677
          %9679 = dma.done %s9675, 1024
        $region60: #{tpu_custom_call.1} parent=55 // pred_fallthru
          _
      $region56: #{tpu_custom_call.1} parent=5 // pred_fallthru
        _
    $region6: #{tpu_custom_call.1} parent=1 // loop_footer
      %s20 = sadd.s32 1, %s16
    $region7: #{tpu_custom_call.1} parent=1 // loop_footer_branch
      %15 = sbr.rel target = $region3
    $region8: #{tpu_custom_call.1} parent=1 // loop_exit
      _
    %9680 = vsyncpa [#allocation6], 1
    %s9681 = scalar_lea.sflag [#allocation6], 1
    %9682 = vsyncpa %s9681, 1

</llo_original>
